<compile_context>
chip_gen: v6e
topology: v6e:2x2x1
jax: 0.10.0
libtpu: 0.0.40
codegen_flags: <defaults>
</compile_context>

<pallas_src>
import jax
import jax.numpy as jnp
from jax.experimental import pallas as pl
from jax.experimental.pallas import tpu as pltpu


def _round_up(x, m):
    return ((x + m - 1) // m) * m


def _critic_kernel(isa_ref,
                   wA_ref, bA_ref, wB_ref, bB_ref,
                   wC_ref, bC_ref, wD_ref, bD_ref,
                   q_ref):
    """Both Q-heads for one batch tile. Weight refs are [2, in, out] bf16."""
    x = isa_ref[...]                       # bf16 [bm, in_dim]

    def dense(x_bf16, w, b, relu=True):
        # bf16 x bf16 MXU matmul, f32 accumulation; bias/ReLU in f32 (VPU).
        y = jnp.dot(x_bf16, w, preferred_element_type=jnp.float32) + b
        if relu:
            y = jnp.maximum(y, 0.0)
        return y

    qs = []
    for h in range(2):                     # static unrolled loop over the twin heads
        a = dense(x, wA_ref[h], bA_ref[h])
        a = dense(a.astype(jnp.bfloat16), wB_ref[h], bB_ref[h])
        a = dense(a.astype(jnp.bfloat16), wC_ref[h], bC_ref[h])
        q = dense(a.astype(jnp.bfloat16), wD_ref[h], bD_ref[h], relu=False)
        qs.append(q)                       # [bm, 1] f32

    q_ref[...] = jnp.concatenate(qs, axis=-1).astype(q_ref.dtype)   # [bm, 2]


def student_critic_forward(img_vec, state, action, params, *, batch_block=512):
    """Twin-Q forward pass. Returns (q1, q2), each [B, 1] float32."""
    # Trivial concat + bf16 cast stay in the JAX wrapper (kernel needs bf16
    # operands for the first MXU dot anyway).
    isa = jnp.concatenate([img_vec, state, action], axis=-1).astype(jnp.bfloat16)
    B, in_dim = isa.shape

    wA, bA = params["wA"], params["bA"]   # [2, in_dim, 768] bf16 / [2, 1, 768] f32
    wB, bB = params["wB"], params["bB"]   # [2, 768, 768]    / [2, 1, 768]
    wC, bC = params["wC"], params["bC"]   # [2, 768, 512]    / [2, 1, 512]
    wD, bD = params["wD"], params["bD"]   # [2, 512, 1]      / [2, 1, 1]

    # Divisor-aware batch tiling: spread B evenly over the tiles so padding
    # waste stays < 16 rows instead of up to batch_block-1.
    bm = min(batch_block, _round_up(B, 16))
    nb = -(-B // bm)                       # ceil div
    bm = _round_up(-(-B // nb), 16)
    B_pad = nb * bm
    if B_pad != B:
        isa = jnp.pad(isa, ((0, B_pad - B), (0, 0)))

    def const_spec(x):
        # Whole-array block, constant index_map: DMA'd once, VMEM-resident
        # across every batch tile.
        return pl.BlockSpec(x.shape, lambda i, _nd=x.ndim: (0,) * _nd)

    out = pl.pallas_call(
        _critic_kernel,
        out_shape=jax.ShapeDtypeStruct((B_pad, 2), jnp.float32),
        grid_spec=pltpu.PrefetchScalarGridSpec(
            num_scalar_prefetch=0,
            grid=(nb,),                                    # batch tiles only
            in_specs=[
                pl.BlockSpec((bm, in_dim), lambda i: (i, 0)),
                const_spec(wA), const_spec(bA),
                const_spec(wB), const_spec(bB),
                const_spec(wC), const_spec(bC),
                const_spec(wD), const_spec(bD),
            ],
            out_specs=pl.BlockSpec((bm, 2), lambda i: (i, 0)),
        ),
        compiler_params=pltpu.CompilerParams(
            dimension_semantics=("parallel",),
            vmem_limit_bytes=40 << 20,
        ),
    )(isa, wA, bA, wB, bB, wC, bC, wD, bD)

    q = out[:B]
    return q[:, 0:1], q[:, 1:2]


def init_params(key, in_dim, hidden1=700, hidden2=512, hidden1_pad=768):
    """nn.Linear-style U(-1/sqrt(fan_in), +1/sqrt(fan_in)) init.

    Weights stored [in, out] (transposed vs PyTorch), twin-Q heads stacked on
    a leading axis of 2, hidden width zero-padded 700 -> 768 for exact MXU
    tiling (zero weight rows/cols + zero bias keep the math exact).
    Weights shipped as bf16, biases f32.
    """
    true_dims = [(in_dim, hidden1), (hidden1, hidden1),
                 (hidden1, hidden2), (hidden2, 1)]
    pad_dims = [(in_dim, hidden1_pad), (hidden1_pad, hidden1_pad),
                (hidden1_pad, hidden2), (hidden2, 1)]
    names = ["A", "B", "C", "D"]
    params = {}
    keys = jax.random.split(key, 2 * 2 * len(true_dims))
    k = 0
    for name, (fin, fout), (pfin, pfout) in zip(names, true_dims, pad_dims):
        bound = float(fin) ** -0.5
        ws, bs = [], []
        for _ in range(2):  # the two Q-heads
            w = jax.random.uniform(keys[k], (fin, fout), jnp.float32, -bound, bound)
            k += 1
            b = jax.random.uniform(keys[k], (1, fout), jnp.float32, -bound, bound)
            k += 1
            w = jnp.pad(w, ((0, pfin - fin), (0, pfout - fout)))
            b = jnp.pad(b, ((0, 0), (0, pfout - fout)))
            ws.append(w)
            bs.append(b)
        params[f"w{name}"] = jnp.stack(ws).astype(jnp.bfloat16)  # [2, pfin, pfout]
        params[f"b{name}"] = jnp.stack(bs)                       # [2, 1, pfout] f32
    return params


def _reference(img_vec, state, action, params):
    """Pure-JAX reference doing the same bf16-weight / f32-accumulate math."""
    isa = jnp.concatenate([img_vec, state, action], axis=-1).astype(jnp.bfloat16)

    def dense(x, w, b, relu=True):
        y = jnp.dot(x, w, preferred_element_type=jnp.float32) + b
        return jnp.maximum(y, 0.0) if relu else y

    def head(h):
        x = dense(isa, params["wA"][h], params["bA"][h])
        x = dense(x.astype(jnp.bfloat16), params["wB"][h], params["bB"][h])
        x = dense(x.astype(jnp.bfloat16), params["wC"][h], params["bC"][h])
        return dense(x.astype(jnp.bfloat16), params["wD"][h], params["bD"][h],
                     relu=False)

    return head(0), head(1)


if __name__ == "__main__":
    # Small shapes consistent with the module:
    #   d_model = 32 -> conv_lat_dim = d_model - 25 = 7
    #   state_dim = 10, action_dim = 8  -> in_dim = 7 + 10 + 8 = 25
    B = 4
    d_model, state_dim, action_dim = 32, 10, 8
    conv_lat_dim = d_model - 25
    in_dim = conv_lat_dim + state_dim + action_dim

    key = jax.random.PRNGKey(0)
    k_p, k_i, k_s, k_a = jax.random.split(key, 4)
    params = init_params(k_p, in_dim)

    img_vec = jax.random.normal(k_i, (B, conv_lat_dim), jnp.float32)
    state = jax.random.normal(k_s, (B, state_dim), jnp.float32)
    action = jax.random.normal(k_a, (B, action_dim), jnp.float32)

    q1, q2 = jax.jit(student_critic_forward)(img_vec, state, action, params)
    jax.block_until_ready((q1, q2))

    r1, r2 = _reference(img_vec, state, action, params)
    assert q1.shape == (B, 1) and q2.shape == (B, 1)
    assert jnp.allclose(q1, r1, atol=1e-2, rtol=1e-2)
    assert jnp.allclose(q2, r2, atol=1e-2, rtol=1e-2)

    print("KERNEL_OK")
</pallas_src>

<mosaic_0001>
module attributes {stable_mosaic.version = 11 : i64} {
  func.func @_critic_kernel(%arg0: i32, %arg1: memref<16x25xbf16, #tpu.memory_space<vmem>>, %arg2: memref<2x25x768xbf16, #tpu.memory_space<vmem>>, %arg3: memref<2x1x768xf32, #tpu.memory_space<vmem>>, %arg4: memref<2x768x768xbf16, #tpu.memory_space<vmem>>, %arg5: memref<2x1x768xf32, #tpu.memory_space<vmem>>, %arg6: memref<2x768x512xbf16, #tpu.memory_space<vmem>>, %arg7: memref<2x1x512xf32, #tpu.memory_space<vmem>>, %arg8: memref<2x512x1xbf16, #tpu.memory_space<vmem>>, %arg9: memref<2x1x1xf32, #tpu.memory_space<vmem>>, %arg10: memref<16x2xf32, #tpu.memory_space<vmem>>) attributes {dimension_semantics = [#tpu.dimension_semantics<parallel>], iteration_bounds = array<i64: 1>, scalar_prefetch = 0 : i64, scratch_operands = 0 : i64, tpu.core_type = #tpu.core_type<tc>, window_params = [{transform_indices = @transform_0, window_bounds = array<i64: 16, 25>}, {pipeline_mode = #tpu.pipeline_mode<synchronous>, transform_indices = @transform_1, window_bounds = array<i64: 2, 25, 768>}, {pipeline_mode = #tpu.pipeline_mode<synchronous>, transform_indices = @transform_2, window_bounds = array<i64: 2, 1, 768>}, {pipeline_mode = #tpu.pipeline_mode<synchronous>, transform_indices = @transform_3, window_bounds = array<i64: 2, 768, 768>}, {pipeline_mode = #tpu.pipeline_mode<synchronous>, transform_indices = @transform_4, window_bounds = array<i64: 2, 1, 768>}, {pipeline_mode = #tpu.pipeline_mode<synchronous>, transform_indices = @transform_5, window_bounds = array<i64: 2, 768, 512>}, {pipeline_mode = #tpu.pipeline_mode<synchronous>, transform_indices = @transform_6, window_bounds = array<i64: 2, 1, 512>}, {pipeline_mode = #tpu.pipeline_mode<synchronous>, transform_indices = @transform_7, window_bounds = array<i64: 2, 512, 1>}, {pipeline_mode = #tpu.pipeline_mode<synchronous>, transform_indices = @transform_8, window_bounds = array<i64: 2, 1, 1>}, {transform_indices = @transform_9, window_bounds = array<i64: 16, 2>}]} {
    %c0 = arith.constant 0 : index
    %c0_0 = arith.constant 0 : index
    %0 = vector.load %arg1[%c0, %c0_0] : memref<16x25xbf16, #tpu.memory_space<vmem>>, vector<16x25xbf16>
    %c0_1 = arith.constant 0 : index
    %c0_2 = arith.constant 0 : index
    %c0_3 = arith.constant 0 : index
    %1 = vector.load %arg2[%c0_1, %c0_2, %c0_3] : memref<2x25x768xbf16, #tpu.memory_space<vmem>>, vector<1x25x768xbf16>
    %2 = vector.shape_cast %1 : vector<1x25x768xbf16> to vector<25x768xbf16>
    %c0_4 = arith.constant 0 : index
    %c0_5 = arith.constant 0 : index
    %c0_6 = arith.constant 0 : index
    %3 = vector.load %arg3[%c0_4, %c0_5, %c0_6] : memref<2x1x768xf32, #tpu.memory_space<vmem>>, vector<1x1x768xf32>
    %4 = vector.shape_cast %3 : vector<1x1x768xf32> to vector<1x768xf32>
    %cst = arith.constant dense<0.000000e+00> : vector<16x768xf32>
    %5 = tpu.matmul %0, %2, %cst {dimension_numbers = #tpu.dot_dimension_numbers<[1], [0], [0], [1], [0, 0, 1, 1], [], []>} : vector<16x25xbf16>, vector<25x768xbf16>, vector<16x768xf32> -> vector<16x768xf32>
    %6 = vector.broadcast %4 : vector<1x768xf32> to vector<16x768xf32>
    %7 = arith.addf %5, %6 : vector<16x768xf32>
    %cst_7 = arith.constant 0.000000e+00 : f32
    %8 = vector.broadcast %cst_7 : f32 to vector<16x768xf32>
    %9 = arith.maximumf %7, %8 : vector<16x768xf32>
    %10 = arith.truncf %9 : vector<16x768xf32> to vector<16x768xbf16>
    %c0_8 = arith.constant 0 : index
    %c0_9 = arith.constant 0 : index
    %c0_10 = arith.constant 0 : index
    %11 = vector.load %arg4[%c0_8, %c0_9, %c0_10] : memref<2x768x768xbf16, #tpu.memory_space<vmem>>, vector<1x768x768xbf16>
    %12 = vector.shape_cast %11 : vector<1x768x768xbf16> to vector<768x768xbf16>
    %c0_11 = arith.constant 0 : index
    %c0_12 = arith.constant 0 : index
    %c0_13 = arith.constant 0 : index
    %13 = vector.load %arg5[%c0_11, %c0_12, %c0_13] : memref<2x1x768xf32, #tpu.memory_space<vmem>>, vector<1x1x768xf32>
    %14 = vector.shape_cast %13 : vector<1x1x768xf32> to vector<1x768xf32>
    %cst_14 = arith.constant dense<0.000000e+00> : vector<16x768xf32>
    %15 = tpu.matmul %10, %12, %cst_14 {dimension_numbers = #tpu.dot_dimension_numbers<[1], [0], [0], [1], [0, 0, 1, 1], [], []>} : vector<16x768xbf16>, vector<768x768xbf16>, vector<16x768xf32> -> vector<16x768xf32>
    %16 = vector.broadcast %14 : vector<1x768xf32> to vector<16x768xf32>
    %17 = arith.addf %15, %16 : vector<16x768xf32>
    %cst_15 = arith.constant 0.000000e+00 : f32
    %18 = vector.broadcast %cst_15 : f32 to vector<16x768xf32>
    %19 = arith.maximumf %17, %18 : vector<16x768xf32>
    %20 = arith.truncf %19 : vector<16x768xf32> to vector<16x768xbf16>
    %c0_16 = arith.constant 0 : index
    %c0_17 = arith.constant 0 : index
    %c0_18 = arith.constant 0 : index
    %21 = vector.load %arg6[%c0_16, %c0_17, %c0_18] : memref<2x768x512xbf16, #tpu.memory_space<vmem>>, vector<1x768x512xbf16>
    %22 = vector.shape_cast %21 : vector<1x768x512xbf16> to vector<768x512xbf16>
    %c0_19 = arith.constant 0 : index
    %c0_20 = arith.constant 0 : index
    %c0_21 = arith.constant 0 : index
    %23 = vector.load %arg7[%c0_19, %c0_20, %c0_21] : memref<2x1x512xf32, #tpu.memory_space<vmem>>, vector<1x1x512xf32>
    %24 = vector.shape_cast %23 : vector<1x1x512xf32> to vector<1x512xf32>
    %cst_22 = arith.constant dense<0.000000e+00> : vector<16x512xf32>
    %25 = tpu.matmul %20, %22, %cst_22 {dimension_numbers = #tpu.dot_dimension_numbers<[1], [0], [0], [1], [0, 0, 1, 1], [], []>} : vector<16x768xbf16>, vector<768x512xbf16>, vector<16x512xf32> -> vector<16x512xf32>
    %26 = vector.broadcast %24 : vector<1x512xf32> to vector<16x512xf32>
    %27 = arith.addf %25, %26 : vector<16x512xf32>
    %cst_23 = arith.constant 0.000000e+00 : f32
    %28 = vector.broadcast %cst_23 : f32 to vector<16x512xf32>
    %29 = arith.maximumf %27, %28 : vector<16x512xf32>
    %30 = arith.truncf %29 : vector<16x512xf32> to vector<16x512xbf16>
    %c0_24 = arith.constant 0 : index
    %c0_25 = arith.constant 0 : index
    %c0_26 = arith.constant 0 : index
    %31 = vector.load %arg8[%c0_24, %c0_25, %c0_26] : memref<2x512x1xbf16, #tpu.memory_space<vmem>>, vector<1x512x1xbf16>
    %32 = vector.shape_cast %31 : vector<1x512x1xbf16> to vector<512x1xbf16>
    %c0_27 = arith.constant 0 : index
    %c0_28 = arith.constant 0 : index
    %c0_29 = arith.constant 0 : index
    %33 = vector.load %arg9[%c0_27, %c0_28, %c0_29] : memref<2x1x1xf32, #tpu.memory_space<vmem>>, vector<1x1x1xf32>
    %34 = vector.shape_cast %33 : vector<1x1x1xf32> to vector<1x1xf32>
    %cst_30 = arith.constant dense<0.000000e+00> : vector<16x1xf32>
    %35 = tpu.matmul %30, %32, %cst_30 {dimension_numbers = #tpu.dot_dimension_numbers<[1], [0], [0], [1], [0, 0, 1, 1], [], []>} : vector<16x512xbf16>, vector<512x1xbf16>, vector<16x1xf32> -> vector<16x1xf32>
    %36 = vector.broadcast %34 : vector<1x1xf32> to vector<16x1xf32>
    %37 = arith.addf %35, %36 : vector<16x1xf32>
    %c1 = arith.constant 1 : index
    %c0_31 = arith.constant 0 : index
    %c0_32 = arith.constant 0 : index
    %38 = vector.load %arg2[%c1, %c0_31, %c0_32] : memref<2x25x768xbf16, #tpu.memory_space<vmem>>, vector<1x25x768xbf16>
    %39 = vector.shape_cast %38 : vector<1x25x768xbf16> to vector<25x768xbf16>
    %c1_33 = arith.constant 1 : index
    %c0_34 = arith.constant 0 : index
    %c0_35 = arith.constant 0 : index
    %40 = vector.load %arg3[%c1_33, %c0_34, %c0_35] : memref<2x1x768xf32, #tpu.memory_space<vmem>>, vector<1x1x768xf32>
    %41 = vector.shape_cast %40 : vector<1x1x768xf32> to vector<1x768xf32>
    %cst_36 = arith.constant dense<0.000000e+00> : vector<16x768xf32>
    %42 = tpu.matmul %0, %39, %cst_36 {dimension_numbers = #tpu.dot_dimension_numbers<[1], [0], [0], [1], [0, 0, 1, 1], [], []>} : vector<16x25xbf16>, vector<25x768xbf16>, vector<16x768xf32> -> vector<16x768xf32>
    %43 = vector.broadcast %41 : vector<1x768xf32> to vector<16x768xf32>
    %44 = arith.addf %42, %43 : vector<16x768xf32>
    %cst_37 = arith.constant 0.000000e+00 : f32
    %45 = vector.broadcast %cst_37 : f32 to vector<16x768xf32>
    %46 = arith.maximumf %44, %45 : vector<16x768xf32>
    %47 = arith.truncf %46 : vector<16x768xf32> to vector<16x768xbf16>
    %c1_38 = arith.constant 1 : index
    %c0_39 = arith.constant 0 : index
    %c0_40 = arith.constant 0 : index
    %48 = vector.load %arg4[%c1_38, %c0_39, %c0_40] : memref<2x768x768xbf16, #tpu.memory_space<vmem>>, vector<1x768x768xbf16>
    %49 = vector.shape_cast %48 : vector<1x768x768xbf16> to vector<768x768xbf16>
    %c1_41 = arith.constant 1 : index
    %c0_42 = arith.constant 0 : index
    %c0_43 = arith.constant 0 : index
    %50 = vector.load %arg5[%c1_41, %c0_42, %c0_43] : memref<2x1x768xf32, #tpu.memory_space<vmem>>, vector<1x1x768xf32>
    %51 = vector.shape_cast %50 : vector<1x1x768xf32> to vector<1x768xf32>
    %cst_44 = arith.constant dense<0.000000e+00> : vector<16x768xf32>
    %52 = tpu.matmul %47, %49, %cst_44 {dimension_numbers = #tpu.dot_dimension_numbers<[1], [0], [0], [1], [0, 0, 1, 1], [], []>} : vector<16x768xbf16>, vector<768x768xbf16>, vector<16x768xf32> -> vector<16x768xf32>
    %53 = vector.broadcast %51 : vector<1x768xf32> to vector<16x768xf32>
    %54 = arith.addf %52, %53 : vector<16x768xf32>
    %cst_45 = arith.constant 0.000000e+00 : f32
    %55 = vector.broadcast %cst_45 : f32 to vector<16x768xf32>
    %56 = arith.maximumf %54, %55 : vector<16x768xf32>
    %57 = arith.truncf %56 : vector<16x768xf32> to vector<16x768xbf16>
    %c1_46 = arith.constant 1 : index
    %c0_47 = arith.constant 0 : index
    %c0_48 = arith.constant 0 : index
    %58 = vector.load %arg6[%c1_46, %c0_47, %c0_48] : memref<2x768x512xbf16, #tpu.memory_space<vmem>>, vector<1x768x512xbf16>
    %59 = vector.shape_cast %58 : vector<1x768x512xbf16> to vector<768x512xbf16>
    %c1_49 = arith.constant 1 : index
    %c0_50 = arith.constant 0 : index
    %c0_51 = arith.constant 0 : index
    %60 = vector.load %arg7[%c1_49, %c0_50, %c0_51] : memref<2x1x512xf32, #tpu.memory_space<vmem>>, vector<1x1x512xf32>
    %61 = vector.shape_cast %60 : vector<1x1x512xf32> to vector<1x512xf32>
    %cst_52 = arith.constant dense<0.000000e+00> : vector<16x512xf32>
    %62 = tpu.matmul %57, %59, %cst_52 {dimension_numbers = #tpu.dot_dimension_numbers<[1], [0], [0], [1], [0, 0, 1, 1], [], []>} : vector<16x768xbf16>, vector<768x512xbf16>, vector<16x512xf32> -> vector<16x512xf32>
    %63 = vector.broadcast %61 : vector<1x512xf32> to vector<16x512xf32>
    %64 = arith.addf %62, %63 : vector<16x512xf32>
    %cst_53 = arith.constant 0.000000e+00 : f32
    %65 = vector.broadcast %cst_53 : f32 to vector<16x512xf32>
    %66 = arith.maximumf %64, %65 : vector<16x512xf32>
    %67 = arith.truncf %66 : vector<16x512xf32> to vector<16x512xbf16>
    %c1_54 = arith.constant 1 : index
    %c0_55 = arith.constant 0 : index
    %c0_56 = arith.constant 0 : index
    %68 = vector.load %arg8[%c1_54, %c0_55, %c0_56] : memref<2x512x1xbf16, #tpu.memory_space<vmem>>, vector<1x512x1xbf16>
    %69 = vector.shape_cast %68 : vector<1x512x1xbf16> to vector<512x1xbf16>
    %c1_57 = arith.constant 1 : index
    %c0_58 = arith.constant 0 : index
    %c0_59 = arith.constant 0 : index
    %70 = vector.load %arg9[%c1_57, %c0_58, %c0_59] : memref<2x1x1xf32, #tpu.memory_space<vmem>>, vector<1x1x1xf32>
    %71 = vector.shape_cast %70 : vector<1x1x1xf32> to vector<1x1xf32>
    %cst_60 = arith.constant dense<0.000000e+00> : vector<16x1xf32>
    %72 = tpu.matmul %67, %69, %cst_60 {dimension_numbers = #tpu.dot_dimension_numbers<[1], [0], [0], [1], [0, 0, 1, 1], [], []>} : vector<16x512xbf16>, vector<512x1xbf16>, vector<16x1xf32> -> vector<16x1xf32>
    %73 = vector.broadcast %71 : vector<1x1xf32> to vector<16x1xf32>
    %74 = arith.addf %72, %73 : vector<16x1xf32>
    %75 = tpu.concatenate %37, %74 in 1 : vector<16x1xf32>, vector<16x1xf32> -> vector<16x2xf32>
    %c0_61 = arith.constant 0 : index
    %c0_62 = arith.constant 0 : index
    %76 = vector.load %arg10[%c0_61, %c0_62] : memref<16x2xf32, #tpu.memory_space<vmem>>, vector<16x2xf32>
    tpu.vector_store %arg10[%c0_61, %c0_62], %75 {strides = array<i32>} : memref<16x2xf32, #tpu.memory_space<vmem>>, vector<16x2xf32>,
    return
  }
  func.func @transform_0(%arg0: i32) -> (i32, i32) {
    %c0_i32 = arith.constant 0 : i32
    %c0_i32_0 = arith.constant 0 : i32
    return %arg0, %c0_i32 : i32, i32
  }
  func.func @transform_1(%arg0: i32) -> (i32, i32, i32) {
    %c0_i32 = arith.constant 0 : i32
    %c0_i32_0 = arith.constant 0 : i32
    %c0_i32_1 = arith.constant 0 : i32
    %c0_i32_2 = arith.constant 0 : i32
    return %c0_i32, %c0_i32_0, %c0_i32_1 : i32, i32, i32
  }
  func.func @transform_2(%arg0: i32) -> (i32, i32, i32) {
    %c0_i32 = arith.constant 0 : i32
    %c0_i32_0 = arith.constant 0 : i32
    %c0_i32_1 = arith.constant 0 : i32
    %c0_i32_2 = arith.constant 0 : i32
    return %c0_i32, %c0_i32_0, %c0_i32_1 : i32, i32, i32
  }
  func.func @transform_3(%arg0: i32) -> (i32, i32, i32) {
    %c0_i32 = arith.constant 0 : i32
    %c0_i32_0 = arith.constant 0 : i32
    %c0_i32_1 = arith.constant 0 : i32
    %c0_i32_2 = arith.constant 0 : i32
    return %c0_i32, %c0_i32_0, %c0_i32_1 : i32, i32, i32
  }
  func.func @transform_4(%arg0: i32) -> (i32, i32, i32) {
    %c0_i32 = arith.constant 0 : i32
    %c0_i32_0 = arith.constant 0 : i32
    %c0_i32_1 = arith.constant 0 : i32
    %c0_i32_2 = arith.constant 0 : i32
    return %c0_i32, %c0_i32_0, %c0_i32_1 : i32, i32, i32
  }
  func.func @transform_5(%arg0: i32) -> (i32, i32, i32) {
    %c0_i32 = arith.constant 0 : i32
    %c0_i32_0 = arith.constant 0 : i32
    %c0_i32_1 = arith.constant 0 : i32
    %c0_i32_2 = arith.constant 0 : i32
    return %c0_i32, %c0_i32_0, %c0_i32_1 : i32, i32, i32
  }
  func.func @transform_6(%arg0: i32) -> (i32, i32, i32) {
    %c0_i32 = arith.constant 0 : i32
    %c0_i32_0 = arith.constant 0 : i32
    %c0_i32_1 = arith.constant 0 : i32
    %c0_i32_2 = arith.constant 0 : i32
    return %c0_i32, %c0_i32_0, %c0_i32_1 : i32, i32, i32
  }
  func.func @transform_7(%arg0: i32) -> (i32, i32, i32) {
    %c0_i32 = arith.constant 0 : i32
    %c0_i32_0 = arith.constant 0 : i32
    %c0_i32_1 = arith.constant 0 : i32
    %c0_i32_2 = arith.constant 0 : i32
    return %c0_i32, %c0_i32_0, %c0_i32_1 : i32, i32, i32
  }
  func.func @transform_8(%arg0: i32) -> (i32, i32, i32) {
    %c0_i32 = arith.constant 0 : i32
    %c0_i32_0 = arith.constant 0 : i32
    %c0_i32_1 = arith.constant 0 : i32
    %c0_i32_2 = arith.constant 0 : i32
    return %c0_i32, %c0_i32_0, %c0_i32_1 : i32, i32, i32
  }
  func.func @transform_9(%arg0: i32) -> (i32, i32) {
    %c0_i32 = arith.constant 0 : i32
    %c0_i32_0 = arith.constant 0 : i32
    return %arg0, %c0_i32 : i32, i32
  }
}

</mosaic_0001>

<llo_original>
// kernel: student_critic_forward.1
$region0: #{student_critic_forward.1}
  #allocation0 [shape = 'u32[]', space=smem, size = 0x4, offset = 0x4, fixed_abs, tag = 'smem constant byte address 0x4 - core index']
  #allocation1 [shape = 'u32[144,128]{1,0:T(1,128)}', space=vmem, size = 0x12000, scoped, tag = 'internal scratch']
  %s0 = inlined_call_operand.vmem [shape: bf16[16,25], index: 0, kind: input, shape index: {}]
  %s1 = inlined_call_operand.vmem [shape: bf16[2,25,768], index: 1, kind: input, shape index: {}]
  %s2 = inlined_call_operand.hbm [shape: f32[2,1,768], index: 2, kind: input, shape index: {}]
  %s3 = inlined_call_operand.hbm [shape: bf16[2,768,768], index: 3, kind: input, shape index: {}]
  %s4 = inlined_call_operand.hbm [shape: f32[2,1,768], index: 4, kind: input, shape index: {}]
  %s5 = inlined_call_operand.hbm [shape: bf16[2,768,512], index: 5, kind: input, shape index: {}]
  %s6 = inlined_call_operand.hbm [shape: f32[2,1,512], index: 6, kind: input, shape index: {}]
  %s7 = inlined_call_operand.vmem [shape: bf16[2,512,1], index: 7, kind: input, shape index: {}]
  %s8 = inlined_call_operand.vmem [shape: f32[2,1,1], index: 8, kind: input, shape index: {}]
  %s9 = inlined_call_operand.vmem [shape: f32[16,2], index: 9, kind: output, shape index: {}]
  %s10 = sld [smem:[#allocation0]]
  $region66: #{student_critic_forward.1} parent=0
    _
  %s12 = ssub.s32 1, %s10
  %s13 = scalar_select 0, %s12, %s10
  $region1: #{student_critic_forward.1} parent=0
    #allocation2 [shape = 'u8[6144]{0}', space=vmem, size = 0x1800, scoped, tag = 'input window, operand 2, single buffered']
    #allocation3 [shape = 's32[1]{0}', space=sflag, size = 0x4, scoped, tag = 'scoped memory for student_critic_forward.1']
    #allocation4 [shape = 'u8[2359296]{0}', space=vmem, size = 0x240000, scoped, tag = 'input window, operand 3, single buffered']
    #allocation5 [shape = 's32[1]{0}', space=sflag, size = 0x4, scoped, tag = 'scoped memory for student_critic_forward.1']
    #allocation6 [shape = 'u8[6144]{0}', space=vmem, size = 0x1800, scoped, tag = 'input window, operand 4, single buffered']
    #allocation7 [shape = 'u8[1572864]{0}', space=vmem, size = 0x180000, scoped, tag = 'input window, operand 5, single buffered']
    #allocation8 [shape = 's32[1]{0}', space=sflag, size = 0x4, scoped, tag = 'scoped memory for student_critic_forward.1']
    #allocation9 [shape = 'u8[4096]{0}', space=vmem, size = 0x1000, scoped, tag = 'input window, operand 6, single buffered']
    %14 = vsyncpa [#allocation3], 0
    %15 = vsyncpa [#allocation5], 0
    %16 = vsyncpa [#allocation8], 0
    // Predicated region
    $region2: #{student_critic_forward.1} parent=1 // pred_check
      _
    $region3: #{student_critic_forward.1} parent=1 // pred_check_branch
      %18 = sbr.rel (0) target = $region5
    $region4: #{student_critic_forward.1} parent=1 // pred_region
      _
    $region5: #{student_critic_forward.1} parent=1 // pred_fallthru
      _
    // Predicated region
    $region6: #{student_critic_forward.1} parent=1 // pred_check
      _
    $region7: #{student_critic_forward.1} parent=1 // pred_check_branch
      %20 = sbr.rel (0) target = $region9
    $region8: #{student_critic_forward.1} parent=1 // pred_region
      _
    $region9: #{student_critic_forward.1} parent=1 // pred_fallthru
      _
    // Predicated region
    $region10: #{student_critic_forward.1} parent=1 // pred_check
      _
    $region11: #{student_critic_forward.1} parent=1 // pred_check_branch
      %22 = sbr.rel (0) target = $region13
    $region12: #{student_critic_forward.1} parent=1 // pred_region
      %s24 = ssub.s32 192, 192
      %25 = vsyncadd [#allocation3], %s24
      %s26 = sshll.u32 [#allocation2], 4
      %s27 = int_to_ptr.vmem [resolvable:$true] %s26
      %32 = dma.hbm_to_vmem [thread:$0]  %s2, 192, %s27, [#allocation3], 96, 96, 6
    $region13: #{student_critic_forward.1} parent=1 // pred_fallthru
      _
    // Predicated region
    $region14: #{student_critic_forward.1} parent=1 // pred_check
      _
    $region15: #{student_critic_forward.1} parent=1 // pred_check_branch
      %34 = sbr.rel (0) target = $region17
    $region16: #{student_critic_forward.1} parent=1 // pred_region
      %s36 = ssub.s32 73728, 73728
      %37 = vsyncadd [#allocation5], %s36
      %s38 = sshll.u32 [#allocation4], 4
      %s39 = int_to_ptr.vmem [resolvable:$true] %s38
      %44 = dma.hbm_to_vmem [thread:$0]  %s3, 73728, %s39, [#allocation5], 384, 384, 24
    $region17: #{student_critic_forward.1} parent=1 // pred_fallthru
      _
    // Predicated region
    $region18: #{student_critic_forward.1} parent=1 // pred_check
      _
    $region19: #{student_critic_forward.1} parent=1 // pred_check_branch
      %46 = sbr.rel (0) target = $region21
    $region20: #{student_critic_forward.1} parent=1 // pred_region
      %s48 = ssub.s32 192, 192
      %49 = vsyncadd [#allocation5], %s48
      %s50 = sshll.u32 [#allocation6], 4
      %s51 = int_to_ptr.vmem [resolvable:$true] %s50
      %56 = dma.hbm_to_vmem [thread:$0]  %s4, 192, %s51, [#allocation5], 96, 96, 6
    $region21: #{student_critic_forward.1} parent=1 // pred_fallthru
      _
    // Predicated region
    $region22: #{student_critic_forward.1} parent=1 // pred_check
      _
    $region23: #{student_critic_forward.1} parent=1 // pred_check_branch
      %58 = sbr.rel (0) target = $region25
    $region24: #{student_critic_forward.1} parent=1 // pred_region
      %s60 = ssub.s32 49152, 49152
      %61 = vsyncadd [#allocation8], %s60
      %s62 = sshll.u32 [#allocation7], 4
      %s63 = int_to_ptr.vmem [resolvable:$true] %s62
      %68 = dma.hbm_to_vmem [thread:$0]  %s5, 49152, %s63, [#allocation8], 256, 256, 16
    $region25: #{student_critic_forward.1} parent=1 // pred_fallthru
      _
    // Predicated region
    $region26: #{student_critic_forward.1} parent=1 // pred_check
      _
    $region27: #{student_critic_forward.1} parent=1 // pred_check_branch
      %70 = sbr.rel (0) target = $region29
    $region28: #{student_critic_forward.1} parent=1 // pred_region
      %s72 = ssub.s32 128, 128
      %73 = vsyncadd [#allocation8], %s72
      %s74 = sshll.u32 [#allocation9], 4
      %s75 = int_to_ptr.vmem [resolvable:$true] %s74
      %80 = dma.hbm_to_vmem [thread:$0]  %s6, 128, %s75, [#allocation8], 64, 64, 4
    $region29: #{student_critic_forward.1} parent=1 // pred_fallthru
      _
    // Predicated region
    $region30: #{student_critic_forward.1} parent=1 // pred_check
      _
    $region31: #{student_critic_forward.1} parent=1 // pred_check_branch
      %82 = sbr.rel (0) target = $region33
    $region32: #{student_critic_forward.1} parent=1 // pred_region
      _
    $region33: #{student_critic_forward.1} parent=1 // pred_fallthru
      _
    // Predicated region
    $region34: #{student_critic_forward.1} parent=1 // pred_check
      _
    $region35: #{student_critic_forward.1} parent=1 // pred_check_branch
      %84 = sbr.rel (0) target = $region37
    $region36: #{student_critic_forward.1} parent=1 // pred_region
      _
    $region37: #{student_critic_forward.1} parent=1 // pred_fallthru
      _
    // Predicated region
    $region38: #{student_critic_forward.1} parent=1 // pred_check
      _
    $region39: #{student_critic_forward.1} parent=1 // pred_check_branch
      %86 = sbr.rel (0) target = $region41
    $region40: #{student_critic_forward.1} parent=1 // pred_region
      %87 = dma.done [#allocation3], 192
    $region41: #{student_critic_forward.1} parent=1 // pred_fallthru
      _
    // Predicated region
    $region42: #{student_critic_forward.1} parent=1 // pred_check
      _
    $region43: #{student_critic_forward.1} parent=1 // pred_check_branch
      %89 = sbr.rel (0) target = $region45
    $region44: #{student_critic_forward.1} parent=1 // pred_region
      %90 = dma.done [#allocation5], 73728
    $region45: #{student_critic_forward.1} parent=1 // pred_fallthru
      _
    // Predicated region
    $region46: #{student_critic_forward.1} parent=1 // pred_check
      _
    $region47: #{student_critic_forward.1} parent=1 // pred_check_branch
      %92 = sbr.rel (0) target = $region49
    $region48: #{student_critic_forward.1} parent=1 // pred_region
      %93 = dma.done [#allocation5], 192
    $region49: #{student_critic_forward.1} parent=1 // pred_fallthru
      _
    // Predicated region
    $region50: #{student_critic_forward.1} parent=1 // pred_check
      _
    $region51: #{student_critic_forward.1} parent=1 // pred_check_branch
      %95 = sbr.rel (0) target = $region53
    $region52: #{student_critic_forward.1} parent=1 // pred_region
      %96 = dma.done [#allocation8], 49152
    $region53: #{student_critic_forward.1} parent=1 // pred_fallthru
      _
    // Predicated region
    $region54: #{student_critic_forward.1} parent=1 // pred_check
      _
    $region55: #{student_critic_forward.1} parent=1 // pred_check_branch
      %98 = sbr.rel (0) target = $region57
    $region56: #{student_critic_forward.1} parent=1 // pred_region
      %99 = dma.done [#allocation8], 128
    $region57: #{student_critic_forward.1} parent=1 // pred_fallthru
      _
    %v101 = vld [vmem:[%s0] sm:$0xf]
    %v102 = vld [vmem:[%s0 + $0x4] sm:$0xf]
    %v103 = vld [vmem:[%s1] sm:$0xff]
    %v104 = vld [vmem:[%s1 + $0x8] sm:$0xff]
    %v105 = vld [vmem:[%s1 + $0x10] sm:$0xff]
    %v106 = vld [vmem:[%s1 + $0x18] sm:$0xff]
    %v107 = vld [vmem:[%s1 + $0x20] sm:$0xff]
    %v108 = vld [vmem:[%s1 + $0x28] sm:$0xff]
    %v109 = vld [vmem:[%s1 + $0x30] sm:$0xff]
    %v110 = vld [vmem:[%s1 + $0x38] sm:$0xff]
    %v111 = vld [vmem:[%s1 + $0x40] sm:$0xff]
    %v112 = vld [vmem:[%s1 + $0x48] sm:$0x11]
    %v113 = vld [vmem:[%s1 + $0x50] sm:$0x11]
    %v114 = vld [vmem:[%s1 + $0x58] sm:$0x11]
    %v115 = vld [vmem:[#allocation2] sm:$0x3f]
    %v117 = vlaneseq
    %v118 = vshrl.u32 %v117, 7
    %v119 = vsub.s32 0, %v118
    %v120 = vrot.slane %v115, %v119
    %v121 = vlaneseq
    %v122 = vshrl.u32 %v121, 7
    %v123 = vsub.s32 1, %v122
    %v124 = vrot.slane %v115, %v123
    %v125 = vlaneseq
    %v126 = vshrl.u32 %v125, 7
    %v127 = vsub.s32 2, %v126
    %v128 = vrot.slane %v115, %v127
    %v129 = vlaneseq
    %v130 = vshrl.u32 %v129, 7
    %v131 = vsub.s32 3, %v130
    %v132 = vrot.slane %v115, %v131
    %v133 = vlaneseq
    %v134 = vshrl.u32 %v133, 7
    %v135 = vsub.s32 4, %v134
    %v136 = vrot.slane %v115, %v135
    %v137 = vlaneseq
    %v138 = vshrl.u32 %v137, 7
    %v139 = vsub.s32 5, %v138
    %v140 = vrot.slane %v115, %v139
    %v149 = vunpack.c.l.b16 %v101
    %v150 = vunpack.c.l.b16 %v102
    %v151 = vpack.c.b16 %v150, %v149
    %v164 = vunpack.c.l.b16 %v103
    %v165 = vunpack.c.h.b16 %v103
    %v166 = vunpack.c.l.b16 %v104
    %v167 = vunpack.c.h.b16 %v104
    %v168 = vunpack.c.l.b16 %v105
    %v169 = vunpack.c.h.b16 %v105
    %v170 = vunpack.c.l.b16 %v106
    %v171 = vunpack.c.h.b16 %v106
    %v172 = vunpack.c.l.b16 %v107
    %v173 = vunpack.c.h.b16 %v107
    %v174 = vunpack.c.l.b16 %v108
    %v175 = vunpack.c.h.b16 %v108
    %v176 = vunpack.c.l.b16 %v109
    %v177 = vunpack.c.h.b16 %v109
    %v178 = vunpack.c.l.b16 %v110
    %v179 = vunpack.c.h.b16 %v110
    %v180 = vunpack.c.l.b16 %v111
    %v181 = vunpack.c.h.b16 %v111
    %v182 = vunpack.c.l.b16 %v112
    %v183 = vunpack.c.h.b16 %v112
    %v184 = vunpack.c.l.b16 %v113
    %v185 = vunpack.c.h.b16 %v113
    %v186 = vunpack.c.l.b16 %v114
    %v187 = vunpack.c.h.b16 %v114
    %v188 = vpack.c.b16 %v170, %v164
    %v189 = vpack.c.b16 %v171, %v165
    %v190 = vpack.c.b16 %v172, %v166
    %v191 = vpack.c.b16 %v173, %v167
    %v192 = vpack.c.b16 %v174, %v168
    %v193 = vpack.c.b16 %v175, %v169
    %v194 = vpack.c.b16 %v182, %v176
    %v195 = vpack.c.b16 %v183, %v177
    %v196 = vpack.c.b16 %v184, %v178
    %v197 = vpack.c.b16 %v185, %v179
    %v198 = vpack.c.b16 %v186, %v180
    %v199 = vpack.c.b16 %v187, %v181
    %vm206 = vcmask 203776
    %v208 = vsel %vm206, %v151, 0
    %vm210 = vcmask 1043456
    %vm211 = vcmask 1044480
    %v212 = vsel %vm210, 4294967295, 65535
    %v213 = vsel %vm211, %v212, 0
    %v215 = vand.u32 %v194, %v213
    %v218 = vand.u32 %v195, %v213
    %v221 = vand.u32 %v196, %v213
    %v224 = vand.u32 %v197, %v213
    %v227 = vand.u32 %v198, %v213
    %v230 = vand.u32 %v199, %v213
    %232 = vmatprep.subr.bf16.mxu0 0
    %233 = vmatpush1.bf16.msra.mxu0 0
    %234 = vmatprep.subr.bf16.mxu0 0
    %235 = vmatpush1.bf16.msra.mxu0 0
    %236 = vmatprep.subr.bf16.mxu0 0
    %237 = vmatpush1.bf16.msra.mxu0 0
    %238 = vmatprep.subr.bf16.mxu0 0
    %239 = vmatpush1.bf16.msra.mxu0 0
    %240 = vmatprep.subr.bf16.mxu0 0
    %241 = vmatpush1.bf16.msra.mxu0 0
    %242 = vmatprep.subr.bf16.mxu0 0
    %243 = vmatpush1.bf16.msra.mxu0 0
    %244 = vmatprep.subr.bf16.mxu0 %v218
    %245 = vmatpush1.bf16.msra.mxu0 %v215
    %246 = vmatprep.subr.bf16.mxu0 %v189
    %247 = vmatpush1.bf16.msra.mxu0 %v188
    %248 = vmatprep.subr.bf16.mxu0 0
    %249 = vmatpush2.bf16.msra.mxu0 0
    %250 = vmatprep.subr.bf16.mxu0 0
    %251 = vmatpush2.bf16.msra.mxu0 0
    %252 = vmatprep.subr.bf16.mxu0 0
    %253 = vmatpush2.bf16.msra.mxu0 0
    %254 = vmatprep.subr.bf16.mxu0 0
    %255 = vmatpush2.bf16.msra.mxu0 0
    %256 = vmatprep.subr.bf16.mxu0 0
    %257 = vmatpush2.bf16.msra.mxu0 0
    %258 = vmatprep.subr.bf16.mxu0 0
    %259 = vmatpush2.bf16.msra.mxu0 0
    %260 = vmatprep.subr.bf16.mxu0 0
    %261 = vmatpush2.bf16.msra.mxu0 0
    %262 = vmatprep.subr.bf16.mxu0 0
    %263 = vmatpush2.bf16.msra.mxu0 0
    %264 = vmatprep.mubr.bf16.mxu0 0
    %265 = vmatmul.mubr.bf16.gmra.mxu0 %v208
    %v266 = vpop.f32.mrf.mxu0
    %v267 = vadd.f32 %v120, %v266
    %v268 = vpop.f32.mrf.mxu0
    %v269 = vadd.f32 %v124, %v268
    %v270 = vpop.f32.mrf.mxu0
    %v271 = vadd.f32 %v120, %v270
    %v272 = vpop.f32.mrf.mxu0
    %v273 = vadd.f32 %v124, %v272
    %274 = vdwg.mxu0
    %275 = vmatprep.subr.bf16.mxu0 0
    %276 = vmatpush1.bf16.msra.mxu0 0
    %277 = vmatprep.subr.bf16.mxu0 0
    %278 = vmatpush1.bf16.msra.mxu0 0
    %279 = vmatprep.subr.bf16.mxu0 0
    %280 = vmatpush1.bf16.msra.mxu0 0
    %281 = vmatprep.subr.bf16.mxu0 0
    %282 = vmatpush1.bf16.msra.mxu0 0
    %283 = vmatprep.subr.bf16.mxu0 0
    %284 = vmatpush1.bf16.msra.mxu0 0
    %285 = vmatprep.subr.bf16.mxu0 0
    %286 = vmatpush1.bf16.msra.mxu0 0
    %287 = vmatprep.subr.bf16.mxu0 %v224
    %288 = vmatpush1.bf16.msra.mxu0 %v221
    %289 = vmatprep.subr.bf16.mxu0 %v191
    %290 = vmatpush1.bf16.msra.mxu0 %v190
    %291 = vmatprep.subr.bf16.mxu0 0
    %292 = vmatpush2.bf16.msra.mxu0 0
    %293 = vmatprep.subr.bf16.mxu0 0
    %294 = vmatpush2.bf16.msra.mxu0 0
    %295 = vmatprep.subr.bf16.mxu0 0
    %296 = vmatpush2.bf16.msra.mxu0 0
    %297 = vmatprep.subr.bf16.mxu0 0
    %298 = vmatpush2.bf16.msra.mxu0 0
    %299 = vmatprep.subr.bf16.mxu0 0
    %300 = vmatpush2.bf16.msra.mxu0 0
    %301 = vmatprep.subr.bf16.mxu0 0
    %302 = vmatpush2.bf16.msra.mxu0 0
    %303 = vmatprep.subr.bf16.mxu0 0
    %304 = vmatpush2.bf16.msra.mxu0 0
    %305 = vmatprep.subr.bf16.mxu0 0
    %306 = vmatpush2.bf16.msra.mxu0 0
    %307 = vmatprep.mubr.bf16.mxu0 0
    %308 = vmatmul.mubr.bf16.gmra.mxu0 %v208
    %v309 = vpop.f32.mrf.mxu0
    %v310 = vadd.f32 %v128, %v309
    %v311 = vpop.f32.mrf.mxu0
    %v312 = vadd.f32 %v132, %v311
    %v313 = vpop.f32.mrf.mxu0
    %v314 = vadd.f32 %v128, %v313
    %v315 = vpop.f32.mrf.mxu0
    %v316 = vadd.f32 %v132, %v315
    %317 = vdwg.mxu0
    %318 = vmatprep.subr.bf16.mxu0 0
    %319 = vmatpush1.bf16.msra.mxu0 0
    %320 = vmatprep.subr.bf16.mxu0 0
    %321 = vmatpush1.bf16.msra.mxu0 0
    %322 = vmatprep.subr.bf16.mxu0 0
    %323 = vmatpush1.bf16.msra.mxu0 0
    %324 = vmatprep.subr.bf16.mxu0 0
    %325 = vmatpush1.bf16.msra.mxu0 0
    %326 = vmatprep.subr.bf16.mxu0 0
    %327 = vmatpush1.bf16.msra.mxu0 0
    %328 = vmatprep.subr.bf16.mxu0 0
    %329 = vmatpush1.bf16.msra.mxu0 0
    %330 = vmatprep.subr.bf16.mxu0 %v230
    %331 = vmatpush1.bf16.msra.mxu0 %v227
    %332 = vmatprep.subr.bf16.mxu0 %v193
    %333 = vmatpush1.bf16.msra.mxu0 %v192
    %334 = vmatprep.subr.bf16.mxu0 0
    %335 = vmatpush2.bf16.msra.mxu0 0
    %336 = vmatprep.subr.bf16.mxu0 0
    %337 = vmatpush2.bf16.msra.mxu0 0
    %338 = vmatprep.subr.bf16.mxu0 0
    %339 = vmatpush2.bf16.msra.mxu0 0
    %340 = vmatprep.subr.bf16.mxu0 0
    %341 = vmatpush2.bf16.msra.mxu0 0
    %342 = vmatprep.subr.bf16.mxu0 0
    %343 = vmatpush2.bf16.msra.mxu0 0
    %344 = vmatprep.subr.bf16.mxu0 0
    %345 = vmatpush2.bf16.msra.mxu0 0
    %346 = vmatprep.subr.bf16.mxu0 0
    %347 = vmatpush2.bf16.msra.mxu0 0
    %348 = vmatprep.subr.bf16.mxu0 0
    %349 = vmatpush2.bf16.msra.mxu0 0
    %350 = vmatprep.mubr.bf16.mxu0 0
    %351 = vmatmul.mubr.bf16.gmra.mxu0 %v208
    %v352 = vpop.f32.mrf.mxu0
    %v353 = vadd.f32 %v136, %v352
    %v354 = vpop.f32.mrf.mxu0
    %v355 = vadd.f32 %v140, %v354
    %v356 = vpop.f32.mrf.mxu0
    %v357 = vadd.f32 %v136, %v356
    %v358 = vpop.f32.mrf.mxu0
    %v359 = vadd.f32 %v140, %v358
    %360 = vdwg.mxu0
    %v361 = vmax.f32 %v267, 0.0
    %v362 = vmax.f32 %v269, 0.0
    %v363 = vmax.f32 %v310, 0.0
    %v364 = vmax.f32 %v312, 0.0
    %v365 = vmax.f32 %v353, 0.0
    %v366 = vmax.f32 %v355, 0.0
    %v367 = vmax.f32 %v271, 0.0
    %v368 = vmax.f32 %v273, 0.0
    %v369 = vmax.f32 %v314, 0.0
    %v370 = vmax.f32 %v316, 0.0
    %v371 = vmax.f32 %v357, 0.0
    %v372 = vmax.f32 %v359, 0.0
    %v373 = vpack.c.bf16 %v367, %v361
    %v374 = vpack.c.bf16 %v368, %v362
    %v375 = vpack.c.bf16 %v369, %v363
    %v376 = vpack.c.bf16 %v370, %v364
    %v377 = vpack.c.bf16 %v371, %v365
    %v378 = vpack.c.bf16 %v372, %v366
    %v379 = vld [vmem:[#allocation4] sm:$0xff]
    %v380 = vld [vmem:[#allocation4 + $0x8] sm:$0xff]
    %v381 = vld [vmem:[#allocation4 + $0x10] sm:$0xff]
    %v382 = vld [vmem:[#allocation4 + $0x18] sm:$0xff]
    %v383 = vld [vmem:[#allocation4 + $0x20] sm:$0xff]
    %v384 = vld [vmem:[#allocation4 + $0x28] sm:$0xff]
    %v385 = vld [vmem:[#allocation4 + $0x30] sm:$0xff]
    %v386 = vld [vmem:[#allocation4 + $0x38] sm:$0xff]
    %v387 = vld [vmem:[#allocation4 + $0x40] sm:$0xff]
    %v388 = vld [vmem:[#allocation4 + $0x48] sm:$0xff]
    %v389 = vld [vmem:[#allocation4 + $0x50] sm:$0xff]
    %v390 = vld [vmem:[#allocation4 + $0x58] sm:$0xff]
    %v391 = vld [vmem:[#allocation4 + $0x60] sm:$0xff]
    %v392 = vld [vmem:[#allocation4 + $0x68] sm:$0xff]
    %v393 = vld [vmem:[#allocation4 + $0x70] sm:$0xff]
    %v394 = vld [vmem:[#allocation4 + $0x78] sm:$0xff]
    %v395 = vld [vmem:[#allocation4 + $0x80] sm:$0xff]
    %v396 = vld [vmem:[#allocation4 + $0x88] sm:$0xff]
    %v397 = vld [vmem:[#allocation4 + $0x90] sm:$0xff]
    %v398 = vld [vmem:[#allocation4 + $0x98] sm:$0xff]
    %v399 = vld [vmem:[#allocation4 + $0xa0] sm:$0xff]
    %v400 = vld [vmem:[#allocation4 + $0xa8] sm:$0xff]
    %v401 = vld [vmem:[#allocation4 + $0xb0] sm:$0xff]
    %v402 = vld [vmem:[#allocation4 + $0xb8] sm:$0xff]
    %v403 = vld [vmem:[#allocation4 + $0xc0] sm:$0xff]
    %v404 = vld [vmem:[#allocation4 + $0xc8] sm:$0xff]
    %v405 = vld [vmem:[#allocation4 + $0xd0] sm:$0xff]
    %v406 = vld [vmem:[#allocation4 + $0xd8] sm:$0xff]
    %v407 = vld [vmem:[#allocation4 + $0xe0] sm:$0xff]
    %v408 = vld [vmem:[#allocation4 + $0xe8] sm:$0xff]
    %v409 = vld [vmem:[#allocation4 + $0xf0] sm:$0xff]
    %v410 = vld [vmem:[#allocation4 + $0xf8] sm:$0xff]
    %v411 = vld [vmem:[#allocation4 + $0x100] sm:$0xff]
    %v412 = vld [vmem:[#allocation4 + $0x108] sm:$0xff]
    %v413 = vld [vmem:[#allocation4 + $0x110] sm:$0xff]
    %v414 = vld [vmem:[#allocation4 + $0x118] sm:$0xff]
    %v415 = vld [vmem:[#allocation4 + $0x120] sm:$0xff]
    %v416 = vld [vmem:[#allocation4 + $0x128] sm:$0xff]
    %v417 = vld [vmem:[#allocation4 + $0x130] sm:$0xff]
    %v418 = vld [vmem:[#allocation4 + $0x138] sm:$0xff]
    %v419 = vld [vmem:[#allocation4 + $0x140] sm:$0xff]
    %v420 = vld [vmem:[#allocation4 + $0x148] sm:$0xff]
    %v421 = vld [vmem:[#allocation4 + $0x150] sm:$0xff]
    %v422 = vld [vmem:[#allocation4 + $0x158] sm:$0xff]
    %v423 = vld [vmem:[#allocation4 + $0x160] sm:$0xff]
    %v424 = vld [vmem:[#allocation4 + $0x168] sm:$0xff]
    %v425 = vld [vmem:[#allocation4 + $0x170] sm:$0xff]
    %v426 = vld [vmem:[#allocation4 + $0x178] sm:$0xff]
    %v427 = vld [vmem:[#allocation4 + $0x180] sm:$0xff]
    %v428 = vld [vmem:[#allocation4 + $0x188] sm:$0xff]
    %v429 = vld [vmem:[#allocation4 + $0x190] sm:$0xff]
    %v430 = vld [vmem:[#allocation4 + $0x198] sm:$0xff]
    %v431 = vld [vmem:[#allocation4 + $0x1a0] sm:$0xff]
    %v432 = vld [vmem:[#allocation4 + $0x1a8] sm:$0xff]
    %v433 = vld [vmem:[#allocation4 + $0x1b0] sm:$0xff]
    %v434 = vld [vmem:[#allocation4 + $0x1b8] sm:$0xff]
    %v435 = vld [vmem:[#allocation4 + $0x1c0] sm:$0xff]
    %v436 = vld [vmem:[#allocation4 + $0x1c8] sm:$0xff]
    %v437 = vld [vmem:[#allocation4 + $0x1d0] sm:$0xff]
    %v438 = vld [vmem:[#allocation4 + $0x1d8] sm:$0xff]
    %v439 = vld [vmem:[#allocation4 + $0x1e0] sm:$0xff]
    %v440 = vld [vmem:[#allocation4 + $0x1e8] sm:$0xff]
    %v441 = vld [vmem:[#allocation4 + $0x1f0] sm:$0xff]
    %v442 = vld [vmem:[#allocation4 + $0x1f8] sm:$0xff]
    %v443 = vld [vmem:[#allocation4 + $0x200] sm:$0xff]
    %v444 = vld [vmem:[#allocation4 + $0x208] sm:$0xff]
    %v445 = vld [vmem:[#allocation4 + $0x210] sm:$0xff]
    %v446 = vld [vmem:[#allocation4 + $0x218] sm:$0xff]
    %v447 = vld [vmem:[#allocation4 + $0x220] sm:$0xff]
    %v448 = vld [vmem:[#allocation4 + $0x228] sm:$0xff]
    %v449 = vld [vmem:[#allocation4 + $0x230] sm:$0xff]
    %v450 = vld [vmem:[#allocation4 + $0x238] sm:$0xff]
    %v451 = vld [vmem:[#allocation4 + $0x240] sm:$0xff]
    %v452 = vld [vmem:[#allocation4 + $0x248] sm:$0xff]
    %v453 = vld [vmem:[#allocation4 + $0x250] sm:$0xff]
    %v454 = vld [vmem:[#allocation4 + $0x258] sm:$0xff]
    %v455 = vld [vmem:[#allocation4 + $0x260] sm:$0xff]
    %v456 = vld [vmem:[#allocation4 + $0x268] sm:$0xff]
    %v457 = vld [vmem:[#allocation4 + $0x270] sm:$0xff]
    %v458 = vld [vmem:[#allocation4 + $0x278] sm:$0xff]
    %v459 = vld [vmem:[#allocation4 + $0x280] sm:$0xff]
    %v460 = vld [vmem:[#allocation4 + $0x288] sm:$0xff]
    %v461 = vld [vmem:[#allocation4 + $0x290] sm:$0xff]
    %v462 = vld [vmem:[#allocation4 + $0x298] sm:$0xff]
    %v463 = vld [vmem:[#allocation4 + $0x2a0] sm:$0xff]
    %v464 = vld [vmem:[#allocation4 + $0x2a8] sm:$0xff]
    %v465 = vld [vmem:[#allocation4 + $0x2b0] sm:$0xff]
    %v466 = vld [vmem:[#allocation4 + $0x2b8] sm:$0xff]
    %v467 = vld [vmem:[#allocation4 + $0x2c0] sm:$0xff]
    %v468 = vld [vmem:[#allocation4 + $0x2c8] sm:$0xff]
    %v469 = vld [vmem:[#allocation4 + $0x2d0] sm:$0xff]
    %v470 = vld [vmem:[#allocation4 + $0x2d8] sm:$0xff]
    %v471 = vld [vmem:[#allocation4 + $0x2e0] sm:$0xff]
    %v472 = vld [vmem:[#allocation4 + $0x2e8] sm:$0xff]
    %v473 = vld [vmem:[#allocation4 + $0x2f0] sm:$0xff]
    %v474 = vld [vmem:[#allocation4 + $0x2f8] sm:$0xff]
    %v475 = vld [vmem:[#allocation4 + $0x300] sm:$0xff]
    %v476 = vld [vmem:[#allocation4 + $0x308] sm:$0xff]
    %v477 = vld [vmem:[#allocation4 + $0x310] sm:$0xff]
    %v478 = vld [vmem:[#allocation4 + $0x318] sm:$0xff]
    %v479 = vld [vmem:[#allocation4 + $0x320] sm:$0xff]
    %v480 = vld [vmem:[#allocation4 + $0x328] sm:$0xff]
    %v481 = vld [vmem:[#allocation4 + $0x330] sm:$0xff]
    %v482 = vld [vmem:[#allocation4 + $0x338] sm:$0xff]
    %v483 = vld [vmem:[#allocation4 + $0x340] sm:$0xff]
    %v484 = vld [vmem:[#allocation4 + $0x348] sm:$0xff]
    %v485 = vld [vmem:[#allocation4 + $0x350] sm:$0xff]
    %v486 = vld [vmem:[#allocation4 + $0x358] sm:$0xff]
    %v487 = vld [vmem:[#allocation4 + $0x360] sm:$0xff]
    %v488 = vld [vmem:[#allocation4 + $0x368] sm:$0xff]
    %v489 = vld [vmem:[#allocation4 + $0x370] sm:$0xff]
    %v490 = vld [vmem:[#allocation4 + $0x378] sm:$0xff]
    %v491 = vld [vmem:[#allocation4 + $0x380] sm:$0xff]
    %v492 = vld [vmem:[#allocation4 + $0x388] sm:$0xff]
    %v493 = vld [vmem:[#allocation4 + $0x390] sm:$0xff]
    %v494 = vld [vmem:[#allocation4 + $0x398] sm:$0xff]
    %v495 = vld [vmem:[#allocation4 + $0x3a0] sm:$0xff]
    %v496 = vld [vmem:[#allocation4 + $0x3a8] sm:$0xff]
    %v497 = vld [vmem:[#allocation4 + $0x3b0] sm:$0xff]
    %v498 = vld [vmem:[#allocation4 + $0x3b8] sm:$0xff]
    %v499 = vld [vmem:[#allocation4 + $0x3c0] sm:$0xff]
    %v500 = vld [vmem:[#allocation4 + $0x3c8] sm:$0xff]
    %v501 = vld [vmem:[#allocation4 + $0x3d0] sm:$0xff]
    %v502 = vld [vmem:[#allocation4 + $0x3d8] sm:$0xff]
    %v503 = vld [vmem:[#allocation4 + $0x3e0] sm:$0xff]
    %v504 = vld [vmem:[#allocation4 + $0x3e8] sm:$0xff]
    %v505 = vld [vmem:[#allocation4 + $0x3f0] sm:$0xff]
    %v506 = vld [vmem:[#allocation4 + $0x3f8] sm:$0xff]
    %v507 = vld [vmem:[#allocation4 + $0x400] sm:$0xff]
    %v508 = vld [vmem:[#allocation4 + $0x408] sm:$0xff]
    %v509 = vld [vmem:[#allocation4 + $0x410] sm:$0xff]
    %v510 = vld [vmem:[#allocation4 + $0x418] sm:$0xff]
    %v511 = vld [vmem:[#allocation4 + $0x420] sm:$0xff]
    %v512 = vld [vmem:[#allocation4 + $0x428] sm:$0xff]
    %v513 = vld [vmem:[#allocation4 + $0x430] sm:$0xff]
    %v514 = vld [vmem:[#allocation4 + $0x438] sm:$0xff]
    %v515 = vld [vmem:[#allocation4 + $0x440] sm:$0xff]
    %v516 = vld [vmem:[#allocation4 + $0x448] sm:$0xff]
    %v517 = vld [vmem:[#allocation4 + $0x450] sm:$0xff]
    %v518 = vld [vmem:[#allocation4 + $0x458] sm:$0xff]
    %v519 = vld [vmem:[#allocation4 + $0x460] sm:$0xff]
    %v520 = vld [vmem:[#allocation4 + $0x468] sm:$0xff]
    %v521 = vld [vmem:[#allocation4 + $0x470] sm:$0xff]
    %v522 = vld [vmem:[#allocation4 + $0x478] sm:$0xff]
    %v523 = vld [vmem:[#allocation4 + $0x480] sm:$0xff]
    %v524 = vld [vmem:[#allocation4 + $0x488] sm:$0xff]
    %v525 = vld [vmem:[#allocation4 + $0x490] sm:$0xff]
    %v526 = vld [vmem:[#allocation4 + $0x498] sm:$0xff]
    %v527 = vld [vmem:[#allocation4 + $0x4a0] sm:$0xff]
    %v528 = vld [vmem:[#allocation4 + $0x4a8] sm:$0xff]
    %v529 = vld [vmem:[#allocation4 + $0x4b0] sm:$0xff]
    %v530 = vld [vmem:[#allocation4 + $0x4b8] sm:$0xff]
    %v531 = vld [vmem:[#allocation4 + $0x4c0] sm:$0xff]
    %v532 = vld [vmem:[#allocation4 + $0x4c8] sm:$0xff]
    %v533 = vld [vmem:[#allocation4 + $0x4d0] sm:$0xff]
    %v534 = vld [vmem:[#allocation4 + $0x4d8] sm:$0xff]
    %v535 = vld [vmem:[#allocation4 + $0x4e0] sm:$0xff]
    %v536 = vld [vmem:[#allocation4 + $0x4e8] sm:$0xff]
    %v537 = vld [vmem:[#allocation4 + $0x4f0] sm:$0xff]
    %v538 = vld [vmem:[#allocation4 + $0x4f8] sm:$0xff]
    %v539 = vld [vmem:[#allocation4 + $0x500] sm:$0xff]
    %v540 = vld [vmem:[#allocation4 + $0x508] sm:$0xff]
    %v541 = vld [vmem:[#allocation4 + $0x510] sm:$0xff]
    %v542 = vld [vmem:[#allocation4 + $0x518] sm:$0xff]
    %v543 = vld [vmem:[#allocation4 + $0x520] sm:$0xff]
    %v544 = vld [vmem:[#allocation4 + $0x528] sm:$0xff]
    %v545 = vld [vmem:[#allocation4 + $0x530] sm:$0xff]
    %v546 = vld [vmem:[#allocation4 + $0x538] sm:$0xff]
    %v547 = vld [vmem:[#allocation4 + $0x540] sm:$0xff]
    %v548 = vld [vmem:[#allocation4 + $0x548] sm:$0xff]
    %v549 = vld [vmem:[#allocation4 + $0x550] sm:$0xff]
    %v550 = vld [vmem:[#allocation4 + $0x558] sm:$0xff]
    %v551 = vld [vmem:[#allocation4 + $0x560] sm:$0xff]
    %v552 = vld [vmem:[#allocation4 + $0x568] sm:$0xff]
    %v553 = vld [vmem:[#allocation4 + $0x570] sm:$0xff]
    %v554 = vld [vmem:[#allocation4 + $0x578] sm:$0xff]
    %v555 = vld [vmem:[#allocation4 + $0x580] sm:$0xff]
    %v556 = vld [vmem:[#allocation4 + $0x588] sm:$0xff]
    %v557 = vld [vmem:[#allocation4 + $0x590] sm:$0xff]
    %v558 = vld [vmem:[#allocation4 + $0x598] sm:$0xff]
    %v559 = vld [vmem:[#allocation4 + $0x5a0] sm:$0xff]
    %v560 = vld [vmem:[#allocation4 + $0x5a8] sm:$0xff]
    %v561 = vld [vmem:[#allocation4 + $0x5b0] sm:$0xff]
    %v562 = vld [vmem:[#allocation4 + $0x5b8] sm:$0xff]
    %v563 = vld [vmem:[#allocation4 + $0x5c0] sm:$0xff]
    %v564 = vld [vmem:[#allocation4 + $0x5c8] sm:$0xff]
    %v565 = vld [vmem:[#allocation4 + $0x5d0] sm:$0xff]
    %v566 = vld [vmem:[#allocation4 + $0x5d8] sm:$0xff]
    %v567 = vld [vmem:[#allocation4 + $0x5e0] sm:$0xff]
    %v568 = vld [vmem:[#allocation4 + $0x5e8] sm:$0xff]
    %v569 = vld [vmem:[#allocation4 + $0x5f0] sm:$0xff]
    %v570 = vld [vmem:[#allocation4 + $0x5f8] sm:$0xff]
    %v571 = vld [vmem:[#allocation4 + $0x600] sm:$0xff]
    %v572 = vld [vmem:[#allocation4 + $0x608] sm:$0xff]
    %v573 = vld [vmem:[#allocation4 + $0x610] sm:$0xff]
    %v574 = vld [vmem:[#allocation4 + $0x618] sm:$0xff]
    %v575 = vld [vmem:[#allocation4 + $0x620] sm:$0xff]
    %v576 = vld [vmem:[#allocation4 + $0x628] sm:$0xff]
    %v577 = vld [vmem:[#allocation4 + $0x630] sm:$0xff]
    %v578 = vld [vmem:[#allocation4 + $0x638] sm:$0xff]
    %v579 = vld [vmem:[#allocation4 + $0x640] sm:$0xff]
    %v580 = vld [vmem:[#allocation4 + $0x648] sm:$0xff]
    %v581 = vld [vmem:[#allocation4 + $0x650] sm:$0xff]
    %v582 = vld [vmem:[#allocation4 + $0x658] sm:$0xff]
    %v583 = vld [vmem:[#allocation4 + $0x660] sm:$0xff]
    %v584 = vld [vmem:[#allocation4 + $0x668] sm:$0xff]
    %v585 = vld [vmem:[#allocation4 + $0x670] sm:$0xff]
    %v586 = vld [vmem:[#allocation4 + $0x678] sm:$0xff]
    %v587 = vld [vmem:[#allocation4 + $0x680] sm:$0xff]
    %v588 = vld [vmem:[#allocation4 + $0x688] sm:$0xff]
    %v589 = vld [vmem:[#allocation4 + $0x690] sm:$0xff]
    %v590 = vld [vmem:[#allocation4 + $0x698] sm:$0xff]
    %v591 = vld [vmem:[#allocation4 + $0x6a0] sm:$0xff]
    %v592 = vld [vmem:[#allocation4 + $0x6a8] sm:$0xff]
    %v593 = vld [vmem:[#allocation4 + $0x6b0] sm:$0xff]
    %v594 = vld [vmem:[#allocation4 + $0x6b8] sm:$0xff]
    %v595 = vld [vmem:[#allocation4 + $0x6c0] sm:$0xff]
    %v596 = vld [vmem:[#allocation4 + $0x6c8] sm:$0xff]
    %v597 = vld [vmem:[#allocation4 + $0x6d0] sm:$0xff]
    %v598 = vld [vmem:[#allocation4 + $0x6d8] sm:$0xff]
    %v599 = vld [vmem:[#allocation4 + $0x6e0] sm:$0xff]
    %v600 = vld [vmem:[#allocation4 + $0x6e8] sm:$0xff]
    %v601 = vld [vmem:[#allocation4 + $0x6f0] sm:$0xff]
    %v602 = vld [vmem:[#allocation4 + $0x6f8] sm:$0xff]
    %v603 = vld [vmem:[#allocation4 + $0x700] sm:$0xff]
    %v604 = vld [vmem:[#allocation4 + $0x708] sm:$0xff]
    %v605 = vld [vmem:[#allocation4 + $0x710] sm:$0xff]
    %v606 = vld [vmem:[#allocation4 + $0x718] sm:$0xff]
    %v607 = vld [vmem:[#allocation4 + $0x720] sm:$0xff]
    %v608 = vld [vmem:[#allocation4 + $0x728] sm:$0xff]
    %v609 = vld [vmem:[#allocation4 + $0x730] sm:$0xff]
    %v610 = vld [vmem:[#allocation4 + $0x738] sm:$0xff]
    %v611 = vld [vmem:[#allocation4 + $0x740] sm:$0xff]
    %v612 = vld [vmem:[#allocation4 + $0x748] sm:$0xff]
    %v613 = vld [vmem:[#allocation4 + $0x750] sm:$0xff]
    %v614 = vld [vmem:[#allocation4 + $0x758] sm:$0xff]
    %v615 = vld [vmem:[#allocation4 + $0x760] sm:$0xff]
    %v616 = vld [vmem:[#allocation4 + $0x768] sm:$0xff]
    %v617 = vld [vmem:[#allocation4 + $0x770] sm:$0xff]
    %v618 = vld [vmem:[#allocation4 + $0x778] sm:$0xff]
    %v619 = vld [vmem:[#allocation4 + $0x780] sm:$0xff]
    %v620 = vld [vmem:[#allocation4 + $0x788] sm:$0xff]
    %v621 = vld [vmem:[#allocation4 + $0x790] sm:$0xff]
    %v622 = vld [vmem:[#allocation4 + $0x798] sm:$0xff]
    %v623 = vld [vmem:[#allocation4 + $0x7a0] sm:$0xff]
    %v624 = vld [vmem:[#allocation4 + $0x7a8] sm:$0xff]
    %v625 = vld [vmem:[#allocation4 + $0x7b0] sm:$0xff]
    %v626 = vld [vmem:[#allocation4 + $0x7b8] sm:$0xff]
    %v627 = vld [vmem:[#allocation4 + $0x7c0] sm:$0xff]
    %v628 = vld [vmem:[#allocation4 + $0x7c8] sm:$0xff]
    %v629 = vld [vmem:[#allocation4 + $0x7d0] sm:$0xff]
    %v630 = vld [vmem:[#allocation4 + $0x7d8] sm:$0xff]
    %v631 = vld [vmem:[#allocation4 + $0x7e0] sm:$0xff]
    %v632 = vld [vmem:[#allocation4 + $0x7e8] sm:$0xff]
    %v633 = vld [vmem:[#allocation4 + $0x7f0] sm:$0xff]
    %v634 = vld [vmem:[#allocation4 + $0x7f8] sm:$0xff]
    %v635 = vld [vmem:[#allocation4 + $0x800] sm:$0xff]
    %v636 = vld [vmem:[#allocation4 + $0x808] sm:$0xff]
    %v637 = vld [vmem:[#allocation4 + $0x810] sm:$0xff]
    %v638 = vld [vmem:[#allocation4 + $0x818] sm:$0xff]
    %v639 = vld [vmem:[#allocation4 + $0x820] sm:$0xff]
    %v640 = vld [vmem:[#allocation4 + $0x828] sm:$0xff]
    %v641 = vld [vmem:[#allocation4 + $0x830] sm:$0xff]
    %v642 = vld [vmem:[#allocation4 + $0x838] sm:$0xff]
    %v643 = vld [vmem:[#allocation4 + $0x840] sm:$0xff]
    %v644 = vld [vmem:[#allocation4 + $0x848] sm:$0xff]
    %v645 = vld [vmem:[#allocation4 + $0x850] sm:$0xff]
    %v646 = vld [vmem:[#allocation4 + $0x858] sm:$0xff]
    %v647 = vld [vmem:[#allocation4 + $0x860] sm:$0xff]
    %v648 = vld [vmem:[#allocation4 + $0x868] sm:$0xff]
    %v649 = vld [vmem:[#allocation4 + $0x870] sm:$0xff]
    %v650 = vld [vmem:[#allocation4 + $0x878] sm:$0xff]
    %v651 = vld [vmem:[#allocation4 + $0x880] sm:$0xff]
    %v652 = vld [vmem:[#allocation4 + $0x888] sm:$0xff]
    %v653 = vld [vmem:[#allocation4 + $0x890] sm:$0xff]
    %v654 = vld [vmem:[#allocation4 + $0x898] sm:$0xff]
    %v655 = vld [vmem:[#allocation4 + $0x8a0] sm:$0xff]
    %v656 = vld [vmem:[#allocation4 + $0x8a8] sm:$0xff]
    %v657 = vld [vmem:[#allocation4 + $0x8b0] sm:$0xff]
    %v658 = vld [vmem:[#allocation4 + $0x8b8] sm:$0xff]
    %v659 = vld [vmem:[#allocation4 + $0x8c0] sm:$0xff]
    %v660 = vld [vmem:[#allocation4 + $0x8c8] sm:$0xff]
    %v661 = vld [vmem:[#allocation4 + $0x8d0] sm:$0xff]
    %v662 = vld [vmem:[#allocation4 + $0x8d8] sm:$0xff]
    %v663 = vld [vmem:[#allocation4 + $0x8e0] sm:$0xff]
    %v664 = vld [vmem:[#allocation4 + $0x8e8] sm:$0xff]
    %v665 = vld [vmem:[#allocation4 + $0x8f0] sm:$0xff]
    %v666 = vld [vmem:[#allocation4 + $0x8f8] sm:$0xff]
    %v667 = vld [vmem:[#allocation6] sm:$0x3f]
    %v669 = vlaneseq
    %v670 = vshrl.u32 %v669, 7
    %v671 = vsub.s32 0, %v670
    %v672 = vrot.slane %v667, %v671
    %v673 = vlaneseq
    %v674 = vshrl.u32 %v673, 7
    %v675 = vsub.s32 1, %v674
    %v676 = vrot.slane %v667, %v675
    %v677 = vlaneseq
    %v678 = vshrl.u32 %v677, 7
    %v679 = vsub.s32 2, %v678
    %v680 = vrot.slane %v667, %v679
    %v681 = vlaneseq
    %v682 = vshrl.u32 %v681, 7
    %v683 = vsub.s32 3, %v682
    %v684 = vrot.slane %v667, %v683
    %v685 = vlaneseq
    %v686 = vshrl.u32 %v685, 7
    %v687 = vsub.s32 4, %v686
    %v688 = vrot.slane %v667, %v687
    %v689 = vlaneseq
    %v690 = vshrl.u32 %v689, 7
    %v691 = vsub.s32 5, %v690
    %v692 = vrot.slane %v667, %v691
    %v987 = vunpack.c.l.b16 %v379
    %v988 = vunpack.c.h.b16 %v379
    %v989 = vunpack.c.l.b16 %v380
    %v990 = vunpack.c.h.b16 %v380
    %v991 = vunpack.c.l.b16 %v381
    %v992 = vunpack.c.h.b16 %v381
    %v993 = vunpack.c.l.b16 %v382
    %v994 = vunpack.c.h.b16 %v382
    %v995 = vunpack.c.l.b16 %v383
    %v996 = vunpack.c.h.b16 %v383
    %v997 = vunpack.c.l.b16 %v384
    %v998 = vunpack.c.h.b16 %v384
    %v999 = vunpack.c.l.b16 %v385
    %v1000 = vunpack.c.h.b16 %v385
    %v1001 = vunpack.c.l.b16 %v386
    %v1002 = vunpack.c.h.b16 %v386
    %v1003 = vunpack.c.l.b16 %v387
    %v1004 = vunpack.c.h.b16 %v387
    %v1005 = vunpack.c.l.b16 %v388
    %v1006 = vunpack.c.h.b16 %v388
    %v1007 = vunpack.c.l.b16 %v389
    %v1008 = vunpack.c.h.b16 %v389
    %v1009 = vunpack.c.l.b16 %v390
    %v1010 = vunpack.c.h.b16 %v390
    %v1011 = vunpack.c.l.b16 %v391
    %v1012 = vunpack.c.h.b16 %v391
    %v1013 = vunpack.c.l.b16 %v392
    %v1014 = vunpack.c.h.b16 %v392
    %v1015 = vunpack.c.l.b16 %v393
    %v1016 = vunpack.c.h.b16 %v393
    %v1017 = vunpack.c.l.b16 %v394
    %v1018 = vunpack.c.h.b16 %v394
    %v1019 = vunpack.c.l.b16 %v395
    %v1020 = vunpack.c.h.b16 %v395
    %v1021 = vunpack.c.l.b16 %v396
    %v1022 = vunpack.c.h.b16 %v396
    %v1023 = vunpack.c.l.b16 %v397
    %v1024 = vunpack.c.h.b16 %v397
    %v1025 = vunpack.c.l.b16 %v398
    %v1026 = vunpack.c.h.b16 %v398
    %v1027 = vunpack.c.l.b16 %v399
    %v1028 = vunpack.c.h.b16 %v399
    %v1029 = vunpack.c.l.b16 %v400
    %v1030 = vunpack.c.h.b16 %v400
    %v1031 = vunpack.c.l.b16 %v401
    %v1032 = vunpack.c.h.b16 %v401
    %v1033 = vunpack.c.l.b16 %v402
    %v1034 = vunpack.c.h.b16 %v402
    %v1035 = vunpack.c.l.b16 %v403
    %v1036 = vunpack.c.h.b16 %v403
    %v1037 = vunpack.c.l.b16 %v404
    %v1038 = vunpack.c.h.b16 %v404
    %v1039 = vunpack.c.l.b16 %v405
    %v1040 = vunpack.c.h.b16 %v405
    %v1041 = vunpack.c.l.b16 %v406
    %v1042 = vunpack.c.h.b16 %v406
    %v1043 = vunpack.c.l.b16 %v407
    %v1044 = vunpack.c.h.b16 %v407
    %v1045 = vunpack.c.l.b16 %v408
    %v1046 = vunpack.c.h.b16 %v408
    %v1047 = vunpack.c.l.b16 %v409
    %v1048 = vunpack.c.h.b16 %v409
    %v1049 = vunpack.c.l.b16 %v410
    %v1050 = vunpack.c.h.b16 %v410
    %v1051 = vunpack.c.l.b16 %v411
    %v1052 = vunpack.c.h.b16 %v411
    %v1053 = vunpack.c.l.b16 %v412
    %v1054 = vunpack.c.h.b16 %v412
    %v1055 = vunpack.c.l.b16 %v413
    %v1056 = vunpack.c.h.b16 %v413
    %v1057 = vunpack.c.l.b16 %v414
    %v1058 = vunpack.c.h.b16 %v414
    %v1059 = vunpack.c.l.b16 %v415
    %v1060 = vunpack.c.h.b16 %v415
    %v1061 = vunpack.c.l.b16 %v416
    %v1062 = vunpack.c.h.b16 %v416
    %v1063 = vunpack.c.l.b16 %v417
    %v1064 = vunpack.c.h.b16 %v417
    %v1065 = vunpack.c.l.b16 %v418
    %v1066 = vunpack.c.h.b16 %v418
    %v1067 = vunpack.c.l.b16 %v419
    %v1068 = vunpack.c.h.b16 %v419
    %v1069 = vunpack.c.l.b16 %v420
    %v1070 = vunpack.c.h.b16 %v420
    %v1071 = vunpack.c.l.b16 %v421
    %v1072 = vunpack.c.h.b16 %v421
    %v1073 = vunpack.c.l.b16 %v422
    %v1074 = vunpack.c.h.b16 %v422
    %v1075 = vunpack.c.l.b16 %v423
    %v1076 = vunpack.c.h.b16 %v423
    %v1077 = vunpack.c.l.b16 %v424
    %v1078 = vunpack.c.h.b16 %v424
    %v1079 = vunpack.c.l.b16 %v425
    %v1080 = vunpack.c.h.b16 %v425
    %v1081 = vunpack.c.l.b16 %v426
    %v1082 = vunpack.c.h.b16 %v426
    %v1083 = vunpack.c.l.b16 %v427
    %v1084 = vunpack.c.h.b16 %v427
    %v1085 = vunpack.c.l.b16 %v428
    %v1086 = vunpack.c.h.b16 %v428
    %v1087 = vunpack.c.l.b16 %v429
    %v1088 = vunpack.c.h.b16 %v429
    %v1089 = vunpack.c.l.b16 %v430
    %v1090 = vunpack.c.h.b16 %v430
    %v1091 = vunpack.c.l.b16 %v431
    %v1092 = vunpack.c.h.b16 %v431
    %v1093 = vunpack.c.l.b16 %v432
    %v1094 = vunpack.c.h.b16 %v432
    %v1095 = vunpack.c.l.b16 %v433
    %v1096 = vunpack.c.h.b16 %v433
    %v1097 = vunpack.c.l.b16 %v434
    %v1098 = vunpack.c.h.b16 %v434
    %v1099 = vunpack.c.l.b16 %v435
    %v1100 = vunpack.c.h.b16 %v435
    %v1101 = vunpack.c.l.b16 %v436
    %v1102 = vunpack.c.h.b16 %v436
    %v1103 = vunpack.c.l.b16 %v437
    %v1104 = vunpack.c.h.b16 %v437
    %v1105 = vunpack.c.l.b16 %v438
    %v1106 = vunpack.c.h.b16 %v438
    %v1107 = vunpack.c.l.b16 %v439
    %v1108 = vunpack.c.h.b16 %v439
    %v1109 = vunpack.c.l.b16 %v440
    %v1110 = vunpack.c.h.b16 %v440
    %v1111 = vunpack.c.l.b16 %v441
    %v1112 = vunpack.c.h.b16 %v441
    %v1113 = vunpack.c.l.b16 %v442
    %v1114 = vunpack.c.h.b16 %v442
    %v1115 = vunpack.c.l.b16 %v443
    %v1116 = vunpack.c.h.b16 %v443
    %v1117 = vunpack.c.l.b16 %v444
    %v1118 = vunpack.c.h.b16 %v444
    %v1119 = vunpack.c.l.b16 %v445
    %v1120 = vunpack.c.h.b16 %v445
    %v1121 = vunpack.c.l.b16 %v446
    %v1122 = vunpack.c.h.b16 %v446
    %v1123 = vunpack.c.l.b16 %v447
    %v1124 = vunpack.c.h.b16 %v447
    %v1125 = vunpack.c.l.b16 %v448
    %v1126 = vunpack.c.h.b16 %v448
    %v1127 = vunpack.c.l.b16 %v449
    %v1128 = vunpack.c.h.b16 %v449
    %v1129 = vunpack.c.l.b16 %v450
    %v1130 = vunpack.c.h.b16 %v450
    %v1131 = vunpack.c.l.b16 %v451
    %v1132 = vunpack.c.h.b16 %v451
    %v1133 = vunpack.c.l.b16 %v452
    %v1134 = vunpack.c.h.b16 %v452
    %v1135 = vunpack.c.l.b16 %v453
    %v1136 = vunpack.c.h.b16 %v453
    %v1137 = vunpack.c.l.b16 %v454
    %v1138 = vunpack.c.h.b16 %v454
    %v1139 = vunpack.c.l.b16 %v455
    %v1140 = vunpack.c.h.b16 %v455
    %v1141 = vunpack.c.l.b16 %v456
    %v1142 = vunpack.c.h.b16 %v456
    %v1143 = vunpack.c.l.b16 %v457
    %v1144 = vunpack.c.h.b16 %v457
    %v1145 = vunpack.c.l.b16 %v458
    %v1146 = vunpack.c.h.b16 %v458
    %v1147 = vunpack.c.l.b16 %v459
    %v1148 = vunpack.c.h.b16 %v459
    %v1149 = vunpack.c.l.b16 %v460
    %v1150 = vunpack.c.h.b16 %v460
    %v1151 = vunpack.c.l.b16 %v461
    %v1152 = vunpack.c.h.b16 %v461
    %v1153 = vunpack.c.l.b16 %v462
    %v1154 = vunpack.c.h.b16 %v462
    %v1155 = vunpack.c.l.b16 %v463
    %v1156 = vunpack.c.h.b16 %v463
    %v1157 = vunpack.c.l.b16 %v464
    %v1158 = vunpack.c.h.b16 %v464
    %v1159 = vunpack.c.l.b16 %v465
    %v1160 = vunpack.c.h.b16 %v465
    %v1161 = vunpack.c.l.b16 %v466
    %v1162 = vunpack.c.h.b16 %v466
    %v1163 = vunpack.c.l.b16 %v467
    %v1164 = vunpack.c.h.b16 %v467
    %v1165 = vunpack.c.l.b16 %v468
    %v1166 = vunpack.c.h.b16 %v468
    %v1167 = vunpack.c.l.b16 %v469
    %v1168 = vunpack.c.h.b16 %v469
    %v1169 = vunpack.c.l.b16 %v470
    %v1170 = vunpack.c.h.b16 %v470
    %v1171 = vunpack.c.l.b16 %v471
    %v1172 = vunpack.c.h.b16 %v471
    %v1173 = vunpack.c.l.b16 %v472
    %v1174 = vunpack.c.h.b16 %v472
    %v1175 = vunpack.c.l.b16 %v473
    %v1176 = vunpack.c.h.b16 %v473
    %v1177 = vunpack.c.l.b16 %v474
    %v1178 = vunpack.c.h.b16 %v474
    %v1179 = vunpack.c.l.b16 %v475
    %v1180 = vunpack.c.h.b16 %v475
    %v1181 = vunpack.c.l.b16 %v476
    %v1182 = vunpack.c.h.b16 %v476
    %v1183 = vunpack.c.l.b16 %v477
    %v1184 = vunpack.c.h.b16 %v477
    %v1185 = vunpack.c.l.b16 %v478
    %v1186 = vunpack.c.h.b16 %v478
    %v1187 = vunpack.c.l.b16 %v479
    %v1188 = vunpack.c.h.b16 %v479
    %v1189 = vunpack.c.l.b16 %v480
    %v1190 = vunpack.c.h.b16 %v480
    %v1191 = vunpack.c.l.b16 %v481
    %v1192 = vunpack.c.h.b16 %v481
    %v1193 = vunpack.c.l.b16 %v482
    %v1194 = vunpack.c.h.b16 %v482
    %v1195 = vunpack.c.l.b16 %v483
    %v1196 = vunpack.c.h.b16 %v483
    %v1197 = vunpack.c.l.b16 %v484
    %v1198 = vunpack.c.h.b16 %v484
    %v1199 = vunpack.c.l.b16 %v485
    %v1200 = vunpack.c.h.b16 %v485
    %v1201 = vunpack.c.l.b16 %v486
    %v1202 = vunpack.c.h.b16 %v486
    %v1203 = vunpack.c.l.b16 %v487
    %v1204 = vunpack.c.h.b16 %v487
    %v1205 = vunpack.c.l.b16 %v488
    %v1206 = vunpack.c.h.b16 %v488
    %v1207 = vunpack.c.l.b16 %v489
    %v1208 = vunpack.c.h.b16 %v489
    %v1209 = vunpack.c.l.b16 %v490
    %v1210 = vunpack.c.h.b16 %v490
    %v1211 = vunpack.c.l.b16 %v491
    %v1212 = vunpack.c.h.b16 %v491
    %v1213 = vunpack.c.l.b16 %v492
    %v1214 = vunpack.c.h.b16 %v492
    %v1215 = vunpack.c.l.b16 %v493
    %v1216 = vunpack.c.h.b16 %v493
    %v1217 = vunpack.c.l.b16 %v494
    %v1218 = vunpack.c.h.b16 %v494
    %v1219 = vunpack.c.l.b16 %v495
    %v1220 = vunpack.c.h.b16 %v495
    %v1221 = vunpack.c.l.b16 %v496
    %v1222 = vunpack.c.h.b16 %v496
    %v1223 = vunpack.c.l.b16 %v497
    %v1224 = vunpack.c.h.b16 %v497
    %v1225 = vunpack.c.l.b16 %v498
    %v1226 = vunpack.c.h.b16 %v498
    %v1227 = vunpack.c.l.b16 %v499
    %v1228 = vunpack.c.h.b16 %v499
    %v1229 = vunpack.c.l.b16 %v500
    %v1230 = vunpack.c.h.b16 %v500
    %v1231 = vunpack.c.l.b16 %v501
    %v1232 = vunpack.c.h.b16 %v501
    %v1233 = vunpack.c.l.b16 %v502
    %v1234 = vunpack.c.h.b16 %v502
    %v1235 = vunpack.c.l.b16 %v503
    %v1236 = vunpack.c.h.b16 %v503
    %v1237 = vunpack.c.l.b16 %v504
    %v1238 = vunpack.c.h.b16 %v504
    %v1239 = vunpack.c.l.b16 %v505
    %v1240 = vunpack.c.h.b16 %v505
    %v1241 = vunpack.c.l.b16 %v506
    %v1242 = vunpack.c.h.b16 %v506
    %v1243 = vunpack.c.l.b16 %v507
    %v1244 = vunpack.c.h.b16 %v507
    %v1245 = vunpack.c.l.b16 %v508
    %v1246 = vunpack.c.h.b16 %v508
    %v1247 = vunpack.c.l.b16 %v509
    %v1248 = vunpack.c.h.b16 %v509
    %v1249 = vunpack.c.l.b16 %v510
    %v1250 = vunpack.c.h.b16 %v510
    %v1251 = vunpack.c.l.b16 %v511
    %v1252 = vunpack.c.h.b16 %v511
    %v1253 = vunpack.c.l.b16 %v512
    %v1254 = vunpack.c.h.b16 %v512
    %v1255 = vunpack.c.l.b16 %v513
    %v1256 = vunpack.c.h.b16 %v513
    %v1257 = vunpack.c.l.b16 %v514
    %v1258 = vunpack.c.h.b16 %v514
    %v1259 = vunpack.c.l.b16 %v515
    %v1260 = vunpack.c.h.b16 %v515
    %v1261 = vunpack.c.l.b16 %v516
    %v1262 = vunpack.c.h.b16 %v516
    %v1263 = vunpack.c.l.b16 %v517
    %v1264 = vunpack.c.h.b16 %v517
    %v1265 = vunpack.c.l.b16 %v518
    %v1266 = vunpack.c.h.b16 %v518
    %v1267 = vunpack.c.l.b16 %v519
    %v1268 = vunpack.c.h.b16 %v519
    %v1269 = vunpack.c.l.b16 %v520
    %v1270 = vunpack.c.h.b16 %v520
    %v1271 = vunpack.c.l.b16 %v521
    %v1272 = vunpack.c.h.b16 %v521
    %v1273 = vunpack.c.l.b16 %v522
    %v1274 = vunpack.c.h.b16 %v522
    %v1275 = vunpack.c.l.b16 %v523
    %v1276 = vunpack.c.h.b16 %v523
    %v1277 = vunpack.c.l.b16 %v524
    %v1278 = vunpack.c.h.b16 %v524
    %v1279 = vunpack.c.l.b16 %v525
    %v1280 = vunpack.c.h.b16 %v525
    %v1281 = vunpack.c.l.b16 %v526
    %v1282 = vunpack.c.h.b16 %v526
    %v1283 = vunpack.c.l.b16 %v527
    %v1284 = vunpack.c.h.b16 %v527
    %v1285 = vunpack.c.l.b16 %v528
    %v1286 = vunpack.c.h.b16 %v528
    %v1287 = vunpack.c.l.b16 %v529
    %v1288 = vunpack.c.h.b16 %v529
    %v1289 = vunpack.c.l.b16 %v530
    %v1290 = vunpack.c.h.b16 %v530
    %v1291 = vunpack.c.l.b16 %v531
    %v1292 = vunpack.c.h.b16 %v531
    %v1293 = vunpack.c.l.b16 %v532
    %v1294 = vunpack.c.h.b16 %v532
    %v1295 = vunpack.c.l.b16 %v533
    %v1296 = vunpack.c.h.b16 %v533
    %v1297 = vunpack.c.l.b16 %v534
    %v1298 = vunpack.c.h.b16 %v534
    %v1299 = vunpack.c.l.b16 %v535
    %v1300 = vunpack.c.h.b16 %v535
    %v1301 = vunpack.c.l.b16 %v536
    %v1302 = vunpack.c.h.b16 %v536
    %v1303 = vunpack.c.l.b16 %v537
    %v1304 = vunpack.c.h.b16 %v537
    %v1305 = vunpack.c.l.b16 %v538
    %v1306 = vunpack.c.h.b16 %v538
    %v1307 = vunpack.c.l.b16 %v539
    %v1308 = vunpack.c.h.b16 %v539
    %v1309 = vunpack.c.l.b16 %v540
    %v1310 = vunpack.c.h.b16 %v540
    %v1311 = vunpack.c.l.b16 %v541
    %v1312 = vunpack.c.h.b16 %v541
    %v1313 = vunpack.c.l.b16 %v542
    %v1314 = vunpack.c.h.b16 %v542
    %v1315 = vunpack.c.l.b16 %v543
    %v1316 = vunpack.c.h.b16 %v543
    %v1317 = vunpack.c.l.b16 %v544
    %v1318 = vunpack.c.h.b16 %v544
    %v1319 = vunpack.c.l.b16 %v545
    %v1320 = vunpack.c.h.b16 %v545
    %v1321 = vunpack.c.l.b16 %v546
    %v1322 = vunpack.c.h.b16 %v546
    %v1323 = vunpack.c.l.b16 %v547
    %v1324 = vunpack.c.h.b16 %v547
    %v1325 = vunpack.c.l.b16 %v548
    %v1326 = vunpack.c.h.b16 %v548
    %v1327 = vunpack.c.l.b16 %v549
    %v1328 = vunpack.c.h.b16 %v549
    %v1329 = vunpack.c.l.b16 %v550
    %v1330 = vunpack.c.h.b16 %v550
    %v1331 = vunpack.c.l.b16 %v551
    %v1332 = vunpack.c.h.b16 %v551
    %v1333 = vunpack.c.l.b16 %v552
    %v1334 = vunpack.c.h.b16 %v552
    %v1335 = vunpack.c.l.b16 %v553
    %v1336 = vunpack.c.h.b16 %v553
    %v1337 = vunpack.c.l.b16 %v554
    %v1338 = vunpack.c.h.b16 %v554
    %v1339 = vunpack.c.l.b16 %v555
    %v1340 = vunpack.c.h.b16 %v555
    %v1341 = vunpack.c.l.b16 %v556
    %v1342 = vunpack.c.h.b16 %v556
    %v1343 = vunpack.c.l.b16 %v557
    %v1344 = vunpack.c.h.b16 %v557
    %v1345 = vunpack.c.l.b16 %v558
    %v1346 = vunpack.c.h.b16 %v558
    %v1347 = vunpack.c.l.b16 %v559
    %v1348 = vunpack.c.h.b16 %v559
    %v1349 = vunpack.c.l.b16 %v560
    %v1350 = vunpack.c.h.b16 %v560
    %v1351 = vunpack.c.l.b16 %v561
    %v1352 = vunpack.c.h.b16 %v561
    %v1353 = vunpack.c.l.b16 %v562
    %v1354 = vunpack.c.h.b16 %v562
    %v1355 = vunpack.c.l.b16 %v563
    %v1356 = vunpack.c.h.b16 %v563
    %v1357 = vunpack.c.l.b16 %v564
    %v1358 = vunpack.c.h.b16 %v564
    %v1359 = vunpack.c.l.b16 %v565
    %v1360 = vunpack.c.h.b16 %v565
    %v1361 = vunpack.c.l.b16 %v566
    %v1362 = vunpack.c.h.b16 %v566
    %v1363 = vunpack.c.l.b16 %v567
    %v1364 = vunpack.c.h.b16 %v567
    %v1365 = vunpack.c.l.b16 %v568
    %v1366 = vunpack.c.h.b16 %v568
    %v1367 = vunpack.c.l.b16 %v569
    %v1368 = vunpack.c.h.b16 %v569
    %v1369 = vunpack.c.l.b16 %v570
    %v1370 = vunpack.c.h.b16 %v570
    %v1371 = vunpack.c.l.b16 %v571
    %v1372 = vunpack.c.h.b16 %v571
    %v1373 = vunpack.c.l.b16 %v572
    %v1374 = vunpack.c.h.b16 %v572
    %v1375 = vunpack.c.l.b16 %v573
    %v1376 = vunpack.c.h.b16 %v573
    %v1377 = vunpack.c.l.b16 %v574
    %v1378 = vunpack.c.h.b16 %v574
    %v1379 = vunpack.c.l.b16 %v575
    %v1380 = vunpack.c.h.b16 %v575
    %v1381 = vunpack.c.l.b16 %v576
    %v1382 = vunpack.c.h.b16 %v576
    %v1383 = vunpack.c.l.b16 %v577
    %v1384 = vunpack.c.h.b16 %v577
    %v1385 = vunpack.c.l.b16 %v578
    %v1386 = vunpack.c.h.b16 %v578
    %v1387 = vunpack.c.l.b16 %v579
    %v1388 = vunpack.c.h.b16 %v579
    %v1389 = vunpack.c.l.b16 %v580
    %v1390 = vunpack.c.h.b16 %v580
    %v1391 = vunpack.c.l.b16 %v581
    %v1392 = vunpack.c.h.b16 %v581
    %v1393 = vunpack.c.l.b16 %v582
    %v1394 = vunpack.c.h.b16 %v582
    %v1395 = vunpack.c.l.b16 %v583
    %v1396 = vunpack.c.h.b16 %v583
    %v1397 = vunpack.c.l.b16 %v584
    %v1398 = vunpack.c.h.b16 %v584
    %v1399 = vunpack.c.l.b16 %v585
    %v1400 = vunpack.c.h.b16 %v585
    %v1401 = vunpack.c.l.b16 %v586
    %v1402 = vunpack.c.h.b16 %v586
    %v1403 = vunpack.c.l.b16 %v587
    %v1404 = vunpack.c.h.b16 %v587
    %v1405 = vunpack.c.l.b16 %v588
    %v1406 = vunpack.c.h.b16 %v588
    %v1407 = vunpack.c.l.b16 %v589
    %v1408 = vunpack.c.h.b16 %v589
    %v1409 = vunpack.c.l.b16 %v590
    %v1410 = vunpack.c.h.b16 %v590
    %v1411 = vunpack.c.l.b16 %v591
    %v1412 = vunpack.c.h.b16 %v591
    %v1413 = vunpack.c.l.b16 %v592
    %v1414 = vunpack.c.h.b16 %v592
    %v1415 = vunpack.c.l.b16 %v593
    %v1416 = vunpack.c.h.b16 %v593
    %v1417 = vunpack.c.l.b16 %v594
    %v1418 = vunpack.c.h.b16 %v594
    %v1419 = vunpack.c.l.b16 %v595
    %v1420 = vunpack.c.h.b16 %v595
    %v1421 = vunpack.c.l.b16 %v596
    %v1422 = vunpack.c.h.b16 %v596
    %v1423 = vunpack.c.l.b16 %v597
    %v1424 = vunpack.c.h.b16 %v597
    %v1425 = vunpack.c.l.b16 %v598
    %v1426 = vunpack.c.h.b16 %v598
    %v1427 = vunpack.c.l.b16 %v599
    %v1428 = vunpack.c.h.b16 %v599
    %v1429 = vunpack.c.l.b16 %v600
    %v1430 = vunpack.c.h.b16 %v600
    %v1431 = vunpack.c.l.b16 %v601
    %v1432 = vunpack.c.h.b16 %v601
    %v1433 = vunpack.c.l.b16 %v602
    %v1434 = vunpack.c.h.b16 %v602
    %v1435 = vunpack.c.l.b16 %v603
    %v1436 = vunpack.c.h.b16 %v603
    %v1437 = vunpack.c.l.b16 %v604
    %v1438 = vunpack.c.h.b16 %v604
    %v1439 = vunpack.c.l.b16 %v605
    %v1440 = vunpack.c.h.b16 %v605
    %v1441 = vunpack.c.l.b16 %v606
    %v1442 = vunpack.c.h.b16 %v606
    %v1443 = vunpack.c.l.b16 %v607
    %v1444 = vunpack.c.h.b16 %v607
    %v1445 = vunpack.c.l.b16 %v608
    %v1446 = vunpack.c.h.b16 %v608
    %v1447 = vunpack.c.l.b16 %v609
    %v1448 = vunpack.c.h.b16 %v609
    %v1449 = vunpack.c.l.b16 %v610
    %v1450 = vunpack.c.h.b16 %v610
    %v1451 = vunpack.c.l.b16 %v611
    %v1452 = vunpack.c.h.b16 %v611
    %v1453 = vunpack.c.l.b16 %v612
    %v1454 = vunpack.c.h.b16 %v612
    %v1455 = vunpack.c.l.b16 %v613
    %v1456 = vunpack.c.h.b16 %v613
    %v1457 = vunpack.c.l.b16 %v614
    %v1458 = vunpack.c.h.b16 %v614
    %v1459 = vunpack.c.l.b16 %v615
    %v1460 = vunpack.c.h.b16 %v615
    %v1461 = vunpack.c.l.b16 %v616
    %v1462 = vunpack.c.h.b16 %v616
    %v1463 = vunpack.c.l.b16 %v617
    %v1464 = vunpack.c.h.b16 %v617
    %v1465 = vunpack.c.l.b16 %v618
    %v1466 = vunpack.c.h.b16 %v618
    %v1467 = vunpack.c.l.b16 %v619
    %v1468 = vunpack.c.h.b16 %v619
    %v1469 = vunpack.c.l.b16 %v620
    %v1470 = vunpack.c.h.b16 %v620
    %v1471 = vunpack.c.l.b16 %v621
    %v1472 = vunpack.c.h.b16 %v621
    %v1473 = vunpack.c.l.b16 %v622
    %v1474 = vunpack.c.h.b16 %v622
    %v1475 = vunpack.c.l.b16 %v623
    %v1476 = vunpack.c.h.b16 %v623
    %v1477 = vunpack.c.l.b16 %v624
    %v1478 = vunpack.c.h.b16 %v624
    %v1479 = vunpack.c.l.b16 %v625
    %v1480 = vunpack.c.h.b16 %v625
    %v1481 = vunpack.c.l.b16 %v626
    %v1482 = vunpack.c.h.b16 %v626
    %v1483 = vunpack.c.l.b16 %v627
    %v1484 = vunpack.c.h.b16 %v627
    %v1485 = vunpack.c.l.b16 %v628
    %v1486 = vunpack.c.h.b16 %v628
    %v1487 = vunpack.c.l.b16 %v629
    %v1488 = vunpack.c.h.b16 %v629
    %v1489 = vunpack.c.l.b16 %v630
    %v1490 = vunpack.c.h.b16 %v630
    %v1491 = vunpack.c.l.b16 %v631
    %v1492 = vunpack.c.h.b16 %v631
    %v1493 = vunpack.c.l.b16 %v632
    %v1494 = vunpack.c.h.b16 %v632
    %v1495 = vunpack.c.l.b16 %v633
    %v1496 = vunpack.c.h.b16 %v633
    %v1497 = vunpack.c.l.b16 %v634
    %v1498 = vunpack.c.h.b16 %v634
    %v1499 = vunpack.c.l.b16 %v635
    %v1500 = vunpack.c.h.b16 %v635
    %v1501 = vunpack.c.l.b16 %v636
    %v1502 = vunpack.c.h.b16 %v636
    %v1503 = vunpack.c.l.b16 %v637
    %v1504 = vunpack.c.h.b16 %v637
    %v1505 = vunpack.c.l.b16 %v638
    %v1506 = vunpack.c.h.b16 %v638
    %v1507 = vunpack.c.l.b16 %v639
    %v1508 = vunpack.c.h.b16 %v639
    %v1509 = vunpack.c.l.b16 %v640
    %v1510 = vunpack.c.h.b16 %v640
    %v1511 = vunpack.c.l.b16 %v641
    %v1512 = vunpack.c.h.b16 %v641
    %v1513 = vunpack.c.l.b16 %v642
    %v1514 = vunpack.c.h.b16 %v642
    %v1515 = vunpack.c.l.b16 %v643
    %v1516 = vunpack.c.h.b16 %v643
    %v1517 = vunpack.c.l.b16 %v644
    %v1518 = vunpack.c.h.b16 %v644
    %v1519 = vunpack.c.l.b16 %v645
    %v1520 = vunpack.c.h.b16 %v645
    %v1521 = vunpack.c.l.b16 %v646
    %v1522 = vunpack.c.h.b16 %v646
    %v1523 = vunpack.c.l.b16 %v647
    %v1524 = vunpack.c.h.b16 %v647
    %v1525 = vunpack.c.l.b16 %v648
    %v1526 = vunpack.c.h.b16 %v648
    %v1527 = vunpack.c.l.b16 %v649
    %v1528 = vunpack.c.h.b16 %v649
    %v1529 = vunpack.c.l.b16 %v650
    %v1530 = vunpack.c.h.b16 %v650
    %v1531 = vunpack.c.l.b16 %v651
    %v1532 = vunpack.c.h.b16 %v651
    %v1533 = vunpack.c.l.b16 %v652
    %v1534 = vunpack.c.h.b16 %v652
    %v1535 = vunpack.c.l.b16 %v653
    %v1536 = vunpack.c.h.b16 %v653
    %v1537 = vunpack.c.l.b16 %v654
    %v1538 = vunpack.c.h.b16 %v654
    %v1539 = vunpack.c.l.b16 %v655
    %v1540 = vunpack.c.h.b16 %v655
    %v1541 = vunpack.c.l.b16 %v656
    %v1542 = vunpack.c.h.b16 %v656
    %v1543 = vunpack.c.l.b16 %v657
    %v1544 = vunpack.c.h.b16 %v657
    %v1545 = vunpack.c.l.b16 %v658
    %v1546 = vunpack.c.h.b16 %v658
    %v1547 = vunpack.c.l.b16 %v659
    %v1548 = vunpack.c.h.b16 %v659
    %v1549 = vunpack.c.l.b16 %v660
    %v1550 = vunpack.c.h.b16 %v660
    %v1551 = vunpack.c.l.b16 %v661
    %v1552 = vunpack.c.h.b16 %v661
    %v1553 = vunpack.c.l.b16 %v662
    %v1554 = vunpack.c.h.b16 %v662
    %v1555 = vunpack.c.l.b16 %v663
    %v1556 = vunpack.c.h.b16 %v663
    %v1557 = vunpack.c.l.b16 %v664
    %v1558 = vunpack.c.h.b16 %v664
    %v1559 = vunpack.c.l.b16 %v665
    %v1560 = vunpack.c.h.b16 %v665
    %v1561 = vunpack.c.l.b16 %v666
    %v1562 = vunpack.c.h.b16 %v666
    %v1563 = vpack.c.b16 %v993, %v987
    %v1564 = vpack.c.b16 %v994, %v988
    %v1565 = vpack.c.b16 %v995, %v989
    %v1566 = vpack.c.b16 %v996, %v990
    %v1567 = vpack.c.b16 %v997, %v991
    %v1568 = vpack.c.b16 %v998, %v992
    %v1569 = vpack.c.b16 %v1005, %v999
    %v1570 = vpack.c.b16 %v1006, %v1000
    %v1571 = vpack.c.b16 %v1007, %v1001
    %v1572 = vpack.c.b16 %v1008, %v1002
    %v1573 = vpack.c.b16 %v1009, %v1003
    %v1574 = vpack.c.b16 %v1010, %v1004
    %v1575 = vpack.c.b16 %v1017, %v1011
    %v1576 = vpack.c.b16 %v1018, %v1012
    %v1577 = vpack.c.b16 %v1019, %v1013
    %v1578 = vpack.c.b16 %v1020, %v1014
    %v1579 = vpack.c.b16 %v1021, %v1015
    %v1580 = vpack.c.b16 %v1022, %v1016
    %v1581 = vpack.c.b16 %v1029, %v1023
    %v1582 = vpack.c.b16 %v1030, %v1024
    %v1583 = vpack.c.b16 %v1031, %v1025
    %v1584 = vpack.c.b16 %v1032, %v1026
    %v1585 = vpack.c.b16 %v1033, %v1027
    %v1586 = vpack.c.b16 %v1034, %v1028
    %v1587 = vpack.c.b16 %v1041, %v1035
    %v1588 = vpack.c.b16 %v1042, %v1036
    %v1589 = vpack.c.b16 %v1043, %v1037
    %v1590 = vpack.c.b16 %v1044, %v1038
    %v1591 = vpack.c.b16 %v1045, %v1039
    %v1592 = vpack.c.b16 %v1046, %v1040
    %v1593 = vpack.c.b16 %v1053, %v1047
    %v1594 = vpack.c.b16 %v1054, %v1048
    %v1595 = vpack.c.b16 %v1055, %v1049
    %v1596 = vpack.c.b16 %v1056, %v1050
    %v1597 = vpack.c.b16 %v1057, %v1051
    %v1598 = vpack.c.b16 %v1058, %v1052
    %v1599 = vpack.c.b16 %v1065, %v1059
    %v1600 = vpack.c.b16 %v1066, %v1060
    %v1601 = vpack.c.b16 %v1067, %v1061
    %v1602 = vpack.c.b16 %v1068, %v1062
    %v1603 = vpack.c.b16 %v1069, %v1063
    %v1604 = vpack.c.b16 %v1070, %v1064
    %v1605 = vpack.c.b16 %v1077, %v1071
    %v1606 = vpack.c.b16 %v1078, %v1072
    %v1607 = vpack.c.b16 %v1079, %v1073
    %v1608 = vpack.c.b16 %v1080, %v1074
    %v1609 = vpack.c.b16 %v1081, %v1075
    %v1610 = vpack.c.b16 %v1082, %v1076
    %v1611 = vpack.c.b16 %v1089, %v1083
    %v1612 = vpack.c.b16 %v1090, %v1084
    %v1613 = vpack.c.b16 %v1091, %v1085
    %v1614 = vpack.c.b16 %v1092, %v1086
    %v1615 = vpack.c.b16 %v1093, %v1087
    %v1616 = vpack.c.b16 %v1094, %v1088
    %v1617 = vpack.c.b16 %v1101, %v1095
    %v1618 = vpack.c.b16 %v1102, %v1096
    %v1619 = vpack.c.b16 %v1103, %v1097
    %v1620 = vpack.c.b16 %v1104, %v1098
    %v1621 = vpack.c.b16 %v1105, %v1099
    %v1622 = vpack.c.b16 %v1106, %v1100
    %v1623 = vpack.c.b16 %v1113, %v1107
    %v1624 = vpack.c.b16 %v1114, %v1108
    %v1625 = vpack.c.b16 %v1115, %v1109
    %v1626 = vpack.c.b16 %v1116, %v1110
    %v1627 = vpack.c.b16 %v1117, %v1111
    %v1628 = vpack.c.b16 %v1118, %v1112
    %v1629 = vpack.c.b16 %v1125, %v1119
    %v1630 = vpack.c.b16 %v1126, %v1120
    %v1631 = vpack.c.b16 %v1127, %v1121
    %v1632 = vpack.c.b16 %v1128, %v1122
    %v1633 = vpack.c.b16 %v1129, %v1123
    %v1634 = vpack.c.b16 %v1130, %v1124
    %v1635 = vpack.c.b16 %v1137, %v1131
    %v1636 = vpack.c.b16 %v1138, %v1132
    %v1637 = vpack.c.b16 %v1139, %v1133
    %v1638 = vpack.c.b16 %v1140, %v1134
    %v1639 = vpack.c.b16 %v1141, %v1135
    %v1640 = vpack.c.b16 %v1142, %v1136
    %v1641 = vpack.c.b16 %v1149, %v1143
    %v1642 = vpack.c.b16 %v1150, %v1144
    %v1643 = vpack.c.b16 %v1151, %v1145
    %v1644 = vpack.c.b16 %v1152, %v1146
    %v1645 = vpack.c.b16 %v1153, %v1147
    %v1646 = vpack.c.b16 %v1154, %v1148
    %v1647 = vpack.c.b16 %v1161, %v1155
    %v1648 = vpack.c.b16 %v1162, %v1156
    %v1649 = vpack.c.b16 %v1163, %v1157
    %v1650 = vpack.c.b16 %v1164, %v1158
    %v1651 = vpack.c.b16 %v1165, %v1159
    %v1652 = vpack.c.b16 %v1166, %v1160
    %v1653 = vpack.c.b16 %v1173, %v1167
    %v1654 = vpack.c.b16 %v1174, %v1168
    %v1655 = vpack.c.b16 %v1175, %v1169
    %v1656 = vpack.c.b16 %v1176, %v1170
    %v1657 = vpack.c.b16 %v1177, %v1171
    %v1658 = vpack.c.b16 %v1178, %v1172
    %v1659 = vpack.c.b16 %v1185, %v1179
    %v1660 = vpack.c.b16 %v1186, %v1180
    %v1661 = vpack.c.b16 %v1187, %v1181
    %v1662 = vpack.c.b16 %v1188, %v1182
    %v1663 = vpack.c.b16 %v1189, %v1183
    %v1664 = vpack.c.b16 %v1190, %v1184
    %v1665 = vpack.c.b16 %v1197, %v1191
    %v1666 = vpack.c.b16 %v1198, %v1192
    %v1667 = vpack.c.b16 %v1199, %v1193
    %v1668 = vpack.c.b16 %v1200, %v1194
    %v1669 = vpack.c.b16 %v1201, %v1195
    %v1670 = vpack.c.b16 %v1202, %v1196
    %v1671 = vpack.c.b16 %v1209, %v1203
    %v1672 = vpack.c.b16 %v1210, %v1204
    %v1673 = vpack.c.b16 %v1211, %v1205
    %v1674 = vpack.c.b16 %v1212, %v1206
    %v1675 = vpack.c.b16 %v1213, %v1207
    %v1676 = vpack.c.b16 %v1214, %v1208
    %v1677 = vpack.c.b16 %v1221, %v1215
    %v1678 = vpack.c.b16 %v1222, %v1216
    %v1679 = vpack.c.b16 %v1223, %v1217
    %v1680 = vpack.c.b16 %v1224, %v1218
    %v1681 = vpack.c.b16 %v1225, %v1219
    %v1682 = vpack.c.b16 %v1226, %v1220
    %v1683 = vpack.c.b16 %v1233, %v1227
    %v1684 = vpack.c.b16 %v1234, %v1228
    %v1685 = vpack.c.b16 %v1235, %v1229
    %v1686 = vpack.c.b16 %v1236, %v1230
    %v1687 = vpack.c.b16 %v1237, %v1231
    %v1688 = vpack.c.b16 %v1238, %v1232
    %v1689 = vpack.c.b16 %v1245, %v1239
    %v1690 = vpack.c.b16 %v1246, %v1240
    %v1691 = vpack.c.b16 %v1247, %v1241
    %v1692 = vpack.c.b16 %v1248, %v1242
    %v1693 = vpack.c.b16 %v1249, %v1243
    %v1694 = vpack.c.b16 %v1250, %v1244
    %v1695 = vpack.c.b16 %v1257, %v1251
    %v1696 = vpack.c.b16 %v1258, %v1252
    %v1697 = vpack.c.b16 %v1259, %v1253
    %v1698 = vpack.c.b16 %v1260, %v1254
    %v1699 = vpack.c.b16 %v1261, %v1255
    %v1700 = vpack.c.b16 %v1262, %v1256
    %v1701 = vpack.c.b16 %v1269, %v1263
    %v1702 = vpack.c.b16 %v1270, %v1264
    %v1703 = vpack.c.b16 %v1271, %v1265
    %v1704 = vpack.c.b16 %v1272, %v1266
    %v1705 = vpack.c.b16 %v1273, %v1267
    %v1706 = vpack.c.b16 %v1274, %v1268
    %v1707 = vpack.c.b16 %v1281, %v1275
    %v1708 = vpack.c.b16 %v1282, %v1276
    %v1709 = vpack.c.b16 %v1283, %v1277
    %v1710 = vpack.c.b16 %v1284, %v1278
    %v1711 = vpack.c.b16 %v1285, %v1279
    %v1712 = vpack.c.b16 %v1286, %v1280
    %v1713 = vpack.c.b16 %v1293, %v1287
    %v1714 = vpack.c.b16 %v1294, %v1288
    %v1715 = vpack.c.b16 %v1295, %v1289
    %v1716 = vpack.c.b16 %v1296, %v1290
    %v1717 = vpack.c.b16 %v1297, %v1291
    %v1718 = vpack.c.b16 %v1298, %v1292
    %v1719 = vpack.c.b16 %v1305, %v1299
    %v1720 = vpack.c.b16 %v1306, %v1300
    %v1721 = vpack.c.b16 %v1307, %v1301
    %v1722 = vpack.c.b16 %v1308, %v1302
    %v1723 = vpack.c.b16 %v1309, %v1303
    %v1724 = vpack.c.b16 %v1310, %v1304
    %v1725 = vpack.c.b16 %v1317, %v1311
    %v1726 = vpack.c.b16 %v1318, %v1312
    %v1727 = vpack.c.b16 %v1319, %v1313
    %v1728 = vpack.c.b16 %v1320, %v1314
    %v1729 = vpack.c.b16 %v1321, %v1315
    %v1730 = vpack.c.b16 %v1322, %v1316
    %v1731 = vpack.c.b16 %v1329, %v1323
    %v1732 = vpack.c.b16 %v1330, %v1324
    %v1733 = vpack.c.b16 %v1331, %v1325
    %v1734 = vpack.c.b16 %v1332, %v1326
    %v1735 = vpack.c.b16 %v1333, %v1327
    %v1736 = vpack.c.b16 %v1334, %v1328
    %v1737 = vpack.c.b16 %v1341, %v1335
    %v1738 = vpack.c.b16 %v1342, %v1336
    %v1739 = vpack.c.b16 %v1343, %v1337
    %v1740 = vpack.c.b16 %v1344, %v1338
    %v1741 = vpack.c.b16 %v1345, %v1339
    %v1742 = vpack.c.b16 %v1346, %v1340
    %v1743 = vpack.c.b16 %v1353, %v1347
    %v1744 = vpack.c.b16 %v1354, %v1348
    %v1745 = vpack.c.b16 %v1355, %v1349
    %v1746 = vpack.c.b16 %v1356, %v1350
    %v1747 = vpack.c.b16 %v1357, %v1351
    %v1748 = vpack.c.b16 %v1358, %v1352
    %v1749 = vpack.c.b16 %v1365, %v1359
    %v1750 = vpack.c.b16 %v1366, %v1360
    %v1751 = vpack.c.b16 %v1367, %v1361
    %v1752 = vpack.c.b16 %v1368, %v1362
    %v1753 = vpack.c.b16 %v1369, %v1363
    %v1754 = vpack.c.b16 %v1370, %v1364
    %v1755 = vpack.c.b16 %v1377, %v1371
    %v1756 = vpack.c.b16 %v1378, %v1372
    %v1757 = vpack.c.b16 %v1379, %v1373
    %v1758 = vpack.c.b16 %v1380, %v1374
    %v1759 = vpack.c.b16 %v1381, %v1375
    %v1760 = vpack.c.b16 %v1382, %v1376
    %v1761 = vpack.c.b16 %v1389, %v1383
    %v1762 = vpack.c.b16 %v1390, %v1384
    %v1763 = vpack.c.b16 %v1391, %v1385
    %v1764 = vpack.c.b16 %v1392, %v1386
    %v1765 = vpack.c.b16 %v1393, %v1387
    %v1766 = vpack.c.b16 %v1394, %v1388
    %v1767 = vpack.c.b16 %v1401, %v1395
    %v1768 = vpack.c.b16 %v1402, %v1396
    %v1769 = vpack.c.b16 %v1403, %v1397
    %v1770 = vpack.c.b16 %v1404, %v1398
    %v1771 = vpack.c.b16 %v1405, %v1399
    %v1772 = vpack.c.b16 %v1406, %v1400
    %v1773 = vpack.c.b16 %v1413, %v1407
    %v1774 = vpack.c.b16 %v1414, %v1408
    %v1775 = vpack.c.b16 %v1415, %v1409
    %v1776 = vpack.c.b16 %v1416, %v1410
    %v1777 = vpack.c.b16 %v1417, %v1411
    %v1778 = vpack.c.b16 %v1418, %v1412
    %v1779 = vpack.c.b16 %v1425, %v1419
    %v1780 = vpack.c.b16 %v1426, %v1420
    %v1781 = vpack.c.b16 %v1427, %v1421
    %v1782 = vpack.c.b16 %v1428, %v1422
    %v1783 = vpack.c.b16 %v1429, %v1423
    %v1784 = vpack.c.b16 %v1430, %v1424
    %v1785 = vpack.c.b16 %v1437, %v1431
    %v1786 = vpack.c.b16 %v1438, %v1432
    %v1787 = vpack.c.b16 %v1439, %v1433
    %v1788 = vpack.c.b16 %v1440, %v1434
    %v1789 = vpack.c.b16 %v1441, %v1435
    %v1790 = vpack.c.b16 %v1442, %v1436
    %v1791 = vpack.c.b16 %v1449, %v1443
    %v1792 = vpack.c.b16 %v1450, %v1444
    %v1793 = vpack.c.b16 %v1451, %v1445
    %v1794 = vpack.c.b16 %v1452, %v1446
    %v1795 = vpack.c.b16 %v1453, %v1447
    %v1796 = vpack.c.b16 %v1454, %v1448
    %v1797 = vpack.c.b16 %v1461, %v1455
    %v1798 = vpack.c.b16 %v1462, %v1456
    %v1799 = vpack.c.b16 %v1463, %v1457
    %v1800 = vpack.c.b16 %v1464, %v1458
    %v1801 = vpack.c.b16 %v1465, %v1459
    %v1802 = vpack.c.b16 %v1466, %v1460
    %v1803 = vpack.c.b16 %v1473, %v1467
    %v1804 = vpack.c.b16 %v1474, %v1468
    %v1805 = vpack.c.b16 %v1475, %v1469
    %v1806 = vpack.c.b16 %v1476, %v1470
    %v1807 = vpack.c.b16 %v1477, %v1471
    %v1808 = vpack.c.b16 %v1478, %v1472
    %v1809 = vpack.c.b16 %v1485, %v1479
    %v1810 = vpack.c.b16 %v1486, %v1480
    %v1811 = vpack.c.b16 %v1487, %v1481
    %v1812 = vpack.c.b16 %v1488, %v1482
    %v1813 = vpack.c.b16 %v1489, %v1483
    %v1814 = vpack.c.b16 %v1490, %v1484
    %v1815 = vpack.c.b16 %v1497, %v1491
    %v1816 = vpack.c.b16 %v1498, %v1492
    %v1817 = vpack.c.b16 %v1499, %v1493
    %v1818 = vpack.c.b16 %v1500, %v1494
    %v1819 = vpack.c.b16 %v1501, %v1495
    %v1820 = vpack.c.b16 %v1502, %v1496
    %v1821 = vpack.c.b16 %v1509, %v1503
    %v1822 = vpack.c.b16 %v1510, %v1504
    %v1823 = vpack.c.b16 %v1511, %v1505
    %v1824 = vpack.c.b16 %v1512, %v1506
    %v1825 = vpack.c.b16 %v1513, %v1507
    %v1826 = vpack.c.b16 %v1514, %v1508
    %v1827 = vpack.c.b16 %v1521, %v1515
    %v1828 = vpack.c.b16 %v1522, %v1516
    %v1829 = vpack.c.b16 %v1523, %v1517
    %v1830 = vpack.c.b16 %v1524, %v1518
    %v1831 = vpack.c.b16 %v1525, %v1519
    %v1832 = vpack.c.b16 %v1526, %v1520
    %v1833 = vpack.c.b16 %v1533, %v1527
    %v1834 = vpack.c.b16 %v1534, %v1528
    %v1835 = vpack.c.b16 %v1535, %v1529
    %v1836 = vpack.c.b16 %v1536, %v1530
    %v1837 = vpack.c.b16 %v1537, %v1531
    %v1838 = vpack.c.b16 %v1538, %v1532
    %v1839 = vpack.c.b16 %v1545, %v1539
    %v1840 = vpack.c.b16 %v1546, %v1540
    %v1841 = vpack.c.b16 %v1547, %v1541
    %v1842 = vpack.c.b16 %v1548, %v1542
    %v1843 = vpack.c.b16 %v1549, %v1543
    %v1844 = vpack.c.b16 %v1550, %v1544
    %v1845 = vpack.c.b16 %v1557, %v1551
    %v1846 = vpack.c.b16 %v1558, %v1552
    %v1847 = vpack.c.b16 %v1559, %v1553
    %v1848 = vpack.c.b16 %v1560, %v1554
    %v1849 = vpack.c.b16 %v1561, %v1555
    %v1850 = vpack.c.b16 %v1562, %v1556
    %2139 = vmatprep.subr.bf16.mxu0 %v1606
    %2140 = vmatpush1.bf16.msra.mxu0 %v1605
    %2141 = vmatprep.subr.bf16.mxu0 %v1600
    %2142 = vmatpush1.bf16.msra.mxu0 %v1599
    %2143 = vmatprep.subr.bf16.mxu0 %v1594
    %2144 = vmatpush1.bf16.msra.mxu0 %v1593
    %2145 = vmatprep.subr.bf16.mxu0 %v1588
    %2146 = vmatpush1.bf16.msra.mxu0 %v1587
    %2147 = vmatprep.subr.bf16.mxu0 %v1582
    %2148 = vmatpush1.bf16.msra.mxu0 %v1581
    %2149 = vmatprep.subr.bf16.mxu0 %v1576
    %2150 = vmatpush1.bf16.msra.mxu0 %v1575
    %2151 = vmatprep.subr.bf16.mxu0 %v1570
    %2152 = vmatpush1.bf16.msra.mxu0 %v1569
    %2153 = vmatprep.subr.bf16.mxu0 %v1564
    %2154 = vmatpush1.bf16.msra.mxu0 %v1563
    %2155 = vmatprep.subr.bf16.mxu0 %v1654
    %2156 = vmatpush2.bf16.msra.mxu0 %v1653
    %2157 = vmatprep.subr.bf16.mxu0 %v1648
    %2158 = vmatpush2.bf16.msra.mxu0 %v1647
    %2159 = vmatprep.subr.bf16.mxu0 %v1642
    %2160 = vmatpush2.bf16.msra.mxu0 %v1641
    %2161 = vmatprep.subr.bf16.mxu0 %v1636
    %2162 = vmatpush2.bf16.msra.mxu0 %v1635
    %2163 = vmatprep.subr.bf16.mxu0 %v1630
    %2164 = vmatpush2.bf16.msra.mxu0 %v1629
    %2165 = vmatprep.subr.bf16.mxu0 %v1624
    %2166 = vmatpush2.bf16.msra.mxu0 %v1623
    %2167 = vmatprep.subr.bf16.mxu0 %v1618
    %2168 = vmatpush2.bf16.msra.mxu0 %v1617
    %2169 = vmatprep.subr.bf16.mxu0 %v1612
    %2170 = vmatpush2.bf16.msra.mxu0 %v1611
    %2171 = vmatprep.mubr.bf16.mxu0 %v374
    %2172 = vmatmul.mubr.bf16.gmra.mxu0 %v373
    %v2173 = vpop.f32.mrf.mxu0
    %v2174 = vadd.f32 %v672, %v2173
    %v2175 = vpop.f32.mrf.mxu0
    %v2176 = vadd.f32 %v676, %v2175
    %v2177 = vpop.f32.mrf.mxu0
    %v2178 = vadd.f32 %v672, %v2177
    %v2179 = vpop.f32.mrf.mxu0
    %v2180 = vadd.f32 %v676, %v2179
    %2181 = vdwg.mxu0
    %2182 = vmatprep.subr.bf16.mxu0 %v1702
    %2183 = vmatpush1.bf16.msra.mxu0 %v1701
    %2184 = vmatprep.subr.bf16.mxu0 %v1696
    %2185 = vmatpush1.bf16.msra.mxu0 %v1695
    %2186 = vmatprep.subr.bf16.mxu0 %v1690
    %2187 = vmatpush1.bf16.msra.mxu0 %v1689
    %2188 = vmatprep.subr.bf16.mxu0 %v1684
    %2189 = vmatpush1.bf16.msra.mxu0 %v1683
    %2190 = vmatprep.subr.bf16.mxu0 %v1678
    %2191 = vmatpush1.bf16.msra.mxu0 %v1677
    %2192 = vmatprep.subr.bf16.mxu0 %v1672
    %2193 = vmatpush1.bf16.msra.mxu0 %v1671
    %2194 = vmatprep.subr.bf16.mxu0 %v1666
    %2195 = vmatpush1.bf16.msra.mxu0 %v1665
    %2196 = vmatprep.subr.bf16.mxu0 %v1660
    %2197 = vmatpush1.bf16.msra.mxu0 %v1659
    %2198 = vmatprep.subr.bf16.mxu0 %v1750
    %2199 = vmatpush2.bf16.msra.mxu0 %v1749
    %2200 = vmatprep.subr.bf16.mxu0 %v1744
    %2201 = vmatpush2.bf16.msra.mxu0 %v1743
    %2202 = vmatprep.subr.bf16.mxu0 %v1738
    %2203 = vmatpush2.bf16.msra.mxu0 %v1737
    %2204 = vmatprep.subr.bf16.mxu0 %v1732
    %2205 = vmatpush2.bf16.msra.mxu0 %v1731
    %2206 = vmatprep.subr.bf16.mxu0 %v1726
    %2207 = vmatpush2.bf16.msra.mxu0 %v1725
    %2208 = vmatprep.subr.bf16.mxu0 %v1720
    %2209 = vmatpush2.bf16.msra.mxu0 %v1719
    %2210 = vmatprep.subr.bf16.mxu0 %v1714
    %2211 = vmatpush2.bf16.msra.mxu0 %v1713
    %2212 = vmatprep.subr.bf16.mxu0 %v1708
    %2213 = vmatpush2.bf16.msra.mxu0 %v1707
    %2214 = vmatprep.mubr.bf16.mxu0 %v376
    %2215 = vmatmul.mubr.bf16.gmra.mxu0 %v375
    %v2216 = vpop.f32.mrf.mxu0
    %v2217 = vadd.f32 %v2174, %v2216
    %v2218 = vpop.f32.mrf.mxu0
    %v2219 = vadd.f32 %v2176, %v2218
    %v2220 = vpop.f32.mrf.mxu0
    %v2221 = vadd.f32 %v2178, %v2220
    %v2222 = vpop.f32.mrf.mxu0
    %v2223 = vadd.f32 %v2180, %v2222
    %2224 = vdwg.mxu0
    %2225 = vmatprep.subr.bf16.mxu0 %v1798
    %2226 = vmatpush1.bf16.msra.mxu0 %v1797
    %2227 = vmatprep.subr.bf16.mxu0 %v1792
    %2228 = vmatpush1.bf16.msra.mxu0 %v1791
    %2229 = vmatprep.subr.bf16.mxu0 %v1786
    %2230 = vmatpush1.bf16.msra.mxu0 %v1785
    %2231 = vmatprep.subr.bf16.mxu0 %v1780
    %2232 = vmatpush1.bf16.msra.mxu0 %v1779
    %2233 = vmatprep.subr.bf16.mxu0 %v1774
    %2234 = vmatpush1.bf16.msra.mxu0 %v1773
    %2235 = vmatprep.subr.bf16.mxu0 %v1768
    %2236 = vmatpush1.bf16.msra.mxu0 %v1767
    %2237 = vmatprep.subr.bf16.mxu0 %v1762
    %2238 = vmatpush1.bf16.msra.mxu0 %v1761
    %2239 = vmatprep.subr.bf16.mxu0 %v1756
    %2240 = vmatpush1.bf16.msra.mxu0 %v1755
    %2241 = vmatprep.subr.bf16.mxu0 %v1846
    %2242 = vmatpush2.bf16.msra.mxu0 %v1845
    %2243 = vmatprep.subr.bf16.mxu0 %v1840
    %2244 = vmatpush2.bf16.msra.mxu0 %v1839
    %2245 = vmatprep.subr.bf16.mxu0 %v1834
    %2246 = vmatpush2.bf16.msra.mxu0 %v1833
    %2247 = vmatprep.subr.bf16.mxu0 %v1828
    %2248 = vmatpush2.bf16.msra.mxu0 %v1827
    %2249 = vmatprep.subr.bf16.mxu0 %v1822
    %2250 = vmatpush2.bf16.msra.mxu0 %v1821
    %2251 = vmatprep.subr.bf16.mxu0 %v1816
    %2252 = vmatpush2.bf16.msra.mxu0 %v1815
    %2253 = vmatprep.subr.bf16.mxu0 %v1810
    %2254 = vmatpush2.bf16.msra.mxu0 %v1809
    %2255 = vmatprep.subr.bf16.mxu0 %v1804
    %2256 = vmatpush2.bf16.msra.mxu0 %v1803
    %2257 = vmatprep.mubr.bf16.mxu0 %v378
    %2258 = vmatmul.mubr.bf16.gmra.mxu0 %v377
    %v2259 = vpop.f32.mrf.mxu0
    %v2260 = vadd.f32 %v2217, %v2259
    %v2261 = vpop.f32.mrf.mxu0
    %v2262 = vadd.f32 %v2219, %v2261
    %v2263 = vpop.f32.mrf.mxu0
    %v2264 = vadd.f32 %v2221, %v2263
    %v2265 = vpop.f32.mrf.mxu0
    %v2266 = vadd.f32 %v2223, %v2265
    %2267 = vdwg.mxu0
    %2268 = vmatprep.subr.bf16.mxu0 %v1608
    %2269 = vmatpush1.bf16.msra.mxu0 %v1607
    %2270 = vmatprep.subr.bf16.mxu0 %v1602
    %2271 = vmatpush1.bf16.msra.mxu0 %v1601
    %2272 = vmatprep.subr.bf16.mxu0 %v1596
    %2273 = vmatpush1.bf16.msra.mxu0 %v1595
    %2274 = vmatprep.subr.bf16.mxu0 %v1590
    %2275 = vmatpush1.bf16.msra.mxu0 %v1589
    %2276 = vmatprep.subr.bf16.mxu0 %v1584
    %2277 = vmatpush1.bf16.msra.mxu0 %v1583
    %2278 = vmatprep.subr.bf16.mxu0 %v1578
    %2279 = vmatpush1.bf16.msra.mxu0 %v1577
    %2280 = vmatprep.subr.bf16.mxu0 %v1572
    %2281 = vmatpush1.bf16.msra.mxu0 %v1571
    %2282 = vmatprep.subr.bf16.mxu0 %v1566
    %2283 = vmatpush1.bf16.msra.mxu0 %v1565
    %2284 = vmatprep.subr.bf16.mxu0 %v1656
    %2285 = vmatpush2.bf16.msra.mxu0 %v1655
    %2286 = vmatprep.subr.bf16.mxu0 %v1650
    %2287 = vmatpush2.bf16.msra.mxu0 %v1649
    %2288 = vmatprep.subr.bf16.mxu0 %v1644
    %2289 = vmatpush2.bf16.msra.mxu0 %v1643
    %2290 = vmatprep.subr.bf16.mxu0 %v1638
    %2291 = vmatpush2.bf16.msra.mxu0 %v1637
    %2292 = vmatprep.subr.bf16.mxu0 %v1632
    %2293 = vmatpush2.bf16.msra.mxu0 %v1631
    %2294 = vmatprep.subr.bf16.mxu0 %v1626
    %2295 = vmatpush2.bf16.msra.mxu0 %v1625
    %2296 = vmatprep.subr.bf16.mxu0 %v1620
    %2297 = vmatpush2.bf16.msra.mxu0 %v1619
    %2298 = vmatprep.subr.bf16.mxu0 %v1614
    %2299 = vmatpush2.bf16.msra.mxu0 %v1613
    %2300 = vmatprep.mubr.bf16.mxu0 %v374
    %2301 = vmatmul.mubr.bf16.gmra.mxu0 %v373
    %v2302 = vpop.f32.mrf.mxu0
    %v2303 = vadd.f32 %v680, %v2302
    %v2304 = vpop.f32.mrf.mxu0
    %v2305 = vadd.f32 %v684, %v2304
    %v2306 = vpop.f32.mrf.mxu0
    %v2307 = vadd.f32 %v680, %v2306
    %v2308 = vpop.f32.mrf.mxu0
    %v2309 = vadd.f32 %v684, %v2308
    %2310 = vdwg.mxu0
    %2311 = vmatprep.subr.bf16.mxu0 %v1704
    %2312 = vmatpush1.bf16.msra.mxu0 %v1703
    %2313 = vmatprep.subr.bf16.mxu0 %v1698
    %2314 = vmatpush1.bf16.msra.mxu0 %v1697
    %2315 = vmatprep.subr.bf16.mxu0 %v1692
    %2316 = vmatpush1.bf16.msra.mxu0 %v1691
    %2317 = vmatprep.subr.bf16.mxu0 %v1686
    %2318 = vmatpush1.bf16.msra.mxu0 %v1685
    %2319 = vmatprep.subr.bf16.mxu0 %v1680
    %2320 = vmatpush1.bf16.msra.mxu0 %v1679
    %2321 = vmatprep.subr.bf16.mxu0 %v1674
    %2322 = vmatpush1.bf16.msra.mxu0 %v1673
    %2323 = vmatprep.subr.bf16.mxu0 %v1668
    %2324 = vmatpush1.bf16.msra.mxu0 %v1667
    %2325 = vmatprep.subr.bf16.mxu0 %v1662
    %2326 = vmatpush1.bf16.msra.mxu0 %v1661
    %2327 = vmatprep.subr.bf16.mxu0 %v1752
    %2328 = vmatpush2.bf16.msra.mxu0 %v1751
    %2329 = vmatprep.subr.bf16.mxu0 %v1746
    %2330 = vmatpush2.bf16.msra.mxu0 %v1745
    %2331 = vmatprep.subr.bf16.mxu0 %v1740
    %2332 = vmatpush2.bf16.msra.mxu0 %v1739
    %2333 = vmatprep.subr.bf16.mxu0 %v1734
    %2334 = vmatpush2.bf16.msra.mxu0 %v1733
    %2335 = vmatprep.subr.bf16.mxu0 %v1728
    %2336 = vmatpush2.bf16.msra.mxu0 %v1727
    %2337 = vmatprep.subr.bf16.mxu0 %v1722
    %2338 = vmatpush2.bf16.msra.mxu0 %v1721
    %2339 = vmatprep.subr.bf16.mxu0 %v1716
    %2340 = vmatpush2.bf16.msra.mxu0 %v1715
    %2341 = vmatprep.subr.bf16.mxu0 %v1710
    %2342 = vmatpush2.bf16.msra.mxu0 %v1709
    %2343 = vmatprep.mubr.bf16.mxu0 %v376
    %2344 = vmatmul.mubr.bf16.gmra.mxu0 %v375
    %v2345 = vpop.f32.mrf.mxu0
    %v2346 = vadd.f32 %v2303, %v2345
    %v2347 = vpop.f32.mrf.mxu0
    %v2348 = vadd.f32 %v2305, %v2347
    %v2349 = vpop.f32.mrf.mxu0
    %v2350 = vadd.f32 %v2307, %v2349
    %v2351 = vpop.f32.mrf.mxu0
    %v2352 = vadd.f32 %v2309, %v2351
    %2353 = vdwg.mxu0
    %2354 = vmatprep.subr.bf16.mxu0 %v1800
    %2355 = vmatpush1.bf16.msra.mxu0 %v1799
    %2356 = vmatprep.subr.bf16.mxu0 %v1794
    %2357 = vmatpush1.bf16.msra.mxu0 %v1793
    %2358 = vmatprep.subr.bf16.mxu0 %v1788
    %2359 = vmatpush1.bf16.msra.mxu0 %v1787
    %2360 = vmatprep.subr.bf16.mxu0 %v1782
    %2361 = vmatpush1.bf16.msra.mxu0 %v1781
    %2362 = vmatprep.subr.bf16.mxu0 %v1776
    %2363 = vmatpush1.bf16.msra.mxu0 %v1775
    %2364 = vmatprep.subr.bf16.mxu0 %v1770
    %2365 = vmatpush1.bf16.msra.mxu0 %v1769
    %2366 = vmatprep.subr.bf16.mxu0 %v1764
    %2367 = vmatpush1.bf16.msra.mxu0 %v1763
    %2368 = vmatprep.subr.bf16.mxu0 %v1758
    %2369 = vmatpush1.bf16.msra.mxu0 %v1757
    %2370 = vmatprep.subr.bf16.mxu0 %v1848
    %2371 = vmatpush2.bf16.msra.mxu0 %v1847
    %2372 = vmatprep.subr.bf16.mxu0 %v1842
    %2373 = vmatpush2.bf16.msra.mxu0 %v1841
    %2374 = vmatprep.subr.bf16.mxu0 %v1836
    %2375 = vmatpush2.bf16.msra.mxu0 %v1835
    %2376 = vmatprep.subr.bf16.mxu0 %v1830
    %2377 = vmatpush2.bf16.msra.mxu0 %v1829
    %2378 = vmatprep.subr.bf16.mxu0 %v1824
    %2379 = vmatpush2.bf16.msra.mxu0 %v1823
    %2380 = vmatprep.subr.bf16.mxu0 %v1818
    %2381 = vmatpush2.bf16.msra.mxu0 %v1817
    %2382 = vmatprep.subr.bf16.mxu0 %v1812
    %2383 = vmatpush2.bf16.msra.mxu0 %v1811
    %2384 = vmatprep.subr.bf16.mxu0 %v1806
    %2385 = vmatpush2.bf16.msra.mxu0 %v1805
    %2386 = vmatprep.mubr.bf16.mxu0 %v378
    %2387 = vmatmul.mubr.bf16.gmra.mxu0 %v377
    %v2388 = vpop.f32.mrf.mxu0
    %v2389 = vadd.f32 %v2346, %v2388
    %v2390 = vpop.f32.mrf.mxu0
    %v2391 = vadd.f32 %v2348, %v2390
    %v2392 = vpop.f32.mrf.mxu0
    %v2393 = vadd.f32 %v2350, %v2392
    %v2394 = vpop.f32.mrf.mxu0
    %v2395 = vadd.f32 %v2352, %v2394
    %2396 = vdwg.mxu0
    %2397 = vmatprep.subr.bf16.mxu0 %v1610
    %2398 = vmatpush1.bf16.msra.mxu0 %v1609
    %2399 = vmatprep.subr.bf16.mxu0 %v1604
    %2400 = vmatpush1.bf16.msra.mxu0 %v1603
    %2401 = vmatprep.subr.bf16.mxu0 %v1598
    %2402 = vmatpush1.bf16.msra.mxu0 %v1597
    %2403 = vmatprep.subr.bf16.mxu0 %v1592
    %2404 = vmatpush1.bf16.msra.mxu0 %v1591
    %2405 = vmatprep.subr.bf16.mxu0 %v1586
    %2406 = vmatpush1.bf16.msra.mxu0 %v1585
    %2407 = vmatprep.subr.bf16.mxu0 %v1580
    %2408 = vmatpush1.bf16.msra.mxu0 %v1579
    %2409 = vmatprep.subr.bf16.mxu0 %v1574
    %2410 = vmatpush1.bf16.msra.mxu0 %v1573
    %2411 = vmatprep.subr.bf16.mxu0 %v1568
    %2412 = vmatpush1.bf16.msra.mxu0 %v1567
    %2413 = vmatprep.subr.bf16.mxu0 %v1658
    %2414 = vmatpush2.bf16.msra.mxu0 %v1657
    %2415 = vmatprep.subr.bf16.mxu0 %v1652
    %2416 = vmatpush2.bf16.msra.mxu0 %v1651
    %2417 = vmatprep.subr.bf16.mxu0 %v1646
    %2418 = vmatpush2.bf16.msra.mxu0 %v1645
    %2419 = vmatprep.subr.bf16.mxu0 %v1640
    %2420 = vmatpush2.bf16.msra.mxu0 %v1639
    %2421 = vmatprep.subr.bf16.mxu0 %v1634
    %2422 = vmatpush2.bf16.msra.mxu0 %v1633
    %2423 = vmatprep.subr.bf16.mxu0 %v1628
    %2424 = vmatpush2.bf16.msra.mxu0 %v1627
    %2425 = vmatprep.subr.bf16.mxu0 %v1622
    %2426 = vmatpush2.bf16.msra.mxu0 %v1621
    %2427 = vmatprep.subr.bf16.mxu0 %v1616
    %2428 = vmatpush2.bf16.msra.mxu0 %v1615
    %2429 = vmatprep.mubr.bf16.mxu0 %v374
    %2430 = vmatmul.mubr.bf16.gmra.mxu0 %v373
    %v2431 = vpop.f32.mrf.mxu0
    %v2432 = vadd.f32 %v688, %v2431
    %v2433 = vpop.f32.mrf.mxu0
    %v2434 = vadd.f32 %v692, %v2433
    %v2435 = vpop.f32.mrf.mxu0
    %v2436 = vadd.f32 %v688, %v2435
    %v2437 = vpop.f32.mrf.mxu0
    %v2438 = vadd.f32 %v692, %v2437
    %2439 = vdwg.mxu0
    %2440 = vmatprep.subr.bf16.mxu0 %v1706
    %2441 = vmatpush1.bf16.msra.mxu0 %v1705
    %2442 = vmatprep.subr.bf16.mxu0 %v1700
    %2443 = vmatpush1.bf16.msra.mxu0 %v1699
    %2444 = vmatprep.subr.bf16.mxu0 %v1694
    %2445 = vmatpush1.bf16.msra.mxu0 %v1693
    %2446 = vmatprep.subr.bf16.mxu0 %v1688
    %2447 = vmatpush1.bf16.msra.mxu0 %v1687
    %2448 = vmatprep.subr.bf16.mxu0 %v1682
    %2449 = vmatpush1.bf16.msra.mxu0 %v1681
    %2450 = vmatprep.subr.bf16.mxu0 %v1676
    %2451 = vmatpush1.bf16.msra.mxu0 %v1675
    %2452 = vmatprep.subr.bf16.mxu0 %v1670
    %2453 = vmatpush1.bf16.msra.mxu0 %v1669
    %2454 = vmatprep.subr.bf16.mxu0 %v1664
    %2455 = vmatpush1.bf16.msra.mxu0 %v1663
    %2456 = vmatprep.subr.bf16.mxu0 %v1754
    %2457 = vmatpush2.bf16.msra.mxu0 %v1753
    %2458 = vmatprep.subr.bf16.mxu0 %v1748
    %2459 = vmatpush2.bf16.msra.mxu0 %v1747
    %2460 = vmatprep.subr.bf16.mxu0 %v1742
    %2461 = vmatpush2.bf16.msra.mxu0 %v1741
    %2462 = vmatprep.subr.bf16.mxu0 %v1736
    %2463 = vmatpush2.bf16.msra.mxu0 %v1735
    %2464 = vmatprep.subr.bf16.mxu0 %v1730
    %2465 = vmatpush2.bf16.msra.mxu0 %v1729
    %2466 = vmatprep.subr.bf16.mxu0 %v1724
    %2467 = vmatpush2.bf16.msra.mxu0 %v1723
    %2468 = vmatprep.subr.bf16.mxu0 %v1718
    %2469 = vmatpush2.bf16.msra.mxu0 %v1717
    %2470 = vmatprep.subr.bf16.mxu0 %v1712
    %2471 = vmatpush2.bf16.msra.mxu0 %v1711
    %2472 = vmatprep.mubr.bf16.mxu0 %v376
    %2473 = vmatmul.mubr.bf16.gmra.mxu0 %v375
    %v2474 = vpop.f32.mrf.mxu0
    %v2475 = vadd.f32 %v2432, %v2474
    %v2476 = vpop.f32.mrf.mxu0
    %v2477 = vadd.f32 %v2434, %v2476
    %v2478 = vpop.f32.mrf.mxu0
    %v2479 = vadd.f32 %v2436, %v2478
    %v2480 = vpop.f32.mrf.mxu0
    %v2481 = vadd.f32 %v2438, %v2480
    %2482 = vdwg.mxu0
    %2483 = vmatprep.subr.bf16.mxu0 %v1802
    %2484 = vmatpush1.bf16.msra.mxu0 %v1801
    %2485 = vmatprep.subr.bf16.mxu0 %v1796
    %2486 = vmatpush1.bf16.msra.mxu0 %v1795
    %2487 = vmatprep.subr.bf16.mxu0 %v1790
    %2488 = vmatpush1.bf16.msra.mxu0 %v1789
    %2489 = vmatprep.subr.bf16.mxu0 %v1784
    %2490 = vmatpush1.bf16.msra.mxu0 %v1783
    %2491 = vmatprep.subr.bf16.mxu0 %v1778
    %2492 = vmatpush1.bf16.msra.mxu0 %v1777
    %2493 = vmatprep.subr.bf16.mxu0 %v1772
    %2494 = vmatpush1.bf16.msra.mxu0 %v1771
    %2495 = vmatprep.subr.bf16.mxu0 %v1766
    %2496 = vmatpush1.bf16.msra.mxu0 %v1765
    %2497 = vmatprep.subr.bf16.mxu0 %v1760
    %2498 = vmatpush1.bf16.msra.mxu0 %v1759
    %2499 = vmatprep.subr.bf16.mxu0 %v1850
    %2500 = vmatpush2.bf16.msra.mxu0 %v1849
    %2501 = vmatprep.subr.bf16.mxu0 %v1844
    %2502 = vmatpush2.bf16.msra.mxu0 %v1843
    %2503 = vmatprep.subr.bf16.mxu0 %v1838
    %2504 = vmatpush2.bf16.msra.mxu0 %v1837
    %2505 = vmatprep.subr.bf16.mxu0 %v1832
    %2506 = vmatpush2.bf16.msra.mxu0 %v1831
    %2507 = vmatprep.subr.bf16.mxu0 %v1826
    %2508 = vmatpush2.bf16.msra.mxu0 %v1825
    %2509 = vmatprep.subr.bf16.mxu0 %v1820
    %2510 = vmatpush2.bf16.msra.mxu0 %v1819
    %2511 = vmatprep.subr.bf16.mxu0 %v1814
    %2512 = vmatpush2.bf16.msra.mxu0 %v1813
    %2513 = vmatprep.subr.bf16.mxu0 %v1808
    %2514 = vmatpush2.bf16.msra.mxu0 %v1807
    %2515 = vmatprep.mubr.bf16.mxu0 %v378
    %2516 = vmatmul.mubr.bf16.gmra.mxu0 %v377
    %v2517 = vpop.f32.mrf.mxu0
    %v2518 = vadd.f32 %v2475, %v2517
    %v2519 = vpop.f32.mrf.mxu0
    %v2520 = vadd.f32 %v2477, %v2519
    %v2521 = vpop.f32.mrf.mxu0
    %v2522 = vadd.f32 %v2479, %v2521
    %v2523 = vpop.f32.mrf.mxu0
    %v2524 = vadd.f32 %v2481, %v2523
    %2525 = vdwg.mxu0
    %v2526 = vmax.f32 %v2260, 0.0
    %v2527 = vmax.f32 %v2262, 0.0
    %v2528 = vmax.f32 %v2389, 0.0
    %v2529 = vmax.f32 %v2391, 0.0
    %v2530 = vmax.f32 %v2518, 0.0
    %v2531 = vmax.f32 %v2520, 0.0
    %v2532 = vmax.f32 %v2264, 0.0
    %v2533 = vmax.f32 %v2266, 0.0
    %v2534 = vmax.f32 %v2393, 0.0
    %v2535 = vmax.f32 %v2395, 0.0
    %v2536 = vmax.f32 %v2522, 0.0
    %v2537 = vmax.f32 %v2524, 0.0
    %v2538 = vpack.c.bf16 %v2532, %v2526
    %v2539 = vpack.c.bf16 %v2533, %v2527
    %v2540 = vpack.c.bf16 %v2534, %v2528
    %v2541 = vpack.c.bf16 %v2535, %v2529
    %v2542 = vpack.c.bf16 %v2536, %v2530
    %v2543 = vpack.c.bf16 %v2537, %v2531
    %v2544 = vld [vmem:[#allocation7] sm:$0xff]
    %v2545 = vld [vmem:[#allocation7 + $0x8] sm:$0xff]
    %v2546 = vld [vmem:[#allocation7 + $0x10] sm:$0xff]
    %v2547 = vld [vmem:[#allocation7 + $0x18] sm:$0xff]
    %v2548 = vld [vmem:[#allocation7 + $0x20] sm:$0xff]
    %v2549 = vld [vmem:[#allocation7 + $0x28] sm:$0xff]
    %v2550 = vld [vmem:[#allocation7 + $0x30] sm:$0xff]
    %v2551 = vld [vmem:[#allocation7 + $0x38] sm:$0xff]
    %v2552 = vld [vmem:[#allocation7 + $0x40] sm:$0xff]
    %v2553 = vld [vmem:[#allocation7 + $0x48] sm:$0xff]
    %v2554 = vld [vmem:[#allocation7 + $0x50] sm:$0xff]
    %v2555 = vld [vmem:[#allocation7 + $0x58] sm:$0xff]
    %v2556 = vld [vmem:[#allocation7 + $0x60] sm:$0xff]
    %v2557 = vld [vmem:[#allocation7 + $0x68] sm:$0xff]
    %v2558 = vld [vmem:[#allocation7 + $0x70] sm:$0xff]
    %v2559 = vld [vmem:[#allocation7 + $0x78] sm:$0xff]
    %v2560 = vld [vmem:[#allocation7 + $0x80] sm:$0xff]
    %v2561 = vld [vmem:[#allocation7 + $0x88] sm:$0xff]
    %v2562 = vld [vmem:[#allocation7 + $0x90] sm:$0xff]
    %v2563 = vld [vmem:[#allocation7 + $0x98] sm:$0xff]
    %v2564 = vld [vmem:[#allocation7 + $0xa0] sm:$0xff]
    %v2565 = vld [vmem:[#allocation7 + $0xa8] sm:$0xff]
    %v2566 = vld [vmem:[#allocation7 + $0xb0] sm:$0xff]
    %v2567 = vld [vmem:[#allocation7 + $0xb8] sm:$0xff]
    %v2568 = vld [vmem:[#allocation7 + $0xc0] sm:$0xff]
    %v2569 = vld [vmem:[#allocation7 + $0xc8] sm:$0xff]
    %v2570 = vld [vmem:[#allocation7 + $0xd0] sm:$0xff]
    %v2571 = vld [vmem:[#allocation7 + $0xd8] sm:$0xff]
    %v2572 = vld [vmem:[#allocation7 + $0xe0] sm:$0xff]
    %v2573 = vld [vmem:[#allocation7 + $0xe8] sm:$0xff]
    %v2574 = vld [vmem:[#allocation7 + $0xf0] sm:$0xff]
    %v2575 = vld [vmem:[#allocation7 + $0xf8] sm:$0xff]
    %v2576 = vld [vmem:[#allocation7 + $0x100] sm:$0xff]
    %v2577 = vld [vmem:[#allocation7 + $0x108] sm:$0xff]
    %v2578 = vld [vmem:[#allocation7 + $0x110] sm:$0xff]
    %v2579 = vld [vmem:[#allocation7 + $0x118] sm:$0xff]
    %v2580 = vld [vmem:[#allocation7 + $0x120] sm:$0xff]
    %v2581 = vld [vmem:[#allocation7 + $0x128] sm:$0xff]
    %v2582 = vld [vmem:[#allocation7 + $0x130] sm:$0xff]
    %v2583 = vld [vmem:[#allocation7 + $0x138] sm:$0xff]
    %v2584 = vld [vmem:[#allocation7 + $0x140] sm:$0xff]
    %v2585 = vld [vmem:[#allocation7 + $0x148] sm:$0xff]
    %v2586 = vld [vmem:[#allocation7 + $0x150] sm:$0xff]
    %v2587 = vld [vmem:[#allocation7 + $0x158] sm:$0xff]
    %v2588 = vld [vmem:[#allocation7 + $0x160] sm:$0xff]
    %v2589 = vld [vmem:[#allocation7 + $0x168] sm:$0xff]
    %v2590 = vld [vmem:[#allocation7 + $0x170] sm:$0xff]
    %v2591 = vld [vmem:[#allocation7 + $0x178] sm:$0xff]
    %v2592 = vld [vmem:[#allocation7 + $0x180] sm:$0xff]
    %v2593 = vld [vmem:[#allocation7 + $0x188] sm:$0xff]
    %v2594 = vld [vmem:[#allocation7 + $0x190] sm:$0xff]
    %v2595 = vld [vmem:[#allocation7 + $0x198] sm:$0xff]
    %v2596 = vld [vmem:[#allocation7 + $0x1a0] sm:$0xff]
    %v2597 = vld [vmem:[#allocation7 + $0x1a8] sm:$0xff]
    %v2598 = vld [vmem:[#allocation7 + $0x1b0] sm:$0xff]
    %v2599 = vld [vmem:[#allocation7 + $0x1b8] sm:$0xff]
    %v2600 = vld [vmem:[#allocation7 + $0x1c0] sm:$0xff]
    %v2601 = vld [vmem:[#allocation7 + $0x1c8] sm:$0xff]
    %v2602 = vld [vmem:[#allocation7 + $0x1d0] sm:$0xff]
    %v2603 = vld [vmem:[#allocation7 + $0x1d8] sm:$0xff]
    %v2604 = vld [vmem:[#allocation7 + $0x1e0] sm:$0xff]
    %v2605 = vld [vmem:[#allocation7 + $0x1e8] sm:$0xff]
    %v2606 = vld [vmem:[#allocation7 + $0x1f0] sm:$0xff]
    %v2607 = vld [vmem:[#allocation7 + $0x1f8] sm:$0xff]
    %v2608 = vld [vmem:[#allocation7 + $0x200] sm:$0xff]
    %v2609 = vld [vmem:[#allocation7 + $0x208] sm:$0xff]
    %v2610 = vld [vmem:[#allocation7 + $0x210] sm:$0xff]
    %v2611 = vld [vmem:[#allocation7 + $0x218] sm:$0xff]
    %v2612 = vld [vmem:[#allocation7 + $0x220] sm:$0xff]
    %v2613 = vld [vmem:[#allocation7 + $0x228] sm:$0xff]
    %v2614 = vld [vmem:[#allocation7 + $0x230] sm:$0xff]
    %v2615 = vld [vmem:[#allocation7 + $0x238] sm:$0xff]
    %v2616 = vld [vmem:[#allocation7 + $0x240] sm:$0xff]
    %v2617 = vld [vmem:[#allocation7 + $0x248] sm:$0xff]
    %v2618 = vld [vmem:[#allocation7 + $0x250] sm:$0xff]
    %v2619 = vld [vmem:[#allocation7 + $0x258] sm:$0xff]
    %v2620 = vld [vmem:[#allocation7 + $0x260] sm:$0xff]
    %v2621 = vld [vmem:[#allocation7 + $0x268] sm:$0xff]
    %v2622 = vld [vmem:[#allocation7 + $0x270] sm:$0xff]
    %v2623 = vld [vmem:[#allocation7 + $0x278] sm:$0xff]
    %v2624 = vld [vmem:[#allocation7 + $0x280] sm:$0xff]
    %v2625 = vld [vmem:[#allocation7 + $0x288] sm:$0xff]
    %v2626 = vld [vmem:[#allocation7 + $0x290] sm:$0xff]
    %v2627 = vld [vmem:[#allocation7 + $0x298] sm:$0xff]
    %v2628 = vld [vmem:[#allocation7 + $0x2a0] sm:$0xff]
    %v2629 = vld [vmem:[#allocation7 + $0x2a8] sm:$0xff]
    %v2630 = vld [vmem:[#allocation7 + $0x2b0] sm:$0xff]
    %v2631 = vld [vmem:[#allocation7 + $0x2b8] sm:$0xff]
    %v2632 = vld [vmem:[#allocation7 + $0x2c0] sm:$0xff]
    %v2633 = vld [vmem:[#allocation7 + $0x2c8] sm:$0xff]
    %v2634 = vld [vmem:[#allocation7 + $0x2d0] sm:$0xff]
    %v2635 = vld [vmem:[#allocation7 + $0x2d8] sm:$0xff]
    %v2636 = vld [vmem:[#allocation7 + $0x2e0] sm:$0xff]
    %v2637 = vld [vmem:[#allocation7 + $0x2e8] sm:$0xff]
    %v2638 = vld [vmem:[#allocation7 + $0x2f0] sm:$0xff]
    %v2639 = vld [vmem:[#allocation7 + $0x2f8] sm:$0xff]
    %v2640 = vld [vmem:[#allocation7 + $0x300] sm:$0xff]
    %v2641 = vld [vmem:[#allocation7 + $0x308] sm:$0xff]
    %v2642 = vld [vmem:[#allocation7 + $0x310] sm:$0xff]
    %v2643 = vld [vmem:[#allocation7 + $0x318] sm:$0xff]
    %v2644 = vld [vmem:[#allocation7 + $0x320] sm:$0xff]
    %v2645 = vld [vmem:[#allocation7 + $0x328] sm:$0xff]
    %v2646 = vld [vmem:[#allocation7 + $0x330] sm:$0xff]
    %v2647 = vld [vmem:[#allocation7 + $0x338] sm:$0xff]
    %v2648 = vld [vmem:[#allocation7 + $0x340] sm:$0xff]
    %v2649 = vld [vmem:[#allocation7 + $0x348] sm:$0xff]
    %v2650 = vld [vmem:[#allocation7 + $0x350] sm:$0xff]
    %v2651 = vld [vmem:[#allocation7 + $0x358] sm:$0xff]
    %v2652 = vld [vmem:[#allocation7 + $0x360] sm:$0xff]
    %v2653 = vld [vmem:[#allocation7 + $0x368] sm:$0xff]
    %v2654 = vld [vmem:[#allocation7 + $0x370] sm:$0xff]
    %v2655 = vld [vmem:[#allocation7 + $0x378] sm:$0xff]
    %v2656 = vld [vmem:[#allocation7 + $0x380] sm:$0xff]
    %v2657 = vld [vmem:[#allocation7 + $0x388] sm:$0xff]
    %v2658 = vld [vmem:[#allocation7 + $0x390] sm:$0xff]
    %v2659 = vld [vmem:[#allocation7 + $0x398] sm:$0xff]
    %v2660 = vld [vmem:[#allocation7 + $0x3a0] sm:$0xff]
    %v2661 = vld [vmem:[#allocation7 + $0x3a8] sm:$0xff]
    %v2662 = vld [vmem:[#allocation7 + $0x3b0] sm:$0xff]
    %v2663 = vld [vmem:[#allocation7 + $0x3b8] sm:$0xff]
    %v2664 = vld [vmem:[#allocation7 + $0x3c0] sm:$0xff]
    %v2665 = vld [vmem:[#allocation7 + $0x3c8] sm:$0xff]
    %v2666 = vld [vmem:[#allocation7 + $0x3d0] sm:$0xff]
    %v2667 = vld [vmem:[#allocation7 + $0x3d8] sm:$0xff]
    %v2668 = vld [vmem:[#allocation7 + $0x3e0] sm:$0xff]
    %v2669 = vld [vmem:[#allocation7 + $0x3e8] sm:$0xff]
    %v2670 = vld [vmem:[#allocation7 + $0x3f0] sm:$0xff]
    %v2671 = vld [vmem:[#allocation7 + $0x3f8] sm:$0xff]
    %v2672 = vld [vmem:[#allocation7 + $0x400] sm:$0xff]
    %v2673 = vld [vmem:[#allocation7 + $0x408] sm:$0xff]
    %v2674 = vld [vmem:[#allocation7 + $0x410] sm:$0xff]
    %v2675 = vld [vmem:[#allocation7 + $0x418] sm:$0xff]
    %v2676 = vld [vmem:[#allocation7 + $0x420] sm:$0xff]
    %v2677 = vld [vmem:[#allocation7 + $0x428] sm:$0xff]
    %v2678 = vld [vmem:[#allocation7 + $0x430] sm:$0xff]
    %v2679 = vld [vmem:[#allocation7 + $0x438] sm:$0xff]
    %v2680 = vld [vmem:[#allocation7 + $0x440] sm:$0xff]
    %v2681 = vld [vmem:[#allocation7 + $0x448] sm:$0xff]
    %v2682 = vld [vmem:[#allocation7 + $0x450] sm:$0xff]
    %v2683 = vld [vmem:[#allocation7 + $0x458] sm:$0xff]
    %v2684 = vld [vmem:[#allocation7 + $0x460] sm:$0xff]
    %v2685 = vld [vmem:[#allocation7 + $0x468] sm:$0xff]
    %v2686 = vld [vmem:[#allocation7 + $0x470] sm:$0xff]
    %v2687 = vld [vmem:[#allocation7 + $0x478] sm:$0xff]
    %v2688 = vld [vmem:[#allocation7 + $0x480] sm:$0xff]
    %v2689 = vld [vmem:[#allocation7 + $0x488] sm:$0xff]
    %v2690 = vld [vmem:[#allocation7 + $0x490] sm:$0xff]
    %v2691 = vld [vmem:[#allocation7 + $0x498] sm:$0xff]
    %v2692 = vld [vmem:[#allocation7 + $0x4a0] sm:$0xff]
    %v2693 = vld [vmem:[#allocation7 + $0x4a8] sm:$0xff]
    %v2694 = vld [vmem:[#allocation7 + $0x4b0] sm:$0xff]
    %v2695 = vld [vmem:[#allocation7 + $0x4b8] sm:$0xff]
    %v2696 = vld [vmem:[#allocation7 + $0x4c0] sm:$0xff]
    %v2697 = vld [vmem:[#allocation7 + $0x4c8] sm:$0xff]
    %v2698 = vld [vmem:[#allocation7 + $0x4d0] sm:$0xff]
    %v2699 = vld [vmem:[#allocation7 + $0x4d8] sm:$0xff]
    %v2700 = vld [vmem:[#allocation7 + $0x4e0] sm:$0xff]
    %v2701 = vld [vmem:[#allocation7 + $0x4e8] sm:$0xff]
    %v2702 = vld [vmem:[#allocation7 + $0x4f0] sm:$0xff]
    %v2703 = vld [vmem:[#allocation7 + $0x4f8] sm:$0xff]
    %v2704 = vld [vmem:[#allocation7 + $0x500] sm:$0xff]
    %v2705 = vld [vmem:[#allocation7 + $0x508] sm:$0xff]
    %v2706 = vld [vmem:[#allocation7 + $0x510] sm:$0xff]
    %v2707 = vld [vmem:[#allocation7 + $0x518] sm:$0xff]
    %v2708 = vld [vmem:[#allocation7 + $0x520] sm:$0xff]
    %v2709 = vld [vmem:[#allocation7 + $0x528] sm:$0xff]
    %v2710 = vld [vmem:[#allocation7 + $0x530] sm:$0xff]
    %v2711 = vld [vmem:[#allocation7 + $0x538] sm:$0xff]
    %v2712 = vld [vmem:[#allocation7 + $0x540] sm:$0xff]
    %v2713 = vld [vmem:[#allocation7 + $0x548] sm:$0xff]
    %v2714 = vld [vmem:[#allocation7 + $0x550] sm:$0xff]
    %v2715 = vld [vmem:[#allocation7 + $0x558] sm:$0xff]
    %v2716 = vld [vmem:[#allocation7 + $0x560] sm:$0xff]
    %v2717 = vld [vmem:[#allocation7 + $0x568] sm:$0xff]
    %v2718 = vld [vmem:[#allocation7 + $0x570] sm:$0xff]
    %v2719 = vld [vmem:[#allocation7 + $0x578] sm:$0xff]
    %v2720 = vld [vmem:[#allocation7 + $0x580] sm:$0xff]
    %v2721 = vld [vmem:[#allocation7 + $0x588] sm:$0xff]
    %v2722 = vld [vmem:[#allocation7 + $0x590] sm:$0xff]
    %v2723 = vld [vmem:[#allocation7 + $0x598] sm:$0xff]
    %v2724 = vld [vmem:[#allocation7 + $0x5a0] sm:$0xff]
    %v2725 = vld [vmem:[#allocation7 + $0x5a8] sm:$0xff]
    %v2726 = vld [vmem:[#allocation7 + $0x5b0] sm:$0xff]
    %v2727 = vld [vmem:[#allocation7 + $0x5b8] sm:$0xff]
    %v2728 = vld [vmem:[#allocation7 + $0x5c0] sm:$0xff]
    %v2729 = vld [vmem:[#allocation7 + $0x5c8] sm:$0xff]
    %v2730 = vld [vmem:[#allocation7 + $0x5d0] sm:$0xff]
    %v2731 = vld [vmem:[#allocation7 + $0x5d8] sm:$0xff]
    %v2732 = vld [vmem:[#allocation7 + $0x5e0] sm:$0xff]
    %v2733 = vld [vmem:[#allocation7 + $0x5e8] sm:$0xff]
    %v2734 = vld [vmem:[#allocation7 + $0x5f0] sm:$0xff]
    %v2735 = vld [vmem:[#allocation7 + $0x5f8] sm:$0xff]
    %v2736 = vld [vmem:[#allocation9] sm:$0xf]
    %v2738 = vlaneseq
    %v2739 = vshrl.u32 %v2738, 7
    %v2740 = vsub.s32 0, %v2739
    %v2741 = vrot.slane %v2736, %v2740
    %v2742 = vlaneseq
    %v2743 = vshrl.u32 %v2742, 7
    %v2744 = vsub.s32 1, %v2743
    %v2745 = vrot.slane %v2736, %v2744
    %v2746 = vlaneseq
    %v2747 = vshrl.u32 %v2746, 7
    %v2748 = vsub.s32 2, %v2747
    %v2749 = vrot.slane %v2736, %v2748
    %v2750 = vlaneseq
    %v2751 = vshrl.u32 %v2750, 7
    %v2752 = vsub.s32 3, %v2751
    %v2753 = vrot.slane %v2736, %v2752
    %v2950 = vunpack.c.l.b16 %v2544
    %v2951 = vunpack.c.h.b16 %v2544
    %v2952 = vunpack.c.l.b16 %v2545
    %v2953 = vunpack.c.h.b16 %v2545
    %v2954 = vunpack.c.l.b16 %v2546
    %v2955 = vunpack.c.h.b16 %v2546
    %v2956 = vunpack.c.l.b16 %v2547
    %v2957 = vunpack.c.h.b16 %v2547
    %v2958 = vunpack.c.l.b16 %v2548
    %v2959 = vunpack.c.h.b16 %v2548
    %v2960 = vunpack.c.l.b16 %v2549
    %v2961 = vunpack.c.h.b16 %v2549
    %v2962 = vunpack.c.l.b16 %v2550
    %v2963 = vunpack.c.h.b16 %v2550
    %v2964 = vunpack.c.l.b16 %v2551
    %v2965 = vunpack.c.h.b16 %v2551
    %v2966 = vunpack.c.l.b16 %v2552
    %v2967 = vunpack.c.h.b16 %v2552
    %v2968 = vunpack.c.l.b16 %v2553
    %v2969 = vunpack.c.h.b16 %v2553
    %v2970 = vunpack.c.l.b16 %v2554
    %v2971 = vunpack.c.h.b16 %v2554
    %v2972 = vunpack.c.l.b16 %v2555
    %v2973 = vunpack.c.h.b16 %v2555
    %v2974 = vunpack.c.l.b16 %v2556
    %v2975 = vunpack.c.h.b16 %v2556
    %v2976 = vunpack.c.l.b16 %v2557
    %v2977 = vunpack.c.h.b16 %v2557
    %v2978 = vunpack.c.l.b16 %v2558
    %v2979 = vunpack.c.h.b16 %v2558
    %v2980 = vunpack.c.l.b16 %v2559
    %v2981 = vunpack.c.h.b16 %v2559
    %v2982 = vunpack.c.l.b16 %v2560
    %v2983 = vunpack.c.h.b16 %v2560
    %v2984 = vunpack.c.l.b16 %v2561
    %v2985 = vunpack.c.h.b16 %v2561
    %v2986 = vunpack.c.l.b16 %v2562
    %v2987 = vunpack.c.h.b16 %v2562
    %v2988 = vunpack.c.l.b16 %v2563
    %v2989 = vunpack.c.h.b16 %v2563
    %v2990 = vunpack.c.l.b16 %v2564
    %v2991 = vunpack.c.h.b16 %v2564
    %v2992 = vunpack.c.l.b16 %v2565
    %v2993 = vunpack.c.h.b16 %v2565
    %v2994 = vunpack.c.l.b16 %v2566
    %v2995 = vunpack.c.h.b16 %v2566
    %v2996 = vunpack.c.l.b16 %v2567
    %v2997 = vunpack.c.h.b16 %v2567
    %v2998 = vunpack.c.l.b16 %v2568
    %v2999 = vunpack.c.h.b16 %v2568
    %v3000 = vunpack.c.l.b16 %v2569
    %v3001 = vunpack.c.h.b16 %v2569
    %v3002 = vunpack.c.l.b16 %v2570
    %v3003 = vunpack.c.h.b16 %v2570
    %v3004 = vunpack.c.l.b16 %v2571
    %v3005 = vunpack.c.h.b16 %v2571
    %v3006 = vunpack.c.l.b16 %v2572
    %v3007 = vunpack.c.h.b16 %v2572
    %v3008 = vunpack.c.l.b16 %v2573
    %v3009 = vunpack.c.h.b16 %v2573
    %v3010 = vunpack.c.l.b16 %v2574
    %v3011 = vunpack.c.h.b16 %v2574
    %v3012 = vunpack.c.l.b16 %v2575
    %v3013 = vunpack.c.h.b16 %v2575
    %v3014 = vunpack.c.l.b16 %v2576
    %v3015 = vunpack.c.h.b16 %v2576
    %v3016 = vunpack.c.l.b16 %v2577
    %v3017 = vunpack.c.h.b16 %v2577
    %v3018 = vunpack.c.l.b16 %v2578
    %v3019 = vunpack.c.h.b16 %v2578
    %v3020 = vunpack.c.l.b16 %v2579
    %v3021 = vunpack.c.h.b16 %v2579
    %v3022 = vunpack.c.l.b16 %v2580
    %v3023 = vunpack.c.h.b16 %v2580
    %v3024 = vunpack.c.l.b16 %v2581
    %v3025 = vunpack.c.h.b16 %v2581
    %v3026 = vunpack.c.l.b16 %v2582
    %v3027 = vunpack.c.h.b16 %v2582
    %v3028 = vunpack.c.l.b16 %v2583
    %v3029 = vunpack.c.h.b16 %v2583
    %v3030 = vunpack.c.l.b16 %v2584
    %v3031 = vunpack.c.h.b16 %v2584
    %v3032 = vunpack.c.l.b16 %v2585
    %v3033 = vunpack.c.h.b16 %v2585
    %v3034 = vunpack.c.l.b16 %v2586
    %v3035 = vunpack.c.h.b16 %v2586
    %v3036 = vunpack.c.l.b16 %v2587
    %v3037 = vunpack.c.h.b16 %v2587
    %v3038 = vunpack.c.l.b16 %v2588
    %v3039 = vunpack.c.h.b16 %v2588
    %v3040 = vunpack.c.l.b16 %v2589
    %v3041 = vunpack.c.h.b16 %v2589
    %v3042 = vunpack.c.l.b16 %v2590
    %v3043 = vunpack.c.h.b16 %v2590
    %v3044 = vunpack.c.l.b16 %v2591
    %v3045 = vunpack.c.h.b16 %v2591
    %v3046 = vunpack.c.l.b16 %v2592
    %v3047 = vunpack.c.h.b16 %v2592
    %v3048 = vunpack.c.l.b16 %v2593
    %v3049 = vunpack.c.h.b16 %v2593
    %v3050 = vunpack.c.l.b16 %v2594
    %v3051 = vunpack.c.h.b16 %v2594
    %v3052 = vunpack.c.l.b16 %v2595
    %v3053 = vunpack.c.h.b16 %v2595
    %v3054 = vunpack.c.l.b16 %v2596
    %v3055 = vunpack.c.h.b16 %v2596
    %v3056 = vunpack.c.l.b16 %v2597
    %v3057 = vunpack.c.h.b16 %v2597
    %v3058 = vunpack.c.l.b16 %v2598
    %v3059 = vunpack.c.h.b16 %v2598
    %v3060 = vunpack.c.l.b16 %v2599
    %v3061 = vunpack.c.h.b16 %v2599
    %v3062 = vunpack.c.l.b16 %v2600
    %v3063 = vunpack.c.h.b16 %v2600
    %v3064 = vunpack.c.l.b16 %v2601
    %v3065 = vunpack.c.h.b16 %v2601
    %v3066 = vunpack.c.l.b16 %v2602
    %v3067 = vunpack.c.h.b16 %v2602
    %v3068 = vunpack.c.l.b16 %v2603
    %v3069 = vunpack.c.h.b16 %v2603
    %v3070 = vunpack.c.l.b16 %v2604
    %v3071 = vunpack.c.h.b16 %v2604
    %v3072 = vunpack.c.l.b16 %v2605
    %v3073 = vunpack.c.h.b16 %v2605
    %v3074 = vunpack.c.l.b16 %v2606
    %v3075 = vunpack.c.h.b16 %v2606
    %v3076 = vunpack.c.l.b16 %v2607
    %v3077 = vunpack.c.h.b16 %v2607
    %v3078 = vunpack.c.l.b16 %v2608
    %v3079 = vunpack.c.h.b16 %v2608
    %v3080 = vunpack.c.l.b16 %v2609
    %v3081 = vunpack.c.h.b16 %v2609
    %v3082 = vunpack.c.l.b16 %v2610
    %v3083 = vunpack.c.h.b16 %v2610
    %v3084 = vunpack.c.l.b16 %v2611
    %v3085 = vunpack.c.h.b16 %v2611
    %v3086 = vunpack.c.l.b16 %v2612
    %v3087 = vunpack.c.h.b16 %v2612
    %v3088 = vunpack.c.l.b16 %v2613
    %v3089 = vunpack.c.h.b16 %v2613
    %v3090 = vunpack.c.l.b16 %v2614
    %v3091 = vunpack.c.h.b16 %v2614
    %v3092 = vunpack.c.l.b16 %v2615
    %v3093 = vunpack.c.h.b16 %v2615
    %v3094 = vunpack.c.l.b16 %v2616
    %v3095 = vunpack.c.h.b16 %v2616
    %v3096 = vunpack.c.l.b16 %v2617
    %v3097 = vunpack.c.h.b16 %v2617
    %v3098 = vunpack.c.l.b16 %v2618
    %v3099 = vunpack.c.h.b16 %v2618
    %v3100 = vunpack.c.l.b16 %v2619
    %v3101 = vunpack.c.h.b16 %v2619
    %v3102 = vunpack.c.l.b16 %v2620
    %v3103 = vunpack.c.h.b16 %v2620
    %v3104 = vunpack.c.l.b16 %v2621
    %v3105 = vunpack.c.h.b16 %v2621
    %v3106 = vunpack.c.l.b16 %v2622
    %v3107 = vunpack.c.h.b16 %v2622
    %v3108 = vunpack.c.l.b16 %v2623
    %v3109 = vunpack.c.h.b16 %v2623
    %v3110 = vunpack.c.l.b16 %v2624
    %v3111 = vunpack.c.h.b16 %v2624
    %v3112 = vunpack.c.l.b16 %v2625
    %v3113 = vunpack.c.h.b16 %v2625
    %v3114 = vunpack.c.l.b16 %v2626
    %v3115 = vunpack.c.h.b16 %v2626
    %v3116 = vunpack.c.l.b16 %v2627
    %v3117 = vunpack.c.h.b16 %v2627
    %v3118 = vunpack.c.l.b16 %v2628
    %v3119 = vunpack.c.h.b16 %v2628
    %v3120 = vunpack.c.l.b16 %v2629
    %v3121 = vunpack.c.h.b16 %v2629
    %v3122 = vunpack.c.l.b16 %v2630
    %v3123 = vunpack.c.h.b16 %v2630
    %v3124 = vunpack.c.l.b16 %v2631
    %v3125 = vunpack.c.h.b16 %v2631
    %v3126 = vunpack.c.l.b16 %v2632
    %v3127 = vunpack.c.h.b16 %v2632
    %v3128 = vunpack.c.l.b16 %v2633
    %v3129 = vunpack.c.h.b16 %v2633
    %v3130 = vunpack.c.l.b16 %v2634
    %v3131 = vunpack.c.h.b16 %v2634
    %v3132 = vunpack.c.l.b16 %v2635
    %v3133 = vunpack.c.h.b16 %v2635
    %v3134 = vunpack.c.l.b16 %v2636
    %v3135 = vunpack.c.h.b16 %v2636
    %v3136 = vunpack.c.l.b16 %v2637
    %v3137 = vunpack.c.h.b16 %v2637
    %v3138 = vunpack.c.l.b16 %v2638
    %v3139 = vunpack.c.h.b16 %v2638
    %v3140 = vunpack.c.l.b16 %v2639
    %v3141 = vunpack.c.h.b16 %v2639
    %v3142 = vunpack.c.l.b16 %v2640
    %v3143 = vunpack.c.h.b16 %v2640
    %v3144 = vunpack.c.l.b16 %v2641
    %v3145 = vunpack.c.h.b16 %v2641
    %v3146 = vunpack.c.l.b16 %v2642
    %v3147 = vunpack.c.h.b16 %v2642
    %v3148 = vunpack.c.l.b16 %v2643
    %v3149 = vunpack.c.h.b16 %v2643
    %v3150 = vunpack.c.l.b16 %v2644
    %v3151 = vunpack.c.h.b16 %v2644
    %v3152 = vunpack.c.l.b16 %v2645
    %v3153 = vunpack.c.h.b16 %v2645
    %v3154 = vunpack.c.l.b16 %v2646
    %v3155 = vunpack.c.h.b16 %v2646
    %v3156 = vunpack.c.l.b16 %v2647
    %v3157 = vunpack.c.h.b16 %v2647
    %v3158 = vunpack.c.l.b16 %v2648
    %v3159 = vunpack.c.h.b16 %v2648
    %v3160 = vunpack.c.l.b16 %v2649
    %v3161 = vunpack.c.h.b16 %v2649
    %v3162 = vunpack.c.l.b16 %v2650
    %v3163 = vunpack.c.h.b16 %v2650
    %v3164 = vunpack.c.l.b16 %v2651
    %v3165 = vunpack.c.h.b16 %v2651
    %v3166 = vunpack.c.l.b16 %v2652
    %v3167 = vunpack.c.h.b16 %v2652
    %v3168 = vunpack.c.l.b16 %v2653
    %v3169 = vunpack.c.h.b16 %v2653
    %v3170 = vunpack.c.l.b16 %v2654
    %v3171 = vunpack.c.h.b16 %v2654
    %v3172 = vunpack.c.l.b16 %v2655
    %v3173 = vunpack.c.h.b16 %v2655
    %v3174 = vunpack.c.l.b16 %v2656
    %v3175 = vunpack.c.h.b16 %v2656
    %v3176 = vunpack.c.l.b16 %v2657
    %v3177 = vunpack.c.h.b16 %v2657
    %v3178 = vunpack.c.l.b16 %v2658
    %v3179 = vunpack.c.h.b16 %v2658
    %v3180 = vunpack.c.l.b16 %v2659
    %v3181 = vunpack.c.h.b16 %v2659
    %v3182 = vunpack.c.l.b16 %v2660
    %v3183 = vunpack.c.h.b16 %v2660
    %v3184 = vunpack.c.l.b16 %v2661
    %v3185 = vunpack.c.h.b16 %v2661
    %v3186 = vunpack.c.l.b16 %v2662
    %v3187 = vunpack.c.h.b16 %v2662
    %v3188 = vunpack.c.l.b16 %v2663
    %v3189 = vunpack.c.h.b16 %v2663
    %v3190 = vunpack.c.l.b16 %v2664
    %v3191 = vunpack.c.h.b16 %v2664
    %v3192 = vunpack.c.l.b16 %v2665
    %v3193 = vunpack.c.h.b16 %v2665
    %v3194 = vunpack.c.l.b16 %v2666
    %v3195 = vunpack.c.h.b16 %v2666
    %v3196 = vunpack.c.l.b16 %v2667
    %v3197 = vunpack.c.h.b16 %v2667
    %v3198 = vunpack.c.l.b16 %v2668
    %v3199 = vunpack.c.h.b16 %v2668
    %v3200 = vunpack.c.l.b16 %v2669
    %v3201 = vunpack.c.h.b16 %v2669
    %v3202 = vunpack.c.l.b16 %v2670
    %v3203 = vunpack.c.h.b16 %v2670
    %v3204 = vunpack.c.l.b16 %v2671
    %v3205 = vunpack.c.h.b16 %v2671
    %v3206 = vunpack.c.l.b16 %v2672
    %v3207 = vunpack.c.h.b16 %v2672
    %v3208 = vunpack.c.l.b16 %v2673
    %v3209 = vunpack.c.h.b16 %v2673
    %v3210 = vunpack.c.l.b16 %v2674
    %v3211 = vunpack.c.h.b16 %v2674
    %v3212 = vunpack.c.l.b16 %v2675
    %v3213 = vunpack.c.h.b16 %v2675
    %v3214 = vunpack.c.l.b16 %v2676
    %v3215 = vunpack.c.h.b16 %v2676
    %v3216 = vunpack.c.l.b16 %v2677
    %v3217 = vunpack.c.h.b16 %v2677
    %v3218 = vunpack.c.l.b16 %v2678
    %v3219 = vunpack.c.h.b16 %v2678
    %v3220 = vunpack.c.l.b16 %v2679
    %v3221 = vunpack.c.h.b16 %v2679
    %v3222 = vunpack.c.l.b16 %v2680
    %v3223 = vunpack.c.h.b16 %v2680
    %v3224 = vunpack.c.l.b16 %v2681
    %v3225 = vunpack.c.h.b16 %v2681
    %v3226 = vunpack.c.l.b16 %v2682
    %v3227 = vunpack.c.h.b16 %v2682
    %v3228 = vunpack.c.l.b16 %v2683
    %v3229 = vunpack.c.h.b16 %v2683
    %v3230 = vunpack.c.l.b16 %v2684
    %v3231 = vunpack.c.h.b16 %v2684
    %v3232 = vunpack.c.l.b16 %v2685
    %v3233 = vunpack.c.h.b16 %v2685
    %v3234 = vunpack.c.l.b16 %v2686
    %v3235 = vunpack.c.h.b16 %v2686
    %v3236 = vunpack.c.l.b16 %v2687
    %v3237 = vunpack.c.h.b16 %v2687
    %v3238 = vunpack.c.l.b16 %v2688
    %v3239 = vunpack.c.h.b16 %v2688
    %v3240 = vunpack.c.l.b16 %v2689
    %v3241 = vunpack.c.h.b16 %v2689
    %v3242 = vunpack.c.l.b16 %v2690
    %v3243 = vunpack.c.h.b16 %v2690
    %v3244 = vunpack.c.l.b16 %v2691
    %v3245 = vunpack.c.h.b16 %v2691
    %v3246 = vunpack.c.l.b16 %v2692
    %v3247 = vunpack.c.h.b16 %v2692
    %v3248 = vunpack.c.l.b16 %v2693
    %v3249 = vunpack.c.h.b16 %v2693
    %v3250 = vunpack.c.l.b16 %v2694
    %v3251 = vunpack.c.h.b16 %v2694
    %v3252 = vunpack.c.l.b16 %v2695
    %v3253 = vunpack.c.h.b16 %v2695
    %v3254 = vunpack.c.l.b16 %v2696
    %v3255 = vunpack.c.h.b16 %v2696
    %v3256 = vunpack.c.l.b16 %v2697
    %v3257 = vunpack.c.h.b16 %v2697
    %v3258 = vunpack.c.l.b16 %v2698
    %v3259 = vunpack.c.h.b16 %v2698
    %v3260 = vunpack.c.l.b16 %v2699
    %v3261 = vunpack.c.h.b16 %v2699
    %v3262 = vunpack.c.l.b16 %v2700
    %v3263 = vunpack.c.h.b16 %v2700
    %v3264 = vunpack.c.l.b16 %v2701
    %v3265 = vunpack.c.h.b16 %v2701
    %v3266 = vunpack.c.l.b16 %v2702
    %v3267 = vunpack.c.h.b16 %v2702
    %v3268 = vunpack.c.l.b16 %v2703
    %v3269 = vunpack.c.h.b16 %v2703
    %v3270 = vunpack.c.l.b16 %v2704
    %v3271 = vunpack.c.h.b16 %v2704
    %v3272 = vunpack.c.l.b16 %v2705
    %v3273 = vunpack.c.h.b16 %v2705
    %v3274 = vunpack.c.l.b16 %v2706
    %v3275 = vunpack.c.h.b16 %v2706
    %v3276 = vunpack.c.l.b16 %v2707
    %v3277 = vunpack.c.h.b16 %v2707
    %v3278 = vunpack.c.l.b16 %v2708
    %v3279 = vunpack.c.h.b16 %v2708
    %v3280 = vunpack.c.l.b16 %v2709
    %v3281 = vunpack.c.h.b16 %v2709
    %v3282 = vunpack.c.l.b16 %v2710
    %v3283 = vunpack.c.h.b16 %v2710
    %v3284 = vunpack.c.l.b16 %v2711
    %v3285 = vunpack.c.h.b16 %v2711
    %v3286 = vunpack.c.l.b16 %v2712
    %v3287 = vunpack.c.h.b16 %v2712
    %v3288 = vunpack.c.l.b16 %v2713
    %v3289 = vunpack.c.h.b16 %v2713
    %v3290 = vunpack.c.l.b16 %v2714
    %v3291 = vunpack.c.h.b16 %v2714
    %v3292 = vunpack.c.l.b16 %v2715
    %v3293 = vunpack.c.h.b16 %v2715
    %v3294 = vunpack.c.l.b16 %v2716
    %v3295 = vunpack.c.h.b16 %v2716
    %v3296 = vunpack.c.l.b16 %v2717
    %v3297 = vunpack.c.h.b16 %v2717
    %v3298 = vunpack.c.l.b16 %v2718
    %v3299 = vunpack.c.h.b16 %v2718
    %v3300 = vunpack.c.l.b16 %v2719
    %v3301 = vunpack.c.h.b16 %v2719
    %v3302 = vunpack.c.l.b16 %v2720
    %v3303 = vunpack.c.h.b16 %v2720
    %v3304 = vunpack.c.l.b16 %v2721
    %v3305 = vunpack.c.h.b16 %v2721
    %v3306 = vunpack.c.l.b16 %v2722
    %v3307 = vunpack.c.h.b16 %v2722
    %v3308 = vunpack.c.l.b16 %v2723
    %v3309 = vunpack.c.h.b16 %v2723
    %v3310 = vunpack.c.l.b16 %v2724
    %v3311 = vunpack.c.h.b16 %v2724
    %v3312 = vunpack.c.l.b16 %v2725
    %v3313 = vunpack.c.h.b16 %v2725
    %v3314 = vunpack.c.l.b16 %v2726
    %v3315 = vunpack.c.h.b16 %v2726
    %v3316 = vunpack.c.l.b16 %v2727
    %v3317 = vunpack.c.h.b16 %v2727
    %v3318 = vunpack.c.l.b16 %v2728
    %v3319 = vunpack.c.h.b16 %v2728
    %v3320 = vunpack.c.l.b16 %v2729
    %v3321 = vunpack.c.h.b16 %v2729
    %v3322 = vunpack.c.l.b16 %v2730
    %v3323 = vunpack.c.h.b16 %v2730
    %v3324 = vunpack.c.l.b16 %v2731
    %v3325 = vunpack.c.h.b16 %v2731
    %v3326 = vunpack.c.l.b16 %v2732
    %v3327 = vunpack.c.h.b16 %v2732
    %v3328 = vunpack.c.l.b16 %v2733
    %v3329 = vunpack.c.h.b16 %v2733
    %v3330 = vunpack.c.l.b16 %v2734
    %v3331 = vunpack.c.h.b16 %v2734
    %v3332 = vunpack.c.l.b16 %v2735
    %v3333 = vunpack.c.h.b16 %v2735
    %v3334 = vpack.c.b16 %v2954, %v2950
    %v3335 = vpack.c.b16 %v2955, %v2951
    %v3336 = vpack.c.b16 %v2956, %v2952
    %v3337 = vpack.c.b16 %v2957, %v2953
    %v3338 = vpack.c.b16 %v2962, %v2958
    %v3339 = vpack.c.b16 %v2963, %v2959
    %v3340 = vpack.c.b16 %v2964, %v2960
    %v3341 = vpack.c.b16 %v2965, %v2961
    %v3342 = vpack.c.b16 %v2970, %v2966
    %v3343 = vpack.c.b16 %v2971, %v2967
    %v3344 = vpack.c.b16 %v2972, %v2968
    %v3345 = vpack.c.b16 %v2973, %v2969
    %v3346 = vpack.c.b16 %v2978, %v2974
    %v3347 = vpack.c.b16 %v2979, %v2975
    %v3348 = vpack.c.b16 %v2980, %v2976
    %v3349 = vpack.c.b16 %v2981, %v2977
    %v3350 = vpack.c.b16 %v2986, %v2982
    %v3351 = vpack.c.b16 %v2987, %v2983
    %v3352 = vpack.c.b16 %v2988, %v2984
    %v3353 = vpack.c.b16 %v2989, %v2985
    %v3354 = vpack.c.b16 %v2994, %v2990
    %v3355 = vpack.c.b16 %v2995, %v2991
    %v3356 = vpack.c.b16 %v2996, %v2992
    %v3357 = vpack.c.b16 %v2997, %v2993
    %v3358 = vpack.c.b16 %v3002, %v2998
    %v3359 = vpack.c.b16 %v3003, %v2999
    %v3360 = vpack.c.b16 %v3004, %v3000
    %v3361 = vpack.c.b16 %v3005, %v3001
    %v3362 = vpack.c.b16 %v3010, %v3006
    %v3363 = vpack.c.b16 %v3011, %v3007
    %v3364 = vpack.c.b16 %v3012, %v3008
    %v3365 = vpack.c.b16 %v3013, %v3009
    %v3366 = vpack.c.b16 %v3018, %v3014
    %v3367 = vpack.c.b16 %v3019, %v3015
    %v3368 = vpack.c.b16 %v3020, %v3016
    %v3369 = vpack.c.b16 %v3021, %v3017
    %v3370 = vpack.c.b16 %v3026, %v3022
    %v3371 = vpack.c.b16 %v3027, %v3023
    %v3372 = vpack.c.b16 %v3028, %v3024
    %v3373 = vpack.c.b16 %v3029, %v3025
    %v3374 = vpack.c.b16 %v3034, %v3030
    %v3375 = vpack.c.b16 %v3035, %v3031
    %v3376 = vpack.c.b16 %v3036, %v3032
    %v3377 = vpack.c.b16 %v3037, %v3033
    %v3378 = vpack.c.b16 %v3042, %v3038
    %v3379 = vpack.c.b16 %v3043, %v3039
    %v3380 = vpack.c.b16 %v3044, %v3040
    %v3381 = vpack.c.b16 %v3045, %v3041
    %v3382 = vpack.c.b16 %v3050, %v3046
    %v3383 = vpack.c.b16 %v3051, %v3047
    %v3384 = vpack.c.b16 %v3052, %v3048
    %v3385 = vpack.c.b16 %v3053, %v3049
    %v3386 = vpack.c.b16 %v3058, %v3054
    %v3387 = vpack.c.b16 %v3059, %v3055
    %v3388 = vpack.c.b16 %v3060, %v3056
    %v3389 = vpack.c.b16 %v3061, %v3057
    %v3390 = vpack.c.b16 %v3066, %v3062
    %v3391 = vpack.c.b16 %v3067, %v3063
    %v3392 = vpack.c.b16 %v3068, %v3064
    %v3393 = vpack.c.b16 %v3069, %v3065
    %v3394 = vpack.c.b16 %v3074, %v3070
    %v3395 = vpack.c.b16 %v3075, %v3071
    %v3396 = vpack.c.b16 %v3076, %v3072
    %v3397 = vpack.c.b16 %v3077, %v3073
    %v3398 = vpack.c.b16 %v3082, %v3078
    %v3399 = vpack.c.b16 %v3083, %v3079
    %v3400 = vpack.c.b16 %v3084, %v3080
    %v3401 = vpack.c.b16 %v3085, %v3081
    %v3402 = vpack.c.b16 %v3090, %v3086
    %v3403 = vpack.c.b16 %v3091, %v3087
    %v3404 = vpack.c.b16 %v3092, %v3088
    %v3405 = vpack.c.b16 %v3093, %v3089
    %v3406 = vpack.c.b16 %v3098, %v3094
    %v3407 = vpack.c.b16 %v3099, %v3095
    %v3408 = vpack.c.b16 %v3100, %v3096
    %v3409 = vpack.c.b16 %v3101, %v3097
    %v3410 = vpack.c.b16 %v3106, %v3102
    %v3411 = vpack.c.b16 %v3107, %v3103
    %v3412 = vpack.c.b16 %v3108, %v3104
    %v3413 = vpack.c.b16 %v3109, %v3105
    %v3414 = vpack.c.b16 %v3114, %v3110
    %v3415 = vpack.c.b16 %v3115, %v3111
    %v3416 = vpack.c.b16 %v3116, %v3112
    %v3417 = vpack.c.b16 %v3117, %v3113
    %v3418 = vpack.c.b16 %v3122, %v3118
    %v3419 = vpack.c.b16 %v3123, %v3119
    %v3420 = vpack.c.b16 %v3124, %v3120
    %v3421 = vpack.c.b16 %v3125, %v3121
    %v3422 = vpack.c.b16 %v3130, %v3126
    %v3423 = vpack.c.b16 %v3131, %v3127
    %v3424 = vpack.c.b16 %v3132, %v3128
    %v3425 = vpack.c.b16 %v3133, %v3129
    %v3426 = vpack.c.b16 %v3138, %v3134
    %v3427 = vpack.c.b16 %v3139, %v3135
    %v3428 = vpack.c.b16 %v3140, %v3136
    %v3429 = vpack.c.b16 %v3141, %v3137
    %v3430 = vpack.c.b16 %v3146, %v3142
    %v3431 = vpack.c.b16 %v3147, %v3143
    %v3432 = vpack.c.b16 %v3148, %v3144
    %v3433 = vpack.c.b16 %v3149, %v3145
    %v3434 = vpack.c.b16 %v3154, %v3150
    %v3435 = vpack.c.b16 %v3155, %v3151
    %v3436 = vpack.c.b16 %v3156, %v3152
    %v3437 = vpack.c.b16 %v3157, %v3153
    %v3438 = vpack.c.b16 %v3162, %v3158
    %v3439 = vpack.c.b16 %v3163, %v3159
    %v3440 = vpack.c.b16 %v3164, %v3160
    %v3441 = vpack.c.b16 %v3165, %v3161
    %v3442 = vpack.c.b16 %v3170, %v3166
    %v3443 = vpack.c.b16 %v3171, %v3167
    %v3444 = vpack.c.b16 %v3172, %v3168
    %v3445 = vpack.c.b16 %v3173, %v3169
    %v3446 = vpack.c.b16 %v3178, %v3174
    %v3447 = vpack.c.b16 %v3179, %v3175
    %v3448 = vpack.c.b16 %v3180, %v3176
    %v3449 = vpack.c.b16 %v3181, %v3177
    %v3450 = vpack.c.b16 %v3186, %v3182
    %v3451 = vpack.c.b16 %v3187, %v3183
    %v3452 = vpack.c.b16 %v3188, %v3184
    %v3453 = vpack.c.b16 %v3189, %v3185
    %v3454 = vpack.c.b16 %v3194, %v3190
    %v3455 = vpack.c.b16 %v3195, %v3191
    %v3456 = vpack.c.b16 %v3196, %v3192
    %v3457 = vpack.c.b16 %v3197, %v3193
    %v3458 = vpack.c.b16 %v3202, %v3198
    %v3459 = vpack.c.b16 %v3203, %v3199
    %v3460 = vpack.c.b16 %v3204, %v3200
    %v3461 = vpack.c.b16 %v3205, %v3201
    %v3462 = vpack.c.b16 %v3210, %v3206
    %v3463 = vpack.c.b16 %v3211, %v3207
    %v3464 = vpack.c.b16 %v3212, %v3208
    %v3465 = vpack.c.b16 %v3213, %v3209
    %v3466 = vpack.c.b16 %v3218, %v3214
    %v3467 = vpack.c.b16 %v3219, %v3215
    %v3468 = vpack.c.b16 %v3220, %v3216
    %v3469 = vpack.c.b16 %v3221, %v3217
    %v3470 = vpack.c.b16 %v3226, %v3222
    %v3471 = vpack.c.b16 %v3227, %v3223
    %v3472 = vpack.c.b16 %v3228, %v3224
    %v3473 = vpack.c.b16 %v3229, %v3225
    %v3474 = vpack.c.b16 %v3234, %v3230
    %v3475 = vpack.c.b16 %v3235, %v3231
    %v3476 = vpack.c.b16 %v3236, %v3232
    %v3477 = vpack.c.b16 %v3237, %v3233
    %v3478 = vpack.c.b16 %v3242, %v3238
    %v3479 = vpack.c.b16 %v3243, %v3239
    %v3480 = vpack.c.b16 %v3244, %v3240
    %v3481 = vpack.c.b16 %v3245, %v3241
    %v3482 = vpack.c.b16 %v3250, %v3246
    %v3483 = vpack.c.b16 %v3251, %v3247
    %v3484 = vpack.c.b16 %v3252, %v3248
    %v3485 = vpack.c.b16 %v3253, %v3249
    %v3486 = vpack.c.b16 %v3258, %v3254
    %v3487 = vpack.c.b16 %v3259, %v3255
    %v3488 = vpack.c.b16 %v3260, %v3256
    %v3489 = vpack.c.b16 %v3261, %v3257
    %v3490 = vpack.c.b16 %v3266, %v3262
    %v3491 = vpack.c.b16 %v3267, %v3263
    %v3492 = vpack.c.b16 %v3268, %v3264
    %v3493 = vpack.c.b16 %v3269, %v3265
    %v3494 = vpack.c.b16 %v3274, %v3270
    %v3495 = vpack.c.b16 %v3275, %v3271
    %v3496 = vpack.c.b16 %v3276, %v3272
    %v3497 = vpack.c.b16 %v3277, %v3273
    %v3498 = vpack.c.b16 %v3282, %v3278
    %v3499 = vpack.c.b16 %v3283, %v3279
    %v3500 = vpack.c.b16 %v3284, %v3280
    %v3501 = vpack.c.b16 %v3285, %v3281
    %v3502 = vpack.c.b16 %v3290, %v3286
    %v3503 = vpack.c.b16 %v3291, %v3287
    %v3504 = vpack.c.b16 %v3292, %v3288
    %v3505 = vpack.c.b16 %v3293, %v3289
    %v3506 = vpack.c.b16 %v3298, %v3294
    %v3507 = vpack.c.b16 %v3299, %v3295
    %v3508 = vpack.c.b16 %v3300, %v3296
    %v3509 = vpack.c.b16 %v3301, %v3297
    %v3510 = vpack.c.b16 %v3306, %v3302
    %v3511 = vpack.c.b16 %v3307, %v3303
    %v3512 = vpack.c.b16 %v3308, %v3304
    %v3513 = vpack.c.b16 %v3309, %v3305
    %v3514 = vpack.c.b16 %v3314, %v3310
    %v3515 = vpack.c.b16 %v3315, %v3311
    %v3516 = vpack.c.b16 %v3316, %v3312
    %v3517 = vpack.c.b16 %v3317, %v3313
    %v3518 = vpack.c.b16 %v3322, %v3318
    %v3519 = vpack.c.b16 %v3323, %v3319
    %v3520 = vpack.c.b16 %v3324, %v3320
    %v3521 = vpack.c.b16 %v3325, %v3321
    %v3522 = vpack.c.b16 %v3330, %v3326
    %v3523 = vpack.c.b16 %v3331, %v3327
    %v3524 = vpack.c.b16 %v3332, %v3328
    %v3525 = vpack.c.b16 %v3333, %v3329
    %3718 = vmatprep.subr.bf16.mxu0 %v3363
    %3719 = vmatpush1.bf16.msra.mxu0 %v3362
    %3720 = vmatprep.subr.bf16.mxu0 %v3359
    %3721 = vmatpush1.bf16.msra.mxu0 %v3358
    %3722 = vmatprep.subr.bf16.mxu0 %v3355
    %3723 = vmatpush1.bf16.msra.mxu0 %v3354
    %3724 = vmatprep.subr.bf16.mxu0 %v3351
    %3725 = vmatpush1.bf16.msra.mxu0 %v3350
    %3726 = vmatprep.subr.bf16.mxu0 %v3347
    %3727 = vmatpush1.bf16.msra.mxu0 %v3346
    %3728 = vmatprep.subr.bf16.mxu0 %v3343
    %3729 = vmatpush1.bf16.msra.mxu0 %v3342
    %3730 = vmatprep.subr.bf16.mxu0 %v3339
    %3731 = vmatpush1.bf16.msra.mxu0 %v3338
    %3732 = vmatprep.subr.bf16.mxu0 %v3335
    %3733 = vmatpush1.bf16.msra.mxu0 %v3334
    %3734 = vmatprep.subr.bf16.mxu0 %v3395
    %3735 = vmatpush2.bf16.msra.mxu0 %v3394
    %3736 = vmatprep.subr.bf16.mxu0 %v3391
    %3737 = vmatpush2.bf16.msra.mxu0 %v3390
    %3738 = vmatprep.subr.bf16.mxu0 %v3387
    %3739 = vmatpush2.bf16.msra.mxu0 %v3386
    %3740 = vmatprep.subr.bf16.mxu0 %v3383
    %3741 = vmatpush2.bf16.msra.mxu0 %v3382
    %3742 = vmatprep.subr.bf16.mxu0 %v3379
    %3743 = vmatpush2.bf16.msra.mxu0 %v3378
    %3744 = vmatprep.subr.bf16.mxu0 %v3375
    %3745 = vmatpush2.bf16.msra.mxu0 %v3374
    %3746 = vmatprep.subr.bf16.mxu0 %v3371
    %3747 = vmatpush2.bf16.msra.mxu0 %v3370
    %3748 = vmatprep.subr.bf16.mxu0 %v3367
    %3749 = vmatpush2.bf16.msra.mxu0 %v3366
    %3750 = vmatprep.mubr.bf16.mxu0 %v2539
    %3751 = vmatmul.mubr.bf16.gmra.mxu0 %v2538
    %v3752 = vpop.f32.mrf.mxu0
    %v3753 = vadd.f32 %v2741, %v3752
    %v3754 = vpop.f32.mrf.mxu0
    %v3755 = vadd.f32 %v2745, %v3754
    %v3756 = vpop.f32.mrf.mxu0
    %v3757 = vadd.f32 %v2741, %v3756
    %v3758 = vpop.f32.mrf.mxu0
    %v3759 = vadd.f32 %v2745, %v3758
    %3760 = vdwg.mxu0
    %3761 = vmatprep.subr.bf16.mxu0 %v3427
    %3762 = vmatpush1.bf16.msra.mxu0 %v3426
    %3763 = vmatprep.subr.bf16.mxu0 %v3423
    %3764 = vmatpush1.bf16.msra.mxu0 %v3422
    %3765 = vmatprep.subr.bf16.mxu0 %v3419
    %3766 = vmatpush1.bf16.msra.mxu0 %v3418
    %3767 = vmatprep.subr.bf16.mxu0 %v3415
    %3768 = vmatpush1.bf16.msra.mxu0 %v3414
    %3769 = vmatprep.subr.bf16.mxu0 %v3411
    %3770 = vmatpush1.bf16.msra.mxu0 %v3410
    %3771 = vmatprep.subr.bf16.mxu0 %v3407
    %3772 = vmatpush1.bf16.msra.mxu0 %v3406
    %3773 = vmatprep.subr.bf16.mxu0 %v3403
    %3774 = vmatpush1.bf16.msra.mxu0 %v3402
    %3775 = vmatprep.subr.bf16.mxu0 %v3399
    %3776 = vmatpush1.bf16.msra.mxu0 %v3398
    %3777 = vmatprep.subr.bf16.mxu0 %v3459
    %3778 = vmatpush2.bf16.msra.mxu0 %v3458
    %3779 = vmatprep.subr.bf16.mxu0 %v3455
    %3780 = vmatpush2.bf16.msra.mxu0 %v3454
    %3781 = vmatprep.subr.bf16.mxu0 %v3451
    %3782 = vmatpush2.bf16.msra.mxu0 %v3450
    %3783 = vmatprep.subr.bf16.mxu0 %v3447
    %3784 = vmatpush2.bf16.msra.mxu0 %v3446
    %3785 = vmatprep.subr.bf16.mxu0 %v3443
    %3786 = vmatpush2.bf16.msra.mxu0 %v3442
    %3787 = vmatprep.subr.bf16.mxu0 %v3439
    %3788 = vmatpush2.bf16.msra.mxu0 %v3438
    %3789 = vmatprep.subr.bf16.mxu0 %v3435
    %3790 = vmatpush2.bf16.msra.mxu0 %v3434
    %3791 = vmatprep.subr.bf16.mxu0 %v3431
    %3792 = vmatpush2.bf16.msra.mxu0 %v3430
    %3793 = vmatprep.mubr.bf16.mxu0 %v2541
    %3794 = vmatmul.mubr.bf16.gmra.mxu0 %v2540
    %v3795 = vpop.f32.mrf.mxu0
    %v3796 = vadd.f32 %v3753, %v3795
    %v3797 = vpop.f32.mrf.mxu0
    %v3798 = vadd.f32 %v3755, %v3797
    %v3799 = vpop.f32.mrf.mxu0
    %v3800 = vadd.f32 %v3757, %v3799
    %v3801 = vpop.f32.mrf.mxu0
    %v3802 = vadd.f32 %v3759, %v3801
    %3803 = vdwg.mxu0
    %3804 = vmatprep.subr.bf16.mxu0 %v3491
    %3805 = vmatpush1.bf16.msra.mxu0 %v3490
    %3806 = vmatprep.subr.bf16.mxu0 %v3487
    %3807 = vmatpush1.bf16.msra.mxu0 %v3486
    %3808 = vmatprep.subr.bf16.mxu0 %v3483
    %3809 = vmatpush1.bf16.msra.mxu0 %v3482
    %3810 = vmatprep.subr.bf16.mxu0 %v3479
    %3811 = vmatpush1.bf16.msra.mxu0 %v3478
    %3812 = vmatprep.subr.bf16.mxu0 %v3475
    %3813 = vmatpush1.bf16.msra.mxu0 %v3474
    %3814 = vmatprep.subr.bf16.mxu0 %v3471
    %3815 = vmatpush1.bf16.msra.mxu0 %v3470
    %3816 = vmatprep.subr.bf16.mxu0 %v3467
    %3817 = vmatpush1.bf16.msra.mxu0 %v3466
    %3818 = vmatprep.subr.bf16.mxu0 %v3463
    %3819 = vmatpush1.bf16.msra.mxu0 %v3462
    %3820 = vmatprep.subr.bf16.mxu0 %v3523
    %3821 = vmatpush2.bf16.msra.mxu0 %v3522
    %3822 = vmatprep.subr.bf16.mxu0 %v3519
    %3823 = vmatpush2.bf16.msra.mxu0 %v3518
    %3824 = vmatprep.subr.bf16.mxu0 %v3515
    %3825 = vmatpush2.bf16.msra.mxu0 %v3514
    %3826 = vmatprep.subr.bf16.mxu0 %v3511
    %3827 = vmatpush2.bf16.msra.mxu0 %v3510
    %3828 = vmatprep.subr.bf16.mxu0 %v3507
    %3829 = vmatpush2.bf16.msra.mxu0 %v3506
    %3830 = vmatprep.subr.bf16.mxu0 %v3503
    %3831 = vmatpush2.bf16.msra.mxu0 %v3502
    %3832 = vmatprep.subr.bf16.mxu0 %v3499
    %3833 = vmatpush2.bf16.msra.mxu0 %v3498
    %3834 = vmatprep.subr.bf16.mxu0 %v3495
    %3835 = vmatpush2.bf16.msra.mxu0 %v3494
    %3836 = vmatprep.mubr.bf16.mxu0 %v2543
    %3837 = vmatmul.mubr.bf16.gmra.mxu0 %v2542
    %v3838 = vpop.f32.mrf.mxu0
    %v3839 = vadd.f32 %v3796, %v3838
    %v3840 = vpop.f32.mrf.mxu0
    %v3841 = vadd.f32 %v3798, %v3840
    %v3842 = vpop.f32.mrf.mxu0
    %v3843 = vadd.f32 %v3800, %v3842
    %v3844 = vpop.f32.mrf.mxu0
    %v3845 = vadd.f32 %v3802, %v3844
    %3846 = vdwg.mxu0
    %3847 = vmatprep.subr.bf16.mxu0 %v3365
    %3848 = vmatpush1.bf16.msra.mxu0 %v3364
    %3849 = vmatprep.subr.bf16.mxu0 %v3361
    %3850 = vmatpush1.bf16.msra.mxu0 %v3360
    %3851 = vmatprep.subr.bf16.mxu0 %v3357
    %3852 = vmatpush1.bf16.msra.mxu0 %v3356
    %3853 = vmatprep.subr.bf16.mxu0 %v3353
    %3854 = vmatpush1.bf16.msra.mxu0 %v3352
    %3855 = vmatprep.subr.bf16.mxu0 %v3349
    %3856 = vmatpush1.bf16.msra.mxu0 %v3348
    %3857 = vmatprep.subr.bf16.mxu0 %v3345
    %3858 = vmatpush1.bf16.msra.mxu0 %v3344
    %3859 = vmatprep.subr.bf16.mxu0 %v3341
    %3860 = vmatpush1.bf16.msra.mxu0 %v3340
    %3861 = vmatprep.subr.bf16.mxu0 %v3337
    %3862 = vmatpush1.bf16.msra.mxu0 %v3336
    %3863 = vmatprep.subr.bf16.mxu0 %v3397
    %3864 = vmatpush2.bf16.msra.mxu0 %v3396
    %3865 = vmatprep.subr.bf16.mxu0 %v3393
    %3866 = vmatpush2.bf16.msra.mxu0 %v3392
    %3867 = vmatprep.subr.bf16.mxu0 %v3389
    %3868 = vmatpush2.bf16.msra.mxu0 %v3388
    %3869 = vmatprep.subr.bf16.mxu0 %v3385
    %3870 = vmatpush2.bf16.msra.mxu0 %v3384
    %3871 = vmatprep.subr.bf16.mxu0 %v3381
    %3872 = vmatpush2.bf16.msra.mxu0 %v3380
    %3873 = vmatprep.subr.bf16.mxu0 %v3377
    %3874 = vmatpush2.bf16.msra.mxu0 %v3376
    %3875 = vmatprep.subr.bf16.mxu0 %v3373
    %3876 = vmatpush2.bf16.msra.mxu0 %v3372
    %3877 = vmatprep.subr.bf16.mxu0 %v3369
    %3878 = vmatpush2.bf16.msra.mxu0 %v3368
    %3879 = vmatprep.mubr.bf16.mxu0 %v2539
    %3880 = vmatmul.mubr.bf16.gmra.mxu0 %v2538
    %v3881 = vpop.f32.mrf.mxu0
    %v3882 = vadd.f32 %v2749, %v3881
    %v3883 = vpop.f32.mrf.mxu0
    %v3884 = vadd.f32 %v2753, %v3883
    %v3885 = vpop.f32.mrf.mxu0
    %v3886 = vadd.f32 %v2749, %v3885
    %v3887 = vpop.f32.mrf.mxu0
    %v3888 = vadd.f32 %v2753, %v3887
    %3889 = vdwg.mxu0
    %3890 = vmatprep.subr.bf16.mxu0 %v3429
    %3891 = vmatpush1.bf16.msra.mxu0 %v3428
    %3892 = vmatprep.subr.bf16.mxu0 %v3425
    %3893 = vmatpush1.bf16.msra.mxu0 %v3424
    %3894 = vmatprep.subr.bf16.mxu0 %v3421
    %3895 = vmatpush1.bf16.msra.mxu0 %v3420
    %3896 = vmatprep.subr.bf16.mxu0 %v3417
    %3897 = vmatpush1.bf16.msra.mxu0 %v3416
    %3898 = vmatprep.subr.bf16.mxu0 %v3413
    %3899 = vmatpush1.bf16.msra.mxu0 %v3412
    %3900 = vmatprep.subr.bf16.mxu0 %v3409
    %3901 = vmatpush1.bf16.msra.mxu0 %v3408
    %3902 = vmatprep.subr.bf16.mxu0 %v3405
    %3903 = vmatpush1.bf16.msra.mxu0 %v3404
    %3904 = vmatprep.subr.bf16.mxu0 %v3401
    %3905 = vmatpush1.bf16.msra.mxu0 %v3400
    %3906 = vmatprep.subr.bf16.mxu0 %v3461
    %3907 = vmatpush2.bf16.msra.mxu0 %v3460
    %3908 = vmatprep.subr.bf16.mxu0 %v3457
    %3909 = vmatpush2.bf16.msra.mxu0 %v3456
    %3910 = vmatprep.subr.bf16.mxu0 %v3453
    %3911 = vmatpush2.bf16.msra.mxu0 %v3452
    %3912 = vmatprep.subr.bf16.mxu0 %v3449
    %3913 = vmatpush2.bf16.msra.mxu0 %v3448
    %3914 = vmatprep.subr.bf16.mxu0 %v3445
    %3915 = vmatpush2.bf16.msra.mxu0 %v3444
    %3916 = vmatprep.subr.bf16.mxu0 %v3441
    %3917 = vmatpush2.bf16.msra.mxu0 %v3440
    %3918 = vmatprep.subr.bf16.mxu0 %v3437
    %3919 = vmatpush2.bf16.msra.mxu0 %v3436
    %3920 = vmatprep.subr.bf16.mxu0 %v3433
    %3921 = vmatpush2.bf16.msra.mxu0 %v3432
    %3922 = vmatprep.mubr.bf16.mxu0 %v2541
    %3923 = vmatmul.mubr.bf16.gmra.mxu0 %v2540
    %v3924 = vpop.f32.mrf.mxu0
    %v3925 = vadd.f32 %v3882, %v3924
    %v3926 = vpop.f32.mrf.mxu0
    %v3927 = vadd.f32 %v3884, %v3926
    %v3928 = vpop.f32.mrf.mxu0
    %v3929 = vadd.f32 %v3886, %v3928
    %v3930 = vpop.f32.mrf.mxu0
    %v3931 = vadd.f32 %v3888, %v3930
    %3932 = vdwg.mxu0
    %3933 = vmatprep.subr.bf16.mxu0 %v3493
    %3934 = vmatpush1.bf16.msra.mxu0 %v3492
    %3935 = vmatprep.subr.bf16.mxu0 %v3489
    %3936 = vmatpush1.bf16.msra.mxu0 %v3488
    %3937 = vmatprep.subr.bf16.mxu0 %v3485
    %3938 = vmatpush1.bf16.msra.mxu0 %v3484
    %3939 = vmatprep.subr.bf16.mxu0 %v3481
    %3940 = vmatpush1.bf16.msra.mxu0 %v3480
    %3941 = vmatprep.subr.bf16.mxu0 %v3477
    %3942 = vmatpush1.bf16.msra.mxu0 %v3476
    %3943 = vmatprep.subr.bf16.mxu0 %v3473
    %3944 = vmatpush1.bf16.msra.mxu0 %v3472
    %3945 = vmatprep.subr.bf16.mxu0 %v3469
    %3946 = vmatpush1.bf16.msra.mxu0 %v3468
    %3947 = vmatprep.subr.bf16.mxu0 %v3465
    %3948 = vmatpush1.bf16.msra.mxu0 %v3464
    %3949 = vmatprep.subr.bf16.mxu0 %v3525
    %3950 = vmatpush2.bf16.msra.mxu0 %v3524
    %3951 = vmatprep.subr.bf16.mxu0 %v3521
    %3952 = vmatpush2.bf16.msra.mxu0 %v3520
    %3953 = vmatprep.subr.bf16.mxu0 %v3517
    %3954 = vmatpush2.bf16.msra.mxu0 %v3516
    %3955 = vmatprep.subr.bf16.mxu0 %v3513
    %3956 = vmatpush2.bf16.msra.mxu0 %v3512
    %3957 = vmatprep.subr.bf16.mxu0 %v3509
    %3958 = vmatpush2.bf16.msra.mxu0 %v3508
    %3959 = vmatprep.subr.bf16.mxu0 %v3505
    %3960 = vmatpush2.bf16.msra.mxu0 %v3504
    %3961 = vmatprep.subr.bf16.mxu0 %v3501
    %3962 = vmatpush2.bf16.msra.mxu0 %v3500
    %3963 = vmatprep.subr.bf16.mxu0 %v3497
    %3964 = vmatpush2.bf16.msra.mxu0 %v3496
    %3965 = vmatprep.mubr.bf16.mxu0 %v2543
    %3966 = vmatmul.mubr.bf16.gmra.mxu0 %v2542
    %v3967 = vpop.f32.mrf.mxu0
    %v3968 = vadd.f32 %v3925, %v3967
    %v3969 = vpop.f32.mrf.mxu0
    %v3970 = vadd.f32 %v3927, %v3969
    %v3971 = vpop.f32.mrf.mxu0
    %v3972 = vadd.f32 %v3929, %v3971
    %v3973 = vpop.f32.mrf.mxu0
    %v3974 = vadd.f32 %v3931, %v3973
    %3975 = vdwg.mxu0
    %v3976 = vmax.f32 %v3839, 0.0
    %v3977 = vmax.f32 %v3841, 0.0
    %v3978 = vmax.f32 %v3968, 0.0
    %v3979 = vmax.f32 %v3970, 0.0
    %v3980 = vmax.f32 %v3843, 0.0
    %v3981 = vmax.f32 %v3845, 0.0
    %v3982 = vmax.f32 %v3972, 0.0
    %v3983 = vmax.f32 %v3974, 0.0
    %v3984 = vpack.c.bf16 %v3980, %v3976
    %v3985 = vpack.c.bf16 %v3981, %v3977
    %v3986 = vpack.c.bf16 %v3982, %v3978
    %v3987 = vpack.c.bf16 %v3983, %v3979
    %v3988 = vld [vmem:[%s7] sm:$0xf]
    %v3989 = vld [vmem:[%s7 + $0x4] sm:$0xf]
    %v3990 = vld [vmem:[%s7 + $0x8] sm:$0xf]
    %v3991 = vld [vmem:[%s7 + $0xc] sm:$0xf]
    %v3992 = vld [vmem:[%s7 + $0x10] sm:$0xf]
    %v3993 = vld [vmem:[%s7 + $0x14] sm:$0xf]
    %v3994 = vld [vmem:[%s7 + $0x18] sm:$0xf]
    %v3995 = vld [vmem:[%s7 + $0x1c] sm:$0xf]
    %v3996 = vld [vmem:[%s7 + $0x20] sm:$0xf]
    %v3997 = vld [vmem:[%s7 + $0x24] sm:$0xf]
    %v3998 = vld [vmem:[%s7 + $0x28] sm:$0xf]
    %v3999 = vld [vmem:[%s7 + $0x2c] sm:$0xf]
    %v4000 = vld [vmem:[%s7 + $0x30] sm:$0xf]
    %v4001 = vld [vmem:[%s7 + $0x34] sm:$0xf]
    %v4002 = vld [vmem:[%s7 + $0x38] sm:$0xf]
    %v4003 = vld [vmem:[%s7 + $0x3c] sm:$0xf]
    %v4004 = vld [vmem:[%s7 + $0x40] sm:$0xf]
    %v4005 = vld [vmem:[%s7 + $0x44] sm:$0xf]
    %v4006 = vld [vmem:[%s7 + $0x48] sm:$0xf]
    %v4007 = vld [vmem:[%s7 + $0x4c] sm:$0xf]
    %v4008 = vld [vmem:[%s7 + $0x50] sm:$0xf]
    %v4009 = vld [vmem:[%s7 + $0x54] sm:$0xf]
    %v4010 = vld [vmem:[%s7 + $0x58] sm:$0xf]
    %v4011 = vld [vmem:[%s7 + $0x5c] sm:$0xf]
    %v4012 = vld [vmem:[%s7 + $0x60] sm:$0xf]
    %v4013 = vld [vmem:[%s7 + $0x64] sm:$0xf]
    %v4014 = vld [vmem:[%s7 + $0x68] sm:$0xf]
    %v4015 = vld [vmem:[%s7 + $0x6c] sm:$0xf]
    %v4016 = vld [vmem:[%s7 + $0x70] sm:$0xf]
    %v4017 = vld [vmem:[%s7 + $0x74] sm:$0xf]
    %v4018 = vld [vmem:[%s7 + $0x78] sm:$0xf]
    %v4019 = vld [vmem:[%s7 + $0x7c] sm:$0xf]
    %v4020 = vld [vmem:[%s7 + $0x80] sm:$0xf]
    %v4021 = vld [vmem:[%s7 + $0x84] sm:$0xf]
    %v4022 = vld [vmem:[%s7 + $0x88] sm:$0xf]
    %v4023 = vld [vmem:[%s7 + $0x8c] sm:$0xf]
    %v4024 = vld [vmem:[%s7 + $0x90] sm:$0xf]
    %v4025 = vld [vmem:[%s7 + $0x94] sm:$0xf]
    %v4026 = vld [vmem:[%s7 + $0x98] sm:$0xf]
    %v4027 = vld [vmem:[%s7 + $0x9c] sm:$0xf]
    %v4028 = vld [vmem:[%s7 + $0xa0] sm:$0xf]
    %v4029 = vld [vmem:[%s7 + $0xa4] sm:$0xf]
    %v4030 = vld [vmem:[%s7 + $0xa8] sm:$0xf]
    %v4031 = vld [vmem:[%s7 + $0xac] sm:$0xf]
    %v4032 = vld [vmem:[%s7 + $0xb0] sm:$0xf]
    %v4033 = vld [vmem:[%s7 + $0xb4] sm:$0xf]
    %v4034 = vld [vmem:[%s7 + $0xb8] sm:$0xf]
    %v4035 = vld [vmem:[%s7 + $0xbc] sm:$0xf]
    %v4036 = vld [vmem:[%s7 + $0xc0] sm:$0xf]
    %v4037 = vld [vmem:[%s7 + $0xc4] sm:$0xf]
    %v4038 = vld [vmem:[%s7 + $0xc8] sm:$0xf]
    %v4039 = vld [vmem:[%s7 + $0xcc] sm:$0xf]
    %v4040 = vld [vmem:[%s7 + $0xd0] sm:$0xf]
    %v4041 = vld [vmem:[%s7 + $0xd4] sm:$0xf]
    %v4042 = vld [vmem:[%s7 + $0xd8] sm:$0xf]
    %v4043 = vld [vmem:[%s7 + $0xdc] sm:$0xf]
    %v4044 = vld [vmem:[%s7 + $0xe0] sm:$0xf]
    %v4045 = vld [vmem:[%s7 + $0xe4] sm:$0xf]
    %v4046 = vld [vmem:[%s7 + $0xe8] sm:$0xf]
    %v4047 = vld [vmem:[%s7 + $0xec] sm:$0xf]
    %v4048 = vld [vmem:[%s7 + $0xf0] sm:$0xf]
    %v4049 = vld [vmem:[%s7 + $0xf4] sm:$0xf]
    %v4050 = vld [vmem:[%s7 + $0xf8] sm:$0xf]
    %v4051 = vld [vmem:[%s7 + $0xfc] sm:$0xf]
    %v4052 = vld [vmem:[%s8] sm:$0x1]
    %v4054 = vlaneseq
    %v4055 = vshrl.u32 %v4054, 7
    %v4056 = vsub.s32 0, %v4055
    %v4057 = vrot.slane %v4052, %v4056
    %v4123 = vunpack.c.l.b16 %v3988
    %v4124 = vunpack.c.l.b16 %v3989
    %v4125 = vunpack.c.l.b16 %v3990
    %v4126 = vunpack.c.l.b16 %v3991
    %v4127 = vunpack.c.l.b16 %v3992
    %v4128 = vunpack.c.l.b16 %v3993
    %v4129 = vunpack.c.l.b16 %v3994
    %v4130 = vunpack.c.l.b16 %v3995
    %v4131 = vunpack.c.l.b16 %v3996
    %v4132 = vunpack.c.l.b16 %v3997
    %v4133 = vunpack.c.l.b16 %v3998
    %v4134 = vunpack.c.l.b16 %v3999
    %v4135 = vunpack.c.l.b16 %v4000
    %v4136 = vunpack.c.l.b16 %v4001
    %v4137 = vunpack.c.l.b16 %v4002
    %v4138 = vunpack.c.l.b16 %v4003
    %v4139 = vunpack.c.l.b16 %v4004
    %v4140 = vunpack.c.l.b16 %v4005
    %v4141 = vunpack.c.l.b16 %v4006
    %v4142 = vunpack.c.l.b16 %v4007
    %v4143 = vunpack.c.l.b16 %v4008
    %v4144 = vunpack.c.l.b16 %v4009
    %v4145 = vunpack.c.l.b16 %v4010
    %v4146 = vunpack.c.l.b16 %v4011
    %v4147 = vunpack.c.l.b16 %v4012
    %v4148 = vunpack.c.l.b16 %v4013
    %v4149 = vunpack.c.l.b16 %v4014
    %v4150 = vunpack.c.l.b16 %v4015
    %v4151 = vunpack.c.l.b16 %v4016
    %v4152 = vunpack.c.l.b16 %v4017
    %v4153 = vunpack.c.l.b16 %v4018
    %v4154 = vunpack.c.l.b16 %v4019
    %v4155 = vunpack.c.l.b16 %v4020
    %v4156 = vunpack.c.l.b16 %v4021
    %v4157 = vunpack.c.l.b16 %v4022
    %v4158 = vunpack.c.l.b16 %v4023
    %v4159 = vunpack.c.l.b16 %v4024
    %v4160 = vunpack.c.l.b16 %v4025
    %v4161 = vunpack.c.l.b16 %v4026
    %v4162 = vunpack.c.l.b16 %v4027
    %v4163 = vunpack.c.l.b16 %v4028
    %v4164 = vunpack.c.l.b16 %v4029
    %v4165 = vunpack.c.l.b16 %v4030
    %v4166 = vunpack.c.l.b16 %v4031
    %v4167 = vunpack.c.l.b16 %v4032
    %v4168 = vunpack.c.l.b16 %v4033
    %v4169 = vunpack.c.l.b16 %v4034
    %v4170 = vunpack.c.l.b16 %v4035
    %v4171 = vunpack.c.l.b16 %v4036
    %v4172 = vunpack.c.l.b16 %v4037
    %v4173 = vunpack.c.l.b16 %v4038
    %v4174 = vunpack.c.l.b16 %v4039
    %v4175 = vunpack.c.l.b16 %v4040
    %v4176 = vunpack.c.l.b16 %v4041
    %v4177 = vunpack.c.l.b16 %v4042
    %v4178 = vunpack.c.l.b16 %v4043
    %v4179 = vunpack.c.l.b16 %v4044
    %v4180 = vunpack.c.l.b16 %v4045
    %v4181 = vunpack.c.l.b16 %v4046
    %v4182 = vunpack.c.l.b16 %v4047
    %v4183 = vunpack.c.l.b16 %v4048
    %v4184 = vunpack.c.l.b16 %v4049
    %v4185 = vunpack.c.l.b16 %v4050
    %v4186 = vunpack.c.l.b16 %v4051
    %v4187 = vpack.c.b16 %v4124, %v4123
    %v4188 = vpack.c.b16 %v4126, %v4125
    %v4189 = vpack.c.b16 %v4128, %v4127
    %v4190 = vpack.c.b16 %v4130, %v4129
    %v4191 = vpack.c.b16 %v4132, %v4131
    %v4192 = vpack.c.b16 %v4134, %v4133
    %v4193 = vpack.c.b16 %v4136, %v4135
    %v4194 = vpack.c.b16 %v4138, %v4137
    %v4195 = vpack.c.b16 %v4140, %v4139
    %v4196 = vpack.c.b16 %v4142, %v4141
    %v4197 = vpack.c.b16 %v4144, %v4143
    %v4198 = vpack.c.b16 %v4146, %v4145
    %v4199 = vpack.c.b16 %v4148, %v4147
    %v4200 = vpack.c.b16 %v4150, %v4149
    %v4201 = vpack.c.b16 %v4152, %v4151
    %v4202 = vpack.c.b16 %v4154, %v4153
    %v4203 = vpack.c.b16 %v4156, %v4155
    %v4204 = vpack.c.b16 %v4158, %v4157
    %v4205 = vpack.c.b16 %v4160, %v4159
    %v4206 = vpack.c.b16 %v4162, %v4161
    %v4207 = vpack.c.b16 %v4164, %v4163
    %v4208 = vpack.c.b16 %v4166, %v4165
    %v4209 = vpack.c.b16 %v4168, %v4167
    %v4210 = vpack.c.b16 %v4170, %v4169
    %v4211 = vpack.c.b16 %v4172, %v4171
    %v4212 = vpack.c.b16 %v4174, %v4173
    %v4213 = vpack.c.b16 %v4176, %v4175
    %v4214 = vpack.c.b16 %v4178, %v4177
    %v4215 = vpack.c.b16 %v4180, %v4179
    %v4216 = vpack.c.b16 %v4182, %v4181
    %v4217 = vpack.c.b16 %v4184, %v4183
    %v4218 = vpack.c.b16 %v4186, %v4185
    %4251 = vmatprep.subr.bf16.mxu0 0
    %4252 = vmatpush1.bf16.msra.mxu0 %v4194
    %4253 = vmatprep.subr.bf16.mxu0 0
    %4254 = vmatpush1.bf16.msra.mxu0 %v4193
    %4255 = vmatprep.subr.bf16.mxu0 0
    %4256 = vmatpush1.bf16.msra.mxu0 %v4192
    %4257 = vmatprep.subr.bf16.mxu0 0
    %4258 = vmatpush1.bf16.msra.mxu0 %v4191
    %4259 = vmatprep.subr.bf16.mxu0 0
    %4260 = vmatpush1.bf16.msra.mxu0 %v4190
    %4261 = vmatprep.subr.bf16.mxu0 0
    %4262 = vmatpush1.bf16.msra.mxu0 %v4189
    %4263 = vmatprep.subr.bf16.mxu0 0
    %4264 = vmatpush1.bf16.msra.mxu0 %v4188
    %4265 = vmatprep.subr.bf16.mxu0 0
    %4266 = vmatpush1.bf16.msra.mxu0 %v4187
    %4267 = vmatprep.subr.bf16.mxu0 0
    %4268 = vmatpush2.bf16.msra.mxu0 %v4202
    %4269 = vmatprep.subr.bf16.mxu0 0
    %4270 = vmatpush2.bf16.msra.mxu0 %v4201
    %4271 = vmatprep.subr.bf16.mxu0 0
    %4272 = vmatpush2.bf16.msra.mxu0 %v4200
    %4273 = vmatprep.subr.bf16.mxu0 0
    %4274 = vmatpush2.bf16.msra.mxu0 %v4199
    %4275 = vmatprep.subr.bf16.mxu0 0
    %4276 = vmatpush2.bf16.msra.mxu0 %v4198
    %4277 = vmatprep.subr.bf16.mxu0 0
    %4278 = vmatpush2.bf16.msra.mxu0 %v4197
    %4279 = vmatprep.subr.bf16.mxu0 0
    %4280 = vmatpush2.bf16.msra.mxu0 %v4196
    %4281 = vmatprep.subr.bf16.mxu0 0
    %4282 = vmatpush2.bf16.msra.mxu0 %v4195
    %4283 = vmatprep.mubr.bf16.mxu0 %v3985
    %4284 = vmatmul.mubr.bf16.gmra.mxu0 %v3984
    %v4285 = vpop.f32.mrf.mxu0
    %v4286 = vadd.f32 %v4057, %v4285
    %v4287 = vpop.f32.mrf.mxu0
    %v4288 = vpop.f32.mrf.mxu0
    %v4289 = vadd.f32 %v4057, %v4288
    %v4290 = vpop.f32.mrf.mxu0
    %4291 = vdwg.mxu0
    %4292 = vmatprep.subr.bf16.mxu0 0
    %4293 = vmatpush1.bf16.msra.mxu0 %v4210
    %4294 = vmatprep.subr.bf16.mxu0 0
    %4295 = vmatpush1.bf16.msra.mxu0 %v4209
    %4296 = vmatprep.subr.bf16.mxu0 0
    %4297 = vmatpush1.bf16.msra.mxu0 %v4208
    %4298 = vmatprep.subr.bf16.mxu0 0
    %4299 = vmatpush1.bf16.msra.mxu0 %v4207
    %4300 = vmatprep.subr.bf16.mxu0 0
    %4301 = vmatpush1.bf16.msra.mxu0 %v4206
    %4302 = vmatprep.subr.bf16.mxu0 0
    %4303 = vmatpush1.bf16.msra.mxu0 %v4205
    %4304 = vmatprep.subr.bf16.mxu0 0
    %4305 = vmatpush1.bf16.msra.mxu0 %v4204
    %4306 = vmatprep.subr.bf16.mxu0 0
    %4307 = vmatpush1.bf16.msra.mxu0 %v4203
    %4308 = vmatprep.subr.bf16.mxu0 0
    %4309 = vmatpush2.bf16.msra.mxu0 %v4218
    %4310 = vmatprep.subr.bf16.mxu0 0
    %4311 = vmatpush2.bf16.msra.mxu0 %v4217
    %4312 = vmatprep.subr.bf16.mxu0 0
    %4313 = vmatpush2.bf16.msra.mxu0 %v4216
    %4314 = vmatprep.subr.bf16.mxu0 0
    %4315 = vmatpush2.bf16.msra.mxu0 %v4215
    %4316 = vmatprep.subr.bf16.mxu0 0
    %4317 = vmatpush2.bf16.msra.mxu0 %v4214
    %4318 = vmatprep.subr.bf16.mxu0 0
    %4319 = vmatpush2.bf16.msra.mxu0 %v4213
    %4320 = vmatprep.subr.bf16.mxu0 0
    %4321 = vmatpush2.bf16.msra.mxu0 %v4212
    %4322 = vmatprep.subr.bf16.mxu0 0
    %4323 = vmatpush2.bf16.msra.mxu0 %v4211
    %4324 = vmatprep.mubr.bf16.mxu0 %v3987
    %4325 = vmatmul.mubr.bf16.gmra.mxu0 %v3986
    %v4326 = vpop.f32.mrf.mxu0
    %v4327 = vadd.f32 %v4286, %v4326
    %v4328 = vpop.f32.mrf.mxu0
    %v4329 = vpop.f32.mrf.mxu0
    %v4330 = vadd.f32 %v4289, %v4329
    %v4331 = vpop.f32.mrf.mxu0
    %4332 = vdwg.mxu0
    %s4333 = scalar_lea.vmem %s1, 96
    %v4334 = vld [vmem:[%s4333] sm:$0xff]
    %v4335 = vld [vmem:[%s4333 + $0x8] sm:$0xff]
    %v4336 = vld [vmem:[%s4333 + $0x10] sm:$0xff]
    %v4337 = vld [vmem:[%s4333 + $0x18] sm:$0xff]
    %v4338 = vld [vmem:[%s4333 + $0x20] sm:$0xff]
    %v4339 = vld [vmem:[%s4333 + $0x28] sm:$0xff]
    %v4340 = vld [vmem:[%s4333 + $0x30] sm:$0xff]
    %v4341 = vld [vmem:[%s4333 + $0x38] sm:$0xff]
    %v4342 = vld [vmem:[%s4333 + $0x40] sm:$0xff]
    %v4343 = vld [vmem:[%s4333 + $0x48] sm:$0x11]
    %v4344 = vld [vmem:[%s4333 + $0x50] sm:$0x11]
    %v4345 = vld [vmem:[%s4333 + $0x58] sm:$0x11]
    %s4346 = scalar_lea.vmem [#allocation2], 6
    %v4347 = vld [vmem:[%s4346] sm:$0x3f]
    %v4349 = vlaneseq
    %v4350 = vshrl.u32 %v4349, 7
    %v4351 = vsub.s32 0, %v4350
    %v4352 = vrot.slane %v4347, %v4351
    %v4353 = vlaneseq
    %v4354 = vshrl.u32 %v4353, 7
    %v4355 = vsub.s32 1, %v4354
    %v4356 = vrot.slane %v4347, %v4355
    %v4357 = vlaneseq
    %v4358 = vshrl.u32 %v4357, 7
    %v4359 = vsub.s32 2, %v4358
    %v4360 = vrot.slane %v4347, %v4359
    %v4361 = vlaneseq
    %v4362 = vshrl.u32 %v4361, 7
    %v4363 = vsub.s32 3, %v4362
    %v4364 = vrot.slane %v4347, %v4363
    %v4365 = vlaneseq
    %v4366 = vshrl.u32 %v4365, 7
    %v4367 = vsub.s32 4, %v4366
    %v4368 = vrot.slane %v4347, %v4367
    %v4369 = vlaneseq
    %v4370 = vshrl.u32 %v4369, 7
    %v4371 = vsub.s32 5, %v4370
    %v4372 = vrot.slane %v4347, %v4371
    %v4391 = vunpack.c.l.b16 %v4334
    %v4392 = vunpack.c.h.b16 %v4334
    %v4393 = vunpack.c.l.b16 %v4335
    %v4394 = vunpack.c.h.b16 %v4335
    %v4395 = vunpack.c.l.b16 %v4336
    %v4396 = vunpack.c.h.b16 %v4336
    %v4397 = vunpack.c.l.b16 %v4337
    %v4398 = vunpack.c.h.b16 %v4337
    %v4399 = vunpack.c.l.b16 %v4338
    %v4400 = vunpack.c.h.b16 %v4338
    %v4401 = vunpack.c.l.b16 %v4339
    %v4402 = vunpack.c.h.b16 %v4339
    %v4403 = vunpack.c.l.b16 %v4340
    %v4404 = vunpack.c.h.b16 %v4340
    %v4405 = vunpack.c.l.b16 %v4341
    %v4406 = vunpack.c.h.b16 %v4341
    %v4407 = vunpack.c.l.b16 %v4342
    %v4408 = vunpack.c.h.b16 %v4342
    %v4409 = vunpack.c.l.b16 %v4343
    %v4410 = vunpack.c.h.b16 %v4343
    %v4411 = vunpack.c.l.b16 %v4344
    %v4412 = vunpack.c.h.b16 %v4344
    %v4413 = vunpack.c.l.b16 %v4345
    %v4414 = vunpack.c.h.b16 %v4345
    %v4415 = vpack.c.b16 %v4397, %v4391
    %v4416 = vpack.c.b16 %v4398, %v4392
    %v4417 = vpack.c.b16 %v4399, %v4393
    %v4418 = vpack.c.b16 %v4400, %v4394
    %v4419 = vpack.c.b16 %v4401, %v4395
    %v4420 = vpack.c.b16 %v4402, %v4396
    %v4421 = vpack.c.b16 %v4409, %v4403
    %v4422 = vpack.c.b16 %v4410, %v4404
    %v4423 = vpack.c.b16 %v4411, %v4405
    %v4424 = vpack.c.b16 %v4412, %v4406
    %v4425 = vpack.c.b16 %v4413, %v4407
    %v4426 = vpack.c.b16 %v4414, %v4408
    %v4434 = vand.u32 %v4421, %v213
    %v4437 = vand.u32 %v4422, %v213
    %v4440 = vand.u32 %v4423, %v213
    %v4443 = vand.u32 %v4424, %v213
    %v4446 = vand.u32 %v4425, %v213
    %v4449 = vand.u32 %v4426, %v213
    %4451 = vmatprep.subr.bf16.mxu0 0
    %4452 = vmatpush1.bf16.msra.mxu0 0
    %4453 = vmatprep.subr.bf16.mxu0 0
    %4454 = vmatpush1.bf16.msra.mxu0 0
    %4455 = vmatprep.subr.bf16.mxu0 0
    %4456 = vmatpush1.bf16.msra.mxu0 0
    %4457 = vmatprep.subr.bf16.mxu0 0
    %4458 = vmatpush1.bf16.msra.mxu0 0
    %4459 = vmatprep.subr.bf16.mxu0 0
    %4460 = vmatpush1.bf16.msra.mxu0 0
    %4461 = vmatprep.subr.bf16.mxu0 0
    %4462 = vmatpush1.bf16.msra.mxu0 0
    %4463 = vmatprep.subr.bf16.mxu0 %v4437
    %4464 = vmatpush1.bf16.msra.mxu0 %v4434
    %4465 = vmatprep.subr.bf16.mxu0 %v4416
    %4466 = vmatpush1.bf16.msra.mxu0 %v4415
    %4467 = vmatprep.subr.bf16.mxu0 0
    %4468 = vmatpush2.bf16.msra.mxu0 0
    %4469 = vmatprep.subr.bf16.mxu0 0
    %4470 = vmatpush2.bf16.msra.mxu0 0
    %4471 = vmatprep.subr.bf16.mxu0 0
    %4472 = vmatpush2.bf16.msra.mxu0 0
    %4473 = vmatprep.subr.bf16.mxu0 0
    %4474 = vmatpush2.bf16.msra.mxu0 0
    %4475 = vmatprep.subr.bf16.mxu0 0
    %4476 = vmatpush2.bf16.msra.mxu0 0
    %4477 = vmatprep.subr.bf16.mxu0 0
    %4478 = vmatpush2.bf16.msra.mxu0 0
    %4479 = vmatprep.subr.bf16.mxu0 0
    %4480 = vmatpush2.bf16.msra.mxu0 0
    %4481 = vmatprep.subr.bf16.mxu0 0
    %4482 = vmatpush2.bf16.msra.mxu0 0
    %4483 = vmatprep.mubr.bf16.mxu0 0
    %4484 = vmatmul.mubr.bf16.gmra.mxu0 %v208
    %v4485 = vpop.f32.mrf.mxu0
    %v4486 = vadd.f32 %v4352, %v4485
    %v4487 = vpop.f32.mrf.mxu0
    %v4488 = vadd.f32 %v4356, %v4487
    %v4489 = vpop.f32.mrf.mxu0
    %v4490 = vadd.f32 %v4352, %v4489
    %v4491 = vpop.f32.mrf.mxu0
    %v4492 = vadd.f32 %v4356, %v4491
    %4493 = vdwg.mxu0
    %4494 = vmatprep.subr.bf16.mxu0 0
    %4495 = vmatpush1.bf16.msra.mxu0 0
    %4496 = vmatprep.subr.bf16.mxu0 0
    %4497 = vmatpush1.bf16.msra.mxu0 0
    %4498 = vmatprep.subr.bf16.mxu0 0
    %4499 = vmatpush1.bf16.msra.mxu0 0
    %4500 = vmatprep.subr.bf16.mxu0 0
    %4501 = vmatpush1.bf16.msra.mxu0 0
    %4502 = vmatprep.subr.bf16.mxu0 0
    %4503 = vmatpush1.bf16.msra.mxu0 0
    %4504 = vmatprep.subr.bf16.mxu0 0
    %4505 = vmatpush1.bf16.msra.mxu0 0
    %4506 = vmatprep.subr.bf16.mxu0 %v4443
    %4507 = vmatpush1.bf16.msra.mxu0 %v4440
    %4508 = vmatprep.subr.bf16.mxu0 %v4418
    %4509 = vmatpush1.bf16.msra.mxu0 %v4417
    %4510 = vmatprep.subr.bf16.mxu0 0
    %4511 = vmatpush2.bf16.msra.mxu0 0
    %4512 = vmatprep.subr.bf16.mxu0 0
    %4513 = vmatpush2.bf16.msra.mxu0 0
    %4514 = vmatprep.subr.bf16.mxu0 0
    %4515 = vmatpush2.bf16.msra.mxu0 0
    %4516 = vmatprep.subr.bf16.mxu0 0
    %4517 = vmatpush2.bf16.msra.mxu0 0
    %4518 = vmatprep.subr.bf16.mxu0 0
    %4519 = vmatpush2.bf16.msra.mxu0 0
    %4520 = vmatprep.subr.bf16.mxu0 0
    %4521 = vmatpush2.bf16.msra.mxu0 0
    %4522 = vmatprep.subr.bf16.mxu0 0
    %4523 = vmatpush2.bf16.msra.mxu0 0
    %4524 = vmatprep.subr.bf16.mxu0 0
    %4525 = vmatpush2.bf16.msra.mxu0 0
    %4526 = vmatprep.mubr.bf16.mxu0 0
    %4527 = vmatmul.mubr.bf16.gmra.mxu0 %v208
    %v4528 = vpop.f32.mrf.mxu0
    %v4529 = vadd.f32 %v4360, %v4528
    %v4530 = vpop.f32.mrf.mxu0
    %v4531 = vadd.f32 %v4364, %v4530
    %v4532 = vpop.f32.mrf.mxu0
    %v4533 = vadd.f32 %v4360, %v4532
    %v4534 = vpop.f32.mrf.mxu0
    %v4535 = vadd.f32 %v4364, %v4534
    %4536 = vdwg.mxu0
    %4537 = vmatprep.subr.bf16.mxu0 0
    %4538 = vmatpush1.bf16.msra.mxu0 0
    %4539 = vmatprep.subr.bf16.mxu0 0
    %4540 = vmatpush1.bf16.msra.mxu0 0
    %4541 = vmatprep.subr.bf16.mxu0 0
    %4542 = vmatpush1.bf16.msra.mxu0 0
    %4543 = vmatprep.subr.bf16.mxu0 0
    %4544 = vmatpush1.bf16.msra.mxu0 0
    %4545 = vmatprep.subr.bf16.mxu0 0
    %4546 = vmatpush1.bf16.msra.mxu0 0
    %4547 = vmatprep.subr.bf16.mxu0 0
    %4548 = vmatpush1.bf16.msra.mxu0 0
    %4549 = vmatprep.subr.bf16.mxu0 %v4449
    %4550 = vmatpush1.bf16.msra.mxu0 %v4446
    %4551 = vmatprep.subr.bf16.mxu0 %v4420
    %4552 = vmatpush1.bf16.msra.mxu0 %v4419
    %4553 = vmatprep.subr.bf16.mxu0 0
    %4554 = vmatpush2.bf16.msra.mxu0 0
    %4555 = vmatprep.subr.bf16.mxu0 0
    %4556 = vmatpush2.bf16.msra.mxu0 0
    %4557 = vmatprep.subr.bf16.mxu0 0
    %4558 = vmatpush2.bf16.msra.mxu0 0
    %4559 = vmatprep.subr.bf16.mxu0 0
    %4560 = vmatpush2.bf16.msra.mxu0 0
    %4561 = vmatprep.subr.bf16.mxu0 0
    %4562 = vmatpush2.bf16.msra.mxu0 0
    %4563 = vmatprep.subr.bf16.mxu0 0
    %4564 = vmatpush2.bf16.msra.mxu0 0
    %4565 = vmatprep.subr.bf16.mxu0 0
    %4566 = vmatpush2.bf16.msra.mxu0 0
    %4567 = vmatprep.subr.bf16.mxu0 0
    %4568 = vmatpush2.bf16.msra.mxu0 0
    %4569 = vmatprep.mubr.bf16.mxu0 0
    %4570 = vmatmul.mubr.bf16.gmra.mxu0 %v208
    %v4571 = vpop.f32.mrf.mxu0
    %v4572 = vadd.f32 %v4368, %v4571
    %v4573 = vpop.f32.mrf.mxu0
    %v4574 = vadd.f32 %v4372, %v4573
    %v4575 = vpop.f32.mrf.mxu0
    %v4576 = vadd.f32 %v4368, %v4575
    %v4577 = vpop.f32.mrf.mxu0
    %v4578 = vadd.f32 %v4372, %v4577
    %4579 = vdwg.mxu0
    %v4580 = vmax.f32 %v4486, 0.0
    %v4581 = vmax.f32 %v4488, 0.0
    %v4582 = vmax.f32 %v4529, 0.0
    %v4583 = vmax.f32 %v4531, 0.0
    %v4584 = vmax.f32 %v4572, 0.0
    %v4585 = vmax.f32 %v4574, 0.0
    %v4586 = vmax.f32 %v4490, 0.0
    %v4587 = vmax.f32 %v4492, 0.0
    %v4588 = vmax.f32 %v4533, 0.0
    %v4589 = vmax.f32 %v4535, 0.0
    %v4590 = vmax.f32 %v4576, 0.0
    %v4591 = vmax.f32 %v4578, 0.0
    %v4592 = vpack.c.bf16 %v4586, %v4580
    %v4593 = vpack.c.bf16 %v4587, %v4581
    %v4594 = vpack.c.bf16 %v4588, %v4582
    %v4595 = vpack.c.bf16 %v4589, %v4583
    %v4596 = vpack.c.bf16 %v4590, %v4584
    %v4597 = vpack.c.bf16 %v4591, %v4585
    %s4598 = scalar_lea.vmem [#allocation4], 2304
    %v4599 = vld [vmem:[%s4598] sm:$0xff]
    %v4600 = vld [vmem:[%s4598 + $0x8] sm:$0xff]
    %v4601 = vld [vmem:[%s4598 + $0x10] sm:$0xff]
    %v4602 = vld [vmem:[%s4598 + $0x18] sm:$0xff]
    %v4603 = vld [vmem:[%s4598 + $0x20] sm:$0xff]
    %v4604 = vld [vmem:[%s4598 + $0x28] sm:$0xff]
    %v4605 = vld [vmem:[%s4598 + $0x30] sm:$0xff]
    %v4606 = vld [vmem:[%s4598 + $0x38] sm:$0xff]
    %v4607 = vld [vmem:[%s4598 + $0x40] sm:$0xff]
    %v4608 = vld [vmem:[%s4598 + $0x48] sm:$0xff]
    %v4609 = vld [vmem:[%s4598 + $0x50] sm:$0xff]
    %v4610 = vld [vmem:[%s4598 + $0x58] sm:$0xff]
    %v4611 = vld [vmem:[%s4598 + $0x60] sm:$0xff]
    %v4612 = vld [vmem:[%s4598 + $0x68] sm:$0xff]
    %v4613 = vld [vmem:[%s4598 + $0x70] sm:$0xff]
    %v4614 = vld [vmem:[%s4598 + $0x78] sm:$0xff]
    %v4615 = vld [vmem:[%s4598 + $0x80] sm:$0xff]
    %v4616 = vld [vmem:[%s4598 + $0x88] sm:$0xff]
    %v4617 = vld [vmem:[%s4598 + $0x90] sm:$0xff]
    %v4618 = vld [vmem:[%s4598 + $0x98] sm:$0xff]
    %v4619 = vld [vmem:[%s4598 + $0xa0] sm:$0xff]
    %v4620 = vld [vmem:[%s4598 + $0xa8] sm:$0xff]
    %v4621 = vld [vmem:[%s4598 + $0xb0] sm:$0xff]
    %v4622 = vld [vmem:[%s4598 + $0xb8] sm:$0xff]
    %v4623 = vld [vmem:[%s4598 + $0xc0] sm:$0xff]
    %v4624 = vld [vmem:[%s4598 + $0xc8] sm:$0xff]
    %v4625 = vld [vmem:[%s4598 + $0xd0] sm:$0xff]
    %v4626 = vld [vmem:[%s4598 + $0xd8] sm:$0xff]
    %v4627 = vld [vmem:[%s4598 + $0xe0] sm:$0xff]
    %v4628 = vld [vmem:[%s4598 + $0xe8] sm:$0xff]
    %v4629 = vld [vmem:[%s4598 + $0xf0] sm:$0xff]
    %v4630 = vld [vmem:[%s4598 + $0xf8] sm:$0xff]
    %v4631 = vld [vmem:[%s4598 + $0x100] sm:$0xff]
    %v4632 = vld [vmem:[%s4598 + $0x108] sm:$0xff]
    %v4633 = vld [vmem:[%s4598 + $0x110] sm:$0xff]
    %v4634 = vld [vmem:[%s4598 + $0x118] sm:$0xff]
    %v4635 = vld [vmem:[%s4598 + $0x120] sm:$0xff]
    %v4636 = vld [vmem:[%s4598 + $0x128] sm:$0xff]
    %v4637 = vld [vmem:[%s4598 + $0x130] sm:$0xff]
    %v4638 = vld [vmem:[%s4598 + $0x138] sm:$0xff]
    %v4639 = vld [vmem:[%s4598 + $0x140] sm:$0xff]
    %v4640 = vld [vmem:[%s4598 + $0x148] sm:$0xff]
    %v4641 = vld [vmem:[%s4598 + $0x150] sm:$0xff]
    %v4642 = vld [vmem:[%s4598 + $0x158] sm:$0xff]
    %v4643 = vld [vmem:[%s4598 + $0x160] sm:$0xff]
    %v4644 = vld [vmem:[%s4598 + $0x168] sm:$0xff]
    %v4645 = vld [vmem:[%s4598 + $0x170] sm:$0xff]
    %v4646 = vld [vmem:[%s4598 + $0x178] sm:$0xff]
    %v4647 = vld [vmem:[%s4598 + $0x180] sm:$0xff]
    %v4648 = vld [vmem:[%s4598 + $0x188] sm:$0xff]
    %v4649 = vld [vmem:[%s4598 + $0x190] sm:$0xff]
    %v4650 = vld [vmem:[%s4598 + $0x198] sm:$0xff]
    %v4651 = vld [vmem:[%s4598 + $0x1a0] sm:$0xff]
    %v4652 = vld [vmem:[%s4598 + $0x1a8] sm:$0xff]
    %v4653 = vld [vmem:[%s4598 + $0x1b0] sm:$0xff]
    %v4654 = vld [vmem:[%s4598 + $0x1b8] sm:$0xff]
    %v4655 = vld [vmem:[%s4598 + $0x1c0] sm:$0xff]
    %v4656 = vld [vmem:[%s4598 + $0x1c8] sm:$0xff]
    %v4657 = vld [vmem:[%s4598 + $0x1d0] sm:$0xff]
    %v4658 = vld [vmem:[%s4598 + $0x1d8] sm:$0xff]
    %v4659 = vld [vmem:[%s4598 + $0x1e0] sm:$0xff]
    %v4660 = vld [vmem:[%s4598 + $0x1e8] sm:$0xff]
    %v4661 = vld [vmem:[%s4598 + $0x1f0] sm:$0xff]
    %v4662 = vld [vmem:[%s4598 + $0x1f8] sm:$0xff]
    %v4663 = vld [vmem:[%s4598 + $0x200] sm:$0xff]
    %v4664 = vld [vmem:[%s4598 + $0x208] sm:$0xff]
    %v4665 = vld [vmem:[%s4598 + $0x210] sm:$0xff]
    %v4666 = vld [vmem:[%s4598 + $0x218] sm:$0xff]
    %v4667 = vld [vmem:[%s4598 + $0x220] sm:$0xff]
    %v4668 = vld [vmem:[%s4598 + $0x228] sm:$0xff]
    %v4669 = vld [vmem:[%s4598 + $0x230] sm:$0xff]
    %v4670 = vld [vmem:[%s4598 + $0x238] sm:$0xff]
    %v4671 = vld [vmem:[%s4598 + $0x240] sm:$0xff]
    %v4672 = vld [vmem:[%s4598 + $0x248] sm:$0xff]
    %v4673 = vld [vmem:[%s4598 + $0x250] sm:$0xff]
    %v4674 = vld [vmem:[%s4598 + $0x258] sm:$0xff]
    %v4675 = vld [vmem:[%s4598 + $0x260] sm:$0xff]
    %v4676 = vld [vmem:[%s4598 + $0x268] sm:$0xff]
    %v4677 = vld [vmem:[%s4598 + $0x270] sm:$0xff]
    %v4678 = vld [vmem:[%s4598 + $0x278] sm:$0xff]
    %v4679 = vld [vmem:[%s4598 + $0x280] sm:$0xff]
    %v4680 = vld [vmem:[%s4598 + $0x288] sm:$0xff]
    %v4681 = vld [vmem:[%s4598 + $0x290] sm:$0xff]
    %v4682 = vld [vmem:[%s4598 + $0x298] sm:$0xff]
    %v4683 = vld [vmem:[%s4598 + $0x2a0] sm:$0xff]
    %v4684 = vld [vmem:[%s4598 + $0x2a8] sm:$0xff]
    %v4685 = vld [vmem:[%s4598 + $0x2b0] sm:$0xff]
    %v4686 = vld [vmem:[%s4598 + $0x2b8] sm:$0xff]
    %v4687 = vld [vmem:[%s4598 + $0x2c0] sm:$0xff]
    %v4688 = vld [vmem:[%s4598 + $0x2c8] sm:$0xff]
    %v4689 = vld [vmem:[%s4598 + $0x2d0] sm:$0xff]
    %v4690 = vld [vmem:[%s4598 + $0x2d8] sm:$0xff]
    %v4691 = vld [vmem:[%s4598 + $0x2e0] sm:$0xff]
    %v4692 = vld [vmem:[%s4598 + $0x2e8] sm:$0xff]
    %v4693 = vld [vmem:[%s4598 + $0x2f0] sm:$0xff]
    %v4694 = vld [vmem:[%s4598 + $0x2f8] sm:$0xff]
    %v4695 = vld [vmem:[%s4598 + $0x300] sm:$0xff]
    %v4696 = vld [vmem:[%s4598 + $0x308] sm:$0xff]
    %v4697 = vld [vmem:[%s4598 + $0x310] sm:$0xff]
    %v4698 = vld [vmem:[%s4598 + $0x318] sm:$0xff]
    %v4699 = vld [vmem:[%s4598 + $0x320] sm:$0xff]
    %v4700 = vld [vmem:[%s4598 + $0x328] sm:$0xff]
    %v4701 = vld [vmem:[%s4598 + $0x330] sm:$0xff]
    %v4702 = vld [vmem:[%s4598 + $0x338] sm:$0xff]
    %v4703 = vld [vmem:[%s4598 + $0x340] sm:$0xff]
    %v4704 = vld [vmem:[%s4598 + $0x348] sm:$0xff]
    %v4705 = vld [vmem:[%s4598 + $0x350] sm:$0xff]
    %v4706 = vld [vmem:[%s4598 + $0x358] sm:$0xff]
    %v4707 = vld [vmem:[%s4598 + $0x360] sm:$0xff]
    %v4708 = vld [vmem:[%s4598 + $0x368] sm:$0xff]
    %v4709 = vld [vmem:[%s4598 + $0x370] sm:$0xff]
    %v4710 = vld [vmem:[%s4598 + $0x378] sm:$0xff]
    %v4711 = vld [vmem:[%s4598 + $0x380] sm:$0xff]
    %v4712 = vld [vmem:[%s4598 + $0x388] sm:$0xff]
    %v4713 = vld [vmem:[%s4598 + $0x390] sm:$0xff]
    %v4714 = vld [vmem:[%s4598 + $0x398] sm:$0xff]
    %v4715 = vld [vmem:[%s4598 + $0x3a0] sm:$0xff]
    %v4716 = vld [vmem:[%s4598 + $0x3a8] sm:$0xff]
    %v4717 = vld [vmem:[%s4598 + $0x3b0] sm:$0xff]
    %v4718 = vld [vmem:[%s4598 + $0x3b8] sm:$0xff]
    %v4719 = vld [vmem:[%s4598 + $0x3c0] sm:$0xff]
    %v4720 = vld [vmem:[%s4598 + $0x3c8] sm:$0xff]
    %v4721 = vld [vmem:[%s4598 + $0x3d0] sm:$0xff]
    %v4722 = vld [vmem:[%s4598 + $0x3d8] sm:$0xff]
    %v4723 = vld [vmem:[%s4598 + $0x3e0] sm:$0xff]
    %v4724 = vld [vmem:[%s4598 + $0x3e8] sm:$0xff]
    %v4725 = vld [vmem:[%s4598 + $0x3f0] sm:$0xff]
    %v4726 = vld [vmem:[%s4598 + $0x3f8] sm:$0xff]
    %v4727 = vld [vmem:[%s4598 + $0x400] sm:$0xff]
    %v4728 = vld [vmem:[%s4598 + $0x408] sm:$0xff]
    %v4729 = vld [vmem:[%s4598 + $0x410] sm:$0xff]
    %v4730 = vld [vmem:[%s4598 + $0x418] sm:$0xff]
    %v4731 = vld [vmem:[%s4598 + $0x420] sm:$0xff]
    %v4732 = vld [vmem:[%s4598 + $0x428] sm:$0xff]
    %v4733 = vld [vmem:[%s4598 + $0x430] sm:$0xff]
    %v4734 = vld [vmem:[%s4598 + $0x438] sm:$0xff]
    %v4735 = vld [vmem:[%s4598 + $0x440] sm:$0xff]
    %v4736 = vld [vmem:[%s4598 + $0x448] sm:$0xff]
    %v4737 = vld [vmem:[%s4598 + $0x450] sm:$0xff]
    %v4738 = vld [vmem:[%s4598 + $0x458] sm:$0xff]
    %v4739 = vld [vmem:[%s4598 + $0x460] sm:$0xff]
    %v4740 = vld [vmem:[%s4598 + $0x468] sm:$0xff]
    %v4741 = vld [vmem:[%s4598 + $0x470] sm:$0xff]
    %v4742 = vld [vmem:[%s4598 + $0x478] sm:$0xff]
    %v4743 = vld [vmem:[%s4598 + $0x480] sm:$0xff]
    %v4744 = vld [vmem:[%s4598 + $0x488] sm:$0xff]
    %v4745 = vld [vmem:[%s4598 + $0x490] sm:$0xff]
    %v4746 = vld [vmem:[%s4598 + $0x498] sm:$0xff]
    %v4747 = vld [vmem:[%s4598 + $0x4a0] sm:$0xff]
    %v4748 = vld [vmem:[%s4598 + $0x4a8] sm:$0xff]
    %v4749 = vld [vmem:[%s4598 + $0x4b0] sm:$0xff]
    %v4750 = vld [vmem:[%s4598 + $0x4b8] sm:$0xff]
    %v4751 = vld [vmem:[%s4598 + $0x4c0] sm:$0xff]
    %v4752 = vld [vmem:[%s4598 + $0x4c8] sm:$0xff]
    %v4753 = vld [vmem:[%s4598 + $0x4d0] sm:$0xff]
    %v4754 = vld [vmem:[%s4598 + $0x4d8] sm:$0xff]
    %v4755 = vld [vmem:[%s4598 + $0x4e0] sm:$0xff]
    %v4756 = vld [vmem:[%s4598 + $0x4e8] sm:$0xff]
    %v4757 = vld [vmem:[%s4598 + $0x4f0] sm:$0xff]
    %v4758 = vld [vmem:[%s4598 + $0x4f8] sm:$0xff]
    %v4759 = vld [vmem:[%s4598 + $0x500] sm:$0xff]
    %v4760 = vld [vmem:[%s4598 + $0x508] sm:$0xff]
    %v4761 = vld [vmem:[%s4598 + $0x510] sm:$0xff]
    %v4762 = vld [vmem:[%s4598 + $0x518] sm:$0xff]
    %v4763 = vld [vmem:[%s4598 + $0x520] sm:$0xff]
    %v4764 = vld [vmem:[%s4598 + $0x528] sm:$0xff]
    %v4765 = vld [vmem:[%s4598 + $0x530] sm:$0xff]
    %v4766 = vld [vmem:[%s4598 + $0x538] sm:$0xff]
    %v4767 = vld [vmem:[%s4598 + $0x540] sm:$0xff]
    %v4768 = vld [vmem:[%s4598 + $0x548] sm:$0xff]
    %v4769 = vld [vmem:[%s4598 + $0x550] sm:$0xff]
    %v4770 = vld [vmem:[%s4598 + $0x558] sm:$0xff]
    %v4771 = vld [vmem:[%s4598 + $0x560] sm:$0xff]
    %v4772 = vld [vmem:[%s4598 + $0x568] sm:$0xff]
    %v4773 = vld [vmem:[%s4598 + $0x570] sm:$0xff]
    %v4774 = vld [vmem:[%s4598 + $0x578] sm:$0xff]
    %v4775 = vld [vmem:[%s4598 + $0x580] sm:$0xff]
    %v4776 = vld [vmem:[%s4598 + $0x588] sm:$0xff]
    %v4777 = vld [vmem:[%s4598 + $0x590] sm:$0xff]
    %v4778 = vld [vmem:[%s4598 + $0x598] sm:$0xff]
    %v4779 = vld [vmem:[%s4598 + $0x5a0] sm:$0xff]
    %v4780 = vld [vmem:[%s4598 + $0x5a8] sm:$0xff]
    %v4781 = vld [vmem:[%s4598 + $0x5b0] sm:$0xff]
    %v4782 = vld [vmem:[%s4598 + $0x5b8] sm:$0xff]
    %v4783 = vld [vmem:[%s4598 + $0x5c0] sm:$0xff]
    %v4784 = vld [vmem:[%s4598 + $0x5c8] sm:$0xff]
    %v4785 = vld [vmem:[%s4598 + $0x5d0] sm:$0xff]
    %v4786 = vld [vmem:[%s4598 + $0x5d8] sm:$0xff]
    %v4787 = vld [vmem:[%s4598 + $0x5e0] sm:$0xff]
    %v4788 = vld [vmem:[%s4598 + $0x5e8] sm:$0xff]
    %v4789 = vld [vmem:[%s4598 + $0x5f0] sm:$0xff]
    %v4790 = vld [vmem:[%s4598 + $0x5f8] sm:$0xff]
    %v4791 = vld [vmem:[%s4598 + $0x600] sm:$0xff]
    %v4792 = vld [vmem:[%s4598 + $0x608] sm:$0xff]
    %v4793 = vld [vmem:[%s4598 + $0x610] sm:$0xff]
    %v4794 = vld [vmem:[%s4598 + $0x618] sm:$0xff]
    %v4795 = vld [vmem:[%s4598 + $0x620] sm:$0xff]
    %v4796 = vld [vmem:[%s4598 + $0x628] sm:$0xff]
    %v4797 = vld [vmem:[%s4598 + $0x630] sm:$0xff]
    %v4798 = vld [vmem:[%s4598 + $0x638] sm:$0xff]
    %v4799 = vld [vmem:[%s4598 + $0x640] sm:$0xff]
    %v4800 = vld [vmem:[%s4598 + $0x648] sm:$0xff]
    %v4801 = vld [vmem:[%s4598 + $0x650] sm:$0xff]
    %v4802 = vld [vmem:[%s4598 + $0x658] sm:$0xff]
    %v4803 = vld [vmem:[%s4598 + $0x660] sm:$0xff]
    %v4804 = vld [vmem:[%s4598 + $0x668] sm:$0xff]
    %v4805 = vld [vmem:[%s4598 + $0x670] sm:$0xff]
    %v4806 = vld [vmem:[%s4598 + $0x678] sm:$0xff]
    %v4807 = vld [vmem:[%s4598 + $0x680] sm:$0xff]
    %v4808 = vld [vmem:[%s4598 + $0x688] sm:$0xff]
    %v4809 = vld [vmem:[%s4598 + $0x690] sm:$0xff]
    %v4810 = vld [vmem:[%s4598 + $0x698] sm:$0xff]
    %v4811 = vld [vmem:[%s4598 + $0x6a0] sm:$0xff]
    %v4812 = vld [vmem:[%s4598 + $0x6a8] sm:$0xff]
    %v4813 = vld [vmem:[%s4598 + $0x6b0] sm:$0xff]
    %v4814 = vld [vmem:[%s4598 + $0x6b8] sm:$0xff]
    %v4815 = vld [vmem:[%s4598 + $0x6c0] sm:$0xff]
    %v4816 = vld [vmem:[%s4598 + $0x6c8] sm:$0xff]
    %v4817 = vld [vmem:[%s4598 + $0x6d0] sm:$0xff]
    %v4818 = vld [vmem:[%s4598 + $0x6d8] sm:$0xff]
    %v4819 = vld [vmem:[%s4598 + $0x6e0] sm:$0xff]
    %v4820 = vld [vmem:[%s4598 + $0x6e8] sm:$0xff]
    %v4821 = vld [vmem:[%s4598 + $0x6f0] sm:$0xff]
    %v4822 = vld [vmem:[%s4598 + $0x6f8] sm:$0xff]
    %v4823 = vld [vmem:[%s4598 + $0x700] sm:$0xff]
    %v4824 = vld [vmem:[%s4598 + $0x708] sm:$0xff]
    %v4825 = vld [vmem:[%s4598 + $0x710] sm:$0xff]
    %v4826 = vld [vmem:[%s4598 + $0x718] sm:$0xff]
    %v4827 = vld [vmem:[%s4598 + $0x720] sm:$0xff]
    %v4828 = vld [vmem:[%s4598 + $0x728] sm:$0xff]
    %v4829 = vld [vmem:[%s4598 + $0x730] sm:$0xff]
    %v4830 = vld [vmem:[%s4598 + $0x738] sm:$0xff]
    %v4831 = vld [vmem:[%s4598 + $0x740] sm:$0xff]
    %v4832 = vld [vmem:[%s4598 + $0x748] sm:$0xff]
    %v4833 = vld [vmem:[%s4598 + $0x750] sm:$0xff]
    %v4834 = vld [vmem:[%s4598 + $0x758] sm:$0xff]
    %v4835 = vld [vmem:[%s4598 + $0x760] sm:$0xff]
    %v4836 = vld [vmem:[%s4598 + $0x768] sm:$0xff]
    %v4837 = vld [vmem:[%s4598 + $0x770] sm:$0xff]
    %v4838 = vld [vmem:[%s4598 + $0x778] sm:$0xff]
    %v4839 = vld [vmem:[%s4598 + $0x780] sm:$0xff]
    %v4840 = vld [vmem:[%s4598 + $0x788] sm:$0xff]
    %v4841 = vld [vmem:[%s4598 + $0x790] sm:$0xff]
    %v4842 = vld [vmem:[%s4598 + $0x798] sm:$0xff]
    %v4843 = vld [vmem:[%s4598 + $0x7a0] sm:$0xff]
    %v4844 = vld [vmem:[%s4598 + $0x7a8] sm:$0xff]
    %v4845 = vld [vmem:[%s4598 + $0x7b0] sm:$0xff]
    %v4846 = vld [vmem:[%s4598 + $0x7b8] sm:$0xff]
    %v4847 = vld [vmem:[%s4598 + $0x7c0] sm:$0xff]
    %v4848 = vld [vmem:[%s4598 + $0x7c8] sm:$0xff]
    %v4849 = vld [vmem:[%s4598 + $0x7d0] sm:$0xff]
    %v4850 = vld [vmem:[%s4598 + $0x7d8] sm:$0xff]
    %v4851 = vld [vmem:[%s4598 + $0x7e0] sm:$0xff]
    %v4852 = vld [vmem:[%s4598 + $0x7e8] sm:$0xff]
    %v4853 = vld [vmem:[%s4598 + $0x7f0] sm:$0xff]
    %v4854 = vld [vmem:[%s4598 + $0x7f8] sm:$0xff]
    %v4855 = vld [vmem:[%s4598 + $0x800] sm:$0xff]
    %v4856 = vld [vmem:[%s4598 + $0x808] sm:$0xff]
    %v4857 = vld [vmem:[%s4598 + $0x810] sm:$0xff]
    %v4858 = vld [vmem:[%s4598 + $0x818] sm:$0xff]
    %v4859 = vld [vmem:[%s4598 + $0x820] sm:$0xff]
    %v4860 = vld [vmem:[%s4598 + $0x828] sm:$0xff]
    %v4861 = vld [vmem:[%s4598 + $0x830] sm:$0xff]
    %v4862 = vld [vmem:[%s4598 + $0x838] sm:$0xff]
    %v4863 = vld [vmem:[%s4598 + $0x840] sm:$0xff]
    %v4864 = vld [vmem:[%s4598 + $0x848] sm:$0xff]
    %v4865 = vld [vmem:[%s4598 + $0x850] sm:$0xff]
    %v4866 = vld [vmem:[%s4598 + $0x858] sm:$0xff]
    %v4867 = vld [vmem:[%s4598 + $0x860] sm:$0xff]
    %v4868 = vld [vmem:[%s4598 + $0x868] sm:$0xff]
    %v4869 = vld [vmem:[%s4598 + $0x870] sm:$0xff]
    %v4870 = vld [vmem:[%s4598 + $0x878] sm:$0xff]
    %v4871 = vld [vmem:[%s4598 + $0x880] sm:$0xff]
    %v4872 = vld [vmem:[%s4598 + $0x888] sm:$0xff]
    %v4873 = vld [vmem:[%s4598 + $0x890] sm:$0xff]
    %v4874 = vld [vmem:[%s4598 + $0x898] sm:$0xff]
    %v4875 = vld [vmem:[%s4598 + $0x8a0] sm:$0xff]
    %v4876 = vld [vmem:[%s4598 + $0x8a8] sm:$0xff]
    %v4877 = vld [vmem:[%s4598 + $0x8b0] sm:$0xff]
    %v4878 = vld [vmem:[%s4598 + $0x8b8] sm:$0xff]
    %v4879 = vld [vmem:[%s4598 + $0x8c0] sm:$0xff]
    %v4880 = vld [vmem:[%s4598 + $0x8c8] sm:$0xff]
    %v4881 = vld [vmem:[%s4598 + $0x8d0] sm:$0xff]
    %v4882 = vld [vmem:[%s4598 + $0x8d8] sm:$0xff]
    %v4883 = vld [vmem:[%s4598 + $0x8e0] sm:$0xff]
    %v4884 = vld [vmem:[%s4598 + $0x8e8] sm:$0xff]
    %v4885 = vld [vmem:[%s4598 + $0x8f0] sm:$0xff]
    %v4886 = vld [vmem:[%s4598 + $0x8f8] sm:$0xff]
    %s4887 = scalar_lea.vmem [#allocation6], 6
    %v4888 = vld [vmem:[%s4887] sm:$0x3f]
    %v4890 = vlaneseq
    %v4891 = vshrl.u32 %v4890, 7
    %v4892 = vsub.s32 0, %v4891
    %v4893 = vrot.slane %v4888, %v4892
    %v4894 = vlaneseq
    %v4895 = vshrl.u32 %v4894, 7
    %v4896 = vsub.s32 1, %v4895
    %v4897 = vrot.slane %v4888, %v4896
    %v4898 = vlaneseq
    %v4899 = vshrl.u32 %v4898, 7
    %v4900 = vsub.s32 2, %v4899
    %v4901 = vrot.slane %v4888, %v4900
    %v4902 = vlaneseq
    %v4903 = vshrl.u32 %v4902, 7
    %v4904 = vsub.s32 3, %v4903
    %v4905 = vrot.slane %v4888, %v4904
    %v4906 = vlaneseq
    %v4907 = vshrl.u32 %v4906, 7
    %v4908 = vsub.s32 4, %v4907
    %v4909 = vrot.slane %v4888, %v4908
    %v4910 = vlaneseq
    %v4911 = vshrl.u32 %v4910, 7
    %v4912 = vsub.s32 5, %v4911
    %v4913 = vrot.slane %v4888, %v4912
    %v5208 = vunpack.c.l.b16 %v4599
    %v5209 = vunpack.c.h.b16 %v4599
    %v5210 = vunpack.c.l.b16 %v4600
    %v5211 = vunpack.c.h.b16 %v4600
    %v5212 = vunpack.c.l.b16 %v4601
    %v5213 = vunpack.c.h.b16 %v4601
    %v5214 = vunpack.c.l.b16 %v4602
    %v5215 = vunpack.c.h.b16 %v4602
    %v5216 = vunpack.c.l.b16 %v4603
    %v5217 = vunpack.c.h.b16 %v4603
    %v5218 = vunpack.c.l.b16 %v4604
    %v5219 = vunpack.c.h.b16 %v4604
    %v5220 = vunpack.c.l.b16 %v4605
    %v5221 = vunpack.c.h.b16 %v4605
    %v5222 = vunpack.c.l.b16 %v4606
    %v5223 = vunpack.c.h.b16 %v4606
    %v5224 = vunpack.c.l.b16 %v4607
    %v5225 = vunpack.c.h.b16 %v4607
    %v5226 = vunpack.c.l.b16 %v4608
    %v5227 = vunpack.c.h.b16 %v4608
    %v5228 = vunpack.c.l.b16 %v4609
    %v5229 = vunpack.c.h.b16 %v4609
    %v5230 = vunpack.c.l.b16 %v4610
    %v5231 = vunpack.c.h.b16 %v4610
    %v5232 = vunpack.c.l.b16 %v4611
    %v5233 = vunpack.c.h.b16 %v4611
    %v5234 = vunpack.c.l.b16 %v4612
    %v5235 = vunpack.c.h.b16 %v4612
    %v5236 = vunpack.c.l.b16 %v4613
    %v5237 = vunpack.c.h.b16 %v4613
    %v5238 = vunpack.c.l.b16 %v4614
    %v5239 = vunpack.c.h.b16 %v4614
    %v5240 = vunpack.c.l.b16 %v4615
    %v5241 = vunpack.c.h.b16 %v4615
    %v5242 = vunpack.c.l.b16 %v4616
    %v5243 = vunpack.c.h.b16 %v4616
    %v5244 = vunpack.c.l.b16 %v4617
    %v5245 = vunpack.c.h.b16 %v4617
    %v5246 = vunpack.c.l.b16 %v4618
    %v5247 = vunpack.c.h.b16 %v4618
    %v5248 = vunpack.c.l.b16 %v4619
    %v5249 = vunpack.c.h.b16 %v4619
    %v5250 = vunpack.c.l.b16 %v4620
    %v5251 = vunpack.c.h.b16 %v4620
    %v5252 = vunpack.c.l.b16 %v4621
    %v5253 = vunpack.c.h.b16 %v4621
    %v5254 = vunpack.c.l.b16 %v4622
    %v5255 = vunpack.c.h.b16 %v4622
    %v5256 = vunpack.c.l.b16 %v4623
    %v5257 = vunpack.c.h.b16 %v4623
    %v5258 = vunpack.c.l.b16 %v4624
    %v5259 = vunpack.c.h.b16 %v4624
    %v5260 = vunpack.c.l.b16 %v4625
    %v5261 = vunpack.c.h.b16 %v4625
    %v5262 = vunpack.c.l.b16 %v4626
    %v5263 = vunpack.c.h.b16 %v4626
    %v5264 = vunpack.c.l.b16 %v4627
    %v5265 = vunpack.c.h.b16 %v4627
    %v5266 = vunpack.c.l.b16 %v4628
    %v5267 = vunpack.c.h.b16 %v4628
    %v5268 = vunpack.c.l.b16 %v4629
    %v5269 = vunpack.c.h.b16 %v4629
    %v5270 = vunpack.c.l.b16 %v4630
    %v5271 = vunpack.c.h.b16 %v4630
    %v5272 = vunpack.c.l.b16 %v4631
    %v5273 = vunpack.c.h.b16 %v4631
    %v5274 = vunpack.c.l.b16 %v4632
    %v5275 = vunpack.c.h.b16 %v4632
    %v5276 = vunpack.c.l.b16 %v4633
    %v5277 = vunpack.c.h.b16 %v4633
    %v5278 = vunpack.c.l.b16 %v4634
    %v5279 = vunpack.c.h.b16 %v4634
    %v5280 = vunpack.c.l.b16 %v4635
    %v5281 = vunpack.c.h.b16 %v4635
    %v5282 = vunpack.c.l.b16 %v4636
    %v5283 = vunpack.c.h.b16 %v4636
    %v5284 = vunpack.c.l.b16 %v4637
    %v5285 = vunpack.c.h.b16 %v4637
    %v5286 = vunpack.c.l.b16 %v4638
    %v5287 = vunpack.c.h.b16 %v4638
    %v5288 = vunpack.c.l.b16 %v4639
    %v5289 = vunpack.c.h.b16 %v4639
    %v5290 = vunpack.c.l.b16 %v4640
    %v5291 = vunpack.c.h.b16 %v4640
    %v5292 = vunpack.c.l.b16 %v4641
    %v5293 = vunpack.c.h.b16 %v4641
    %v5294 = vunpack.c.l.b16 %v4642
    %v5295 = vunpack.c.h.b16 %v4642
    %v5296 = vunpack.c.l.b16 %v4643
    %v5297 = vunpack.c.h.b16 %v4643
    %v5298 = vunpack.c.l.b16 %v4644
    %v5299 = vunpack.c.h.b16 %v4644
    %v5300 = vunpack.c.l.b16 %v4645
    %v5301 = vunpack.c.h.b16 %v4645
    %v5302 = vunpack.c.l.b16 %v4646
    %v5303 = vunpack.c.h.b16 %v4646
    %v5304 = vunpack.c.l.b16 %v4647
    %v5305 = vunpack.c.h.b16 %v4647
    %v5306 = vunpack.c.l.b16 %v4648
    %v5307 = vunpack.c.h.b16 %v4648
    %v5308 = vunpack.c.l.b16 %v4649
    %v5309 = vunpack.c.h.b16 %v4649
    %v5310 = vunpack.c.l.b16 %v4650
    %v5311 = vunpack.c.h.b16 %v4650
    %v5312 = vunpack.c.l.b16 %v4651
    %v5313 = vunpack.c.h.b16 %v4651
    %v5314 = vunpack.c.l.b16 %v4652
    %v5315 = vunpack.c.h.b16 %v4652
    %v5316 = vunpack.c.l.b16 %v4653
    %v5317 = vunpack.c.h.b16 %v4653
    %v5318 = vunpack.c.l.b16 %v4654
    %v5319 = vunpack.c.h.b16 %v4654
    %v5320 = vunpack.c.l.b16 %v4655
    %v5321 = vunpack.c.h.b16 %v4655
    %v5322 = vunpack.c.l.b16 %v4656
    %v5323 = vunpack.c.h.b16 %v4656
    %v5324 = vunpack.c.l.b16 %v4657
    %v5325 = vunpack.c.h.b16 %v4657
    %v5326 = vunpack.c.l.b16 %v4658
    %v5327 = vunpack.c.h.b16 %v4658
    %v5328 = vunpack.c.l.b16 %v4659
    %v5329 = vunpack.c.h.b16 %v4659
    %v5330 = vunpack.c.l.b16 %v4660
    %v5331 = vunpack.c.h.b16 %v4660
    %v5332 = vunpack.c.l.b16 %v4661
    %v5333 = vunpack.c.h.b16 %v4661
    %v5334 = vunpack.c.l.b16 %v4662
    %v5335 = vunpack.c.h.b16 %v4662
    %v5336 = vunpack.c.l.b16 %v4663
    %v5337 = vunpack.c.h.b16 %v4663
    %v5338 = vunpack.c.l.b16 %v4664
    %v5339 = vunpack.c.h.b16 %v4664
    %v5340 = vunpack.c.l.b16 %v4665
    %v5341 = vunpack.c.h.b16 %v4665
    %v5342 = vunpack.c.l.b16 %v4666
    %v5343 = vunpack.c.h.b16 %v4666
    %v5344 = vunpack.c.l.b16 %v4667
    %v5345 = vunpack.c.h.b16 %v4667
    %v5346 = vunpack.c.l.b16 %v4668
    %v5347 = vunpack.c.h.b16 %v4668
    %v5348 = vunpack.c.l.b16 %v4669
    %v5349 = vunpack.c.h.b16 %v4669
    %v5350 = vunpack.c.l.b16 %v4670
    %v5351 = vunpack.c.h.b16 %v4670
    %v5352 = vunpack.c.l.b16 %v4671
    %v5353 = vunpack.c.h.b16 %v4671
    %v5354 = vunpack.c.l.b16 %v4672
    %v5355 = vunpack.c.h.b16 %v4672
    %v5356 = vunpack.c.l.b16 %v4673
    %v5357 = vunpack.c.h.b16 %v4673
    %v5358 = vunpack.c.l.b16 %v4674
    %v5359 = vunpack.c.h.b16 %v4674
    %v5360 = vunpack.c.l.b16 %v4675
    %v5361 = vunpack.c.h.b16 %v4675
    %v5362 = vunpack.c.l.b16 %v4676
    %v5363 = vunpack.c.h.b16 %v4676
    %v5364 = vunpack.c.l.b16 %v4677
    %v5365 = vunpack.c.h.b16 %v4677
    %v5366 = vunpack.c.l.b16 %v4678
    %v5367 = vunpack.c.h.b16 %v4678
    %v5368 = vunpack.c.l.b16 %v4679
    %v5369 = vunpack.c.h.b16 %v4679
    %v5370 = vunpack.c.l.b16 %v4680
    %v5371 = vunpack.c.h.b16 %v4680
    %v5372 = vunpack.c.l.b16 %v4681
    %v5373 = vunpack.c.h.b16 %v4681
    %v5374 = vunpack.c.l.b16 %v4682
    %v5375 = vunpack.c.h.b16 %v4682
    %v5376 = vunpack.c.l.b16 %v4683
    %v5377 = vunpack.c.h.b16 %v4683
    %v5378 = vunpack.c.l.b16 %v4684
    %v5379 = vunpack.c.h.b16 %v4684
    %v5380 = vunpack.c.l.b16 %v4685
    %v5381 = vunpack.c.h.b16 %v4685
    %v5382 = vunpack.c.l.b16 %v4686
    %v5383 = vunpack.c.h.b16 %v4686
    %v5384 = vunpack.c.l.b16 %v4687
    %v5385 = vunpack.c.h.b16 %v4687
    %v5386 = vunpack.c.l.b16 %v4688
    %v5387 = vunpack.c.h.b16 %v4688
    %v5388 = vunpack.c.l.b16 %v4689
    %v5389 = vunpack.c.h.b16 %v4689
    %v5390 = vunpack.c.l.b16 %v4690
    %v5391 = vunpack.c.h.b16 %v4690
    %v5392 = vunpack.c.l.b16 %v4691
    %v5393 = vunpack.c.h.b16 %v4691
    %v5394 = vunpack.c.l.b16 %v4692
    %v5395 = vunpack.c.h.b16 %v4692
    %v5396 = vunpack.c.l.b16 %v4693
    %v5397 = vunpack.c.h.b16 %v4693
    %v5398 = vunpack.c.l.b16 %v4694
    %v5399 = vunpack.c.h.b16 %v4694
    %v5400 = vunpack.c.l.b16 %v4695
    %v5401 = vunpack.c.h.b16 %v4695
    %v5402 = vunpack.c.l.b16 %v4696
    %v5403 = vunpack.c.h.b16 %v4696
    %v5404 = vunpack.c.l.b16 %v4697
    %v5405 = vunpack.c.h.b16 %v4697
    %v5406 = vunpack.c.l.b16 %v4698
    %v5407 = vunpack.c.h.b16 %v4698
    %v5408 = vunpack.c.l.b16 %v4699
    %v5409 = vunpack.c.h.b16 %v4699
    %v5410 = vunpack.c.l.b16 %v4700
    %v5411 = vunpack.c.h.b16 %v4700
    %v5412 = vunpack.c.l.b16 %v4701
    %v5413 = vunpack.c.h.b16 %v4701
    %v5414 = vunpack.c.l.b16 %v4702
    %v5415 = vunpack.c.h.b16 %v4702
    %v5416 = vunpack.c.l.b16 %v4703
    %v5417 = vunpack.c.h.b16 %v4703
    %v5418 = vunpack.c.l.b16 %v4704
    %v5419 = vunpack.c.h.b16 %v4704
    %v5420 = vunpack.c.l.b16 %v4705
    %v5421 = vunpack.c.h.b16 %v4705
    %v5422 = vunpack.c.l.b16 %v4706
    %v5423 = vunpack.c.h.b16 %v4706
    %v5424 = vunpack.c.l.b16 %v4707
    %v5425 = vunpack.c.h.b16 %v4707
    %v5426 = vunpack.c.l.b16 %v4708
    %v5427 = vunpack.c.h.b16 %v4708
    %v5428 = vunpack.c.l.b16 %v4709
    %v5429 = vunpack.c.h.b16 %v4709
    %v5430 = vunpack.c.l.b16 %v4710
    %v5431 = vunpack.c.h.b16 %v4710
    %v5432 = vunpack.c.l.b16 %v4711
    %v5433 = vunpack.c.h.b16 %v4711
    %v5434 = vunpack.c.l.b16 %v4712
    %v5435 = vunpack.c.h.b16 %v4712
    %v5436 = vunpack.c.l.b16 %v4713
    %v5437 = vunpack.c.h.b16 %v4713
    %v5438 = vunpack.c.l.b16 %v4714
    %v5439 = vunpack.c.h.b16 %v4714
    %v5440 = vunpack.c.l.b16 %v4715
    %v5441 = vunpack.c.h.b16 %v4715
    %v5442 = vunpack.c.l.b16 %v4716
    %v5443 = vunpack.c.h.b16 %v4716
    %v5444 = vunpack.c.l.b16 %v4717
    %v5445 = vunpack.c.h.b16 %v4717
    %v5446 = vunpack.c.l.b16 %v4718
    %v5447 = vunpack.c.h.b16 %v4718
    %v5448 = vunpack.c.l.b16 %v4719
    %v5449 = vunpack.c.h.b16 %v4719
    %v5450 = vunpack.c.l.b16 %v4720
    %v5451 = vunpack.c.h.b16 %v4720
    %v5452 = vunpack.c.l.b16 %v4721
    %v5453 = vunpack.c.h.b16 %v4721
    %v5454 = vunpack.c.l.b16 %v4722
    %v5455 = vunpack.c.h.b16 %v4722
    %v5456 = vunpack.c.l.b16 %v4723
    %v5457 = vunpack.c.h.b16 %v4723
    %v5458 = vunpack.c.l.b16 %v4724
    %v5459 = vunpack.c.h.b16 %v4724
    %v5460 = vunpack.c.l.b16 %v4725
    %v5461 = vunpack.c.h.b16 %v4725
    %v5462 = vunpack.c.l.b16 %v4726
    %v5463 = vunpack.c.h.b16 %v4726
    %v5464 = vunpack.c.l.b16 %v4727
    %v5465 = vunpack.c.h.b16 %v4727
    %v5466 = vunpack.c.l.b16 %v4728
    %v5467 = vunpack.c.h.b16 %v4728
    %v5468 = vunpack.c.l.b16 %v4729
    %v5469 = vunpack.c.h.b16 %v4729
    %v5470 = vunpack.c.l.b16 %v4730
    %v5471 = vunpack.c.h.b16 %v4730
    %v5472 = vunpack.c.l.b16 %v4731
    %v5473 = vunpack.c.h.b16 %v4731
    %v5474 = vunpack.c.l.b16 %v4732
    %v5475 = vunpack.c.h.b16 %v4732
    %v5476 = vunpack.c.l.b16 %v4733
    %v5477 = vunpack.c.h.b16 %v4733
    %v5478 = vunpack.c.l.b16 %v4734
    %v5479 = vunpack.c.h.b16 %v4734
    %v5480 = vunpack.c.l.b16 %v4735
    %v5481 = vunpack.c.h.b16 %v4735
    %v5482 = vunpack.c.l.b16 %v4736
    %v5483 = vunpack.c.h.b16 %v4736
    %v5484 = vunpack.c.l.b16 %v4737
    %v5485 = vunpack.c.h.b16 %v4737
    %v5486 = vunpack.c.l.b16 %v4738
    %v5487 = vunpack.c.h.b16 %v4738
    %v5488 = vunpack.c.l.b16 %v4739
    %v5489 = vunpack.c.h.b16 %v4739
    %v5490 = vunpack.c.l.b16 %v4740
    %v5491 = vunpack.c.h.b16 %v4740
    %v5492 = vunpack.c.l.b16 %v4741
    %v5493 = vunpack.c.h.b16 %v4741
    %v5494 = vunpack.c.l.b16 %v4742
    %v5495 = vunpack.c.h.b16 %v4742
    %v5496 = vunpack.c.l.b16 %v4743
    %v5497 = vunpack.c.h.b16 %v4743
    %v5498 = vunpack.c.l.b16 %v4744
    %v5499 = vunpack.c.h.b16 %v4744
    %v5500 = vunpack.c.l.b16 %v4745
    %v5501 = vunpack.c.h.b16 %v4745
    %v5502 = vunpack.c.l.b16 %v4746
    %v5503 = vunpack.c.h.b16 %v4746
    %v5504 = vunpack.c.l.b16 %v4747
    %v5505 = vunpack.c.h.b16 %v4747
    %v5506 = vunpack.c.l.b16 %v4748
    %v5507 = vunpack.c.h.b16 %v4748
    %v5508 = vunpack.c.l.b16 %v4749
    %v5509 = vunpack.c.h.b16 %v4749
    %v5510 = vunpack.c.l.b16 %v4750
    %v5511 = vunpack.c.h.b16 %v4750
    %v5512 = vunpack.c.l.b16 %v4751
    %v5513 = vunpack.c.h.b16 %v4751
    %v5514 = vunpack.c.l.b16 %v4752
    %v5515 = vunpack.c.h.b16 %v4752
    %v5516 = vunpack.c.l.b16 %v4753
    %v5517 = vunpack.c.h.b16 %v4753
    %v5518 = vunpack.c.l.b16 %v4754
    %v5519 = vunpack.c.h.b16 %v4754
    %v5520 = vunpack.c.l.b16 %v4755
    %v5521 = vunpack.c.h.b16 %v4755
    %v5522 = vunpack.c.l.b16 %v4756
    %v5523 = vunpack.c.h.b16 %v4756
    %v5524 = vunpack.c.l.b16 %v4757
    %v5525 = vunpack.c.h.b16 %v4757
    %v5526 = vunpack.c.l.b16 %v4758
    %v5527 = vunpack.c.h.b16 %v4758
    %v5528 = vunpack.c.l.b16 %v4759
    %v5529 = vunpack.c.h.b16 %v4759
    %v5530 = vunpack.c.l.b16 %v4760
    %v5531 = vunpack.c.h.b16 %v4760
    %v5532 = vunpack.c.l.b16 %v4761
    %v5533 = vunpack.c.h.b16 %v4761
    %v5534 = vunpack.c.l.b16 %v4762
    %v5535 = vunpack.c.h.b16 %v4762
    %v5536 = vunpack.c.l.b16 %v4763
    %v5537 = vunpack.c.h.b16 %v4763
    %v5538 = vunpack.c.l.b16 %v4764
    %v5539 = vunpack.c.h.b16 %v4764
    %v5540 = vunpack.c.l.b16 %v4765
    %v5541 = vunpack.c.h.b16 %v4765
    %v5542 = vunpack.c.l.b16 %v4766
    %v5543 = vunpack.c.h.b16 %v4766
    %v5544 = vunpack.c.l.b16 %v4767
    %v5545 = vunpack.c.h.b16 %v4767
    %v5546 = vunpack.c.l.b16 %v4768
    %v5547 = vunpack.c.h.b16 %v4768
    %v5548 = vunpack.c.l.b16 %v4769
    %v5549 = vunpack.c.h.b16 %v4769
    %v5550 = vunpack.c.l.b16 %v4770
    %v5551 = vunpack.c.h.b16 %v4770
    %v5552 = vunpack.c.l.b16 %v4771
    %v5553 = vunpack.c.h.b16 %v4771
    %v5554 = vunpack.c.l.b16 %v4772
    %v5555 = vunpack.c.h.b16 %v4772
    %v5556 = vunpack.c.l.b16 %v4773
    %v5557 = vunpack.c.h.b16 %v4773
    %v5558 = vunpack.c.l.b16 %v4774
    %v5559 = vunpack.c.h.b16 %v4774
    %v5560 = vunpack.c.l.b16 %v4775
    %v5561 = vunpack.c.h.b16 %v4775
    %v5562 = vunpack.c.l.b16 %v4776
    %v5563 = vunpack.c.h.b16 %v4776
    %v5564 = vunpack.c.l.b16 %v4777
    %v5565 = vunpack.c.h.b16 %v4777
    %v5566 = vunpack.c.l.b16 %v4778
    %v5567 = vunpack.c.h.b16 %v4778
    %v5568 = vunpack.c.l.b16 %v4779
    %v5569 = vunpack.c.h.b16 %v4779
    %v5570 = vunpack.c.l.b16 %v4780
    %v5571 = vunpack.c.h.b16 %v4780
    %v5572 = vunpack.c.l.b16 %v4781
    %v5573 = vunpack.c.h.b16 %v4781
    %v5574 = vunpack.c.l.b16 %v4782
    %v5575 = vunpack.c.h.b16 %v4782
    %v5576 = vunpack.c.l.b16 %v4783
    %v5577 = vunpack.c.h.b16 %v4783
    %v5578 = vunpack.c.l.b16 %v4784
    %v5579 = vunpack.c.h.b16 %v4784
    %v5580 = vunpack.c.l.b16 %v4785
    %v5581 = vunpack.c.h.b16 %v4785
    %v5582 = vunpack.c.l.b16 %v4786
    %v5583 = vunpack.c.h.b16 %v4786
    %v5584 = vunpack.c.l.b16 %v4787
    %v5585 = vunpack.c.h.b16 %v4787
    %v5586 = vunpack.c.l.b16 %v4788
    %v5587 = vunpack.c.h.b16 %v4788
    %v5588 = vunpack.c.l.b16 %v4789
    %v5589 = vunpack.c.h.b16 %v4789
    %v5590 = vunpack.c.l.b16 %v4790
    %v5591 = vunpack.c.h.b16 %v4790
    %v5592 = vunpack.c.l.b16 %v4791
    %v5593 = vunpack.c.h.b16 %v4791
    %v5594 = vunpack.c.l.b16 %v4792
    %v5595 = vunpack.c.h.b16 %v4792
    %v5596 = vunpack.c.l.b16 %v4793
    %v5597 = vunpack.c.h.b16 %v4793
    %v5598 = vunpack.c.l.b16 %v4794
    %v5599 = vunpack.c.h.b16 %v4794
    %v5600 = vunpack.c.l.b16 %v4795
    %v5601 = vunpack.c.h.b16 %v4795
    %v5602 = vunpack.c.l.b16 %v4796
    %v5603 = vunpack.c.h.b16 %v4796
    %v5604 = vunpack.c.l.b16 %v4797
    %v5605 = vunpack.c.h.b16 %v4797
    %v5606 = vunpack.c.l.b16 %v4798
    %v5607 = vunpack.c.h.b16 %v4798
    %v5608 = vunpack.c.l.b16 %v4799
    %v5609 = vunpack.c.h.b16 %v4799
    %v5610 = vunpack.c.l.b16 %v4800
    %v5611 = vunpack.c.h.b16 %v4800
    %v5612 = vunpack.c.l.b16 %v4801
    %v5613 = vunpack.c.h.b16 %v4801
    %v5614 = vunpack.c.l.b16 %v4802
    %v5615 = vunpack.c.h.b16 %v4802
    %v5616 = vunpack.c.l.b16 %v4803
    %v5617 = vunpack.c.h.b16 %v4803
    %v5618 = vunpack.c.l.b16 %v4804
    %v5619 = vunpack.c.h.b16 %v4804
    %v5620 = vunpack.c.l.b16 %v4805
    %v5621 = vunpack.c.h.b16 %v4805
    %v5622 = vunpack.c.l.b16 %v4806
    %v5623 = vunpack.c.h.b16 %v4806
    %v5624 = vunpack.c.l.b16 %v4807
    %v5625 = vunpack.c.h.b16 %v4807
    %v5626 = vunpack.c.l.b16 %v4808
    %v5627 = vunpack.c.h.b16 %v4808
    %v5628 = vunpack.c.l.b16 %v4809
    %v5629 = vunpack.c.h.b16 %v4809
    %v5630 = vunpack.c.l.b16 %v4810
    %v5631 = vunpack.c.h.b16 %v4810
    %v5632 = vunpack.c.l.b16 %v4811
    %v5633 = vunpack.c.h.b16 %v4811
    %v5634 = vunpack.c.l.b16 %v4812
    %v5635 = vunpack.c.h.b16 %v4812
    %v5636 = vunpack.c.l.b16 %v4813
    %v5637 = vunpack.c.h.b16 %v4813
    %v5638 = vunpack.c.l.b16 %v4814
    %v5639 = vunpack.c.h.b16 %v4814
    %v5640 = vunpack.c.l.b16 %v4815
    %v5641 = vunpack.c.h.b16 %v4815
    %v5642 = vunpack.c.l.b16 %v4816
    %v5643 = vunpack.c.h.b16 %v4816
    %v5644 = vunpack.c.l.b16 %v4817
    %v5645 = vunpack.c.h.b16 %v4817
    %v5646 = vunpack.c.l.b16 %v4818
    %v5647 = vunpack.c.h.b16 %v4818
    %v5648 = vunpack.c.l.b16 %v4819
    %v5649 = vunpack.c.h.b16 %v4819
    %v5650 = vunpack.c.l.b16 %v4820
    %v5651 = vunpack.c.h.b16 %v4820
    %v5652 = vunpack.c.l.b16 %v4821
    %v5653 = vunpack.c.h.b16 %v4821
    %v5654 = vunpack.c.l.b16 %v4822
    %v5655 = vunpack.c.h.b16 %v4822
    %v5656 = vunpack.c.l.b16 %v4823
    %v5657 = vunpack.c.h.b16 %v4823
    %v5658 = vunpack.c.l.b16 %v4824
    %v5659 = vunpack.c.h.b16 %v4824
    %v5660 = vunpack.c.l.b16 %v4825
    %v5661 = vunpack.c.h.b16 %v4825
    %v5662 = vunpack.c.l.b16 %v4826
    %v5663 = vunpack.c.h.b16 %v4826
    %v5664 = vunpack.c.l.b16 %v4827
    %v5665 = vunpack.c.h.b16 %v4827
    %v5666 = vunpack.c.l.b16 %v4828
    %v5667 = vunpack.c.h.b16 %v4828
    %v5668 = vunpack.c.l.b16 %v4829
    %v5669 = vunpack.c.h.b16 %v4829
    %v5670 = vunpack.c.l.b16 %v4830
    %v5671 = vunpack.c.h.b16 %v4830
    %v5672 = vunpack.c.l.b16 %v4831
    %v5673 = vunpack.c.h.b16 %v4831
    %v5674 = vunpack.c.l.b16 %v4832
    %v5675 = vunpack.c.h.b16 %v4832
    %v5676 = vunpack.c.l.b16 %v4833
    %v5677 = vunpack.c.h.b16 %v4833
    %v5678 = vunpack.c.l.b16 %v4834
    %v5679 = vunpack.c.h.b16 %v4834
    %v5680 = vunpack.c.l.b16 %v4835
    %v5681 = vunpack.c.h.b16 %v4835
    %v5682 = vunpack.c.l.b16 %v4836
    %v5683 = vunpack.c.h.b16 %v4836
    %v5684 = vunpack.c.l.b16 %v4837
    %v5685 = vunpack.c.h.b16 %v4837
    %v5686 = vunpack.c.l.b16 %v4838
    %v5687 = vunpack.c.h.b16 %v4838
    %v5688 = vunpack.c.l.b16 %v4839
    %v5689 = vunpack.c.h.b16 %v4839
    %v5690 = vunpack.c.l.b16 %v4840
    %v5691 = vunpack.c.h.b16 %v4840
    %v5692 = vunpack.c.l.b16 %v4841
    %v5693 = vunpack.c.h.b16 %v4841
    %v5694 = vunpack.c.l.b16 %v4842
    %v5695 = vunpack.c.h.b16 %v4842
    %v5696 = vunpack.c.l.b16 %v4843
    %v5697 = vunpack.c.h.b16 %v4843
    %v5698 = vunpack.c.l.b16 %v4844
    %v5699 = vunpack.c.h.b16 %v4844
    %v5700 = vunpack.c.l.b16 %v4845
    %v5701 = vunpack.c.h.b16 %v4845
    %v5702 = vunpack.c.l.b16 %v4846
    %v5703 = vunpack.c.h.b16 %v4846
    %v5704 = vunpack.c.l.b16 %v4847
    %v5705 = vunpack.c.h.b16 %v4847
    %v5706 = vunpack.c.l.b16 %v4848
    %v5707 = vunpack.c.h.b16 %v4848
    %v5708 = vunpack.c.l.b16 %v4849
    %v5709 = vunpack.c.h.b16 %v4849
    %v5710 = vunpack.c.l.b16 %v4850
    %v5711 = vunpack.c.h.b16 %v4850
    %v5712 = vunpack.c.l.b16 %v4851
    %v5713 = vunpack.c.h.b16 %v4851
    %v5714 = vunpack.c.l.b16 %v4852
    %v5715 = vunpack.c.h.b16 %v4852
    %v5716 = vunpack.c.l.b16 %v4853
    %v5717 = vunpack.c.h.b16 %v4853
    %v5718 = vunpack.c.l.b16 %v4854
    %v5719 = vunpack.c.h.b16 %v4854
    %v5720 = vunpack.c.l.b16 %v4855
    %v5721 = vunpack.c.h.b16 %v4855
    %v5722 = vunpack.c.l.b16 %v4856
    %v5723 = vunpack.c.h.b16 %v4856
    %v5724 = vunpack.c.l.b16 %v4857
    %v5725 = vunpack.c.h.b16 %v4857
    %v5726 = vunpack.c.l.b16 %v4858
    %v5727 = vunpack.c.h.b16 %v4858
    %v5728 = vunpack.c.l.b16 %v4859
    %v5729 = vunpack.c.h.b16 %v4859
    %v5730 = vunpack.c.l.b16 %v4860
    %v5731 = vunpack.c.h.b16 %v4860
    %v5732 = vunpack.c.l.b16 %v4861
    %v5733 = vunpack.c.h.b16 %v4861
    %v5734 = vunpack.c.l.b16 %v4862
    %v5735 = vunpack.c.h.b16 %v4862
    %v5736 = vunpack.c.l.b16 %v4863
    %v5737 = vunpack.c.h.b16 %v4863
    %v5738 = vunpack.c.l.b16 %v4864
    %v5739 = vunpack.c.h.b16 %v4864
    %v5740 = vunpack.c.l.b16 %v4865
    %v5741 = vunpack.c.h.b16 %v4865
    %v5742 = vunpack.c.l.b16 %v4866
    %v5743 = vunpack.c.h.b16 %v4866
    %v5744 = vunpack.c.l.b16 %v4867
    %v5745 = vunpack.c.h.b16 %v4867
    %v5746 = vunpack.c.l.b16 %v4868
    %v5747 = vunpack.c.h.b16 %v4868
    %v5748 = vunpack.c.l.b16 %v4869
    %v5749 = vunpack.c.h.b16 %v4869
    %v5750 = vunpack.c.l.b16 %v4870
    %v5751 = vunpack.c.h.b16 %v4870
    %v5752 = vunpack.c.l.b16 %v4871
    %v5753 = vunpack.c.h.b16 %v4871
    %v5754 = vunpack.c.l.b16 %v4872
    %v5755 = vunpack.c.h.b16 %v4872
    %v5756 = vunpack.c.l.b16 %v4873
    %v5757 = vunpack.c.h.b16 %v4873
    %v5758 = vunpack.c.l.b16 %v4874
    %v5759 = vunpack.c.h.b16 %v4874
    %v5760 = vunpack.c.l.b16 %v4875
    %v5761 = vunpack.c.h.b16 %v4875
    %v5762 = vunpack.c.l.b16 %v4876
    %v5763 = vunpack.c.h.b16 %v4876
    %v5764 = vunpack.c.l.b16 %v4877
    %v5765 = vunpack.c.h.b16 %v4877
    %v5766 = vunpack.c.l.b16 %v4878
    %v5767 = vunpack.c.h.b16 %v4878
    %v5768 = vunpack.c.l.b16 %v4879
    %v5769 = vunpack.c.h.b16 %v4879
    %v5770 = vunpack.c.l.b16 %v4880
    %v5771 = vunpack.c.h.b16 %v4880
    %v5772 = vunpack.c.l.b16 %v4881
    %v5773 = vunpack.c.h.b16 %v4881
    %v5774 = vunpack.c.l.b16 %v4882
    %v5775 = vunpack.c.h.b16 %v4882
    %v5776 = vunpack.c.l.b16 %v4883
    %v5777 = vunpack.c.h.b16 %v4883
    %v5778 = vunpack.c.l.b16 %v4884
    %v5779 = vunpack.c.h.b16 %v4884
    %v5780 = vunpack.c.l.b16 %v4885
    %v5781 = vunpack.c.h.b16 %v4885
    %v5782 = vunpack.c.l.b16 %v4886
    %v5783 = vunpack.c.h.b16 %v4886
    %v5784 = vpack.c.b16 %v5214, %v5208
    %v5785 = vpack.c.b16 %v5215, %v5209
    %v5786 = vpack.c.b16 %v5216, %v5210
    %v5787 = vpack.c.b16 %v5217, %v5211
    %v5788 = vpack.c.b16 %v5218, %v5212
    %v5789 = vpack.c.b16 %v5219, %v5213
    %v5790 = vpack.c.b16 %v5226, %v5220
    %v5791 = vpack.c.b16 %v5227, %v5221
    %v5792 = vpack.c.b16 %v5228, %v5222
    %v5793 = vpack.c.b16 %v5229, %v5223
    %v5794 = vpack.c.b16 %v5230, %v5224
    %v5795 = vpack.c.b16 %v5231, %v5225
    %v5796 = vpack.c.b16 %v5238, %v5232
    %v5797 = vpack.c.b16 %v5239, %v5233
    %v5798 = vpack.c.b16 %v5240, %v5234
    %v5799 = vpack.c.b16 %v5241, %v5235
    %v5800 = vpack.c.b16 %v5242, %v5236
    %v5801 = vpack.c.b16 %v5243, %v5237
    %v5802 = vpack.c.b16 %v5250, %v5244
    %v5803 = vpack.c.b16 %v5251, %v5245
    %v5804 = vpack.c.b16 %v5252, %v5246
    %v5805 = vpack.c.b16 %v5253, %v5247
    %v5806 = vpack.c.b16 %v5254, %v5248
    %v5807 = vpack.c.b16 %v5255, %v5249
    %v5808 = vpack.c.b16 %v5262, %v5256
    %v5809 = vpack.c.b16 %v5263, %v5257
    %v5810 = vpack.c.b16 %v5264, %v5258
    %v5811 = vpack.c.b16 %v5265, %v5259
    %v5812 = vpack.c.b16 %v5266, %v5260
    %v5813 = vpack.c.b16 %v5267, %v5261
    %v5814 = vpack.c.b16 %v5274, %v5268
    %v5815 = vpack.c.b16 %v5275, %v5269
    %v5816 = vpack.c.b16 %v5276, %v5270
    %v5817 = vpack.c.b16 %v5277, %v5271
    %v5818 = vpack.c.b16 %v5278, %v5272
    %v5819 = vpack.c.b16 %v5279, %v5273
    %v5820 = vpack.c.b16 %v5286, %v5280
    %v5821 = vpack.c.b16 %v5287, %v5281
    %v5822 = vpack.c.b16 %v5288, %v5282
    %v5823 = vpack.c.b16 %v5289, %v5283
    %v5824 = vpack.c.b16 %v5290, %v5284
    %v5825 = vpack.c.b16 %v5291, %v5285
    %v5826 = vpack.c.b16 %v5298, %v5292
    %v5827 = vpack.c.b16 %v5299, %v5293
    %v5828 = vpack.c.b16 %v5300, %v5294
    %v5829 = vpack.c.b16 %v5301, %v5295
    %v5830 = vpack.c.b16 %v5302, %v5296
    %v5831 = vpack.c.b16 %v5303, %v5297
    %v5832 = vpack.c.b16 %v5310, %v5304
    %v5833 = vpack.c.b16 %v5311, %v5305
    %v5834 = vpack.c.b16 %v5312, %v5306
    %v5835 = vpack.c.b16 %v5313, %v5307
    %v5836 = vpack.c.b16 %v5314, %v5308
    %v5837 = vpack.c.b16 %v5315, %v5309
    %v5838 = vpack.c.b16 %v5322, %v5316
    %v5839 = vpack.c.b16 %v5323, %v5317
    %v5840 = vpack.c.b16 %v5324, %v5318
    %v5841 = vpack.c.b16 %v5325, %v5319
    %v5842 = vpack.c.b16 %v5326, %v5320
    %v5843 = vpack.c.b16 %v5327, %v5321
    %v5844 = vpack.c.b16 %v5334, %v5328
    %v5845 = vpack.c.b16 %v5335, %v5329
    %v5846 = vpack.c.b16 %v5336, %v5330
    %v5847 = vpack.c.b16 %v5337, %v5331
    %v5848 = vpack.c.b16 %v5338, %v5332
    %v5849 = vpack.c.b16 %v5339, %v5333
    %v5850 = vpack.c.b16 %v5346, %v5340
    %v5851 = vpack.c.b16 %v5347, %v5341
    %v5852 = vpack.c.b16 %v5348, %v5342
    %v5853 = vpack.c.b16 %v5349, %v5343
    %v5854 = vpack.c.b16 %v5350, %v5344
    %v5855 = vpack.c.b16 %v5351, %v5345
    %v5856 = vpack.c.b16 %v5358, %v5352
    %v5857 = vpack.c.b16 %v5359, %v5353
    %v5858 = vpack.c.b16 %v5360, %v5354
    %v5859 = vpack.c.b16 %v5361, %v5355
    %v5860 = vpack.c.b16 %v5362, %v5356
    %v5861 = vpack.c.b16 %v5363, %v5357
    %v5862 = vpack.c.b16 %v5370, %v5364
    %v5863 = vpack.c.b16 %v5371, %v5365
    %v5864 = vpack.c.b16 %v5372, %v5366
    %v5865 = vpack.c.b16 %v5373, %v5367
    %v5866 = vpack.c.b16 %v5374, %v5368
    %v5867 = vpack.c.b16 %v5375, %v5369
    %v5868 = vpack.c.b16 %v5382, %v5376
    %v5869 = vpack.c.b16 %v5383, %v5377
    %v5870 = vpack.c.b16 %v5384, %v5378
    %v5871 = vpack.c.b16 %v5385, %v5379
    %v5872 = vpack.c.b16 %v5386, %v5380
    %v5873 = vpack.c.b16 %v5387, %v5381
    %v5874 = vpack.c.b16 %v5394, %v5388
    %v5875 = vpack.c.b16 %v5395, %v5389
    %v5876 = vpack.c.b16 %v5396, %v5390
    %v5877 = vpack.c.b16 %v5397, %v5391
    %v5878 = vpack.c.b16 %v5398, %v5392
    %v5879 = vpack.c.b16 %v5399, %v5393
    %v5880 = vpack.c.b16 %v5406, %v5400
    %v5881 = vpack.c.b16 %v5407, %v5401
    %v5882 = vpack.c.b16 %v5408, %v5402
    %v5883 = vpack.c.b16 %v5409, %v5403
    %v5884 = vpack.c.b16 %v5410, %v5404
    %v5885 = vpack.c.b16 %v5411, %v5405
    %v5886 = vpack.c.b16 %v5418, %v5412
    %v5887 = vpack.c.b16 %v5419, %v5413
    %v5888 = vpack.c.b16 %v5420, %v5414
    %v5889 = vpack.c.b16 %v5421, %v5415
    %v5890 = vpack.c.b16 %v5422, %v5416
    %v5891 = vpack.c.b16 %v5423, %v5417
    %v5892 = vpack.c.b16 %v5430, %v5424
    %v5893 = vpack.c.b16 %v5431, %v5425
    %v5894 = vpack.c.b16 %v5432, %v5426
    %v5895 = vpack.c.b16 %v5433, %v5427
    %v5896 = vpack.c.b16 %v5434, %v5428
    %v5897 = vpack.c.b16 %v5435, %v5429
    %v5898 = vpack.c.b16 %v5442, %v5436
    %v5899 = vpack.c.b16 %v5443, %v5437
    %v5900 = vpack.c.b16 %v5444, %v5438
    %v5901 = vpack.c.b16 %v5445, %v5439
    %v5902 = vpack.c.b16 %v5446, %v5440
    %v5903 = vpack.c.b16 %v5447, %v5441
    %v5904 = vpack.c.b16 %v5454, %v5448
    %v5905 = vpack.c.b16 %v5455, %v5449
    %v5906 = vpack.c.b16 %v5456, %v5450
    %v5907 = vpack.c.b16 %v5457, %v5451
    %v5908 = vpack.c.b16 %v5458, %v5452
    %v5909 = vpack.c.b16 %v5459, %v5453
    %v5910 = vpack.c.b16 %v5466, %v5460
    %v5911 = vpack.c.b16 %v5467, %v5461
    %v5912 = vpack.c.b16 %v5468, %v5462
    %v5913 = vpack.c.b16 %v5469, %v5463
    %v5914 = vpack.c.b16 %v5470, %v5464
    %v5915 = vpack.c.b16 %v5471, %v5465
    %v5916 = vpack.c.b16 %v5478, %v5472
    %v5917 = vpack.c.b16 %v5479, %v5473
    %v5918 = vpack.c.b16 %v5480, %v5474
    %v5919 = vpack.c.b16 %v5481, %v5475
    %v5920 = vpack.c.b16 %v5482, %v5476
    %v5921 = vpack.c.b16 %v5483, %v5477
    %v5922 = vpack.c.b16 %v5490, %v5484
    %v5923 = vpack.c.b16 %v5491, %v5485
    %v5924 = vpack.c.b16 %v5492, %v5486
    %v5925 = vpack.c.b16 %v5493, %v5487
    %v5926 = vpack.c.b16 %v5494, %v5488
    %v5927 = vpack.c.b16 %v5495, %v5489
    %v5928 = vpack.c.b16 %v5502, %v5496
    %v5929 = vpack.c.b16 %v5503, %v5497
    %v5930 = vpack.c.b16 %v5504, %v5498
    %v5931 = vpack.c.b16 %v5505, %v5499
    %v5932 = vpack.c.b16 %v5506, %v5500
    %v5933 = vpack.c.b16 %v5507, %v5501
    %v5934 = vpack.c.b16 %v5514, %v5508
    %v5935 = vpack.c.b16 %v5515, %v5509
    %v5936 = vpack.c.b16 %v5516, %v5510
    %v5937 = vpack.c.b16 %v5517, %v5511
    %v5938 = vpack.c.b16 %v5518, %v5512
    %v5939 = vpack.c.b16 %v5519, %v5513
    %v5940 = vpack.c.b16 %v5526, %v5520
    %v5941 = vpack.c.b16 %v5527, %v5521
    %v5942 = vpack.c.b16 %v5528, %v5522
    %v5943 = vpack.c.b16 %v5529, %v5523
    %v5944 = vpack.c.b16 %v5530, %v5524
    %v5945 = vpack.c.b16 %v5531, %v5525
    %v5946 = vpack.c.b16 %v5538, %v5532
    %v5947 = vpack.c.b16 %v5539, %v5533
    %v5948 = vpack.c.b16 %v5540, %v5534
    %v5949 = vpack.c.b16 %v5541, %v5535
    %v5950 = vpack.c.b16 %v5542, %v5536
    %v5951 = vpack.c.b16 %v5543, %v5537
    %v5952 = vpack.c.b16 %v5550, %v5544
    %v5953 = vpack.c.b16 %v5551, %v5545
    %v5954 = vpack.c.b16 %v5552, %v5546
    %v5955 = vpack.c.b16 %v5553, %v5547
    %v5956 = vpack.c.b16 %v5554, %v5548
    %v5957 = vpack.c.b16 %v5555, %v5549
    %v5958 = vpack.c.b16 %v5562, %v5556
    %v5959 = vpack.c.b16 %v5563, %v5557
    %v5960 = vpack.c.b16 %v5564, %v5558
    %v5961 = vpack.c.b16 %v5565, %v5559
    %v5962 = vpack.c.b16 %v5566, %v5560
    %v5963 = vpack.c.b16 %v5567, %v5561
    %v5964 = vpack.c.b16 %v5574, %v5568
    %v5965 = vpack.c.b16 %v5575, %v5569
    %v5966 = vpack.c.b16 %v5576, %v5570
    %v5967 = vpack.c.b16 %v5577, %v5571
    %v5968 = vpack.c.b16 %v5578, %v5572
    %v5969 = vpack.c.b16 %v5579, %v5573
    %v5970 = vpack.c.b16 %v5586, %v5580
    %v5971 = vpack.c.b16 %v5587, %v5581
    %v5972 = vpack.c.b16 %v5588, %v5582
    %v5973 = vpack.c.b16 %v5589, %v5583
    %v5974 = vpack.c.b16 %v5590, %v5584
    %v5975 = vpack.c.b16 %v5591, %v5585
    %v5976 = vpack.c.b16 %v5598, %v5592
    %v5977 = vpack.c.b16 %v5599, %v5593
    %v5978 = vpack.c.b16 %v5600, %v5594
    %v5979 = vpack.c.b16 %v5601, %v5595
    %v5980 = vpack.c.b16 %v5602, %v5596
    %v5981 = vpack.c.b16 %v5603, %v5597
    %v5982 = vpack.c.b16 %v5610, %v5604
    %v5983 = vpack.c.b16 %v5611, %v5605
    %v5984 = vpack.c.b16 %v5612, %v5606
    %v5985 = vpack.c.b16 %v5613, %v5607
    %v5986 = vpack.c.b16 %v5614, %v5608
    %v5987 = vpack.c.b16 %v5615, %v5609
    %v5988 = vpack.c.b16 %v5622, %v5616
    %v5989 = vpack.c.b16 %v5623, %v5617
    %v5990 = vpack.c.b16 %v5624, %v5618
    %v5991 = vpack.c.b16 %v5625, %v5619
    %v5992 = vpack.c.b16 %v5626, %v5620
    %v5993 = vpack.c.b16 %v5627, %v5621
    %v5994 = vpack.c.b16 %v5634, %v5628
    %v5995 = vpack.c.b16 %v5635, %v5629
    %v5996 = vpack.c.b16 %v5636, %v5630
    %v5997 = vpack.c.b16 %v5637, %v5631
    %v5998 = vpack.c.b16 %v5638, %v5632
    %v5999 = vpack.c.b16 %v5639, %v5633
    %v6000 = vpack.c.b16 %v5646, %v5640
    %v6001 = vpack.c.b16 %v5647, %v5641
    %v6002 = vpack.c.b16 %v5648, %v5642
    %v6003 = vpack.c.b16 %v5649, %v5643
    %v6004 = vpack.c.b16 %v5650, %v5644
    %v6005 = vpack.c.b16 %v5651, %v5645
    %v6006 = vpack.c.b16 %v5658, %v5652
    %v6007 = vpack.c.b16 %v5659, %v5653
    %v6008 = vpack.c.b16 %v5660, %v5654
    %v6009 = vpack.c.b16 %v5661, %v5655
    %v6010 = vpack.c.b16 %v5662, %v5656
    %v6011 = vpack.c.b16 %v5663, %v5657
    %v6012 = vpack.c.b16 %v5670, %v5664
    %v6013 = vpack.c.b16 %v5671, %v5665
    %v6014 = vpack.c.b16 %v5672, %v5666
    %v6015 = vpack.c.b16 %v5673, %v5667
    %v6016 = vpack.c.b16 %v5674, %v5668
    %v6017 = vpack.c.b16 %v5675, %v5669
    %v6018 = vpack.c.b16 %v5682, %v5676
    %v6019 = vpack.c.b16 %v5683, %v5677
    %v6020 = vpack.c.b16 %v5684, %v5678
    %v6021 = vpack.c.b16 %v5685, %v5679
    %v6022 = vpack.c.b16 %v5686, %v5680
    %v6023 = vpack.c.b16 %v5687, %v5681
    %v6024 = vpack.c.b16 %v5694, %v5688
    %v6025 = vpack.c.b16 %v5695, %v5689
    %v6026 = vpack.c.b16 %v5696, %v5690
    %v6027 = vpack.c.b16 %v5697, %v5691
    %v6028 = vpack.c.b16 %v5698, %v5692
    %v6029 = vpack.c.b16 %v5699, %v5693
    %v6030 = vpack.c.b16 %v5706, %v5700
    %v6031 = vpack.c.b16 %v5707, %v5701
    %v6032 = vpack.c.b16 %v5708, %v5702
    %v6033 = vpack.c.b16 %v5709, %v5703
    %v6034 = vpack.c.b16 %v5710, %v5704
    %v6035 = vpack.c.b16 %v5711, %v5705
    %v6036 = vpack.c.b16 %v5718, %v5712
    %v6037 = vpack.c.b16 %v5719, %v5713
    %v6038 = vpack.c.b16 %v5720, %v5714
    %v6039 = vpack.c.b16 %v5721, %v5715
    %v6040 = vpack.c.b16 %v5722, %v5716
    %v6041 = vpack.c.b16 %v5723, %v5717
    %v6042 = vpack.c.b16 %v5730, %v5724
    %v6043 = vpack.c.b16 %v5731, %v5725
    %v6044 = vpack.c.b16 %v5732, %v5726
    %v6045 = vpack.c.b16 %v5733, %v5727
    %v6046 = vpack.c.b16 %v5734, %v5728
    %v6047 = vpack.c.b16 %v5735, %v5729
    %v6048 = vpack.c.b16 %v5742, %v5736
    %v6049 = vpack.c.b16 %v5743, %v5737
    %v6050 = vpack.c.b16 %v5744, %v5738
    %v6051 = vpack.c.b16 %v5745, %v5739
    %v6052 = vpack.c.b16 %v5746, %v5740
    %v6053 = vpack.c.b16 %v5747, %v5741
    %v6054 = vpack.c.b16 %v5754, %v5748
    %v6055 = vpack.c.b16 %v5755, %v5749
    %v6056 = vpack.c.b16 %v5756, %v5750
    %v6057 = vpack.c.b16 %v5757, %v5751
    %v6058 = vpack.c.b16 %v5758, %v5752
    %v6059 = vpack.c.b16 %v5759, %v5753
    %v6060 = vpack.c.b16 %v5766, %v5760
    %v6061 = vpack.c.b16 %v5767, %v5761
    %v6062 = vpack.c.b16 %v5768, %v5762
    %v6063 = vpack.c.b16 %v5769, %v5763
    %v6064 = vpack.c.b16 %v5770, %v5764
    %v6065 = vpack.c.b16 %v5771, %v5765
    %v6066 = vpack.c.b16 %v5778, %v5772
    %v6067 = vpack.c.b16 %v5779, %v5773
    %v6068 = vpack.c.b16 %v5780, %v5774
    %v6069 = vpack.c.b16 %v5781, %v5775
    %v6070 = vpack.c.b16 %v5782, %v5776
    %v6071 = vpack.c.b16 %v5783, %v5777
    %6360 = vmatprep.subr.bf16.mxu0 %v5827
    %6361 = vmatpush1.bf16.msra.mxu0 %v5826
    %6362 = vmatprep.subr.bf16.mxu0 %v5821
    %6363 = vmatpush1.bf16.msra.mxu0 %v5820
    %6364 = vmatprep.subr.bf16.mxu0 %v5815
    %6365 = vmatpush1.bf16.msra.mxu0 %v5814
    %6366 = vmatprep.subr.bf16.mxu0 %v5809
    %6367 = vmatpush1.bf16.msra.mxu0 %v5808
    %6368 = vmatprep.subr.bf16.mxu0 %v5803
    %6369 = vmatpush1.bf16.msra.mxu0 %v5802
    %6370 = vmatprep.subr.bf16.mxu0 %v5797
    %6371 = vmatpush1.bf16.msra.mxu0 %v5796
    %6372 = vmatprep.subr.bf16.mxu0 %v5791
    %6373 = vmatpush1.bf16.msra.mxu0 %v5790
    %6374 = vmatprep.subr.bf16.mxu0 %v5785
    %6375 = vmatpush1.bf16.msra.mxu0 %v5784
    %6376 = vmatprep.subr.bf16.mxu0 %v5875
    %6377 = vmatpush2.bf16.msra.mxu0 %v5874
    %6378 = vmatprep.subr.bf16.mxu0 %v5869
    %6379 = vmatpush2.bf16.msra.mxu0 %v5868
    %6380 = vmatprep.subr.bf16.mxu0 %v5863
    %6381 = vmatpush2.bf16.msra.mxu0 %v5862
    %6382 = vmatprep.subr.bf16.mxu0 %v5857
    %6383 = vmatpush2.bf16.msra.mxu0 %v5856
    %6384 = vmatprep.subr.bf16.mxu0 %v5851
    %6385 = vmatpush2.bf16.msra.mxu0 %v5850
    %6386 = vmatprep.subr.bf16.mxu0 %v5845
    %6387 = vmatpush2.bf16.msra.mxu0 %v5844
    %6388 = vmatprep.subr.bf16.mxu0 %v5839
    %6389 = vmatpush2.bf16.msra.mxu0 %v5838
    %6390 = vmatprep.subr.bf16.mxu0 %v5833
    %6391 = vmatpush2.bf16.msra.mxu0 %v5832
    %6392 = vmatprep.mubr.bf16.mxu0 %v4593
    %6393 = vmatmul.mubr.bf16.gmra.mxu0 %v4592
    %v6394 = vpop.f32.mrf.mxu0
    %v6395 = vadd.f32 %v4893, %v6394
    %v6396 = vpop.f32.mrf.mxu0
    %v6397 = vadd.f32 %v4897, %v6396
    %v6398 = vpop.f32.mrf.mxu0
    %v6399 = vadd.f32 %v4893, %v6398
    %v6400 = vpop.f32.mrf.mxu0
    %v6401 = vadd.f32 %v4897, %v6400
    %6402 = vdwg.mxu0
    %6403 = vmatprep.subr.bf16.mxu0 %v5923
    %6404 = vmatpush1.bf16.msra.mxu0 %v5922
    %6405 = vmatprep.subr.bf16.mxu0 %v5917
    %6406 = vmatpush1.bf16.msra.mxu0 %v5916
    %6407 = vmatprep.subr.bf16.mxu0 %v5911
    %6408 = vmatpush1.bf16.msra.mxu0 %v5910
    %6409 = vmatprep.subr.bf16.mxu0 %v5905
    %6410 = vmatpush1.bf16.msra.mxu0 %v5904
    %6411 = vmatprep.subr.bf16.mxu0 %v5899
    %6412 = vmatpush1.bf16.msra.mxu0 %v5898
    %6413 = vmatprep.subr.bf16.mxu0 %v5893
    %6414 = vmatpush1.bf16.msra.mxu0 %v5892
    %6415 = vmatprep.subr.bf16.mxu0 %v5887
    %6416 = vmatpush1.bf16.msra.mxu0 %v5886
    %6417 = vmatprep.subr.bf16.mxu0 %v5881
    %6418 = vmatpush1.bf16.msra.mxu0 %v5880
    %6419 = vmatprep.subr.bf16.mxu0 %v5971
    %6420 = vmatpush2.bf16.msra.mxu0 %v5970
    %6421 = vmatprep.subr.bf16.mxu0 %v5965
    %6422 = vmatpush2.bf16.msra.mxu0 %v5964
    %6423 = vmatprep.subr.bf16.mxu0 %v5959
    %6424 = vmatpush2.bf16.msra.mxu0 %v5958
    %6425 = vmatprep.subr.bf16.mxu0 %v5953
    %6426 = vmatpush2.bf16.msra.mxu0 %v5952
    %6427 = vmatprep.subr.bf16.mxu0 %v5947
    %6428 = vmatpush2.bf16.msra.mxu0 %v5946
    %6429 = vmatprep.subr.bf16.mxu0 %v5941
    %6430 = vmatpush2.bf16.msra.mxu0 %v5940
    %6431 = vmatprep.subr.bf16.mxu0 %v5935
    %6432 = vmatpush2.bf16.msra.mxu0 %v5934
    %6433 = vmatprep.subr.bf16.mxu0 %v5929
    %6434 = vmatpush2.bf16.msra.mxu0 %v5928
    %6435 = vmatprep.mubr.bf16.mxu0 %v4595
    %6436 = vmatmul.mubr.bf16.gmra.mxu0 %v4594
    %v6437 = vpop.f32.mrf.mxu0
    %v6438 = vadd.f32 %v6395, %v6437
    %v6439 = vpop.f32.mrf.mxu0
    %v6440 = vadd.f32 %v6397, %v6439
    %v6441 = vpop.f32.mrf.mxu0
    %v6442 = vadd.f32 %v6399, %v6441
    %v6443 = vpop.f32.mrf.mxu0
    %v6444 = vadd.f32 %v6401, %v6443
    %6445 = vdwg.mxu0
    %6446 = vmatprep.subr.bf16.mxu0 %v6019
    %6447 = vmatpush1.bf16.msra.mxu0 %v6018
    %6448 = vmatprep.subr.bf16.mxu0 %v6013
    %6449 = vmatpush1.bf16.msra.mxu0 %v6012
    %6450 = vmatprep.subr.bf16.mxu0 %v6007
    %6451 = vmatpush1.bf16.msra.mxu0 %v6006
    %6452 = vmatprep.subr.bf16.mxu0 %v6001
    %6453 = vmatpush1.bf16.msra.mxu0 %v6000
    %6454 = vmatprep.subr.bf16.mxu0 %v5995
    %6455 = vmatpush1.bf16.msra.mxu0 %v5994
    %6456 = vmatprep.subr.bf16.mxu0 %v5989
    %6457 = vmatpush1.bf16.msra.mxu0 %v5988
    %6458 = vmatprep.subr.bf16.mxu0 %v5983
    %6459 = vmatpush1.bf16.msra.mxu0 %v5982
    %6460 = vmatprep.subr.bf16.mxu0 %v5977
    %6461 = vmatpush1.bf16.msra.mxu0 %v5976
    %6462 = vmatprep.subr.bf16.mxu0 %v6067
    %6463 = vmatpush2.bf16.msra.mxu0 %v6066
    %6464 = vmatprep.subr.bf16.mxu0 %v6061
    %6465 = vmatpush2.bf16.msra.mxu0 %v6060
    %6466 = vmatprep.subr.bf16.mxu0 %v6055
    %6467 = vmatpush2.bf16.msra.mxu0 %v6054
    %6468 = vmatprep.subr.bf16.mxu0 %v6049
    %6469 = vmatpush2.bf16.msra.mxu0 %v6048
    %6470 = vmatprep.subr.bf16.mxu0 %v6043
    %6471 = vmatpush2.bf16.msra.mxu0 %v6042
    %6472 = vmatprep.subr.bf16.mxu0 %v6037
    %6473 = vmatpush2.bf16.msra.mxu0 %v6036
    %6474 = vmatprep.subr.bf16.mxu0 %v6031
    %6475 = vmatpush2.bf16.msra.mxu0 %v6030
    %6476 = vmatprep.subr.bf16.mxu0 %v6025
    %6477 = vmatpush2.bf16.msra.mxu0 %v6024
    %6478 = vmatprep.mubr.bf16.mxu0 %v4597
    %6479 = vmatmul.mubr.bf16.gmra.mxu0 %v4596
    %v6480 = vpop.f32.mrf.mxu0
    %v6481 = vadd.f32 %v6438, %v6480
    %v6482 = vpop.f32.mrf.mxu0
    %v6483 = vadd.f32 %v6440, %v6482
    %v6484 = vpop.f32.mrf.mxu0
    %v6485 = vadd.f32 %v6442, %v6484
    %v6486 = vpop.f32.mrf.mxu0
    %v6487 = vadd.f32 %v6444, %v6486
    %6488 = vdwg.mxu0
    %6489 = vmatprep.subr.bf16.mxu0 %v5829
    %6490 = vmatpush1.bf16.msra.mxu0 %v5828
    %6491 = vmatprep.subr.bf16.mxu0 %v5823
    %6492 = vmatpush1.bf16.msra.mxu0 %v5822
    %6493 = vmatprep.subr.bf16.mxu0 %v5817
    %6494 = vmatpush1.bf16.msra.mxu0 %v5816
    %6495 = vmatprep.subr.bf16.mxu0 %v5811
    %6496 = vmatpush1.bf16.msra.mxu0 %v5810
    %6497 = vmatprep.subr.bf16.mxu0 %v5805
    %6498 = vmatpush1.bf16.msra.mxu0 %v5804
    %6499 = vmatprep.subr.bf16.mxu0 %v5799
    %6500 = vmatpush1.bf16.msra.mxu0 %v5798
    %6501 = vmatprep.subr.bf16.mxu0 %v5793
    %6502 = vmatpush1.bf16.msra.mxu0 %v5792
    %6503 = vmatprep.subr.bf16.mxu0 %v5787
    %6504 = vmatpush1.bf16.msra.mxu0 %v5786
    %6505 = vmatprep.subr.bf16.mxu0 %v5877
    %6506 = vmatpush2.bf16.msra.mxu0 %v5876
    %6507 = vmatprep.subr.bf16.mxu0 %v5871
    %6508 = vmatpush2.bf16.msra.mxu0 %v5870
    %6509 = vmatprep.subr.bf16.mxu0 %v5865
    %6510 = vmatpush2.bf16.msra.mxu0 %v5864
    %6511 = vmatprep.subr.bf16.mxu0 %v5859
    %6512 = vmatpush2.bf16.msra.mxu0 %v5858
    %6513 = vmatprep.subr.bf16.mxu0 %v5853
    %6514 = vmatpush2.bf16.msra.mxu0 %v5852
    %6515 = vmatprep.subr.bf16.mxu0 %v5847
    %6516 = vmatpush2.bf16.msra.mxu0 %v5846
    %6517 = vmatprep.subr.bf16.mxu0 %v5841
    %6518 = vmatpush2.bf16.msra.mxu0 %v5840
    %6519 = vmatprep.subr.bf16.mxu0 %v5835
    %6520 = vmatpush2.bf16.msra.mxu0 %v5834
    %6521 = vmatprep.mubr.bf16.mxu0 %v4593
    %6522 = vmatmul.mubr.bf16.gmra.mxu0 %v4592
    %v6523 = vpop.f32.mrf.mxu0
    %v6524 = vadd.f32 %v4901, %v6523
    %v6525 = vpop.f32.mrf.mxu0
    %v6526 = vadd.f32 %v4905, %v6525
    %v6527 = vpop.f32.mrf.mxu0
    %v6528 = vadd.f32 %v4901, %v6527
    %v6529 = vpop.f32.mrf.mxu0
    %v6530 = vadd.f32 %v4905, %v6529
    %6531 = vdwg.mxu0
    %6532 = vmatprep.subr.bf16.mxu0 %v5925
    %6533 = vmatpush1.bf16.msra.mxu0 %v5924
    %6534 = vmatprep.subr.bf16.mxu0 %v5919
    %6535 = vmatpush1.bf16.msra.mxu0 %v5918
    %6536 = vmatprep.subr.bf16.mxu0 %v5913
    %6537 = vmatpush1.bf16.msra.mxu0 %v5912
    %6538 = vmatprep.subr.bf16.mxu0 %v5907
    %6539 = vmatpush1.bf16.msra.mxu0 %v5906
    %6540 = vmatprep.subr.bf16.mxu0 %v5901
    %6541 = vmatpush1.bf16.msra.mxu0 %v5900
    %6542 = vmatprep.subr.bf16.mxu0 %v5895
    %6543 = vmatpush1.bf16.msra.mxu0 %v5894
    %6544 = vmatprep.subr.bf16.mxu0 %v5889
    %6545 = vmatpush1.bf16.msra.mxu0 %v5888
    %6546 = vmatprep.subr.bf16.mxu0 %v5883
    %6547 = vmatpush1.bf16.msra.mxu0 %v5882
    %6548 = vmatprep.subr.bf16.mxu0 %v5973
    %6549 = vmatpush2.bf16.msra.mxu0 %v5972
    %6550 = vmatprep.subr.bf16.mxu0 %v5967
    %6551 = vmatpush2.bf16.msra.mxu0 %v5966
    %6552 = vmatprep.subr.bf16.mxu0 %v5961
    %6553 = vmatpush2.bf16.msra.mxu0 %v5960
    %6554 = vmatprep.subr.bf16.mxu0 %v5955
    %6555 = vmatpush2.bf16.msra.mxu0 %v5954
    %6556 = vmatprep.subr.bf16.mxu0 %v5949
    %6557 = vmatpush2.bf16.msra.mxu0 %v5948
    %6558 = vmatprep.subr.bf16.mxu0 %v5943
    %6559 = vmatpush2.bf16.msra.mxu0 %v5942
    %6560 = vmatprep.subr.bf16.mxu0 %v5937
    %6561 = vmatpush2.bf16.msra.mxu0 %v5936
    %6562 = vmatprep.subr.bf16.mxu0 %v5931
    %6563 = vmatpush2.bf16.msra.mxu0 %v5930
    %6564 = vmatprep.mubr.bf16.mxu0 %v4595
    %6565 = vmatmul.mubr.bf16.gmra.mxu0 %v4594
    %v6566 = vpop.f32.mrf.mxu0
    %v6567 = vadd.f32 %v6524, %v6566
    %v6568 = vpop.f32.mrf.mxu0
    %v6569 = vadd.f32 %v6526, %v6568
    %v6570 = vpop.f32.mrf.mxu0
    %v6571 = vadd.f32 %v6528, %v6570
    %v6572 = vpop.f32.mrf.mxu0
    %v6573 = vadd.f32 %v6530, %v6572
    %6574 = vdwg.mxu0
    %6575 = vmatprep.subr.bf16.mxu0 %v6021
    %6576 = vmatpush1.bf16.msra.mxu0 %v6020
    %6577 = vmatprep.subr.bf16.mxu0 %v6015
    %6578 = vmatpush1.bf16.msra.mxu0 %v6014
    %6579 = vmatprep.subr.bf16.mxu0 %v6009
    %6580 = vmatpush1.bf16.msra.mxu0 %v6008
    %6581 = vmatprep.subr.bf16.mxu0 %v6003
    %6582 = vmatpush1.bf16.msra.mxu0 %v6002
    %6583 = vmatprep.subr.bf16.mxu0 %v5997
    %6584 = vmatpush1.bf16.msra.mxu0 %v5996
    %6585 = vmatprep.subr.bf16.mxu0 %v5991
    %6586 = vmatpush1.bf16.msra.mxu0 %v5990
    %6587 = vmatprep.subr.bf16.mxu0 %v5985
    %6588 = vmatpush1.bf16.msra.mxu0 %v5984
    %6589 = vmatprep.subr.bf16.mxu0 %v5979
    %6590 = vmatpush1.bf16.msra.mxu0 %v5978
    %6591 = vmatprep.subr.bf16.mxu0 %v6069
    %6592 = vmatpush2.bf16.msra.mxu0 %v6068
    %6593 = vmatprep.subr.bf16.mxu0 %v6063
    %6594 = vmatpush2.bf16.msra.mxu0 %v6062
    %6595 = vmatprep.subr.bf16.mxu0 %v6057
    %6596 = vmatpush2.bf16.msra.mxu0 %v6056
    %6597 = vmatprep.subr.bf16.mxu0 %v6051
    %6598 = vmatpush2.bf16.msra.mxu0 %v6050
    %6599 = vmatprep.subr.bf16.mxu0 %v6045
    %6600 = vmatpush2.bf16.msra.mxu0 %v6044
    %6601 = vmatprep.subr.bf16.mxu0 %v6039
    %6602 = vmatpush2.bf16.msra.mxu0 %v6038
    %6603 = vmatprep.subr.bf16.mxu0 %v6033
    %6604 = vmatpush2.bf16.msra.mxu0 %v6032
    %6605 = vmatprep.subr.bf16.mxu0 %v6027
    %6606 = vmatpush2.bf16.msra.mxu0 %v6026
    %6607 = vmatprep.mubr.bf16.mxu0 %v4597
    %6608 = vmatmul.mubr.bf16.gmra.mxu0 %v4596
    %v6609 = vpop.f32.mrf.mxu0
    %v6610 = vadd.f32 %v6567, %v6609
    %v6611 = vpop.f32.mrf.mxu0
    %v6612 = vadd.f32 %v6569, %v6611
    %v6613 = vpop.f32.mrf.mxu0
    %v6614 = vadd.f32 %v6571, %v6613
    %v6615 = vpop.f32.mrf.mxu0
    %v6616 = vadd.f32 %v6573, %v6615
    %6617 = vdwg.mxu0
    %6618 = vmatprep.subr.bf16.mxu0 %v5831
    %6619 = vmatpush1.bf16.msra.mxu0 %v5830
    %6620 = vmatprep.subr.bf16.mxu0 %v5825
    %6621 = vmatpush1.bf16.msra.mxu0 %v5824
    %6622 = vmatprep.subr.bf16.mxu0 %v5819
    %6623 = vmatpush1.bf16.msra.mxu0 %v5818
    %6624 = vmatprep.subr.bf16.mxu0 %v5813
    %6625 = vmatpush1.bf16.msra.mxu0 %v5812
    %6626 = vmatprep.subr.bf16.mxu0 %v5807
    %6627 = vmatpush1.bf16.msra.mxu0 %v5806
    %6628 = vmatprep.subr.bf16.mxu0 %v5801
    %6629 = vmatpush1.bf16.msra.mxu0 %v5800
    %6630 = vmatprep.subr.bf16.mxu0 %v5795
    %6631 = vmatpush1.bf16.msra.mxu0 %v5794
    %6632 = vmatprep.subr.bf16.mxu0 %v5789
    %6633 = vmatpush1.bf16.msra.mxu0 %v5788
    %6634 = vmatprep.subr.bf16.mxu0 %v5879
    %6635 = vmatpush2.bf16.msra.mxu0 %v5878
    %6636 = vmatprep.subr.bf16.mxu0 %v5873
    %6637 = vmatpush2.bf16.msra.mxu0 %v5872
    %6638 = vmatprep.subr.bf16.mxu0 %v5867
    %6639 = vmatpush2.bf16.msra.mxu0 %v5866
    %6640 = vmatprep.subr.bf16.mxu0 %v5861
    %6641 = vmatpush2.bf16.msra.mxu0 %v5860
    %6642 = vmatprep.subr.bf16.mxu0 %v5855
    %6643 = vmatpush2.bf16.msra.mxu0 %v5854
    %6644 = vmatprep.subr.bf16.mxu0 %v5849
    %6645 = vmatpush2.bf16.msra.mxu0 %v5848
    %6646 = vmatprep.subr.bf16.mxu0 %v5843
    %6647 = vmatpush2.bf16.msra.mxu0 %v5842
    %6648 = vmatprep.subr.bf16.mxu0 %v5837
    %6649 = vmatpush2.bf16.msra.mxu0 %v5836
    %6650 = vmatprep.mubr.bf16.mxu0 %v4593
    %6651 = vmatmul.mubr.bf16.gmra.mxu0 %v4592
    %v6652 = vpop.f32.mrf.mxu0
    %v6653 = vadd.f32 %v4909, %v6652
    %v6654 = vpop.f32.mrf.mxu0
    %v6655 = vadd.f32 %v4913, %v6654
    %v6656 = vpop.f32.mrf.mxu0
    %v6657 = vadd.f32 %v4909, %v6656
    %v6658 = vpop.f32.mrf.mxu0
    %v6659 = vadd.f32 %v4913, %v6658
    %6660 = vdwg.mxu0
    %6661 = vmatprep.subr.bf16.mxu0 %v5927
    %6662 = vmatpush1.bf16.msra.mxu0 %v5926
    %6663 = vmatprep.subr.bf16.mxu0 %v5921
    %6664 = vmatpush1.bf16.msra.mxu0 %v5920
    %6665 = vmatprep.subr.bf16.mxu0 %v5915
    %6666 = vmatpush1.bf16.msra.mxu0 %v5914
    %6667 = vmatprep.subr.bf16.mxu0 %v5909
    %6668 = vmatpush1.bf16.msra.mxu0 %v5908
    %6669 = vmatprep.subr.bf16.mxu0 %v5903
    %6670 = vmatpush1.bf16.msra.mxu0 %v5902
    %6671 = vmatprep.subr.bf16.mxu0 %v5897
    %6672 = vmatpush1.bf16.msra.mxu0 %v5896
    %6673 = vmatprep.subr.bf16.mxu0 %v5891
    %6674 = vmatpush1.bf16.msra.mxu0 %v5890
    %6675 = vmatprep.subr.bf16.mxu0 %v5885
    %6676 = vmatpush1.bf16.msra.mxu0 %v5884
    %6677 = vmatprep.subr.bf16.mxu0 %v5975
    %6678 = vmatpush2.bf16.msra.mxu0 %v5974
    %6679 = vmatprep.subr.bf16.mxu0 %v5969
    %6680 = vmatpush2.bf16.msra.mxu0 %v5968
    %6681 = vmatprep.subr.bf16.mxu0 %v5963
    %6682 = vmatpush2.bf16.msra.mxu0 %v5962
    %6683 = vmatprep.subr.bf16.mxu0 %v5957
    %6684 = vmatpush2.bf16.msra.mxu0 %v5956
    %6685 = vmatprep.subr.bf16.mxu0 %v5951
    %6686 = vmatpush2.bf16.msra.mxu0 %v5950
    %6687 = vmatprep.subr.bf16.mxu0 %v5945
    %6688 = vmatpush2.bf16.msra.mxu0 %v5944
    %6689 = vmatprep.subr.bf16.mxu0 %v5939
    %6690 = vmatpush2.bf16.msra.mxu0 %v5938
    %6691 = vmatprep.subr.bf16.mxu0 %v5933
    %6692 = vmatpush2.bf16.msra.mxu0 %v5932
    %6693 = vmatprep.mubr.bf16.mxu0 %v4595
    %6694 = vmatmul.mubr.bf16.gmra.mxu0 %v4594
    %v6695 = vpop.f32.mrf.mxu0
    %v6696 = vadd.f32 %v6653, %v6695
    %v6697 = vpop.f32.mrf.mxu0
    %v6698 = vadd.f32 %v6655, %v6697
    %v6699 = vpop.f32.mrf.mxu0
    %v6700 = vadd.f32 %v6657, %v6699
    %v6701 = vpop.f32.mrf.mxu0
    %v6702 = vadd.f32 %v6659, %v6701
    %6703 = vdwg.mxu0
    %6704 = vmatprep.subr.bf16.mxu0 %v6023
    %6705 = vmatpush1.bf16.msra.mxu0 %v6022
    %6706 = vmatprep.subr.bf16.mxu0 %v6017
    %6707 = vmatpush1.bf16.msra.mxu0 %v6016
    %6708 = vmatprep.subr.bf16.mxu0 %v6011
    %6709 = vmatpush1.bf16.msra.mxu0 %v6010
    %6710 = vmatprep.subr.bf16.mxu0 %v6005
    %6711 = vmatpush1.bf16.msra.mxu0 %v6004
    %6712 = vmatprep.subr.bf16.mxu0 %v5999
    %6713 = vmatpush1.bf16.msra.mxu0 %v5998
    %6714 = vmatprep.subr.bf16.mxu0 %v5993
    %6715 = vmatpush1.bf16.msra.mxu0 %v5992
    %6716 = vmatprep.subr.bf16.mxu0 %v5987
    %6717 = vmatpush1.bf16.msra.mxu0 %v5986
    %6718 = vmatprep.subr.bf16.mxu0 %v5981
    %6719 = vmatpush1.bf16.msra.mxu0 %v5980
    %6720 = vmatprep.subr.bf16.mxu0 %v6071
    %6721 = vmatpush2.bf16.msra.mxu0 %v6070
    %6722 = vmatprep.subr.bf16.mxu0 %v6065
    %6723 = vmatpush2.bf16.msra.mxu0 %v6064
    %6724 = vmatprep.subr.bf16.mxu0 %v6059
    %6725 = vmatpush2.bf16.msra.mxu0 %v6058
    %6726 = vmatprep.subr.bf16.mxu0 %v6053
    %6727 = vmatpush2.bf16.msra.mxu0 %v6052
    %6728 = vmatprep.subr.bf16.mxu0 %v6047
    %6729 = vmatpush2.bf16.msra.mxu0 %v6046
    %6730 = vmatprep.subr.bf16.mxu0 %v6041
    %6731 = vmatpush2.bf16.msra.mxu0 %v6040
    %6732 = vmatprep.subr.bf16.mxu0 %v6035
    %6733 = vmatpush2.bf16.msra.mxu0 %v6034
    %6734 = vmatprep.subr.bf16.mxu0 %v6029
    %6735 = vmatpush2.bf16.msra.mxu0 %v6028
    %6736 = vmatprep.mubr.bf16.mxu0 %v4597
    %6737 = vmatmul.mubr.bf16.gmra.mxu0 %v4596
    %v6738 = vpop.f32.mrf.mxu0
    %v6739 = vadd.f32 %v6696, %v6738
    %v6740 = vpop.f32.mrf.mxu0
    %v6741 = vadd.f32 %v6698, %v6740
    %v6742 = vpop.f32.mrf.mxu0
    %v6743 = vadd.f32 %v6700, %v6742
    %v6744 = vpop.f32.mrf.mxu0
    %v6745 = vadd.f32 %v6702, %v6744
    %6746 = vdwg.mxu0
    %v6747 = vmax.f32 %v6481, 0.0
    %v6748 = vmax.f32 %v6483, 0.0
    %v6749 = vmax.f32 %v6610, 0.0
    %v6750 = vmax.f32 %v6612, 0.0
    %v6751 = vmax.f32 %v6739, 0.0
    %v6752 = vmax.f32 %v6741, 0.0
    %v6753 = vmax.f32 %v6485, 0.0
    %v6754 = vmax.f32 %v6487, 0.0
    %v6755 = vmax.f32 %v6614, 0.0
    %v6756 = vmax.f32 %v6616, 0.0
    %v6757 = vmax.f32 %v6743, 0.0
    %v6758 = vmax.f32 %v6745, 0.0
    %v6759 = vpack.c.bf16 %v6753, %v6747
    %v6760 = vpack.c.bf16 %v6754, %v6748
    %v6761 = vpack.c.bf16 %v6755, %v6749
    %v6762 = vpack.c.bf16 %v6756, %v6750
    %v6763 = vpack.c.bf16 %v6757, %v6751
    %v6764 = vpack.c.bf16 %v6758, %v6752
    %s6765 = scalar_lea.vmem [#allocation7], 1536
    %v6766 = vld [vmem:[%s6765] sm:$0xff]
    %v6767 = vld [vmem:[%s6765 + $0x8] sm:$0xff]
    %v6768 = vld [vmem:[%s6765 + $0x10] sm:$0xff]
    %v6769 = vld [vmem:[%s6765 + $0x18] sm:$0xff]
    %v6770 = vld [vmem:[%s6765 + $0x20] sm:$0xff]
    %v6771 = vld [vmem:[%s6765 + $0x28] sm:$0xff]
    %v6772 = vld [vmem:[%s6765 + $0x30] sm:$0xff]
    %v6773 = vld [vmem:[%s6765 + $0x38] sm:$0xff]
    %v6774 = vld [vmem:[%s6765 + $0x40] sm:$0xff]
    %v6775 = vld [vmem:[%s6765 + $0x48] sm:$0xff]
    %v6776 = vld [vmem:[%s6765 + $0x50] sm:$0xff]
    %v6777 = vld [vmem:[%s6765 + $0x58] sm:$0xff]
    %v6778 = vld [vmem:[%s6765 + $0x60] sm:$0xff]
    %v6779 = vld [vmem:[%s6765 + $0x68] sm:$0xff]
    %v6780 = vld [vmem:[%s6765 + $0x70] sm:$0xff]
    %v6781 = vld [vmem:[%s6765 + $0x78] sm:$0xff]
    %v6782 = vld [vmem:[%s6765 + $0x80] sm:$0xff]
    %v6783 = vld [vmem:[%s6765 + $0x88] sm:$0xff]
    %v6784 = vld [vmem:[%s6765 + $0x90] sm:$0xff]
    %v6785 = vld [vmem:[%s6765 + $0x98] sm:$0xff]
    %v6786 = vld [vmem:[%s6765 + $0xa0] sm:$0xff]
    %v6787 = vld [vmem:[%s6765 + $0xa8] sm:$0xff]
    %v6788 = vld [vmem:[%s6765 + $0xb0] sm:$0xff]
    %v6789 = vld [vmem:[%s6765 + $0xb8] sm:$0xff]
    %v6790 = vld [vmem:[%s6765 + $0xc0] sm:$0xff]
    %v6791 = vld [vmem:[%s6765 + $0xc8] sm:$0xff]
    %v6792 = vld [vmem:[%s6765 + $0xd0] sm:$0xff]
    %v6793 = vld [vmem:[%s6765 + $0xd8] sm:$0xff]
    %v6794 = vld [vmem:[%s6765 + $0xe0] sm:$0xff]
    %v6795 = vld [vmem:[%s6765 + $0xe8] sm:$0xff]
    %v6796 = vld [vmem:[%s6765 + $0xf0] sm:$0xff]
    %v6797 = vld [vmem:[%s6765 + $0xf8] sm:$0xff]
    %v6798 = vld [vmem:[%s6765 + $0x100] sm:$0xff]
    %v6799 = vld [vmem:[%s6765 + $0x108] sm:$0xff]
    %v6800 = vld [vmem:[%s6765 + $0x110] sm:$0xff]
    %v6801 = vld [vmem:[%s6765 + $0x118] sm:$0xff]
    %v6802 = vld [vmem:[%s6765 + $0x120] sm:$0xff]
    %v6803 = vld [vmem:[%s6765 + $0x128] sm:$0xff]
    %v6804 = vld [vmem:[%s6765 + $0x130] sm:$0xff]
    %v6805 = vld [vmem:[%s6765 + $0x138] sm:$0xff]
    %v6806 = vld [vmem:[%s6765 + $0x140] sm:$0xff]
    %v6807 = vld [vmem:[%s6765 + $0x148] sm:$0xff]
    %v6808 = vld [vmem:[%s6765 + $0x150] sm:$0xff]
    %v6809 = vld [vmem:[%s6765 + $0x158] sm:$0xff]
    %v6810 = vld [vmem:[%s6765 + $0x160] sm:$0xff]
    %v6811 = vld [vmem:[%s6765 + $0x168] sm:$0xff]
    %v6812 = vld [vmem:[%s6765 + $0x170] sm:$0xff]
    %v6813 = vld [vmem:[%s6765 + $0x178] sm:$0xff]
    %v6814 = vld [vmem:[%s6765 + $0x180] sm:$0xff]
    %v6815 = vld [vmem:[%s6765 + $0x188] sm:$0xff]
    %v6816 = vld [vmem:[%s6765 + $0x190] sm:$0xff]
    %v6817 = vld [vmem:[%s6765 + $0x198] sm:$0xff]
    %v6818 = vld [vmem:[%s6765 + $0x1a0] sm:$0xff]
    %v6819 = vld [vmem:[%s6765 + $0x1a8] sm:$0xff]
    %v6820 = vld [vmem:[%s6765 + $0x1b0] sm:$0xff]
    %v6821 = vld [vmem:[%s6765 + $0x1b8] sm:$0xff]
    %v6822 = vld [vmem:[%s6765 + $0x1c0] sm:$0xff]
    %v6823 = vld [vmem:[%s6765 + $0x1c8] sm:$0xff]
    %v6824 = vld [vmem:[%s6765 + $0x1d0] sm:$0xff]
    %v6825 = vld [vmem:[%s6765 + $0x1d8] sm:$0xff]
    %v6826 = vld [vmem:[%s6765 + $0x1e0] sm:$0xff]
    %v6827 = vld [vmem:[%s6765 + $0x1e8] sm:$0xff]
    %v6828 = vld [vmem:[%s6765 + $0x1f0] sm:$0xff]
    %v6829 = vld [vmem:[%s6765 + $0x1f8] sm:$0xff]
    %v6830 = vld [vmem:[%s6765 + $0x200] sm:$0xff]
    %v6831 = vld [vmem:[%s6765 + $0x208] sm:$0xff]
    %v6832 = vld [vmem:[%s6765 + $0x210] sm:$0xff]
    %v6833 = vld [vmem:[%s6765 + $0x218] sm:$0xff]
    %v6834 = vld [vmem:[%s6765 + $0x220] sm:$0xff]
    %v6835 = vld [vmem:[%s6765 + $0x228] sm:$0xff]
    %v6836 = vld [vmem:[%s6765 + $0x230] sm:$0xff]
    %v6837 = vld [vmem:[%s6765 + $0x238] sm:$0xff]
    %v6838 = vld [vmem:[%s6765 + $0x240] sm:$0xff]
    %v6839 = vld [vmem:[%s6765 + $0x248] sm:$0xff]
    %v6840 = vld [vmem:[%s6765 + $0x250] sm:$0xff]
    %v6841 = vld [vmem:[%s6765 + $0x258] sm:$0xff]
    %v6842 = vld [vmem:[%s6765 + $0x260] sm:$0xff]
    %v6843 = vld [vmem:[%s6765 + $0x268] sm:$0xff]
    %v6844 = vld [vmem:[%s6765 + $0x270] sm:$0xff]
    %v6845 = vld [vmem:[%s6765 + $0x278] sm:$0xff]
    %v6846 = vld [vmem:[%s6765 + $0x280] sm:$0xff]
    %v6847 = vld [vmem:[%s6765 + $0x288] sm:$0xff]
    %v6848 = vld [vmem:[%s6765 + $0x290] sm:$0xff]
    %v6849 = vld [vmem:[%s6765 + $0x298] sm:$0xff]
    %v6850 = vld [vmem:[%s6765 + $0x2a0] sm:$0xff]
    %v6851 = vld [vmem:[%s6765 + $0x2a8] sm:$0xff]
    %v6852 = vld [vmem:[%s6765 + $0x2b0] sm:$0xff]
    %v6853 = vld [vmem:[%s6765 + $0x2b8] sm:$0xff]
    %v6854 = vld [vmem:[%s6765 + $0x2c0] sm:$0xff]
    %v6855 = vld [vmem:[%s6765 + $0x2c8] sm:$0xff]
    %v6856 = vld [vmem:[%s6765 + $0x2d0] sm:$0xff]
    %v6857 = vld [vmem:[%s6765 + $0x2d8] sm:$0xff]
    %v6858 = vld [vmem:[%s6765 + $0x2e0] sm:$0xff]
    %v6859 = vld [vmem:[%s6765 + $0x2e8] sm:$0xff]
    %v6860 = vld [vmem:[%s6765 + $0x2f0] sm:$0xff]
    %v6861 = vld [vmem:[%s6765 + $0x2f8] sm:$0xff]
    %v6862 = vld [vmem:[%s6765 + $0x300] sm:$0xff]
    %v6863 = vld [vmem:[%s6765 + $0x308] sm:$0xff]
    %v6864 = vld [vmem:[%s6765 + $0x310] sm:$0xff]
    %v6865 = vld [vmem:[%s6765 + $0x318] sm:$0xff]
    %v6866 = vld [vmem:[%s6765 + $0x320] sm:$0xff]
    %v6867 = vld [vmem:[%s6765 + $0x328] sm:$0xff]
    %v6868 = vld [vmem:[%s6765 + $0x330] sm:$0xff]
    %v6869 = vld [vmem:[%s6765 + $0x338] sm:$0xff]
    %v6870 = vld [vmem:[%s6765 + $0x340] sm:$0xff]
    %v6871 = vld [vmem:[%s6765 + $0x348] sm:$0xff]
    %v6872 = vld [vmem:[%s6765 + $0x350] sm:$0xff]
    %v6873 = vld [vmem:[%s6765 + $0x358] sm:$0xff]
    %v6874 = vld [vmem:[%s6765 + $0x360] sm:$0xff]
    %v6875 = vld [vmem:[%s6765 + $0x368] sm:$0xff]
    %v6876 = vld [vmem:[%s6765 + $0x370] sm:$0xff]
    %v6877 = vld [vmem:[%s6765 + $0x378] sm:$0xff]
    %v6878 = vld [vmem:[%s6765 + $0x380] sm:$0xff]
    %v6879 = vld [vmem:[%s6765 + $0x388] sm:$0xff]
    %v6880 = vld [vmem:[%s6765 + $0x390] sm:$0xff]
    %v6881 = vld [vmem:[%s6765 + $0x398] sm:$0xff]
    %v6882 = vld [vmem:[%s6765 + $0x3a0] sm:$0xff]
    %v6883 = vld [vmem:[%s6765 + $0x3a8] sm:$0xff]
    %v6884 = vld [vmem:[%s6765 + $0x3b0] sm:$0xff]
    %v6885 = vld [vmem:[%s6765 + $0x3b8] sm:$0xff]
    %v6886 = vld [vmem:[%s6765 + $0x3c0] sm:$0xff]
    %v6887 = vld [vmem:[%s6765 + $0x3c8] sm:$0xff]
    %v6888 = vld [vmem:[%s6765 + $0x3d0] sm:$0xff]
    %v6889 = vld [vmem:[%s6765 + $0x3d8] sm:$0xff]
    %v6890 = vld [vmem:[%s6765 + $0x3e0] sm:$0xff]
    %v6891 = vld [vmem:[%s6765 + $0x3e8] sm:$0xff]
    %v6892 = vld [vmem:[%s6765 + $0x3f0] sm:$0xff]
    %v6893 = vld [vmem:[%s6765 + $0x3f8] sm:$0xff]
    %v6894 = vld [vmem:[%s6765 + $0x400] sm:$0xff]
    %v6895 = vld [vmem:[%s6765 + $0x408] sm:$0xff]
    %v6896 = vld [vmem:[%s6765 + $0x410] sm:$0xff]
    %v6897 = vld [vmem:[%s6765 + $0x418] sm:$0xff]
    %v6898 = vld [vmem:[%s6765 + $0x420] sm:$0xff]
    %v6899 = vld [vmem:[%s6765 + $0x428] sm:$0xff]
    %v6900 = vld [vmem:[%s6765 + $0x430] sm:$0xff]
    %v6901 = vld [vmem:[%s6765 + $0x438] sm:$0xff]
    %v6902 = vld [vmem:[%s6765 + $0x440] sm:$0xff]
    %v6903 = vld [vmem:[%s6765 + $0x448] sm:$0xff]
    %v6904 = vld [vmem:[%s6765 + $0x450] sm:$0xff]
    %v6905 = vld [vmem:[%s6765 + $0x458] sm:$0xff]
    %v6906 = vld [vmem:[%s6765 + $0x460] sm:$0xff]
    %v6907 = vld [vmem:[%s6765 + $0x468] sm:$0xff]
    %v6908 = vld [vmem:[%s6765 + $0x470] sm:$0xff]
    %v6909 = vld [vmem:[%s6765 + $0x478] sm:$0xff]
    %v6910 = vld [vmem:[%s6765 + $0x480] sm:$0xff]
    %v6911 = vld [vmem:[%s6765 + $0x488] sm:$0xff]
    %v6912 = vld [vmem:[%s6765 + $0x490] sm:$0xff]
    %v6913 = vld [vmem:[%s6765 + $0x498] sm:$0xff]
    %v6914 = vld [vmem:[%s6765 + $0x4a0] sm:$0xff]
    %v6915 = vld [vmem:[%s6765 + $0x4a8] sm:$0xff]
    %v6916 = vld [vmem:[%s6765 + $0x4b0] sm:$0xff]
    %v6917 = vld [vmem:[%s6765 + $0x4b8] sm:$0xff]
    %v6918 = vld [vmem:[%s6765 + $0x4c0] sm:$0xff]
    %v6919 = vld [vmem:[%s6765 + $0x4c8] sm:$0xff]
    %v6920 = vld [vmem:[%s6765 + $0x4d0] sm:$0xff]
    %v6921 = vld [vmem:[%s6765 + $0x4d8] sm:$0xff]
    %v6922 = vld [vmem:[%s6765 + $0x4e0] sm:$0xff]
    %v6923 = vld [vmem:[%s6765 + $0x4e8] sm:$0xff]
    %v6924 = vld [vmem:[%s6765 + $0x4f0] sm:$0xff]
    %v6925 = vld [vmem:[%s6765 + $0x4f8] sm:$0xff]
    %v6926 = vld [vmem:[%s6765 + $0x500] sm:$0xff]
    %v6927 = vld [vmem:[%s6765 + $0x508] sm:$0xff]
    %v6928 = vld [vmem:[%s6765 + $0x510] sm:$0xff]
    %v6929 = vld [vmem:[%s6765 + $0x518] sm:$0xff]
    %v6930 = vld [vmem:[%s6765 + $0x520] sm:$0xff]
    %v6931 = vld [vmem:[%s6765 + $0x528] sm:$0xff]
    %v6932 = vld [vmem:[%s6765 + $0x530] sm:$0xff]
    %v6933 = vld [vmem:[%s6765 + $0x538] sm:$0xff]
    %v6934 = vld [vmem:[%s6765 + $0x540] sm:$0xff]
    %v6935 = vld [vmem:[%s6765 + $0x548] sm:$0xff]
    %v6936 = vld [vmem:[%s6765 + $0x550] sm:$0xff]
    %v6937 = vld [vmem:[%s6765 + $0x558] sm:$0xff]
    %v6938 = vld [vmem:[%s6765 + $0x560] sm:$0xff]
    %v6939 = vld [vmem:[%s6765 + $0x568] sm:$0xff]
    %v6940 = vld [vmem:[%s6765 + $0x570] sm:$0xff]
    %v6941 = vld [vmem:[%s6765 + $0x578] sm:$0xff]
    %v6942 = vld [vmem:[%s6765 + $0x580] sm:$0xff]
    %v6943 = vld [vmem:[%s6765 + $0x588] sm:$0xff]
    %v6944 = vld [vmem:[%s6765 + $0x590] sm:$0xff]
    %v6945 = vld [vmem:[%s6765 + $0x598] sm:$0xff]
    %v6946 = vld [vmem:[%s6765 + $0x5a0] sm:$0xff]
    %v6947 = vld [vmem:[%s6765 + $0x5a8] sm:$0xff]
    %v6948 = vld [vmem:[%s6765 + $0x5b0] sm:$0xff]
    %v6949 = vld [vmem:[%s6765 + $0x5b8] sm:$0xff]
    %v6950 = vld [vmem:[%s6765 + $0x5c0] sm:$0xff]
    %v6951 = vld [vmem:[%s6765 + $0x5c8] sm:$0xff]
    %v6952 = vld [vmem:[%s6765 + $0x5d0] sm:$0xff]
    %v6953 = vld [vmem:[%s6765 + $0x5d8] sm:$0xff]
    %v6954 = vld [vmem:[%s6765 + $0x5e0] sm:$0xff]
    %v6955 = vld [vmem:[%s6765 + $0x5e8] sm:$0xff]
    %v6956 = vld [vmem:[%s6765 + $0x5f0] sm:$0xff]
    %v6957 = vld [vmem:[%s6765 + $0x5f8] sm:$0xff]
    %s6958 = scalar_lea.vmem [#allocation9], 4
    %v6959 = vld [vmem:[%s6958] sm:$0xf]
    %v6961 = vlaneseq
    %v6962 = vshrl.u32 %v6961, 7
    %v6963 = vsub.s32 0, %v6962
    %v6964 = vrot.slane %v6959, %v6963
    %v6965 = vlaneseq
    %v6966 = vshrl.u32 %v6965, 7
    %v6967 = vsub.s32 1, %v6966
    %v6968 = vrot.slane %v6959, %v6967
    %v6969 = vlaneseq
    %v6970 = vshrl.u32 %v6969, 7
    %v6971 = vsub.s32 2, %v6970
    %v6972 = vrot.slane %v6959, %v6971
    %v6973 = vlaneseq
    %v6974 = vshrl.u32 %v6973, 7
    %v6975 = vsub.s32 3, %v6974
    %v6976 = vrot.slane %v6959, %v6975
    %v7173 = vunpack.c.l.b16 %v6766
    %v7174 = vunpack.c.h.b16 %v6766
    %v7175 = vunpack.c.l.b16 %v6767
    %v7176 = vunpack.c.h.b16 %v6767
    %v7177 = vunpack.c.l.b16 %v6768
    %v7178 = vunpack.c.h.b16 %v6768
    %v7179 = vunpack.c.l.b16 %v6769
    %v7180 = vunpack.c.h.b16 %v6769
    %v7181 = vunpack.c.l.b16 %v6770
    %v7182 = vunpack.c.h.b16 %v6770
    %v7183 = vunpack.c.l.b16 %v6771
    %v7184 = vunpack.c.h.b16 %v6771
    %v7185 = vunpack.c.l.b16 %v6772
    %v7186 = vunpack.c.h.b16 %v6772
    %v7187 = vunpack.c.l.b16 %v6773
    %v7188 = vunpack.c.h.b16 %v6773
    %v7189 = vunpack.c.l.b16 %v6774
    %v7190 = vunpack.c.h.b16 %v6774
    %v7191 = vunpack.c.l.b16 %v6775
    %v7192 = vunpack.c.h.b16 %v6775
    %v7193 = vunpack.c.l.b16 %v6776
    %v7194 = vunpack.c.h.b16 %v6776
    %v7195 = vunpack.c.l.b16 %v6777
    %v7196 = vunpack.c.h.b16 %v6777
    %v7197 = vunpack.c.l.b16 %v6778
    %v7198 = vunpack.c.h.b16 %v6778
    %v7199 = vunpack.c.l.b16 %v6779
    %v7200 = vunpack.c.h.b16 %v6779
    %v7201 = vunpack.c.l.b16 %v6780
    %v7202 = vunpack.c.h.b16 %v6780
    %v7203 = vunpack.c.l.b16 %v6781
    %v7204 = vunpack.c.h.b16 %v6781
    %v7205 = vunpack.c.l.b16 %v6782
    %v7206 = vunpack.c.h.b16 %v6782
    %v7207 = vunpack.c.l.b16 %v6783
    %v7208 = vunpack.c.h.b16 %v6783
    %v7209 = vunpack.c.l.b16 %v6784
    %v7210 = vunpack.c.h.b16 %v6784
    %v7211 = vunpack.c.l.b16 %v6785
    %v7212 = vunpack.c.h.b16 %v6785
    %v7213 = vunpack.c.l.b16 %v6786
    %v7214 = vunpack.c.h.b16 %v6786
    %v7215 = vunpack.c.l.b16 %v6787
    %v7216 = vunpack.c.h.b16 %v6787
    %v7217 = vunpack.c.l.b16 %v6788
    %v7218 = vunpack.c.h.b16 %v6788
    %v7219 = vunpack.c.l.b16 %v6789
    %v7220 = vunpack.c.h.b16 %v6789
    %v7221 = vunpack.c.l.b16 %v6790
    %v7222 = vunpack.c.h.b16 %v6790
    %v7223 = vunpack.c.l.b16 %v6791
    %v7224 = vunpack.c.h.b16 %v6791
    %v7225 = vunpack.c.l.b16 %v6792
    %v7226 = vunpack.c.h.b16 %v6792
    %v7227 = vunpack.c.l.b16 %v6793
    %v7228 = vunpack.c.h.b16 %v6793
    %v7229 = vunpack.c.l.b16 %v6794
    %v7230 = vunpack.c.h.b16 %v6794
    %v7231 = vunpack.c.l.b16 %v6795
    %v7232 = vunpack.c.h.b16 %v6795
    %v7233 = vunpack.c.l.b16 %v6796
    %v7234 = vunpack.c.h.b16 %v6796
    %v7235 = vunpack.c.l.b16 %v6797
    %v7236 = vunpack.c.h.b16 %v6797
    %v7237 = vunpack.c.l.b16 %v6798
    %v7238 = vunpack.c.h.b16 %v6798
    %v7239 = vunpack.c.l.b16 %v6799
    %v7240 = vunpack.c.h.b16 %v6799
    %v7241 = vunpack.c.l.b16 %v6800
    %v7242 = vunpack.c.h.b16 %v6800
    %v7243 = vunpack.c.l.b16 %v6801
    %v7244 = vunpack.c.h.b16 %v6801
    %v7245 = vunpack.c.l.b16 %v6802
    %v7246 = vunpack.c.h.b16 %v6802
    %v7247 = vunpack.c.l.b16 %v6803
    %v7248 = vunpack.c.h.b16 %v6803
    %v7249 = vunpack.c.l.b16 %v6804
    %v7250 = vunpack.c.h.b16 %v6804
    %v7251 = vunpack.c.l.b16 %v6805
    %v7252 = vunpack.c.h.b16 %v6805
    %v7253 = vunpack.c.l.b16 %v6806
    %v7254 = vunpack.c.h.b16 %v6806
    %v7255 = vunpack.c.l.b16 %v6807
    %v7256 = vunpack.c.h.b16 %v6807
    %v7257 = vunpack.c.l.b16 %v6808
    %v7258 = vunpack.c.h.b16 %v6808
    %v7259 = vunpack.c.l.b16 %v6809
    %v7260 = vunpack.c.h.b16 %v6809
    %v7261 = vunpack.c.l.b16 %v6810
    %v7262 = vunpack.c.h.b16 %v6810
    %v7263 = vunpack.c.l.b16 %v6811
    %v7264 = vunpack.c.h.b16 %v6811
    %v7265 = vunpack.c.l.b16 %v6812
    %v7266 = vunpack.c.h.b16 %v6812
    %v7267 = vunpack.c.l.b16 %v6813
    %v7268 = vunpack.c.h.b16 %v6813
    %v7269 = vunpack.c.l.b16 %v6814
    %v7270 = vunpack.c.h.b16 %v6814
    %v7271 = vunpack.c.l.b16 %v6815
    %v7272 = vunpack.c.h.b16 %v6815
    %v7273 = vunpack.c.l.b16 %v6816
    %v7274 = vunpack.c.h.b16 %v6816
    %v7275 = vunpack.c.l.b16 %v6817
    %v7276 = vunpack.c.h.b16 %v6817
    %v7277 = vunpack.c.l.b16 %v6818
    %v7278 = vunpack.c.h.b16 %v6818
    %v7279 = vunpack.c.l.b16 %v6819
    %v7280 = vunpack.c.h.b16 %v6819
    %v7281 = vunpack.c.l.b16 %v6820
    %v7282 = vunpack.c.h.b16 %v6820
    %v7283 = vunpack.c.l.b16 %v6821
    %v7284 = vunpack.c.h.b16 %v6821
    %v7285 = vunpack.c.l.b16 %v6822
    %v7286 = vunpack.c.h.b16 %v6822
    %v7287 = vunpack.c.l.b16 %v6823
    %v7288 = vunpack.c.h.b16 %v6823
    %v7289 = vunpack.c.l.b16 %v6824
    %v7290 = vunpack.c.h.b16 %v6824
    %v7291 = vunpack.c.l.b16 %v6825
    %v7292 = vunpack.c.h.b16 %v6825
    %v7293 = vunpack.c.l.b16 %v6826
    %v7294 = vunpack.c.h.b16 %v6826
    %v7295 = vunpack.c.l.b16 %v6827
    %v7296 = vunpack.c.h.b16 %v6827
    %v7297 = vunpack.c.l.b16 %v6828
    %v7298 = vunpack.c.h.b16 %v6828
    %v7299 = vunpack.c.l.b16 %v6829
    %v7300 = vunpack.c.h.b16 %v6829
    %v7301 = vunpack.c.l.b16 %v6830
    %v7302 = vunpack.c.h.b16 %v6830
    %v7303 = vunpack.c.l.b16 %v6831
    %v7304 = vunpack.c.h.b16 %v6831
    %v7305 = vunpack.c.l.b16 %v6832
    %v7306 = vunpack.c.h.b16 %v6832
    %v7307 = vunpack.c.l.b16 %v6833
    %v7308 = vunpack.c.h.b16 %v6833
    %v7309 = vunpack.c.l.b16 %v6834
    %v7310 = vunpack.c.h.b16 %v6834
    %v7311 = vunpack.c.l.b16 %v6835
    %v7312 = vunpack.c.h.b16 %v6835
    %v7313 = vunpack.c.l.b16 %v6836
    %v7314 = vunpack.c.h.b16 %v6836
    %v7315 = vunpack.c.l.b16 %v6837
    %v7316 = vunpack.c.h.b16 %v6837
    %v7317 = vunpack.c.l.b16 %v6838
    %v7318 = vunpack.c.h.b16 %v6838
    %v7319 = vunpack.c.l.b16 %v6839
    %v7320 = vunpack.c.h.b16 %v6839
    %v7321 = vunpack.c.l.b16 %v6840
    %v7322 = vunpack.c.h.b16 %v6840
    %v7323 = vunpack.c.l.b16 %v6841
    %v7324 = vunpack.c.h.b16 %v6841
    %v7325 = vunpack.c.l.b16 %v6842
    %v7326 = vunpack.c.h.b16 %v6842
    %v7327 = vunpack.c.l.b16 %v6843
    %v7328 = vunpack.c.h.b16 %v6843
    %v7329 = vunpack.c.l.b16 %v6844
    %v7330 = vunpack.c.h.b16 %v6844
    %v7331 = vunpack.c.l.b16 %v6845
    %v7332 = vunpack.c.h.b16 %v6845
    %v7333 = vunpack.c.l.b16 %v6846
    %v7334 = vunpack.c.h.b16 %v6846
    %v7335 = vunpack.c.l.b16 %v6847
    %v7336 = vunpack.c.h.b16 %v6847
    %v7337 = vunpack.c.l.b16 %v6848
    %v7338 = vunpack.c.h.b16 %v6848
    %v7339 = vunpack.c.l.b16 %v6849
    %v7340 = vunpack.c.h.b16 %v6849
    %v7341 = vunpack.c.l.b16 %v6850
    %v7342 = vunpack.c.h.b16 %v6850
    %v7343 = vunpack.c.l.b16 %v6851
    %v7344 = vunpack.c.h.b16 %v6851
    %v7345 = vunpack.c.l.b16 %v6852
    %v7346 = vunpack.c.h.b16 %v6852
    %v7347 = vunpack.c.l.b16 %v6853
    %v7348 = vunpack.c.h.b16 %v6853
    %v7349 = vunpack.c.l.b16 %v6854
    %v7350 = vunpack.c.h.b16 %v6854
    %v7351 = vunpack.c.l.b16 %v6855
    %v7352 = vunpack.c.h.b16 %v6855
    %v7353 = vunpack.c.l.b16 %v6856
    %v7354 = vunpack.c.h.b16 %v6856
    %v7355 = vunpack.c.l.b16 %v6857
    %v7356 = vunpack.c.h.b16 %v6857
    %v7357 = vunpack.c.l.b16 %v6858
    %v7358 = vunpack.c.h.b16 %v6858
    %v7359 = vunpack.c.l.b16 %v6859
    %v7360 = vunpack.c.h.b16 %v6859
    %v7361 = vunpack.c.l.b16 %v6860
    %v7362 = vunpack.c.h.b16 %v6860
    %v7363 = vunpack.c.l.b16 %v6861
    %v7364 = vunpack.c.h.b16 %v6861
    %v7365 = vunpack.c.l.b16 %v6862
    %v7366 = vunpack.c.h.b16 %v6862
    %v7367 = vunpack.c.l.b16 %v6863
    %v7368 = vunpack.c.h.b16 %v6863
    %v7369 = vunpack.c.l.b16 %v6864
    %v7370 = vunpack.c.h.b16 %v6864
    %v7371 = vunpack.c.l.b16 %v6865
    %v7372 = vunpack.c.h.b16 %v6865
    %v7373 = vunpack.c.l.b16 %v6866
    %v7374 = vunpack.c.h.b16 %v6866
    %v7375 = vunpack.c.l.b16 %v6867
    %v7376 = vunpack.c.h.b16 %v6867
    %v7377 = vunpack.c.l.b16 %v6868
    %v7378 = vunpack.c.h.b16 %v6868
    %v7379 = vunpack.c.l.b16 %v6869
    %v7380 = vunpack.c.h.b16 %v6869
    %v7381 = vunpack.c.l.b16 %v6870
    %v7382 = vunpack.c.h.b16 %v6870
    %v7383 = vunpack.c.l.b16 %v6871
    %v7384 = vunpack.c.h.b16 %v6871
    %v7385 = vunpack.c.l.b16 %v6872
    %v7386 = vunpack.c.h.b16 %v6872
    %v7387 = vunpack.c.l.b16 %v6873
    %v7388 = vunpack.c.h.b16 %v6873
    %v7389 = vunpack.c.l.b16 %v6874
    %v7390 = vunpack.c.h.b16 %v6874
    %v7391 = vunpack.c.l.b16 %v6875
    %v7392 = vunpack.c.h.b16 %v6875
    %v7393 = vunpack.c.l.b16 %v6876
    %v7394 = vunpack.c.h.b16 %v6876
    %v7395 = vunpack.c.l.b16 %v6877
    %v7396 = vunpack.c.h.b16 %v6877
    %v7397 = vunpack.c.l.b16 %v6878
    %v7398 = vunpack.c.h.b16 %v6878
    %v7399 = vunpack.c.l.b16 %v6879
    %v7400 = vunpack.c.h.b16 %v6879
    %v7401 = vunpack.c.l.b16 %v6880
    %v7402 = vunpack.c.h.b16 %v6880
    %v7403 = vunpack.c.l.b16 %v6881
    %v7404 = vunpack.c.h.b16 %v6881
    %v7405 = vunpack.c.l.b16 %v6882
    %v7406 = vunpack.c.h.b16 %v6882
    %v7407 = vunpack.c.l.b16 %v6883
    %v7408 = vunpack.c.h.b16 %v6883
    %v7409 = vunpack.c.l.b16 %v6884
    %v7410 = vunpack.c.h.b16 %v6884
    %v7411 = vunpack.c.l.b16 %v6885
    %v7412 = vunpack.c.h.b16 %v6885
    %v7413 = vunpack.c.l.b16 %v6886
    %v7414 = vunpack.c.h.b16 %v6886
    %v7415 = vunpack.c.l.b16 %v6887
    %v7416 = vunpack.c.h.b16 %v6887
    %v7417 = vunpack.c.l.b16 %v6888
    %v7418 = vunpack.c.h.b16 %v6888
    %v7419 = vunpack.c.l.b16 %v6889
    %v7420 = vunpack.c.h.b16 %v6889
    %v7421 = vunpack.c.l.b16 %v6890
    %v7422 = vunpack.c.h.b16 %v6890
    %v7423 = vunpack.c.l.b16 %v6891
    %v7424 = vunpack.c.h.b16 %v6891
    %v7425 = vunpack.c.l.b16 %v6892
    %v7426 = vunpack.c.h.b16 %v6892
    %v7427 = vunpack.c.l.b16 %v6893
    %v7428 = vunpack.c.h.b16 %v6893
    %v7429 = vunpack.c.l.b16 %v6894
    %v7430 = vunpack.c.h.b16 %v6894
    %v7431 = vunpack.c.l.b16 %v6895
    %v7432 = vunpack.c.h.b16 %v6895
    %v7433 = vunpack.c.l.b16 %v6896
    %v7434 = vunpack.c.h.b16 %v6896
    %v7435 = vunpack.c.l.b16 %v6897
    %v7436 = vunpack.c.h.b16 %v6897
    %v7437 = vunpack.c.l.b16 %v6898
    %v7438 = vunpack.c.h.b16 %v6898
    %v7439 = vunpack.c.l.b16 %v6899
    %v7440 = vunpack.c.h.b16 %v6899
    %v7441 = vunpack.c.l.b16 %v6900
    %v7442 = vunpack.c.h.b16 %v6900
    %v7443 = vunpack.c.l.b16 %v6901
    %v7444 = vunpack.c.h.b16 %v6901
    %v7445 = vunpack.c.l.b16 %v6902
    %v7446 = vunpack.c.h.b16 %v6902
    %v7447 = vunpack.c.l.b16 %v6903
    %v7448 = vunpack.c.h.b16 %v6903
    %v7449 = vunpack.c.l.b16 %v6904
    %v7450 = vunpack.c.h.b16 %v6904
    %v7451 = vunpack.c.l.b16 %v6905
    %v7452 = vunpack.c.h.b16 %v6905
    %v7453 = vunpack.c.l.b16 %v6906
    %v7454 = vunpack.c.h.b16 %v6906
    %v7455 = vunpack.c.l.b16 %v6907
    %v7456 = vunpack.c.h.b16 %v6907
    %v7457 = vunpack.c.l.b16 %v6908
    %v7458 = vunpack.c.h.b16 %v6908
    %v7459 = vunpack.c.l.b16 %v6909
    %v7460 = vunpack.c.h.b16 %v6909
    %v7461 = vunpack.c.l.b16 %v6910
    %v7462 = vunpack.c.h.b16 %v6910
    %v7463 = vunpack.c.l.b16 %v6911
    %v7464 = vunpack.c.h.b16 %v6911
    %v7465 = vunpack.c.l.b16 %v6912
    %v7466 = vunpack.c.h.b16 %v6912
    %v7467 = vunpack.c.l.b16 %v6913
    %v7468 = vunpack.c.h.b16 %v6913
    %v7469 = vunpack.c.l.b16 %v6914
    %v7470 = vunpack.c.h.b16 %v6914
    %v7471 = vunpack.c.l.b16 %v6915
    %v7472 = vunpack.c.h.b16 %v6915
    %v7473 = vunpack.c.l.b16 %v6916
    %v7474 = vunpack.c.h.b16 %v6916
    %v7475 = vunpack.c.l.b16 %v6917
    %v7476 = vunpack.c.h.b16 %v6917
    %v7477 = vunpack.c.l.b16 %v6918
    %v7478 = vunpack.c.h.b16 %v6918
    %v7479 = vunpack.c.l.b16 %v6919
    %v7480 = vunpack.c.h.b16 %v6919
    %v7481 = vunpack.c.l.b16 %v6920
    %v7482 = vunpack.c.h.b16 %v6920
    %v7483 = vunpack.c.l.b16 %v6921
    %v7484 = vunpack.c.h.b16 %v6921
    %v7485 = vunpack.c.l.b16 %v6922
    %v7486 = vunpack.c.h.b16 %v6922
    %v7487 = vunpack.c.l.b16 %v6923
    %v7488 = vunpack.c.h.b16 %v6923
    %v7489 = vunpack.c.l.b16 %v6924
    %v7490 = vunpack.c.h.b16 %v6924
    %v7491 = vunpack.c.l.b16 %v6925
    %v7492 = vunpack.c.h.b16 %v6925
    %v7493 = vunpack.c.l.b16 %v6926
    %v7494 = vunpack.c.h.b16 %v6926
    %v7495 = vunpack.c.l.b16 %v6927
    %v7496 = vunpack.c.h.b16 %v6927
    %v7497 = vunpack.c.l.b16 %v6928
    %v7498 = vunpack.c.h.b16 %v6928
    %v7499 = vunpack.c.l.b16 %v6929
    %v7500 = vunpack.c.h.b16 %v6929
    %v7501 = vunpack.c.l.b16 %v6930
    %v7502 = vunpack.c.h.b16 %v6930
    %v7503 = vunpack.c.l.b16 %v6931
    %v7504 = vunpack.c.h.b16 %v6931
    %v7505 = vunpack.c.l.b16 %v6932
    %v7506 = vunpack.c.h.b16 %v6932
    %v7507 = vunpack.c.l.b16 %v6933
    %v7508 = vunpack.c.h.b16 %v6933
    %v7509 = vunpack.c.l.b16 %v6934
    %v7510 = vunpack.c.h.b16 %v6934
    %v7511 = vunpack.c.l.b16 %v6935
    %v7512 = vunpack.c.h.b16 %v6935
    %v7513 = vunpack.c.l.b16 %v6936
    %v7514 = vunpack.c.h.b16 %v6936
    %v7515 = vunpack.c.l.b16 %v6937
    %v7516 = vunpack.c.h.b16 %v6937
    %v7517 = vunpack.c.l.b16 %v6938
    %v7518 = vunpack.c.h.b16 %v6938
    %v7519 = vunpack.c.l.b16 %v6939
    %v7520 = vunpack.c.h.b16 %v6939
    %v7521 = vunpack.c.l.b16 %v6940
    %v7522 = vunpack.c.h.b16 %v6940
    %v7523 = vunpack.c.l.b16 %v6941
    %v7524 = vunpack.c.h.b16 %v6941
    %v7525 = vunpack.c.l.b16 %v6942
    %v7526 = vunpack.c.h.b16 %v6942
    %v7527 = vunpack.c.l.b16 %v6943
    %v7528 = vunpack.c.h.b16 %v6943
    %v7529 = vunpack.c.l.b16 %v6944
    %v7530 = vunpack.c.h.b16 %v6944
    %v7531 = vunpack.c.l.b16 %v6945
    %v7532 = vunpack.c.h.b16 %v6945
    %v7533 = vunpack.c.l.b16 %v6946
    %v7534 = vunpack.c.h.b16 %v6946
    %v7535 = vunpack.c.l.b16 %v6947
    %v7536 = vunpack.c.h.b16 %v6947
    %v7537 = vunpack.c.l.b16 %v6948
    %v7538 = vunpack.c.h.b16 %v6948
    %v7539 = vunpack.c.l.b16 %v6949
    %v7540 = vunpack.c.h.b16 %v6949
    %v7541 = vunpack.c.l.b16 %v6950
    %v7542 = vunpack.c.h.b16 %v6950
    %v7543 = vunpack.c.l.b16 %v6951
    %v7544 = vunpack.c.h.b16 %v6951
    %v7545 = vunpack.c.l.b16 %v6952
    %v7546 = vunpack.c.h.b16 %v6952
    %v7547 = vunpack.c.l.b16 %v6953
    %v7548 = vunpack.c.h.b16 %v6953
    %v7549 = vunpack.c.l.b16 %v6954
    %v7550 = vunpack.c.h.b16 %v6954
    %v7551 = vunpack.c.l.b16 %v6955
    %v7552 = vunpack.c.h.b16 %v6955
    %v7553 = vunpack.c.l.b16 %v6956
    %v7554 = vunpack.c.h.b16 %v6956
    %v7555 = vunpack.c.l.b16 %v6957
    %v7556 = vunpack.c.h.b16 %v6957
    %v7557 = vpack.c.b16 %v7177, %v7173
    %v7558 = vpack.c.b16 %v7178, %v7174
    %v7559 = vpack.c.b16 %v7179, %v7175
    %v7560 = vpack.c.b16 %v7180, %v7176
    %v7561 = vpack.c.b16 %v7185, %v7181
    %v7562 = vpack.c.b16 %v7186, %v7182
    %v7563 = vpack.c.b16 %v7187, %v7183
    %v7564 = vpack.c.b16 %v7188, %v7184
    %v7565 = vpack.c.b16 %v7193, %v7189
    %v7566 = vpack.c.b16 %v7194, %v7190
    %v7567 = vpack.c.b16 %v7195, %v7191
    %v7568 = vpack.c.b16 %v7196, %v7192
    %v7569 = vpack.c.b16 %v7201, %v7197
    %v7570 = vpack.c.b16 %v7202, %v7198
    %v7571 = vpack.c.b16 %v7203, %v7199
    %v7572 = vpack.c.b16 %v7204, %v7200
    %v7573 = vpack.c.b16 %v7209, %v7205
    %v7574 = vpack.c.b16 %v7210, %v7206
    %v7575 = vpack.c.b16 %v7211, %v7207
    %v7576 = vpack.c.b16 %v7212, %v7208
    %v7577 = vpack.c.b16 %v7217, %v7213
    %v7578 = vpack.c.b16 %v7218, %v7214
    %v7579 = vpack.c.b16 %v7219, %v7215
    %v7580 = vpack.c.b16 %v7220, %v7216
    %v7581 = vpack.c.b16 %v7225, %v7221
    %v7582 = vpack.c.b16 %v7226, %v7222
    %v7583 = vpack.c.b16 %v7227, %v7223
    %v7584 = vpack.c.b16 %v7228, %v7224
    %v7585 = vpack.c.b16 %v7233, %v7229
    %v7586 = vpack.c.b16 %v7234, %v7230
    %v7587 = vpack.c.b16 %v7235, %v7231
    %v7588 = vpack.c.b16 %v7236, %v7232
    %v7589 = vpack.c.b16 %v7241, %v7237
    %v7590 = vpack.c.b16 %v7242, %v7238
    %v7591 = vpack.c.b16 %v7243, %v7239
    %v7592 = vpack.c.b16 %v7244, %v7240
    %v7593 = vpack.c.b16 %v7249, %v7245
    %v7594 = vpack.c.b16 %v7250, %v7246
    %v7595 = vpack.c.b16 %v7251, %v7247
    %v7596 = vpack.c.b16 %v7252, %v7248
    %v7597 = vpack.c.b16 %v7257, %v7253
    %v7598 = vpack.c.b16 %v7258, %v7254
    %v7599 = vpack.c.b16 %v7259, %v7255
    %v7600 = vpack.c.b16 %v7260, %v7256
    %v7601 = vpack.c.b16 %v7265, %v7261
    %v7602 = vpack.c.b16 %v7266, %v7262
    %v7603 = vpack.c.b16 %v7267, %v7263
    %v7604 = vpack.c.b16 %v7268, %v7264
    %v7605 = vpack.c.b16 %v7273, %v7269
    %v7606 = vpack.c.b16 %v7274, %v7270
    %v7607 = vpack.c.b16 %v7275, %v7271
    %v7608 = vpack.c.b16 %v7276, %v7272
    %v7609 = vpack.c.b16 %v7281, %v7277
    %v7610 = vpack.c.b16 %v7282, %v7278
    %v7611 = vpack.c.b16 %v7283, %v7279
    %v7612 = vpack.c.b16 %v7284, %v7280
    %v7613 = vpack.c.b16 %v7289, %v7285
    %v7614 = vpack.c.b16 %v7290, %v7286
    %v7615 = vpack.c.b16 %v7291, %v7287
    %v7616 = vpack.c.b16 %v7292, %v7288
    %v7617 = vpack.c.b16 %v7297, %v7293
    %v7618 = vpack.c.b16 %v7298, %v7294
    %v7619 = vpack.c.b16 %v7299, %v7295
    %v7620 = vpack.c.b16 %v7300, %v7296
    %v7621 = vpack.c.b16 %v7305, %v7301
    %v7622 = vpack.c.b16 %v7306, %v7302
    %v7623 = vpack.c.b16 %v7307, %v7303
    %v7624 = vpack.c.b16 %v7308, %v7304
    %v7625 = vpack.c.b16 %v7313, %v7309
    %v7626 = vpack.c.b16 %v7314, %v7310
    %v7627 = vpack.c.b16 %v7315, %v7311
    %v7628 = vpack.c.b16 %v7316, %v7312
    %v7629 = vpack.c.b16 %v7321, %v7317
    %v7630 = vpack.c.b16 %v7322, %v7318
    %v7631 = vpack.c.b16 %v7323, %v7319
    %v7632 = vpack.c.b16 %v7324, %v7320
    %v7633 = vpack.c.b16 %v7329, %v7325
    %v7634 = vpack.c.b16 %v7330, %v7326
    %v7635 = vpack.c.b16 %v7331, %v7327
    %v7636 = vpack.c.b16 %v7332, %v7328
    %v7637 = vpack.c.b16 %v7337, %v7333
    %v7638 = vpack.c.b16 %v7338, %v7334
    %v7639 = vpack.c.b16 %v7339, %v7335
    %v7640 = vpack.c.b16 %v7340, %v7336
    %v7641 = vpack.c.b16 %v7345, %v7341
    %v7642 = vpack.c.b16 %v7346, %v7342
    %v7643 = vpack.c.b16 %v7347, %v7343
    %v7644 = vpack.c.b16 %v7348, %v7344
    %v7645 = vpack.c.b16 %v7353, %v7349
    %v7646 = vpack.c.b16 %v7354, %v7350
    %v7647 = vpack.c.b16 %v7355, %v7351
    %v7648 = vpack.c.b16 %v7356, %v7352
    %v7649 = vpack.c.b16 %v7361, %v7357
    %v7650 = vpack.c.b16 %v7362, %v7358
    %v7651 = vpack.c.b16 %v7363, %v7359
    %v7652 = vpack.c.b16 %v7364, %v7360
    %v7653 = vpack.c.b16 %v7369, %v7365
    %v7654 = vpack.c.b16 %v7370, %v7366
    %v7655 = vpack.c.b16 %v7371, %v7367
    %v7656 = vpack.c.b16 %v7372, %v7368
    %v7657 = vpack.c.b16 %v7377, %v7373
    %v7658 = vpack.c.b16 %v7378, %v7374
    %v7659 = vpack.c.b16 %v7379, %v7375
    %v7660 = vpack.c.b16 %v7380, %v7376
    %v7661 = vpack.c.b16 %v7385, %v7381
    %v7662 = vpack.c.b16 %v7386, %v7382
    %v7663 = vpack.c.b16 %v7387, %v7383
    %v7664 = vpack.c.b16 %v7388, %v7384
    %v7665 = vpack.c.b16 %v7393, %v7389
    %v7666 = vpack.c.b16 %v7394, %v7390
    %v7667 = vpack.c.b16 %v7395, %v7391
    %v7668 = vpack.c.b16 %v7396, %v7392
    %v7669 = vpack.c.b16 %v7401, %v7397
    %v7670 = vpack.c.b16 %v7402, %v7398
    %v7671 = vpack.c.b16 %v7403, %v7399
    %v7672 = vpack.c.b16 %v7404, %v7400
    %v7673 = vpack.c.b16 %v7409, %v7405
    %v7674 = vpack.c.b16 %v7410, %v7406
    %v7675 = vpack.c.b16 %v7411, %v7407
    %v7676 = vpack.c.b16 %v7412, %v7408
    %v7677 = vpack.c.b16 %v7417, %v7413
    %v7678 = vpack.c.b16 %v7418, %v7414
    %v7679 = vpack.c.b16 %v7419, %v7415
    %v7680 = vpack.c.b16 %v7420, %v7416
    %v7681 = vpack.c.b16 %v7425, %v7421
    %v7682 = vpack.c.b16 %v7426, %v7422
    %v7683 = vpack.c.b16 %v7427, %v7423
    %v7684 = vpack.c.b16 %v7428, %v7424
    %v7685 = vpack.c.b16 %v7433, %v7429
    %v7686 = vpack.c.b16 %v7434, %v7430
    %v7687 = vpack.c.b16 %v7435, %v7431
    %v7688 = vpack.c.b16 %v7436, %v7432
    %v7689 = vpack.c.b16 %v7441, %v7437
    %v7690 = vpack.c.b16 %v7442, %v7438
    %v7691 = vpack.c.b16 %v7443, %v7439
    %v7692 = vpack.c.b16 %v7444, %v7440
    %v7693 = vpack.c.b16 %v7449, %v7445
    %v7694 = vpack.c.b16 %v7450, %v7446
    %v7695 = vpack.c.b16 %v7451, %v7447
    %v7696 = vpack.c.b16 %v7452, %v7448
    %v7697 = vpack.c.b16 %v7457, %v7453
    %v7698 = vpack.c.b16 %v7458, %v7454
    %v7699 = vpack.c.b16 %v7459, %v7455
    %v7700 = vpack.c.b16 %v7460, %v7456
    %v7701 = vpack.c.b16 %v7465, %v7461
    %v7702 = vpack.c.b16 %v7466, %v7462
    %v7703 = vpack.c.b16 %v7467, %v7463
    %v7704 = vpack.c.b16 %v7468, %v7464
    %v7705 = vpack.c.b16 %v7473, %v7469
    %v7706 = vpack.c.b16 %v7474, %v7470
    %v7707 = vpack.c.b16 %v7475, %v7471
    %v7708 = vpack.c.b16 %v7476, %v7472
    %v7709 = vpack.c.b16 %v7481, %v7477
    %v7710 = vpack.c.b16 %v7482, %v7478
    %v7711 = vpack.c.b16 %v7483, %v7479
    %v7712 = vpack.c.b16 %v7484, %v7480
    %v7713 = vpack.c.b16 %v7489, %v7485
    %v7714 = vpack.c.b16 %v7490, %v7486
    %v7715 = vpack.c.b16 %v7491, %v7487
    %v7716 = vpack.c.b16 %v7492, %v7488
    %v7717 = vpack.c.b16 %v7497, %v7493
    %v7718 = vpack.c.b16 %v7498, %v7494
    %v7719 = vpack.c.b16 %v7499, %v7495
    %v7720 = vpack.c.b16 %v7500, %v7496
    %v7721 = vpack.c.b16 %v7505, %v7501
    %v7722 = vpack.c.b16 %v7506, %v7502
    %v7723 = vpack.c.b16 %v7507, %v7503
    %v7724 = vpack.c.b16 %v7508, %v7504
    %v7725 = vpack.c.b16 %v7513, %v7509
    %v7726 = vpack.c.b16 %v7514, %v7510
    %v7727 = vpack.c.b16 %v7515, %v7511
    %v7728 = vpack.c.b16 %v7516, %v7512
    %v7729 = vpack.c.b16 %v7521, %v7517
    %v7730 = vpack.c.b16 %v7522, %v7518
    %v7731 = vpack.c.b16 %v7523, %v7519
    %v7732 = vpack.c.b16 %v7524, %v7520
    %v7733 = vpack.c.b16 %v7529, %v7525
    %v7734 = vpack.c.b16 %v7530, %v7526
    %v7735 = vpack.c.b16 %v7531, %v7527
    %v7736 = vpack.c.b16 %v7532, %v7528
    %v7737 = vpack.c.b16 %v7537, %v7533
    %v7738 = vpack.c.b16 %v7538, %v7534
    %v7739 = vpack.c.b16 %v7539, %v7535
    %v7740 = vpack.c.b16 %v7540, %v7536
    %v7741 = vpack.c.b16 %v7545, %v7541
    %v7742 = vpack.c.b16 %v7546, %v7542
    %v7743 = vpack.c.b16 %v7547, %v7543
    %v7744 = vpack.c.b16 %v7548, %v7544
    %v7745 = vpack.c.b16 %v7553, %v7549
    %v7746 = vpack.c.b16 %v7554, %v7550
    %v7747 = vpack.c.b16 %v7555, %v7551
    %v7748 = vpack.c.b16 %v7556, %v7552
    %7941 = vmatprep.subr.bf16.mxu0 %v7586
    %7942 = vmatpush1.bf16.msra.mxu0 %v7585
    %7943 = vmatprep.subr.bf16.mxu0 %v7582
    %7944 = vmatpush1.bf16.msra.mxu0 %v7581
    %7945 = vmatprep.subr.bf16.mxu0 %v7578
    %7946 = vmatpush1.bf16.msra.mxu0 %v7577
    %7947 = vmatprep.subr.bf16.mxu0 %v7574
    %7948 = vmatpush1.bf16.msra.mxu0 %v7573
    %7949 = vmatprep.subr.bf16.mxu0 %v7570
    %7950 = vmatpush1.bf16.msra.mxu0 %v7569
    %7951 = vmatprep.subr.bf16.mxu0 %v7566
    %7952 = vmatpush1.bf16.msra.mxu0 %v7565
    %7953 = vmatprep.subr.bf16.mxu0 %v7562
    %7954 = vmatpush1.bf16.msra.mxu0 %v7561
    %7955 = vmatprep.subr.bf16.mxu0 %v7558
    %7956 = vmatpush1.bf16.msra.mxu0 %v7557
    %7957 = vmatprep.subr.bf16.mxu0 %v7618
    %7958 = vmatpush2.bf16.msra.mxu0 %v7617
    %7959 = vmatprep.subr.bf16.mxu0 %v7614
    %7960 = vmatpush2.bf16.msra.mxu0 %v7613
    %7961 = vmatprep.subr.bf16.mxu0 %v7610
    %7962 = vmatpush2.bf16.msra.mxu0 %v7609
    %7963 = vmatprep.subr.bf16.mxu0 %v7606
    %7964 = vmatpush2.bf16.msra.mxu0 %v7605
    %7965 = vmatprep.subr.bf16.mxu0 %v7602
    %7966 = vmatpush2.bf16.msra.mxu0 %v7601
    %7967 = vmatprep.subr.bf16.mxu0 %v7598
    %7968 = vmatpush2.bf16.msra.mxu0 %v7597
    %7969 = vmatprep.subr.bf16.mxu0 %v7594
    %7970 = vmatpush2.bf16.msra.mxu0 %v7593
    %7971 = vmatprep.subr.bf16.mxu0 %v7590
    %7972 = vmatpush2.bf16.msra.mxu0 %v7589
    %7973 = vmatprep.mubr.bf16.mxu0 %v6760
    %7974 = vmatmul.mubr.bf16.gmra.mxu0 %v6759
    %v7975 = vpop.f32.mrf.mxu0
    %v7976 = vadd.f32 %v6964, %v7975
    %v7977 = vpop.f32.mrf.mxu0
    %v7978 = vadd.f32 %v6968, %v7977
    %v7979 = vpop.f32.mrf.mxu0
    %v7980 = vadd.f32 %v6964, %v7979
    %v7981 = vpop.f32.mrf.mxu0
    %v7982 = vadd.f32 %v6968, %v7981
    %7983 = vdwg.mxu0
    %7984 = vmatprep.subr.bf16.mxu0 %v7650
    %7985 = vmatpush1.bf16.msra.mxu0 %v7649
    %7986 = vmatprep.subr.bf16.mxu0 %v7646
    %7987 = vmatpush1.bf16.msra.mxu0 %v7645
    %7988 = vmatprep.subr.bf16.mxu0 %v7642
    %7989 = vmatpush1.bf16.msra.mxu0 %v7641
    %7990 = vmatprep.subr.bf16.mxu0 %v7638
    %7991 = vmatpush1.bf16.msra.mxu0 %v7637
    %7992 = vmatprep.subr.bf16.mxu0 %v7634
    %7993 = vmatpush1.bf16.msra.mxu0 %v7633
    %7994 = vmatprep.subr.bf16.mxu0 %v7630
    %7995 = vmatpush1.bf16.msra.mxu0 %v7629
    %7996 = vmatprep.subr.bf16.mxu0 %v7626
    %7997 = vmatpush1.bf16.msra.mxu0 %v7625
    %7998 = vmatprep.subr.bf16.mxu0 %v7622
    %7999 = vmatpush1.bf16.msra.mxu0 %v7621
    %8000 = vmatprep.subr.bf16.mxu0 %v7682
    %8001 = vmatpush2.bf16.msra.mxu0 %v7681
    %8002 = vmatprep.subr.bf16.mxu0 %v7678
    %8003 = vmatpush2.bf16.msra.mxu0 %v7677
    %8004 = vmatprep.subr.bf16.mxu0 %v7674
    %8005 = vmatpush2.bf16.msra.mxu0 %v7673
    %8006 = vmatprep.subr.bf16.mxu0 %v7670
    %8007 = vmatpush2.bf16.msra.mxu0 %v7669
    %8008 = vmatprep.subr.bf16.mxu0 %v7666
    %8009 = vmatpush2.bf16.msra.mxu0 %v7665
    %8010 = vmatprep.subr.bf16.mxu0 %v7662
    %8011 = vmatpush2.bf16.msra.mxu0 %v7661
    %8012 = vmatprep.subr.bf16.mxu0 %v7658
    %8013 = vmatpush2.bf16.msra.mxu0 %v7657
    %8014 = vmatprep.subr.bf16.mxu0 %v7654
    %8015 = vmatpush2.bf16.msra.mxu0 %v7653
    %8016 = vmatprep.mubr.bf16.mxu0 %v6762
    %8017 = vmatmul.mubr.bf16.gmra.mxu0 %v6761
    %v8018 = vpop.f32.mrf.mxu0
    %v8019 = vadd.f32 %v7976, %v8018
    %v8020 = vpop.f32.mrf.mxu0
    %v8021 = vadd.f32 %v7978, %v8020
    %v8022 = vpop.f32.mrf.mxu0
    %v8023 = vadd.f32 %v7980, %v8022
    %v8024 = vpop.f32.mrf.mxu0
    %v8025 = vadd.f32 %v7982, %v8024
    %8026 = vdwg.mxu0
    %8027 = vmatprep.subr.bf16.mxu0 %v7714
    %8028 = vmatpush1.bf16.msra.mxu0 %v7713
    %8029 = vmatprep.subr.bf16.mxu0 %v7710
    %8030 = vmatpush1.bf16.msra.mxu0 %v7709
    %8031 = vmatprep.subr.bf16.mxu0 %v7706
    %8032 = vmatpush1.bf16.msra.mxu0 %v7705
    %8033 = vmatprep.subr.bf16.mxu0 %v7702
    %8034 = vmatpush1.bf16.msra.mxu0 %v7701
    %8035 = vmatprep.subr.bf16.mxu0 %v7698
    %8036 = vmatpush1.bf16.msra.mxu0 %v7697
    %8037 = vmatprep.subr.bf16.mxu0 %v7694
    %8038 = vmatpush1.bf16.msra.mxu0 %v7693
    %8039 = vmatprep.subr.bf16.mxu0 %v7690
    %8040 = vmatpush1.bf16.msra.mxu0 %v7689
    %8041 = vmatprep.subr.bf16.mxu0 %v7686
    %8042 = vmatpush1.bf16.msra.mxu0 %v7685
    %8043 = vmatprep.subr.bf16.mxu0 %v7746
    %8044 = vmatpush2.bf16.msra.mxu0 %v7745
    %8045 = vmatprep.subr.bf16.mxu0 %v7742
    %8046 = vmatpush2.bf16.msra.mxu0 %v7741
    %8047 = vmatprep.subr.bf16.mxu0 %v7738
    %8048 = vmatpush2.bf16.msra.mxu0 %v7737
    %8049 = vmatprep.subr.bf16.mxu0 %v7734
    %8050 = vmatpush2.bf16.msra.mxu0 %v7733
    %8051 = vmatprep.subr.bf16.mxu0 %v7730
    %8052 = vmatpush2.bf16.msra.mxu0 %v7729
    %8053 = vmatprep.subr.bf16.mxu0 %v7726
    %8054 = vmatpush2.bf16.msra.mxu0 %v7725
    %8055 = vmatprep.subr.bf16.mxu0 %v7722
    %8056 = vmatpush2.bf16.msra.mxu0 %v7721
    %8057 = vmatprep.subr.bf16.mxu0 %v7718
    %8058 = vmatpush2.bf16.msra.mxu0 %v7717
    %8059 = vmatprep.mubr.bf16.mxu0 %v6764
    %8060 = vmatmul.mubr.bf16.gmra.mxu0 %v6763
    %v8061 = vpop.f32.mrf.mxu0
    %v8062 = vadd.f32 %v8019, %v8061
    %v8063 = vpop.f32.mrf.mxu0
    %v8064 = vadd.f32 %v8021, %v8063
    %v8065 = vpop.f32.mrf.mxu0
    %v8066 = vadd.f32 %v8023, %v8065
    %v8067 = vpop.f32.mrf.mxu0
    %v8068 = vadd.f32 %v8025, %v8067
    %8069 = vdwg.mxu0
    %8070 = vmatprep.subr.bf16.mxu0 %v7588
    %8071 = vmatpush1.bf16.msra.mxu0 %v7587
    %8072 = vmatprep.subr.bf16.mxu0 %v7584
    %8073 = vmatpush1.bf16.msra.mxu0 %v7583
    %8074 = vmatprep.subr.bf16.mxu0 %v7580
    %8075 = vmatpush1.bf16.msra.mxu0 %v7579
    %8076 = vmatprep.subr.bf16.mxu0 %v7576
    %8077 = vmatpush1.bf16.msra.mxu0 %v7575
    %8078 = vmatprep.subr.bf16.mxu0 %v7572
    %8079 = vmatpush1.bf16.msra.mxu0 %v7571
    %8080 = vmatprep.subr.bf16.mxu0 %v7568
    %8081 = vmatpush1.bf16.msra.mxu0 %v7567
    %8082 = vmatprep.subr.bf16.mxu0 %v7564
    %8083 = vmatpush1.bf16.msra.mxu0 %v7563
    %8084 = vmatprep.subr.bf16.mxu0 %v7560
    %8085 = vmatpush1.bf16.msra.mxu0 %v7559
    %8086 = vmatprep.subr.bf16.mxu0 %v7620
    %8087 = vmatpush2.bf16.msra.mxu0 %v7619
    %8088 = vmatprep.subr.bf16.mxu0 %v7616
    %8089 = vmatpush2.bf16.msra.mxu0 %v7615
    %8090 = vmatprep.subr.bf16.mxu0 %v7612
    %8091 = vmatpush2.bf16.msra.mxu0 %v7611
    %8092 = vmatprep.subr.bf16.mxu0 %v7608
    %8093 = vmatpush2.bf16.msra.mxu0 %v7607
    %8094 = vmatprep.subr.bf16.mxu0 %v7604
    %8095 = vmatpush2.bf16.msra.mxu0 %v7603
    %8096 = vmatprep.subr.bf16.mxu0 %v7600
    %8097 = vmatpush2.bf16.msra.mxu0 %v7599
    %8098 = vmatprep.subr.bf16.mxu0 %v7596
    %8099 = vmatpush2.bf16.msra.mxu0 %v7595
    %8100 = vmatprep.subr.bf16.mxu0 %v7592
    %8101 = vmatpush2.bf16.msra.mxu0 %v7591
    %8102 = vmatprep.mubr.bf16.mxu0 %v6760
    %8103 = vmatmul.mubr.bf16.gmra.mxu0 %v6759
    %v8104 = vpop.f32.mrf.mxu0
    %v8105 = vadd.f32 %v6972, %v8104
    %v8106 = vpop.f32.mrf.mxu0
    %v8107 = vadd.f32 %v6976, %v8106
    %v8108 = vpop.f32.mrf.mxu0
    %v8109 = vadd.f32 %v6972, %v8108
    %v8110 = vpop.f32.mrf.mxu0
    %v8111 = vadd.f32 %v6976, %v8110
    %8112 = vdwg.mxu0
    %8113 = vmatprep.subr.bf16.mxu0 %v7652
    %8114 = vmatpush1.bf16.msra.mxu0 %v7651
    %8115 = vmatprep.subr.bf16.mxu0 %v7648
    %8116 = vmatpush1.bf16.msra.mxu0 %v7647
    %8117 = vmatprep.subr.bf16.mxu0 %v7644
    %8118 = vmatpush1.bf16.msra.mxu0 %v7643
    %8119 = vmatprep.subr.bf16.mxu0 %v7640
    %8120 = vmatpush1.bf16.msra.mxu0 %v7639
    %8121 = vmatprep.subr.bf16.mxu0 %v7636
    %8122 = vmatpush1.bf16.msra.mxu0 %v7635
    %8123 = vmatprep.subr.bf16.mxu0 %v7632
    %8124 = vmatpush1.bf16.msra.mxu0 %v7631
    %8125 = vmatprep.subr.bf16.mxu0 %v7628
    %8126 = vmatpush1.bf16.msra.mxu0 %v7627
    %8127 = vmatprep.subr.bf16.mxu0 %v7624
    %8128 = vmatpush1.bf16.msra.mxu0 %v7623
    %8129 = vmatprep.subr.bf16.mxu0 %v7684
    %8130 = vmatpush2.bf16.msra.mxu0 %v7683
    %8131 = vmatprep.subr.bf16.mxu0 %v7680
    %8132 = vmatpush2.bf16.msra.mxu0 %v7679
    %8133 = vmatprep.subr.bf16.mxu0 %v7676
    %8134 = vmatpush2.bf16.msra.mxu0 %v7675
    %8135 = vmatprep.subr.bf16.mxu0 %v7672
    %8136 = vmatpush2.bf16.msra.mxu0 %v7671
    %8137 = vmatprep.subr.bf16.mxu0 %v7668
    %8138 = vmatpush2.bf16.msra.mxu0 %v7667
    %8139 = vmatprep.subr.bf16.mxu0 %v7664
    %8140 = vmatpush2.bf16.msra.mxu0 %v7663
    %8141 = vmatprep.subr.bf16.mxu0 %v7660
    %8142 = vmatpush2.bf16.msra.mxu0 %v7659
    %8143 = vmatprep.subr.bf16.mxu0 %v7656
    %8144 = vmatpush2.bf16.msra.mxu0 %v7655
    %8145 = vmatprep.mubr.bf16.mxu0 %v6762
    %8146 = vmatmul.mubr.bf16.gmra.mxu0 %v6761
    %v8147 = vpop.f32.mrf.mxu0
    %v8148 = vadd.f32 %v8105, %v8147
    %v8149 = vpop.f32.mrf.mxu0
    %v8150 = vadd.f32 %v8107, %v8149
    %v8151 = vpop.f32.mrf.mxu0
    %v8152 = vadd.f32 %v8109, %v8151
    %v8153 = vpop.f32.mrf.mxu0
    %v8154 = vadd.f32 %v8111, %v8153
    %8155 = vdwg.mxu0
    %8156 = vmatprep.subr.bf16.mxu0 %v7716
    %8157 = vmatpush1.bf16.msra.mxu0 %v7715
    %8158 = vmatprep.subr.bf16.mxu0 %v7712
    %8159 = vmatpush1.bf16.msra.mxu0 %v7711
    %8160 = vmatprep.subr.bf16.mxu0 %v7708
    %8161 = vmatpush1.bf16.msra.mxu0 %v7707
    %8162 = vmatprep.subr.bf16.mxu0 %v7704
    %8163 = vmatpush1.bf16.msra.mxu0 %v7703
    %8164 = vmatprep.subr.bf16.mxu0 %v7700
    %8165 = vmatpush1.bf16.msra.mxu0 %v7699
    %8166 = vmatprep.subr.bf16.mxu0 %v7696
    %8167 = vmatpush1.bf16.msra.mxu0 %v7695
    %8168 = vmatprep.subr.bf16.mxu0 %v7692
    %8169 = vmatpush1.bf16.msra.mxu0 %v7691
    %8170 = vmatprep.subr.bf16.mxu0 %v7688
    %8171 = vmatpush1.bf16.msra.mxu0 %v7687
    %8172 = vmatprep.subr.bf16.mxu0 %v7748
    %8173 = vmatpush2.bf16.msra.mxu0 %v7747
    %8174 = vmatprep.subr.bf16.mxu0 %v7744
    %8175 = vmatpush2.bf16.msra.mxu0 %v7743
    %8176 = vmatprep.subr.bf16.mxu0 %v7740
    %8177 = vmatpush2.bf16.msra.mxu0 %v7739
    %8178 = vmatprep.subr.bf16.mxu0 %v7736
    %8179 = vmatpush2.bf16.msra.mxu0 %v7735
    %8180 = vmatprep.subr.bf16.mxu0 %v7732
    %8181 = vmatpush2.bf16.msra.mxu0 %v7731
    %8182 = vmatprep.subr.bf16.mxu0 %v7728
    %8183 = vmatpush2.bf16.msra.mxu0 %v7727
    %8184 = vmatprep.subr.bf16.mxu0 %v7724
    %8185 = vmatpush2.bf16.msra.mxu0 %v7723
    %8186 = vmatprep.subr.bf16.mxu0 %v7720
    %8187 = vmatpush2.bf16.msra.mxu0 %v7719
    %8188 = vmatprep.mubr.bf16.mxu0 %v6764
    %8189 = vmatmul.mubr.bf16.gmra.mxu0 %v6763
    %v8190 = vpop.f32.mrf.mxu0
    %v8191 = vadd.f32 %v8148, %v8190
    %v8192 = vpop.f32.mrf.mxu0
    %v8193 = vadd.f32 %v8150, %v8192
    %v8194 = vpop.f32.mrf.mxu0
    %v8195 = vadd.f32 %v8152, %v8194
    %v8196 = vpop.f32.mrf.mxu0
    %v8197 = vadd.f32 %v8154, %v8196
    %8198 = vdwg.mxu0
    %v8199 = vmax.f32 %v8062, 0.0
    %v8200 = vmax.f32 %v8064, 0.0
    %v8201 = vmax.f32 %v8191, 0.0
    %v8202 = vmax.f32 %v8193, 0.0
    %v8203 = vmax.f32 %v8066, 0.0
    %v8204 = vmax.f32 %v8068, 0.0
    %v8205 = vmax.f32 %v8195, 0.0
    %v8206 = vmax.f32 %v8197, 0.0
    %v8207 = vpack.c.bf16 %v8203, %v8199
    %v8208 = vpack.c.bf16 %v8204, %v8200
    %v8209 = vpack.c.bf16 %v8205, %v8201
    %v8210 = vpack.c.bf16 %v8206, %v8202
    %s8211 = scalar_lea.vmem %s7, 256
    %v8212 = vld [vmem:[%s8211] sm:$0xf]
    %v8213 = vld [vmem:[%s8211 + $0x4] sm:$0xf]
    %v8214 = vld [vmem:[%s8211 + $0x8] sm:$0xf]
    %v8215 = vld [vmem:[%s8211 + $0xc] sm:$0xf]
    %v8216 = vld [vmem:[%s8211 + $0x10] sm:$0xf]
    %v8217 = vld [vmem:[%s8211 + $0x14] sm:$0xf]
    %v8218 = vld [vmem:[%s8211 + $0x18] sm:$0xf]
    %v8219 = vld [vmem:[%s8211 + $0x1c] sm:$0xf]
    %v8220 = vld [vmem:[%s8211 + $0x20] sm:$0xf]
    %v8221 = vld [vmem:[%s8211 + $0x24] sm:$0xf]
    %v8222 = vld [vmem:[%s8211 + $0x28] sm:$0xf]
    %v8223 = vld [vmem:[%s8211 + $0x2c] sm:$0xf]
    %v8224 = vld [vmem:[%s8211 + $0x30] sm:$0xf]
    %v8225 = vld [vmem:[%s8211 + $0x34] sm:$0xf]
    %v8226 = vld [vmem:[%s8211 + $0x38] sm:$0xf]
    %v8227 = vld [vmem:[%s8211 + $0x3c] sm:$0xf]
    %v8228 = vld [vmem:[%s8211 + $0x40] sm:$0xf]
    %v8229 = vld [vmem:[%s8211 + $0x44] sm:$0xf]
    %v8230 = vld [vmem:[%s8211 + $0x48] sm:$0xf]
    %v8231 = vld [vmem:[%s8211 + $0x4c] sm:$0xf]
    %v8232 = vld [vmem:[%s8211 + $0x50] sm:$0xf]
    %v8233 = vld [vmem:[%s8211 + $0x54] sm:$0xf]
    %v8234 = vld [vmem:[%s8211 + $0x58] sm:$0xf]
    %v8235 = vld [vmem:[%s8211 + $0x5c] sm:$0xf]
    %v8236 = vld [vmem:[%s8211 + $0x60] sm:$0xf]
    %v8237 = vld [vmem:[%s8211 + $0x64] sm:$0xf]
    %v8238 = vld [vmem:[%s8211 + $0x68] sm:$0xf]
    %v8239 = vld [vmem:[%s8211 + $0x6c] sm:$0xf]
    %v8240 = vld [vmem:[%s8211 + $0x70] sm:$0xf]
    %v8241 = vld [vmem:[%s8211 + $0x74] sm:$0xf]
    %v8242 = vld [vmem:[%s8211 + $0x78] sm:$0xf]
    %v8243 = vld [vmem:[%s8211 + $0x7c] sm:$0xf]
    %v8244 = vld [vmem:[%s8211 + $0x80] sm:$0xf]
    %v8245 = vld [vmem:[%s8211 + $0x84] sm:$0xf]
    %v8246 = vld [vmem:[%s8211 + $0x88] sm:$0xf]
    %v8247 = vld [vmem:[%s8211 + $0x8c] sm:$0xf]
    %v8248 = vld [vmem:[%s8211 + $0x90] sm:$0xf]
    %v8249 = vld [vmem:[%s8211 + $0x94] sm:$0xf]
    %v8250 = vld [vmem:[%s8211 + $0x98] sm:$0xf]
    %v8251 = vld [vmem:[%s8211 + $0x9c] sm:$0xf]
    %v8252 = vld [vmem:[%s8211 + $0xa0] sm:$0xf]
    %v8253 = vld [vmem:[%s8211 + $0xa4] sm:$0xf]
    %v8254 = vld [vmem:[%s8211 + $0xa8] sm:$0xf]
    %v8255 = vld [vmem:[%s8211 + $0xac] sm:$0xf]
    %v8256 = vld [vmem:[%s8211 + $0xb0] sm:$0xf]
    %v8257 = vld [vmem:[%s8211 + $0xb4] sm:$0xf]
    %v8258 = vld [vmem:[%s8211 + $0xb8] sm:$0xf]
    %v8259 = vld [vmem:[%s8211 + $0xbc] sm:$0xf]
    %v8260 = vld [vmem:[%s8211 + $0xc0] sm:$0xf]
    %v8261 = vld [vmem:[%s8211 + $0xc4] sm:$0xf]
    %v8262 = vld [vmem:[%s8211 + $0xc8] sm:$0xf]
    %v8263 = vld [vmem:[%s8211 + $0xcc] sm:$0xf]
    %v8264 = vld [vmem:[%s8211 + $0xd0] sm:$0xf]
    %v8265 = vld [vmem:[%s8211 + $0xd4] sm:$0xf]
    %v8266 = vld [vmem:[%s8211 + $0xd8] sm:$0xf]
    %v8267 = vld [vmem:[%s8211 + $0xdc] sm:$0xf]
    %v8268 = vld [vmem:[%s8211 + $0xe0] sm:$0xf]
    %v8269 = vld [vmem:[%s8211 + $0xe4] sm:$0xf]
    %v8270 = vld [vmem:[%s8211 + $0xe8] sm:$0xf]
    %v8271 = vld [vmem:[%s8211 + $0xec] sm:$0xf]
    %v8272 = vld [vmem:[%s8211 + $0xf0] sm:$0xf]
    %v8273 = vld [vmem:[%s8211 + $0xf4] sm:$0xf]
    %v8274 = vld [vmem:[%s8211 + $0xf8] sm:$0xf]
    %v8275 = vld [vmem:[%s8211 + $0xfc] sm:$0xf]
    %s8276 = scalar_lea.vmem %s8, 1
    %v8277 = vld [vmem:[%s8276] sm:$0x1]
    %v8279 = vlaneseq
    %v8280 = vshrl.u32 %v8279, 7
    %v8281 = vsub.s32 0, %v8280
    %v8282 = vrot.slane %v8277, %v8281
    %v8348 = vunpack.c.l.b16 %v8212
    %v8349 = vunpack.c.l.b16 %v8213
    %v8350 = vunpack.c.l.b16 %v8214
    %v8351 = vunpack.c.l.b16 %v8215
    %v8352 = vunpack.c.l.b16 %v8216
    %v8353 = vunpack.c.l.b16 %v8217
    %v8354 = vunpack.c.l.b16 %v8218
    %v8355 = vunpack.c.l.b16 %v8219
    %v8356 = vunpack.c.l.b16 %v8220
    %v8357 = vunpack.c.l.b16 %v8221
    %v8358 = vunpack.c.l.b16 %v8222
    %v8359 = vunpack.c.l.b16 %v8223
    %v8360 = vunpack.c.l.b16 %v8224
    %v8361 = vunpack.c.l.b16 %v8225
    %v8362 = vunpack.c.l.b16 %v8226
    %v8363 = vunpack.c.l.b16 %v8227
    %v8364 = vunpack.c.l.b16 %v8228
    %v8365 = vunpack.c.l.b16 %v8229
    %v8366 = vunpack.c.l.b16 %v8230
    %v8367 = vunpack.c.l.b16 %v8231
    %v8368 = vunpack.c.l.b16 %v8232
    %v8369 = vunpack.c.l.b16 %v8233
    %v8370 = vunpack.c.l.b16 %v8234
    %v8371 = vunpack.c.l.b16 %v8235
    %v8372 = vunpack.c.l.b16 %v8236
    %v8373 = vunpack.c.l.b16 %v8237
    %v8374 = vunpack.c.l.b16 %v8238
    %v8375 = vunpack.c.l.b16 %v8239
    %v8376 = vunpack.c.l.b16 %v8240
    %v8377 = vunpack.c.l.b16 %v8241
    %v8378 = vunpack.c.l.b16 %v8242
    %v8379 = vunpack.c.l.b16 %v8243
    %v8380 = vunpack.c.l.b16 %v8244
    %v8381 = vunpack.c.l.b16 %v8245
    %v8382 = vunpack.c.l.b16 %v8246
    %v8383 = vunpack.c.l.b16 %v8247
    %v8384 = vunpack.c.l.b16 %v8248
    %v8385 = vunpack.c.l.b16 %v8249
    %v8386 = vunpack.c.l.b16 %v8250
    %v8387 = vunpack.c.l.b16 %v8251
    %v8388 = vunpack.c.l.b16 %v8252
    %v8389 = vunpack.c.l.b16 %v8253
    %v8390 = vunpack.c.l.b16 %v8254
    %v8391 = vunpack.c.l.b16 %v8255
    %v8392 = vunpack.c.l.b16 %v8256
    %v8393 = vunpack.c.l.b16 %v8257
    %v8394 = vunpack.c.l.b16 %v8258
    %v8395 = vunpack.c.l.b16 %v8259
    %v8396 = vunpack.c.l.b16 %v8260
    %v8397 = vunpack.c.l.b16 %v8261
    %v8398 = vunpack.c.l.b16 %v8262
    %v8399 = vunpack.c.l.b16 %v8263
    %v8400 = vunpack.c.l.b16 %v8264
    %v8401 = vunpack.c.l.b16 %v8265
    %v8402 = vunpack.c.l.b16 %v8266
    %v8403 = vunpack.c.l.b16 %v8267
    %v8404 = vunpack.c.l.b16 %v8268
    %v8405 = vunpack.c.l.b16 %v8269
    %v8406 = vunpack.c.l.b16 %v8270
    %v8407 = vunpack.c.l.b16 %v8271
    %v8408 = vunpack.c.l.b16 %v8272
    %v8409 = vunpack.c.l.b16 %v8273
    %v8410 = vunpack.c.l.b16 %v8274
    %v8411 = vunpack.c.l.b16 %v8275
    %v8412 = vpack.c.b16 %v8349, %v8348
    %v8413 = vpack.c.b16 %v8351, %v8350
    %v8414 = vpack.c.b16 %v8353, %v8352
    %v8415 = vpack.c.b16 %v8355, %v8354
    %v8416 = vpack.c.b16 %v8357, %v8356
    %v8417 = vpack.c.b16 %v8359, %v8358
    %v8418 = vpack.c.b16 %v8361, %v8360
    %v8419 = vpack.c.b16 %v8363, %v8362
    %v8420 = vpack.c.b16 %v8365, %v8364
    %v8421 = vpack.c.b16 %v8367, %v8366
    %v8422 = vpack.c.b16 %v8369, %v8368
    %v8423 = vpack.c.b16 %v8371, %v8370
    %v8424 = vpack.c.b16 %v8373, %v8372
    %v8425 = vpack.c.b16 %v8375, %v8374
    %v8426 = vpack.c.b16 %v8377, %v8376
    %v8427 = vpack.c.b16 %v8379, %v8378
    %v8428 = vpack.c.b16 %v8381, %v8380
    %v8429 = vpack.c.b16 %v8383, %v8382
    %v8430 = vpack.c.b16 %v8385, %v8384
    %v8431 = vpack.c.b16 %v8387, %v8386
    %v8432 = vpack.c.b16 %v8389, %v8388
    %v8433 = vpack.c.b16 %v8391, %v8390
    %v8434 = vpack.c.b16 %v8393, %v8392
    %v8435 = vpack.c.b16 %v8395, %v8394
    %v8436 = vpack.c.b16 %v8397, %v8396
    %v8437 = vpack.c.b16 %v8399, %v8398
    %v8438 = vpack.c.b16 %v8401, %v8400
    %v8439 = vpack.c.b16 %v8403, %v8402
    %v8440 = vpack.c.b16 %v8405, %v8404
    %v8441 = vpack.c.b16 %v8407, %v8406
    %v8442 = vpack.c.b16 %v8409, %v8408
    %v8443 = vpack.c.b16 %v8411, %v8410
    %8476 = vmatprep.subr.bf16.mxu0 0
    %8477 = vmatpush1.bf16.msra.mxu0 %v8419
    %8478 = vmatprep.subr.bf16.mxu0 0
    %8479 = vmatpush1.bf16.msra.mxu0 %v8418
    %8480 = vmatprep.subr.bf16.mxu0 0
    %8481 = vmatpush1.bf16.msra.mxu0 %v8417
    %8482 = vmatprep.subr.bf16.mxu0 0
    %8483 = vmatpush1.bf16.msra.mxu0 %v8416
    %8484 = vmatprep.subr.bf16.mxu0 0
    %8485 = vmatpush1.bf16.msra.mxu0 %v8415
    %8486 = vmatprep.subr.bf16.mxu0 0
    %8487 = vmatpush1.bf16.msra.mxu0 %v8414
    %8488 = vmatprep.subr.bf16.mxu0 0
    %8489 = vmatpush1.bf16.msra.mxu0 %v8413
    %8490 = vmatprep.subr.bf16.mxu0 0
    %8491 = vmatpush1.bf16.msra.mxu0 %v8412
    %8492 = vmatprep.subr.bf16.mxu0 0
    %8493 = vmatpush2.bf16.msra.mxu0 %v8427
    %8494 = vmatprep.subr.bf16.mxu0 0
    %8495 = vmatpush2.bf16.msra.mxu0 %v8426
    %8496 = vmatprep.subr.bf16.mxu0 0
    %8497 = vmatpush2.bf16.msra.mxu0 %v8425
    %8498 = vmatprep.subr.bf16.mxu0 0
    %8499 = vmatpush2.bf16.msra.mxu0 %v8424
    %8500 = vmatprep.subr.bf16.mxu0 0
    %8501 = vmatpush2.bf16.msra.mxu0 %v8423
    %8502 = vmatprep.subr.bf16.mxu0 0
    %8503 = vmatpush2.bf16.msra.mxu0 %v8422
    %8504 = vmatprep.subr.bf16.mxu0 0
    %8505 = vmatpush2.bf16.msra.mxu0 %v8421
    %8506 = vmatprep.subr.bf16.mxu0 0
    %8507 = vmatpush2.bf16.msra.mxu0 %v8420
    %8508 = vmatprep.mubr.bf16.mxu0 %v8208
    %8509 = vmatmul.mubr.bf16.gmra.mxu0 %v8207
    %v8510 = vpop.f32.mrf.mxu0
    %v8511 = vadd.f32 %v8282, %v8510
    %v8512 = vpop.f32.mrf.mxu0
    %v8513 = vpop.f32.mrf.mxu0
    %v8514 = vadd.f32 %v8282, %v8513
    %v8515 = vpop.f32.mrf.mxu0
    %8516 = vdwg.mxu0
    %8517 = vmatprep.subr.bf16.mxu0 0
    %8518 = vmatpush1.bf16.msra.mxu0 %v8435
    %8519 = vmatprep.subr.bf16.mxu0 0
    %8520 = vmatpush1.bf16.msra.mxu0 %v8434
    %8521 = vmatprep.subr.bf16.mxu0 0
    %8522 = vmatpush1.bf16.msra.mxu0 %v8433
    %8523 = vmatprep.subr.bf16.mxu0 0
    %8524 = vmatpush1.bf16.msra.mxu0 %v8432
    %8525 = vmatprep.subr.bf16.mxu0 0
    %8526 = vmatpush1.bf16.msra.mxu0 %v8431
    %8527 = vmatprep.subr.bf16.mxu0 0
    %8528 = vmatpush1.bf16.msra.mxu0 %v8430
    %8529 = vmatprep.subr.bf16.mxu0 0
    %8530 = vmatpush1.bf16.msra.mxu0 %v8429
    %8531 = vmatprep.subr.bf16.mxu0 0
    %8532 = vmatpush1.bf16.msra.mxu0 %v8428
    %8533 = vmatprep.subr.bf16.mxu0 0
    %8534 = vmatpush2.bf16.msra.mxu0 %v8443
    %8535 = vmatprep.subr.bf16.mxu0 0
    %8536 = vmatpush2.bf16.msra.mxu0 %v8442
    %8537 = vmatprep.subr.bf16.mxu0 0
    %8538 = vmatpush2.bf16.msra.mxu0 %v8441
    %8539 = vmatprep.subr.bf16.mxu0 0
    %8540 = vmatpush2.bf16.msra.mxu0 %v8440
    %8541 = vmatprep.subr.bf16.mxu0 0
    %8542 = vmatpush2.bf16.msra.mxu0 %v8439
    %8543 = vmatprep.subr.bf16.mxu0 0
    %8544 = vmatpush2.bf16.msra.mxu0 %v8438
    %8545 = vmatprep.subr.bf16.mxu0 0
    %8546 = vmatpush2.bf16.msra.mxu0 %v8437
    %8547 = vmatprep.subr.bf16.mxu0 0
    %8548 = vmatpush2.bf16.msra.mxu0 %v8436
    %8549 = vmatprep.mubr.bf16.mxu0 %v8210
    %8550 = vmatmul.mubr.bf16.gmra.mxu0 %v8209
    %v8551 = vpop.f32.mrf.mxu0
    %v8552 = vadd.f32 %v8511, %v8551
    %v8553 = vpop.f32.mrf.mxu0
    %v8554 = vpop.f32.mrf.mxu0
    %v8555 = vadd.f32 %v8514, %v8554
    %v8556 = vpop.f32.mrf.mxu0
    %8557 = vdwg.mxu0
    %8560 = vrot.lane.b32.xlu0 %v8552, 1
    %v8561 = vpop.permute.xlu0 %8560
    %8562 = vrot.lane.b32.xlu0 %v8555, 1
    %v8563 = vpop.permute.xlu0 %8562
    %vm8566 = vcmask 7168
    %v8567 = vsel %vm8566, %v4327, %v8561
    %v8568 = vsel %vm8566, %v4330, %v8563
    %vm8569 = vcmask 15360
    %8570 = vst.msk [vmem:[%s9] sm:$0xff] %vm8569, %v8567
    %8571 = vst.msk [vmem:[%s9 + $0x8] sm:$0xff] %vm8569, %v8568
    // Predicated region
    $region58: #{student_critic_forward.1} parent=1 // pred_check
      _
    $region59: #{student_critic_forward.1} parent=1 // pred_check_branch
      %8573 = sbr.rel (0) target = $region61
    $region60: #{student_critic_forward.1} parent=1 // pred_region
      _
    $region61: #{student_critic_forward.1} parent=1 // pred_fallthru
      _
    // Predicated region
    $region62: #{student_critic_forward.1} parent=1 // pred_check
      _
    $region63: #{student_critic_forward.1} parent=1 // pred_check_branch
      %8575 = sbr.rel (0) target = $region65
    $region64: #{student_critic_forward.1} parent=1 // pred_region
      _
    $region65: #{student_critic_forward.1} parent=1 // pred_fallthru
      _
    %8576 = vsyncpa [#allocation3], 1
    %8577 = vsyncpa [#allocation5], 1
    %8578 = vsyncpa [#allocation8], 1

</llo_original>
